<compile_context>
chip_gen: v7x
topology: tpu7x:2x2x1
jax: 0.10.0
libtpu: 0.0.40
codegen_flags: <defaults>
</compile_context>

<pallas_src>
import jax
import jax.numpy as jnp
from jax.experimental import pallas as pl
from jax.experimental.pallas import tpu as pltpu


# --------------------------- in-kernel building blocks ----------------------------

def _mm_last(x, w):
    """x: [..., K] @ w: [K, N] -> [..., N] via one flat MXU matmul (leading dims merged)."""
    lead = x.shape[:-1]
    y = jnp.dot(x.reshape((-1, x.shape[-1])), w, preferred_element_type=jnp.float32)
    return y.reshape(lead + (w.shape[1],))


def _temporal_glu(x, w_big, b_conv, b_align):
    """Causal temporal conv (kernel (Kt,1), 2c channels) + GLU with aligned residual.

    x: [T, V, Cin].  w_big: [Cin, Kt*2c + c] = [tap_0 | ... | tap_{Kt-1} | align], so the
    Kt taps and the residual-align projection come out of ONE lane-dense matmul; the
    temporal unfold is done with shifted-slice adds (VPU) on the matmul result.
    Returns [T-Kt+1, V, c].
    """
    c = b_align.shape[-1]
    kt = (w_big.shape[-1] - c) // (2 * c)
    t_out = x.shape[0] - kt + 1
    y = _mm_last(x, w_big)                                     # [T, V, Kt*2c + c]
    pq = y[0:t_out, :, 0:2 * c]
    for k in range(1, kt):
        pq = pq + y[k:k + t_out, :, 2 * c * k:2 * c * (k + 1)]
    pq = pq + b_conv
    res = y[kt - 1:, :, kt * 2 * c:] + b_align                 # aligned residual [t_out,V,c]
    p = pq[..., :c] + res
    q = pq[..., c:]
    return p * jax.nn.sigmoid(q)


def _graph_conv_res_relu(h, gso, gw, gib, gcbf):
    """'graph_conv' layer + residual + ReLU.  h: [T, V, c0].

    gw = [agw | agw @ gcw] (align and graph weights fused: one matmul, N = 2*c1).
    gib = align bias [1, c1].  gcbf = precomputed total bias [V, c1] (graph bias plus the
    GSO-folded align-bias term).  The GSO contraction is ONE [V,V] @ [V, T*c1] matmul.
    """
    c1 = gib.shape[-1]
    y = _mm_last(h, gw)                                        # [T, V, 2*c1]
    g_in = y[..., :c1] + gib                                   # align(h)
    z = y[..., c1:]                                            # align(h) @ gcw (bias folded)
    t, v, _ = z.shape
    z2 = jnp.transpose(z, (1, 0, 2)).reshape(v, t * c1)        # [V, T*c1] (lane-dense N)
    gz = jnp.dot(gso, z2, preferred_element_type=jnp.float32)  # single GSO matmul
    gc = jnp.transpose(gz.reshape(v, t, c1), (1, 0, 2)) + gcbf[None]
    return jnp.maximum(gc + g_in, 0.0)                         # residual + STConvBlock ReLU


def _layer_norm_vc(x, gamma, beta, eps=1e-12):
    """LayerNorm over the last two axes (n_vertex, channels).

    eps=1e-12 matches the STGCN reference nn.LayerNorm(..., eps=1e-12)."""
    d = x.shape[-1] * x.shape[-2]
    mu = jnp.sum(jnp.sum(x, axis=-1, keepdims=True), axis=-2, keepdims=True) / d
    xc = x - mu
    var = jnp.sum(jnp.sum(xc * xc, axis=-1, keepdims=True), axis=-2, keepdims=True) / d
    return xc * jax.lax.rsqrt(var + eps) * gamma + beta


# ------------------------------ fused network kernel ------------------------------

_ST_KEYS = ("gso", "tw1", "tb1", "ta1b", "gw", "gib", "gcbf",
            "tw2", "tb2", "ta2b", "lng", "lnb")
_OUT_KEYS = ("tw", "tb", "tab", "lng", "lnb", "f1w", "f1b", "f2w", "f2b")
_ST_NW = len(_ST_KEYS)
_OUT_NW = len(_OUT_KEYS)


def _make_network_kernel(n_st, has_out):
    """Build a kernel that runs the ENTIRE network for one batch element in VMEM."""
    def kernel(x_ref, *refs):
        o_ref = refs[-1]
        wrefs = refs[:-1]
        h = x_ref[...]                                         # [T, V, Cin] (batch squeezed)
        i = 0
        for _ in range(n_st):
            (gso, tw1, tb1, ta1b, gw, gib, gcbf,
             tw2, tb2, ta2b, lng, lnb) = (r[...] for r in wrefs[i:i + _ST_NW])
            i += _ST_NW
            h = _temporal_glu(h, tw1, tb1, ta1b)               # temporal GLU conv #1
            h = _graph_conv_res_relu(h, gso, gw, gib, gcbf)    # graph conv + residual + ReLU
            h = _temporal_glu(h, tw2, tb2, ta2b)               # temporal GLU conv #2
            h = _layer_norm_vc(h, lng, lnb)                    # LayerNorm([V, c2])
            # TODO(synk): nn.Dropout is identity in eval mode; training-mode dropout not modeled.
        if has_out:
            tw, tb, tab, lng, lnb, f1w, f1b, f2w, f2b = (r[...] for r in wrefs[i:i + _OUT_NW])
            h = _temporal_glu(h, tw, tb, tab)                  # OutputBlock temporal GLU conv
            h = _layer_norm_vc(h, lng, lnb)
            h = jnp.maximum(_mm_last(h, f1w) + f1b, 0.0)       # fc1 + ReLU
            h = _mm_last(h, f2w) + f2b                         # fc2
        o_ref[...] = h.reshape(h.shape[0], -1)                 # lane-dense [T_out, V*end] store
    return kernel


def _full_spec(shape):
    nd = len(shape)
    return pl.BlockSpec(shape, lambda i, _nd=nd: (0,) * _nd)


# ------------------------------------ forward -------------------------------------

def stgcn_graph_conv_forward(x, prep, task_type="measurement_forecast"):
    # x: [B, C, T, V] (NCHW, matching the PyTorch module)
    h = jnp.transpose(x, (0, 2, 3, 1))                         # NCHW -> [B,T,V,C], once at entry
    B, T, V, C = h.shape
    n_st = len(prep["st"])
    has_out = prep["out"] is not None

    # Flatten weights in kernel order; derive static T_out / C_out from weight shapes.
    weights = []
    t_final = T
    c_final = C
    for bp in prep["st"]:
        weights += [bp[k] for k in _ST_KEYS]
        c0 = bp["ta1b"].shape[1]
        kt1 = (bp["tw1"].shape[1] - c0) // (2 * c0)
        c2 = bp["ta2b"].shape[1]
        kt2 = (bp["tw2"].shape[1] - c2) // (2 * c2)
        t_final -= (kt1 - 1) + (kt2 - 1)
        c_final = bp["lnb"].shape[1]
    if has_out:
        op = prep["out"]
        weights += [op[k] for k in _OUT_KEYS]
        c0 = op["tab"].shape[1]
        ko = (op["tw"].shape[1] - c0) // (2 * c0)
        t_final -= ko - 1
        c_final = op["f2b"].shape[1]

    flat = V * c_final
    out = pl.pallas_call(
        _make_network_kernel(n_st, has_out),
        grid=(B,),                                             # batch-parallel (2 TCs on v7x)
        in_specs=[pl.BlockSpec((pl.Squeezed(), T, V, C), lambda i: (i, 0, 0, 0))]
                 + [_full_spec(w.shape) for w in weights],
        out_specs=pl.BlockSpec((pl.Squeezed(), t_final, flat), lambda i: (i, 0, 0)),
        out_shape=jax.ShapeDtypeStruct((B, t_final, flat), jnp.float32),
        compiler_params=pltpu.CompilerParams(dimension_semantics=("parallel",)),
    )(h, *weights)

    y = jnp.transpose(out.reshape(B, t_final, V, c_final), (0, 3, 1, 2))  # back to NCHW, once
    if task_type == "measurement_forecast":
        return jnp.squeeze(y, axis=2)
    # TODO(synk): Ko == 0 head and classification/consumption task heads not exercised here.
    raise ValueError(f"Unknown task_type: {task_type}")


# --------------------- one-time parameter preprocessing (hoisted) ------------------

def _align_mats(ap, c_in, c_out):
    """Align layer as a single [c_in, c_out] matmul:
    learned 1x1 conv (c_in>c_out), zero channel-pad (c_in<c_out), identity (equal)."""
    if c_in > c_out:
        return (jnp.transpose(ap["w"][:, :, 0, 0]).astype(jnp.float32),
                ap["b"].reshape(1, c_out).astype(jnp.float32))
    return jnp.eye(c_in, c_out, dtype=jnp.float32), jnp.zeros((1, c_out), jnp.float32)


def _fused_temporal_mats(conv_w, conv_b, align_w):
    """Torch conv weight [2c, c_in, K, 1] + align matrix [c_in, c] -> one wide matrix
    [c_in, K*2c + c] (= [tap_0 | ... | tap_{K-1} | align]) plus conv bias [1, 2c]."""
    taps = jnp.transpose(conv_w[:, :, :, 0], (2, 1, 0)).astype(jnp.float32)  # [K, c_in, 2c]
    k = taps.shape[0]
    w_big = jnp.concatenate([taps[i] for i in range(k)] + [align_w], axis=1)
    return w_big, conv_b.reshape(1, conv_b.shape[0]).astype(jnp.float32)


def prepare_params(params, gso_list, blocks):
    prep_st = []
    c_last = blocks[0][0]
    for l in range(len(blocks) - 3):
        p = params["st"][l]
        c0, c1, c2 = blocks[l + 1]
        gso = gso_list[l].astype(jnp.float32)

        a1w, a1b = _align_mats(p["tc1_align"], c_last, c0)
        tw1, tb1 = _fused_temporal_mats(p["tc1_w"], p["tc1_b"], a1w)

        agw, agb = _align_mats(p["gc_align"], c0, c1)
        gcw = p["gc_w"].astype(jnp.float32)
        gw = jnp.concatenate([agw, agw @ gcw], axis=1)         # [c0, 2*c1]: align | align@gcw
        zb = agb @ gcw                                         # align bias pushed through gcw
        deg = jnp.sum(gso, axis=1, keepdims=True)              # [V, 1] GSO row sums
        gcbf = deg @ zb + p["gc_b"].reshape(1, c1)             # [V, c1] total folded bias

        a2w, a2b = _align_mats(p["tc2_align"], c1, c2)
        tw2, tb2 = _fused_temporal_mats(p["tc2_w"], p["tc2_b"], a2w)

        prep_st.append(dict(gso=gso, tw1=tw1, tb1=tb1, ta1b=a1b,
                            gw=gw, gib=agb, gcbf=gcbf,
                            tw2=tw2, tb2=tb2, ta2b=a2b,
                            lng=p["ln_g"], lnb=p["ln_b"]))
        c_last = c2

    prep_out = None
    if params.get("out") is not None:
        op = params["out"]
        c0, c1 = blocks[-2]
        end = blocks[-1][0]
        aw, ab = _align_mats(op["tc_align"], c_last, c0)
        tw, tb = _fused_temporal_mats(op["tc_w"], op["tc_b"], aw)
        prep_out = dict(tw=tw, tb=tb, tab=ab, lng=op["ln_g"], lnb=op["ln_b"],
                        f1w=jnp.transpose(op["fc1_w"]), f1b=op["fc1_b"].reshape(1, c1),
                        f2w=jnp.transpose(op["fc2_w"]), f2b=op["fc2_b"].reshape(1, end))
    return {"st": prep_st, "out": prep_out}


# ------------------------------- parameter init ------------------------------------

def _nrm(key, shape, scale=0.1):
    return scale * jax.random.normal(key, shape, jnp.float32)


def _init_align(key, c_in, c_out):
    if c_in > c_out:
        k1, k2 = jax.random.split(key)
        return {"w": _nrm(k1, (c_out, c_in, 1, 1)), "b": _nrm(k2, (c_out,), 0.01)}
    return None


def _init_st_block(key, kt, c_last, channels, n_vertex):
    ks = jax.random.split(key, 9)
    c0, c1, c2 = channels
    return {
        "tc1_align": _init_align(ks[0], c_last, c0),
        "tc1_w": _nrm(ks[1], (2 * c0, c_last, kt, 1)),
        "tc1_b": _nrm(ks[2], (2 * c0,), 0.01),
        "gc_align": _init_align(ks[3], c0, c1),
        "gc_w": _nrm(ks[4], (c1, c1)),
        "gc_b": _nrm(ks[5], (c1,), 0.01),
        "tc2_align": _init_align(ks[6], c1, c2),
        "tc2_w": _nrm(ks[7], (2 * c2, c1, kt, 1)),
        "tc2_b": _nrm(ks[8], (2 * c2,), 0.01),
        "ln_g": jnp.ones((n_vertex, c2), jnp.float32),   # LayerNorm([n_vertex, c2]) affine
        "ln_b": jnp.zeros((n_vertex, c2), jnp.float32),
    }


def _init_output_block(key, ko, c_last, channels, end_channel, n_vertex):
    ks = jax.random.split(key, 7)
    c0, c1 = channels
    return {
        "tc_align": _init_align(ks[0], c_last, c0),
        "tc_w": _nrm(ks[1], (2 * c0, c_last, ko, 1)),
        "tc_b": _nrm(ks[2], (2 * c0,), 0.01),
        "ln_g": jnp.ones((n_vertex, c0), jnp.float32),
        "ln_b": jnp.zeros((n_vertex, c0), jnp.float32),
        "fc1_w": _nrm(ks[3], (c1, c0)),
        "fc1_b": _nrm(ks[4], (c1,), 0.01),
        "fc2_w": _nrm(ks[5], (end_channel, c1)),
        "fc2_b": _nrm(ks[6], (end_channel,), 0.01),
    }


# --------------------------------------- main ---------------------------------------

if __name__ == "__main__":
    # args: Kt=3, Ks=3, n_his=12, act_func='glu', graph_conv_type='graph_conv'
    B, V, n_his, Kt = 2, 16, 12, 3
    blocks = [[4], [16, 8, 16], [16, 8, 16], [16, 8], [2]]
    n_st = len(blocks) - 3
    Ko = n_his - n_st * 2 * (Kt - 1)          # = 4 > 1  -> OutputBlock path

    key = jax.random.PRNGKey(0)
    k_gso, k_x, k_params = jax.random.split(key, 3)

    # Normalized adjacency (graph shift operator), deterministic.
    A = jax.random.uniform(k_gso, (V, V), jnp.float32)
    A = 0.5 * (A + A.T) * (1.0 - jnp.eye(V, dtype=jnp.float32))
    A_hat = A + jnp.eye(V, dtype=jnp.float32)
    d_inv_sqrt = 1.0 / jnp.sqrt(jnp.sum(A_hat, axis=1))
    gso = A_hat * d_inv_sqrt[:, None] * d_inv_sqrt[None, :]
    gso_list = [gso] * n_st

    ks = jax.random.split(k_params, n_st + 1)
    params = {
        "st": [_init_st_block(ks[l], Kt, blocks[l][-1], blocks[l + 1], V)
               for l in range(n_st)],
        "out": _init_output_block(ks[n_st], Ko, blocks[-3][-1], blocks[-2],
                                  blocks[-1][0], V),
    }

    # One-time weight-layout preprocessing / fusion (outside the jitted forward).
    prep = prepare_params(params, gso_list, blocks)

    # Input: [batch, features, time_steps, n_vertex]
    x = jax.random.normal(k_x, (B, blocks[0][0], n_his, V), jnp.float32)

    fwd = jax.jit(stgcn_graph_conv_forward, static_argnames=("task_type",))
    y = fwd(x, prep, task_type="measurement_forecast")
    y = jax.block_until_ready(y)
    assert y.shape == (B, blocks[-1][0], V), y.shape
    assert bool(jnp.all(jnp.isfinite(y)))
    print("KERNEL_OK")
</pallas_src>

<mosaic_0001>
module attributes {stable_mosaic.version = 11 : i64} {
  func.func @kernel(%arg0: i32, %arg1: memref<1x12x16x4xf32, #tpu.memory_space<vmem>>, %arg2: memref<16x16xf32, #tpu.memory_space<vmem>>, %arg3: memref<4x112xf32, #tpu.memory_space<vmem>>, %arg4: memref<1x32xf32, #tpu.memory_space<vmem>>, %arg5: memref<1x16xf32, #tpu.memory_space<vmem>>, %arg6: memref<16x16xf32, #tpu.memory_space<vmem>>, %arg7: memref<1x8xf32, #tpu.memory_space<vmem>>, %arg8: memref<16x8xf32, #tpu.memory_space<vmem>>, %arg9: memref<8x112xf32, #tpu.memory_space<vmem>>, %arg10: memref<1x32xf32, #tpu.memory_space<vmem>>, %arg11: memref<1x16xf32, #tpu.memory_space<vmem>>, %arg12: memref<16x16xf32, #tpu.memory_space<vmem>>, %arg13: memref<16x16xf32, #tpu.memory_space<vmem>>, %arg14: memref<16x16xf32, #tpu.memory_space<vmem>>, %arg15: memref<16x112xf32, #tpu.memory_space<vmem>>, %arg16: memref<1x32xf32, #tpu.memory_space<vmem>>, %arg17: memref<1x16xf32, #tpu.memory_space<vmem>>, %arg18: memref<16x16xf32, #tpu.memory_space<vmem>>, %arg19: memref<1x8xf32, #tpu.memory_space<vmem>>, %arg20: memref<16x8xf32, #tpu.memory_space<vmem>>, %arg21: memref<8x112xf32, #tpu.memory_space<vmem>>, %arg22: memref<1x32xf32, #tpu.memory_space<vmem>>, %arg23: memref<1x16xf32, #tpu.memory_space<vmem>>, %arg24: memref<16x16xf32, #tpu.memory_space<vmem>>, %arg25: memref<16x16xf32, #tpu.memory_space<vmem>>, %arg26: memref<16x144xf32, #tpu.memory_space<vmem>>, %arg27: memref<1x32xf32, #tpu.memory_space<vmem>>, %arg28: memref<1x16xf32, #tpu.memory_space<vmem>>, %arg29: memref<16x16xf32, #tpu.memory_space<vmem>>, %arg30: memref<16x16xf32, #tpu.memory_space<vmem>>, %arg31: memref<16x8xf32, #tpu.memory_space<vmem>>, %arg32: memref<1x8xf32, #tpu.memory_space<vmem>>, %arg33: memref<8x2xf32, #tpu.memory_space<vmem>>, %arg34: memref<1x2xf32, #tpu.memory_space<vmem>>, %arg35: memref<1x1x32xf32, #tpu.memory_space<vmem>>) attributes {dimension_semantics = [#tpu.dimension_semantics<parallel>], iteration_bounds = array<i64: 2>, scalar_prefetch = 0 : i64, scratch_operands = 0 : i64, tpu.core_type = #tpu.core_type<tc>, window_params = [{transform_indices = @transform_0, window_bounds = array<i64: 1, 12, 16, 4>}, {pipeline_mode = #tpu.pipeline_mode<synchronous>, transform_indices = @transform_1, window_bounds = array<i64: 16, 16>}, {pipeline_mode = #tpu.pipeline_mode<synchronous>, transform_indices = @transform_2, window_bounds = array<i64: 4, 112>}, {pipeline_mode = #tpu.pipeline_mode<synchronous>, transform_indices = @transform_3, window_bounds = array<i64: 1, 32>}, {pipeline_mode = #tpu.pipeline_mode<synchronous>, transform_indices = @transform_4, window_bounds = array<i64: 1, 16>}, {pipeline_mode = #tpu.pipeline_mode<synchronous>, transform_indices = @transform_5, window_bounds = array<i64: 16, 16>}, {pipeline_mode = #tpu.pipeline_mode<synchronous>, transform_indices = @transform_6, window_bounds = array<i64: 1, 8>}, {pipeline_mode = #tpu.pipeline_mode<synchronous>, transform_indices = @transform_7, window_bounds = array<i64: 16, 8>}, {pipeline_mode = #tpu.pipeline_mode<synchronous>, transform_indices = @transform_8, window_bounds = array<i64: 8, 112>}, {pipeline_mode = #tpu.pipeline_mode<synchronous>, transform_indices = @transform_9, window_bounds = array<i64: 1, 32>}, {pipeline_mode = #tpu.pipeline_mode<synchronous>, transform_indices = @transform_10, window_bounds = array<i64: 1, 16>}, {pipeline_mode = #tpu.pipeline_mode<synchronous>, transform_indices = @transform_11, window_bounds = array<i64: 16, 16>}, {pipeline_mode = #tpu.pipeline_mode<synchronous>, transform_indices = @transform_12, window_bounds = array<i64: 16, 16>}, {pipeline_mode = #tpu.pipeline_mode<synchronous>, transform_indices = @transform_13, window_bounds = array<i64: 16, 16>}, {pipeline_mode = #tpu.pipeline_mode<synchronous>, transform_indices = @transform_14, window_bounds = array<i64: 16, 112>}, {pipeline_mode = #tpu.pipeline_mode<synchronous>, transform_indices = @transform_15, window_bounds = array<i64: 1, 32>}, {pipeline_mode = #tpu.pipeline_mode<synchronous>, transform_indices = @transform_16, window_bounds = array<i64: 1, 16>}, {pipeline_mode = #tpu.pipeline_mode<synchronous>, transform_indices = @transform_17, window_bounds = array<i64: 16, 16>}, {pipeline_mode = #tpu.pipeline_mode<synchronous>, transform_indices = @transform_18, window_bounds = array<i64: 1, 8>}, {pipeline_mode = #tpu.pipeline_mode<synchronous>, transform_indices = @transform_19, window_bounds = array<i64: 16, 8>}, {pipeline_mode = #tpu.pipeline_mode<synchronous>, transform_indices = @transform_20, window_bounds = array<i64: 8, 112>}, {pipeline_mode = #tpu.pipeline_mode<synchronous>, transform_indices = @transform_21, window_bounds = array<i64: 1, 32>}, {pipeline_mode = #tpu.pipeline_mode<synchronous>, transform_indices = @transform_22, window_bounds = array<i64: 1, 16>}, {pipeline_mode = #tpu.pipeline_mode<synchronous>, transform_indices = @transform_23, window_bounds = array<i64: 16, 16>}, {pipeline_mode = #tpu.pipeline_mode<synchronous>, transform_indices = @transform_24, window_bounds = array<i64: 16, 16>}, {pipeline_mode = #tpu.pipeline_mode<synchronous>, transform_indices = @transform_25, window_bounds = array<i64: 16, 144>}, {pipeline_mode = #tpu.pipeline_mode<synchronous>, transform_indices = @transform_26, window_bounds = array<i64: 1, 32>}, {pipeline_mode = #tpu.pipeline_mode<synchronous>, transform_indices = @transform_27, window_bounds = array<i64: 1, 16>}, {pipeline_mode = #tpu.pipeline_mode<synchronous>, transform_indices = @transform_28, window_bounds = array<i64: 16, 16>}, {pipeline_mode = #tpu.pipeline_mode<synchronous>, transform_indices = @transform_29, window_bounds = array<i64: 16, 16>}, {pipeline_mode = #tpu.pipeline_mode<synchronous>, transform_indices = @transform_30, window_bounds = array<i64: 16, 8>}, {pipeline_mode = #tpu.pipeline_mode<synchronous>, transform_indices = @transform_31, window_bounds = array<i64: 1, 8>}, {pipeline_mode = #tpu.pipeline_mode<synchronous>, transform_indices = @transform_32, window_bounds = array<i64: 8, 2>}, {pipeline_mode = #tpu.pipeline_mode<synchronous>, transform_indices = @transform_33, window_bounds = array<i64: 1, 2>}, {transform_indices = @transform_34, window_bounds = array<i64: 1, 1, 32>}]} {
    %c0 = arith.constant 0 : index
    %c0_0 = arith.constant 0 : index
    %c0_1 = arith.constant 0 : index
    %c0_2 = arith.constant 0 : index
    %0 = vector.load %arg1[%c0, %c0_0, %c0_1, %c0_2] : memref<1x12x16x4xf32, #tpu.memory_space<vmem>>, vector<1x12x16x4xf32>
    %1 = vector.shape_cast %0 : vector<1x12x16x4xf32> to vector<12x16x4xf32>
    %c0_3 = arith.constant 0 : index
    %c0_4 = arith.constant 0 : index
    %2 = vector.load %arg2[%c0_3, %c0_4] : memref<16x16xf32, #tpu.memory_space<vmem>>, vector<16x16xf32>
    %c0_5 = arith.constant 0 : index
    %c0_6 = arith.constant 0 : index
    %3 = vector.load %arg3[%c0_5, %c0_6] : memref<4x112xf32, #tpu.memory_space<vmem>>, vector<4x112xf32>
    %c0_7 = arith.constant 0 : index
    %c0_8 = arith.constant 0 : index
    %4 = vector.load %arg4[%c0_7, %c0_8] : memref<1x32xf32, #tpu.memory_space<vmem>>, vector<1x32xf32>
    %c0_9 = arith.constant 0 : index
    %c0_10 = arith.constant 0 : index
    %5 = vector.load %arg5[%c0_9, %c0_10] : memref<1x16xf32, #tpu.memory_space<vmem>>, vector<1x16xf32>
    %c0_11 = arith.constant 0 : index
    %c0_12 = arith.constant 0 : index
    %6 = vector.load %arg6[%c0_11, %c0_12] : memref<16x16xf32, #tpu.memory_space<vmem>>, vector<16x16xf32>
    %c0_13 = arith.constant 0 : index
    %c0_14 = arith.constant 0 : index
    %7 = vector.load %arg7[%c0_13, %c0_14] : memref<1x8xf32, #tpu.memory_space<vmem>>, vector<1x8xf32>
    %c0_15 = arith.constant 0 : index
    %c0_16 = arith.constant 0 : index
    %8 = vector.load %arg8[%c0_15, %c0_16] : memref<16x8xf32, #tpu.memory_space<vmem>>, vector<16x8xf32>
    %c0_17 = arith.constant 0 : index
    %c0_18 = arith.constant 0 : index
    %9 = vector.load %arg9[%c0_17, %c0_18] : memref<8x112xf32, #tpu.memory_space<vmem>>, vector<8x112xf32>
    %c0_19 = arith.constant 0 : index
    %c0_20 = arith.constant 0 : index
    %10 = vector.load %arg10[%c0_19, %c0_20] : memref<1x32xf32, #tpu.memory_space<vmem>>, vector<1x32xf32>
    %c0_21 = arith.constant 0 : index
    %c0_22 = arith.constant 0 : index
    %11 = vector.load %arg11[%c0_21, %c0_22] : memref<1x16xf32, #tpu.memory_space<vmem>>, vector<1x16xf32>
    %c0_23 = arith.constant 0 : index
    %c0_24 = arith.constant 0 : index
    %12 = vector.load %arg12[%c0_23, %c0_24] : memref<16x16xf32, #tpu.memory_space<vmem>>, vector<16x16xf32>
    %c0_25 = arith.constant 0 : index
    %c0_26 = arith.constant 0 : index
    %13 = vector.load %arg13[%c0_25, %c0_26] : memref<16x16xf32, #tpu.memory_space<vmem>>, vector<16x16xf32>
    %14 = vector.shape_cast %1 : vector<12x16x4xf32> to vector<192x4xf32>
    %cst = arith.constant dense<0.000000e+00> : vector<192x112xf32>
    %15 = tpu.matmul %14, %3, %cst {dimension_numbers = #tpu.dot_dimension_numbers<[1], [0], [0], [1], [0, 0, 1, 1], [], []>} : vector<192x4xf32>, vector<4x112xf32>, vector<192x112xf32> -> vector<192x112xf32>
    %16 = vector.shape_cast %15 : vector<192x112xf32> to vector<12x16x112xf32>
    %17 = vector.extract_strided_slice %16 {offsets = [0, 0, 0], sizes = [10, 16, 32], strides = [1, 1, 1]} : vector<12x16x112xf32> to vector<10x16x32xf32>
    %18 = vector.extract_strided_slice %16 {offsets = [1, 0, 32], sizes = [10, 16, 32], strides = [1, 1, 1]} : vector<12x16x112xf32> to vector<10x16x32xf32>
    %19 = arith.addf %17, %18 : vector<10x16x32xf32>
    %20 = vector.extract_strided_slice %16 {offsets = [2, 0, 64], sizes = [10, 16, 32], strides = [1, 1, 1]} : vector<12x16x112xf32> to vector<10x16x32xf32>
    %21 = arith.addf %19, %20 : vector<10x16x32xf32>
    %22 = vector.shape_cast %4 : vector<1x32xf32> to vector<1x1x32xf32>
    %23 = vector.broadcast %22 : vector<1x1x32xf32> to vector<10x16x32xf32>
    %24 = arith.addf %21, %23 : vector<10x16x32xf32>
    %25 = vector.extract_strided_slice %16 {offsets = [2, 0, 96], sizes = [10, 16, 16], strides = [1, 1, 1]} : vector<12x16x112xf32> to vector<10x16x16xf32>
    %26 = vector.shape_cast %5 : vector<1x16xf32> to vector<1x1x16xf32>
    %27 = vector.broadcast %26 : vector<1x1x16xf32> to vector<10x16x16xf32>
    %28 = arith.addf %25, %27 : vector<10x16x16xf32>
    %29 = vector.extract_strided_slice %24 {offsets = [0, 0, 0], sizes = [10, 16, 16], strides = [1, 1, 1]} : vector<10x16x32xf32> to vector<10x16x16xf32>
    %30 = arith.addf %29, %28 : vector<10x16x16xf32>
    %31 = vector.extract_strided_slice %24 {offsets = [0, 0, 16], sizes = [10, 16, 16], strides = [1, 1, 1]} : vector<10x16x32xf32> to vector<10x16x16xf32>
    %32 = arith.negf %31 : vector<10x16x16xf32>
    %33 = math.exp %32 : vector<10x16x16xf32>
    %cst_27 = arith.constant 1.000000e+00 : f32
    %34 = vector.broadcast %cst_27 : f32 to vector<10x16x16xf32>
    %35 = arith.addf %34, %33 : vector<10x16x16xf32>
    %36 = arith.divf %34, %35 : vector<10x16x16xf32>
    %37 = arith.mulf %30, %36 : vector<10x16x16xf32>
    %38 = vector.shape_cast %37 : vector<10x16x16xf32> to vector<160x16xf32>
    %cst_28 = arith.constant dense<0.000000e+00> : vector<160x16xf32>
    %39 = tpu.matmul %38, %6, %cst_28 {dimension_numbers = #tpu.dot_dimension_numbers<[1], [0], [0], [1], [0, 0, 1, 1], [], []>} : vector<160x16xf32>, vector<16x16xf32>, vector<160x16xf32> -> vector<160x16xf32>
    %40 = vector.shape_cast %39 : vector<160x16xf32> to vector<10x16x16xf32>
    %41 = vector.extract_strided_slice %40 {offsets = [0, 0, 0], sizes = [10, 16, 8], strides = [1, 1, 1]} : vector<10x16x16xf32> to vector<10x16x8xf32>
    %42 = vector.shape_cast %7 : vector<1x8xf32> to vector<1x1x8xf32>
    %43 = vector.broadcast %42 : vector<1x1x8xf32> to vector<10x16x8xf32>
    %44 = arith.addf %41, %43 : vector<10x16x8xf32>
    %45 = vector.extract_strided_slice %40 {offsets = [0, 0, 8], sizes = [10, 16, 8], strides = [1, 1, 1]} : vector<10x16x16xf32> to vector<10x16x8xf32>
    %46 = tpu.transpose %45, [1, 0, 2] : vector<10x16x8xf32> -> vector<16x10x8xf32>
    %47 = vector.shape_cast %46 : vector<16x10x8xf32> to vector<16x80xf32>
    %cst_29 = arith.constant dense<0.000000e+00> : vector<16x80xf32>
    %48 = tpu.matmul %2, %47, %cst_29 {dimension_numbers = #tpu.dot_dimension_numbers<[1], [0], [0], [1], [0, 0, 1, 1], [], []>} : vector<16x16xf32>, vector<16x80xf32>, vector<16x80xf32> -> vector<16x80xf32>
    %49 = vector.shape_cast %48 : vector<16x80xf32> to vector<16x10x8xf32>
    %50 = tpu.transpose %49, [1, 0, 2] : vector<16x10x8xf32> -> vector<10x16x8xf32>
    %51 = vector.shape_cast %8 : vector<16x8xf32> to vector<1x16x8xf32>
    %52 = vector.broadcast %51 : vector<1x16x8xf32> to vector<10x16x8xf32>
    %53 = arith.addf %50, %52 : vector<10x16x8xf32>
    %54 = arith.addf %53, %44 : vector<10x16x8xf32>
    %cst_30 = arith.constant 0.000000e+00 : f32
    %55 = vector.broadcast %cst_30 : f32 to vector<10x16x8xf32>
    %56 = arith.maximumf %54, %55 : vector<10x16x8xf32>
    %57 = vector.shape_cast %56 : vector<10x16x8xf32> to vector<160x8xf32>
    %cst_31 = arith.constant dense<0.000000e+00> : vector<160x112xf32>
    %58 = tpu.matmul %57, %9, %cst_31 {dimension_numbers = #tpu.dot_dimension_numbers<[1], [0], [0], [1], [0, 0, 1, 1], [], []>} : vector<160x8xf32>, vector<8x112xf32>, vector<160x112xf32> -> vector<160x112xf32>
    %59 = vector.shape_cast %58 : vector<160x112xf32> to vector<10x16x112xf32>
    %60 = vector.extract_strided_slice %59 {offsets = [0, 0, 0], sizes = [8, 16, 32], strides = [1, 1, 1]} : vector<10x16x112xf32> to vector<8x16x32xf32>
    %61 = vector.extract_strided_slice %59 {offsets = [1, 0, 32], sizes = [8, 16, 32], strides = [1, 1, 1]} : vector<10x16x112xf32> to vector<8x16x32xf32>
    %62 = arith.addf %60, %61 : vector<8x16x32xf32>
    %63 = vector.extract_strided_slice %59 {offsets = [2, 0, 64], sizes = [8, 16, 32], strides = [1, 1, 1]} : vector<10x16x112xf32> to vector<8x16x32xf32>
    %64 = arith.addf %62, %63 : vector<8x16x32xf32>
    %65 = vector.shape_cast %10 : vector<1x32xf32> to vector<1x1x32xf32>
    %66 = vector.broadcast %65 : vector<1x1x32xf32> to vector<8x16x32xf32>
    %67 = arith.addf %64, %66 : vector<8x16x32xf32>
    %68 = vector.extract_strided_slice %59 {offsets = [2, 0, 96], sizes = [8, 16, 16], strides = [1, 1, 1]} : vector<10x16x112xf32> to vector<8x16x16xf32>
    %69 = vector.shape_cast %11 : vector<1x16xf32> to vector<1x1x16xf32>
    %70 = vector.broadcast %69 : vector<1x1x16xf32> to vector<8x16x16xf32>
    %71 = arith.addf %68, %70 : vector<8x16x16xf32>
    %72 = vector.extract_strided_slice %67 {offsets = [0, 0, 0], sizes = [8, 16, 16], strides = [1, 1, 1]} : vector<8x16x32xf32> to vector<8x16x16xf32>
    %73 = arith.addf %72, %71 : vector<8x16x16xf32>
    %74 = vector.extract_strided_slice %67 {offsets = [0, 0, 16], sizes = [8, 16, 16], strides = [1, 1, 1]} : vector<8x16x32xf32> to vector<8x16x16xf32>
    %75 = arith.negf %74 : vector<8x16x16xf32>
    %76 = math.exp %75 : vector<8x16x16xf32>
    %cst_32 = arith.constant 1.000000e+00 : f32
    %77 = vector.broadcast %cst_32 : f32 to vector<8x16x16xf32>
    %78 = arith.addf %77, %76 : vector<8x16x16xf32>
    %79 = arith.divf %77, %78 : vector<8x16x16xf32>
    %80 = arith.mulf %73, %79 : vector<8x16x16xf32>
    %cst_33 = arith.constant dense<0.000000e+00> : vector<8x16xf32>
    %81 = vector.multi_reduction <add>, %80, %cst_33 [2] : vector<8x16x16xf32> to vector<8x16xf32>
    %82 = vector.shape_cast %81 : vector<8x16xf32> to vector<8x16x1xf32>
    %cst_34 = arith.constant dense<0.000000e+00> : vector<8x1xf32>
    %83 = vector.multi_reduction <add>, %82, %cst_34 [1] : vector<8x16x1xf32> to vector<8x1xf32>
    %84 = vector.shape_cast %83 : vector<8x1xf32> to vector<8x1x1xf32>
    %cst_35 = arith.constant 2.560000e+02 : f32
    %85 = vector.broadcast %cst_35 : f32 to vector<8x1x1xf32>
    %86 = arith.divf %84, %85 : vector<8x1x1xf32>
    %87 = vector.broadcast %86 : vector<8x1x1xf32> to vector<8x16x16xf32>
    %88 = arith.subf %80, %87 : vector<8x16x16xf32>
    %89 = arith.mulf %88, %88 : vector<8x16x16xf32>
    %cst_36 = arith.constant dense<0.000000e+00> : vector<8x16xf32>
    %90 = vector.multi_reduction <add>, %89, %cst_36 [2] : vector<8x16x16xf32> to vector<8x16xf32>
    %91 = vector.shape_cast %90 : vector<8x16xf32> to vector<8x16x1xf32>
    %cst_37 = arith.constant dense<0.000000e+00> : vector<8x1xf32>
    %92 = vector.multi_reduction <add>, %91, %cst_37 [1] : vector<8x16x1xf32> to vector<8x1xf32>
    %93 = vector.shape_cast %92 : vector<8x1xf32> to vector<8x1x1xf32>
    %cst_38 = arith.constant 2.560000e+02 : f32
    %94 = vector.broadcast %cst_38 : f32 to vector<8x1x1xf32>
    %95 = arith.divf %93, %94 : vector<8x1x1xf32>
    %cst_39 = arith.constant 9.99999996E-13 : f32
    %96 = vector.broadcast %cst_39 : f32 to vector<8x1x1xf32>
    %97 = arith.addf %95, %96 : vector<8x1x1xf32>
    %98 = math.rsqrt %97 : vector<8x1x1xf32>
    %99 = vector.broadcast %98 : vector<8x1x1xf32> to vector<8x16x16xf32>
    %100 = arith.mulf %88, %99 : vector<8x16x16xf32>
    %101 = vector.shape_cast %12 : vector<16x16xf32> to vector<1x16x16xf32>
    %102 = vector.broadcast %101 : vector<1x16x16xf32> to vector<8x16x16xf32>
    %103 = arith.mulf %100, %102 : vector<8x16x16xf32>
    %104 = vector.shape_cast %13 : vector<16x16xf32> to vector<1x16x16xf32>
    %105 = vector.broadcast %104 : vector<1x16x16xf32> to vector<8x16x16xf32>
    %106 = arith.addf %103, %105 : vector<8x16x16xf32>
    %c0_40 = arith.constant 0 : index
    %c0_41 = arith.constant 0 : index
    %107 = vector.load %arg14[%c0_40, %c0_41] : memref<16x16xf32, #tpu.memory_space<vmem>>, vector<16x16xf32>
    %c0_42 = arith.constant 0 : index
    %c0_43 = arith.constant 0 : index
    %108 = vector.load %arg15[%c0_42, %c0_43] : memref<16x112xf32, #tpu.memory_space<vmem>>, vector<16x112xf32>
    %c0_44 = arith.constant 0 : index
    %c0_45 = arith.constant 0 : index
    %109 = vector.load %arg16[%c0_44, %c0_45] : memref<1x32xf32, #tpu.memory_space<vmem>>, vector<1x32xf32>
    %c0_46 = arith.constant 0 : index
    %c0_47 = arith.constant 0 : index
    %110 = vector.load %arg17[%c0_46, %c0_47] : memref<1x16xf32, #tpu.memory_space<vmem>>, vector<1x16xf32>
    %c0_48 = arith.constant 0 : index
    %c0_49 = arith.constant 0 : index
    %111 = vector.load %arg18[%c0_48, %c0_49] : memref<16x16xf32, #tpu.memory_space<vmem>>, vector<16x16xf32>
    %c0_50 = arith.constant 0 : index
    %c0_51 = arith.constant 0 : index
    %112 = vector.load %arg19[%c0_50, %c0_51] : memref<1x8xf32, #tpu.memory_space<vmem>>, vector<1x8xf32>
    %c0_52 = arith.constant 0 : index
    %c0_53 = arith.constant 0 : index
    %113 = vector.load %arg20[%c0_52, %c0_53] : memref<16x8xf32, #tpu.memory_space<vmem>>, vector<16x8xf32>
    %c0_54 = arith.constant 0 : index
    %c0_55 = arith.constant 0 : index
    %114 = vector.load %arg21[%c0_54, %c0_55] : memref<8x112xf32, #tpu.memory_space<vmem>>, vector<8x112xf32>
    %c0_56 = arith.constant 0 : index
    %c0_57 = arith.constant 0 : index
    %115 = vector.load %arg22[%c0_56, %c0_57] : memref<1x32xf32, #tpu.memory_space<vmem>>, vector<1x32xf32>
    %c0_58 = arith.constant 0 : index
    %c0_59 = arith.constant 0 : index
    %116 = vector.load %arg23[%c0_58, %c0_59] : memref<1x16xf32, #tpu.memory_space<vmem>>, vector<1x16xf32>
    %c0_60 = arith.constant 0 : index
    %c0_61 = arith.constant 0 : index
    %117 = vector.load %arg24[%c0_60, %c0_61] : memref<16x16xf32, #tpu.memory_space<vmem>>, vector<16x16xf32>
    %c0_62 = arith.constant 0 : index
    %c0_63 = arith.constant 0 : index
    %118 = vector.load %arg25[%c0_62, %c0_63] : memref<16x16xf32, #tpu.memory_space<vmem>>, vector<16x16xf32>
    %119 = vector.shape_cast %106 : vector<8x16x16xf32> to vector<128x16xf32>
    %cst_64 = arith.constant dense<0.000000e+00> : vector<128x112xf32>
    %120 = tpu.matmul %119, %108, %cst_64 {dimension_numbers = #tpu.dot_dimension_numbers<[1], [0], [0], [1], [0, 0, 1, 1], [], []>} : vector<128x16xf32>, vector<16x112xf32>, vector<128x112xf32> -> vector<128x112xf32>
    %121 = vector.shape_cast %120 : vector<128x112xf32> to vector<8x16x112xf32>
    %122 = vector.extract_strided_slice %121 {offsets = [0, 0, 0], sizes = [6, 16, 32], strides = [1, 1, 1]} : vector<8x16x112xf32> to vector<6x16x32xf32>
    %123 = vector.extract_strided_slice %121 {offsets = [1, 0, 32], sizes = [6, 16, 32], strides = [1, 1, 1]} : vector<8x16x112xf32> to vector<6x16x32xf32>
    %124 = arith.addf %122, %123 : vector<6x16x32xf32>
    %125 = vector.extract_strided_slice %121 {offsets = [2, 0, 64], sizes = [6, 16, 32], strides = [1, 1, 1]} : vector<8x16x112xf32> to vector<6x16x32xf32>
    %126 = arith.addf %124, %125 : vector<6x16x32xf32>
    %127 = vector.shape_cast %109 : vector<1x32xf32> to vector<1x1x32xf32>
    %128 = vector.broadcast %127 : vector<1x1x32xf32> to vector<6x16x32xf32>
    %129 = arith.addf %126, %128 : vector<6x16x32xf32>
    %130 = vector.extract_strided_slice %121 {offsets = [2, 0, 96], sizes = [6, 16, 16], strides = [1, 1, 1]} : vector<8x16x112xf32> to vector<6x16x16xf32>
    %131 = vector.shape_cast %110 : vector<1x16xf32> to vector<1x1x16xf32>
    %132 = vector.broadcast %131 : vector<1x1x16xf32> to vector<6x16x16xf32>
    %133 = arith.addf %130, %132 : vector<6x16x16xf32>
    %134 = vector.extract_strided_slice %129 {offsets = [0, 0, 0], sizes = [6, 16, 16], strides = [1, 1, 1]} : vector<6x16x32xf32> to vector<6x16x16xf32>
    %135 = arith.addf %134, %133 : vector<6x16x16xf32>
    %136 = vector.extract_strided_slice %129 {offsets = [0, 0, 16], sizes = [6, 16, 16], strides = [1, 1, 1]} : vector<6x16x32xf32> to vector<6x16x16xf32>
    %137 = arith.negf %136 : vector<6x16x16xf32>
    %138 = math.exp %137 : vector<6x16x16xf32>
    %cst_65 = arith.constant 1.000000e+00 : f32
    %139 = vector.broadcast %cst_65 : f32 to vector<6x16x16xf32>
    %140 = arith.addf %139, %138 : vector<6x16x16xf32>
    %141 = arith.divf %139, %140 : vector<6x16x16xf32>
    %142 = arith.mulf %135, %141 : vector<6x16x16xf32>
    %143 = vector.shape_cast %142 : vector<6x16x16xf32> to vector<96x16xf32>
    %cst_66 = arith.constant dense<0.000000e+00> : vector<96x16xf32>
    %144 = tpu.matmul %143, %111, %cst_66 {dimension_numbers = #tpu.dot_dimension_numbers<[1], [0], [0], [1], [0, 0, 1, 1], [], []>} : vector<96x16xf32>, vector<16x16xf32>, vector<96x16xf32> -> vector<96x16xf32>
    %145 = vector.shape_cast %144 : vector<96x16xf32> to vector<6x16x16xf32>
    %146 = vector.extract_strided_slice %145 {offsets = [0, 0, 0], sizes = [6, 16, 8], strides = [1, 1, 1]} : vector<6x16x16xf32> to vector<6x16x8xf32>
    %147 = vector.shape_cast %112 : vector<1x8xf32> to vector<1x1x8xf32>
    %148 = vector.broadcast %147 : vector<1x1x8xf32> to vector<6x16x8xf32>
    %149 = arith.addf %146, %148 : vector<6x16x8xf32>
    %150 = vector.extract_strided_slice %145 {offsets = [0, 0, 8], sizes = [6, 16, 8], strides = [1, 1, 1]} : vector<6x16x16xf32> to vector<6x16x8xf32>
    %151 = tpu.transpose %150, [1, 0, 2] : vector<6x16x8xf32> -> vector<16x6x8xf32>
    %152 = vector.shape_cast %151 : vector<16x6x8xf32> to vector<16x48xf32>
    %cst_67 = arith.constant dense<0.000000e+00> : vector<16x48xf32>
    %153 = tpu.matmul %107, %152, %cst_67 {dimension_numbers = #tpu.dot_dimension_numbers<[1], [0], [0], [1], [0, 0, 1, 1], [], []>} : vector<16x16xf32>, vector<16x48xf32>, vector<16x48xf32> -> vector<16x48xf32>
    %154 = vector.shape_cast %153 : vector<16x48xf32> to vector<16x6x8xf32>
    %155 = tpu.transpose %154, [1, 0, 2] : vector<16x6x8xf32> -> vector<6x16x8xf32>
    %156 = vector.shape_cast %113 : vector<16x8xf32> to vector<1x16x8xf32>
    %157 = vector.broadcast %156 : vector<1x16x8xf32> to vector<6x16x8xf32>
    %158 = arith.addf %155, %157 : vector<6x16x8xf32>
    %159 = arith.addf %158, %149 : vector<6x16x8xf32>
    %cst_68 = arith.constant 0.000000e+00 : f32
    %160 = vector.broadcast %cst_68 : f32 to vector<6x16x8xf32>
    %161 = arith.maximumf %159, %160 : vector<6x16x8xf32>
    %162 = vector.shape_cast %161 : vector<6x16x8xf32> to vector<96x8xf32>
    %cst_69 = arith.constant dense<0.000000e+00> : vector<96x112xf32>
    %163 = tpu.matmul %162, %114, %cst_69 {dimension_numbers = #tpu.dot_dimension_numbers<[1], [0], [0], [1], [0, 0, 1, 1], [], []>} : vector<96x8xf32>, vector<8x112xf32>, vector<96x112xf32> -> vector<96x112xf32>
    %164 = vector.shape_cast %163 : vector<96x112xf32> to vector<6x16x112xf32>
    %165 = vector.extract_strided_slice %164 {offsets = [0, 0, 0], sizes = [4, 16, 32], strides = [1, 1, 1]} : vector<6x16x112xf32> to vector<4x16x32xf32>
    %166 = vector.extract_strided_slice %164 {offsets = [1, 0, 32], sizes = [4, 16, 32], strides = [1, 1, 1]} : vector<6x16x112xf32> to vector<4x16x32xf32>
    %167 = arith.addf %165, %166 : vector<4x16x32xf32>
    %168 = vector.extract_strided_slice %164 {offsets = [2, 0, 64], sizes = [4, 16, 32], strides = [1, 1, 1]} : vector<6x16x112xf32> to vector<4x16x32xf32>
    %169 = arith.addf %167, %168 : vector<4x16x32xf32>
    %170 = vector.shape_cast %115 : vector<1x32xf32> to vector<1x1x32xf32>
    %171 = vector.broadcast %170 : vector<1x1x32xf32> to vector<4x16x32xf32>
    %172 = arith.addf %169, %171 : vector<4x16x32xf32>
    %173 = vector.extract_strided_slice %164 {offsets = [2, 0, 96], sizes = [4, 16, 16], strides = [1, 1, 1]} : vector<6x16x112xf32> to vector<4x16x16xf32>
    %174 = vector.shape_cast %116 : vector<1x16xf32> to vector<1x1x16xf32>
    %175 = vector.broadcast %174 : vector<1x1x16xf32> to vector<4x16x16xf32>
    %176 = arith.addf %173, %175 : vector<4x16x16xf32>
    %177 = vector.extract_strided_slice %172 {offsets = [0, 0, 0], sizes = [4, 16, 16], strides = [1, 1, 1]} : vector<4x16x32xf32> to vector<4x16x16xf32>
    %178 = arith.addf %177, %176 : vector<4x16x16xf32>
    %179 = vector.extract_strided_slice %172 {offsets = [0, 0, 16], sizes = [4, 16, 16], strides = [1, 1, 1]} : vector<4x16x32xf32> to vector<4x16x16xf32>
    %180 = arith.negf %179 : vector<4x16x16xf32>
    %181 = math.exp %180 : vector<4x16x16xf32>
    %cst_70 = arith.constant 1.000000e+00 : f32
    %182 = vector.broadcast %cst_70 : f32 to vector<4x16x16xf32>
    %183 = arith.addf %182, %181 : vector<4x16x16xf32>
    %184 = arith.divf %182, %183 : vector<4x16x16xf32>
    %185 = arith.mulf %178, %184 : vector<4x16x16xf32>
    %cst_71 = arith.constant dense<0.000000e+00> : vector<4x16xf32>
    %186 = vector.multi_reduction <add>, %185, %cst_71 [2] : vector<4x16x16xf32> to vector<4x16xf32>
    %187 = vector.shape_cast %186 : vector<4x16xf32> to vector<4x16x1xf32>
    %cst_72 = arith.constant dense<0.000000e+00> : vector<4x1xf32>
    %188 = vector.multi_reduction <add>, %187, %cst_72 [1] : vector<4x16x1xf32> to vector<4x1xf32>
    %189 = vector.shape_cast %188 : vector<4x1xf32> to vector<4x1x1xf32>
    %cst_73 = arith.constant 2.560000e+02 : f32
    %190 = vector.broadcast %cst_73 : f32 to vector<4x1x1xf32>
    %191 = arith.divf %189, %190 : vector<4x1x1xf32>
    %192 = vector.broadcast %191 : vector<4x1x1xf32> to vector<4x16x16xf32>
    %193 = arith.subf %185, %192 : vector<4x16x16xf32>
    %194 = arith.mulf %193, %193 : vector<4x16x16xf32>
    %cst_74 = arith.constant dense<0.000000e+00> : vector<4x16xf32>
    %195 = vector.multi_reduction <add>, %194, %cst_74 [2] : vector<4x16x16xf32> to vector<4x16xf32>
    %196 = vector.shape_cast %195 : vector<4x16xf32> to vector<4x16x1xf32>
    %cst_75 = arith.constant dense<0.000000e+00> : vector<4x1xf32>
    %197 = vector.multi_reduction <add>, %196, %cst_75 [1] : vector<4x16x1xf32> to vector<4x1xf32>
    %198 = vector.shape_cast %197 : vector<4x1xf32> to vector<4x1x1xf32>
    %cst_76 = arith.constant 2.560000e+02 : f32
    %199 = vector.broadcast %cst_76 : f32 to vector<4x1x1xf32>
    %200 = arith.divf %198, %199 : vector<4x1x1xf32>
    %cst_77 = arith.constant 9.99999996E-13 : f32
    %201 = vector.broadcast %cst_77 : f32 to vector<4x1x1xf32>
    %202 = arith.addf %200, %201 : vector<4x1x1xf32>
    %203 = math.rsqrt %202 : vector<4x1x1xf32>
    %204 = vector.broadcast %203 : vector<4x1x1xf32> to vector<4x16x16xf32>
    %205 = arith.mulf %193, %204 : vector<4x16x16xf32>
    %206 = vector.shape_cast %117 : vector<16x16xf32> to vector<1x16x16xf32>
    %207 = vector.broadcast %206 : vector<1x16x16xf32> to vector<4x16x16xf32>
    %208 = arith.mulf %205, %207 : vector<4x16x16xf32>
    %209 = vector.shape_cast %118 : vector<16x16xf32> to vector<1x16x16xf32>
    %210 = vector.broadcast %209 : vector<1x16x16xf32> to vector<4x16x16xf32>
    %211 = arith.addf %208, %210 : vector<4x16x16xf32>
    %c0_78 = arith.constant 0 : index
    %c0_79 = arith.constant 0 : index
    %212 = vector.load %arg26[%c0_78, %c0_79] : memref<16x144xf32, #tpu.memory_space<vmem>>, vector<16x144xf32>
    %c0_80 = arith.constant 0 : index
    %c0_81 = arith.constant 0 : index
    %213 = vector.load %arg27[%c0_80, %c0_81] : memref<1x32xf32, #tpu.memory_space<vmem>>, vector<1x32xf32>
    %c0_82 = arith.constant 0 : index
    %c0_83 = arith.constant 0 : index
    %214 = vector.load %arg28[%c0_82, %c0_83] : memref<1x16xf32, #tpu.memory_space<vmem>>, vector<1x16xf32>
    %c0_84 = arith.constant 0 : index
    %c0_85 = arith.constant 0 : index
    %215 = vector.load %arg29[%c0_84, %c0_85] : memref<16x16xf32, #tpu.memory_space<vmem>>, vector<16x16xf32>
    %c0_86 = arith.constant 0 : index
    %c0_87 = arith.constant 0 : index
    %216 = vector.load %arg30[%c0_86, %c0_87] : memref<16x16xf32, #tpu.memory_space<vmem>>, vector<16x16xf32>
    %c0_88 = arith.constant 0 : index
    %c0_89 = arith.constant 0 : index
    %217 = vector.load %arg31[%c0_88, %c0_89] : memref<16x8xf32, #tpu.memory_space<vmem>>, vector<16x8xf32>
    %c0_90 = arith.constant 0 : index
    %c0_91 = arith.constant 0 : index
    %218 = vector.load %arg32[%c0_90, %c0_91] : memref<1x8xf32, #tpu.memory_space<vmem>>, vector<1x8xf32>
    %c0_92 = arith.constant 0 : index
    %c0_93 = arith.constant 0 : index
    %219 = vector.load %arg33[%c0_92, %c0_93] : memref<8x2xf32, #tpu.memory_space<vmem>>, vector<8x2xf32>
    %c0_94 = arith.constant 0 : index
    %c0_95 = arith.constant 0 : index
    %220 = vector.load %arg34[%c0_94, %c0_95] : memref<1x2xf32, #tpu.memory_space<vmem>>, vector<1x2xf32>
    %221 = vector.shape_cast %211 : vector<4x16x16xf32> to vector<64x16xf32>
    %cst_96 = arith.constant dense<0.000000e+00> : vector<64x144xf32>
    %222 = tpu.matmul %221, %212, %cst_96 {dimension_numbers = #tpu.dot_dimension_numbers<[1], [0], [0], [1], [0, 0, 1, 1], [], []>} : vector<64x16xf32>, vector<16x144xf32>, vector<64x144xf32> -> vector<64x144xf32>
    %223 = vector.shape_cast %222 : vector<64x144xf32> to vector<4x16x144xf32>
    %224 = vector.extract_strided_slice %223 {offsets = [0, 0, 0], sizes = [1, 16, 32], strides = [1, 1, 1]} : vector<4x16x144xf32> to vector<1x16x32xf32>
    %225 = vector.extract_strided_slice %223 {offsets = [1, 0, 32], sizes = [1, 16, 32], strides = [1, 1, 1]} : vector<4x16x144xf32> to vector<1x16x32xf32>
    %226 = arith.addf %224, %225 : vector<1x16x32xf32>
    %227 = vector.extract_strided_slice %223 {offsets = [2, 0, 64], sizes = [1, 16, 32], strides = [1, 1, 1]} : vector<4x16x144xf32> to vector<1x16x32xf32>
    %228 = arith.addf %226, %227 : vector<1x16x32xf32>
    %229 = vector.extract_strided_slice %223 {offsets = [3, 0, 96], sizes = [1, 16, 32], strides = [1, 1, 1]} : vector<4x16x144xf32> to vector<1x16x32xf32>
    %230 = arith.addf %228, %229 : vector<1x16x32xf32>
    %231 = vector.shape_cast %213 : vector<1x32xf32> to vector<1x1x32xf32>
    %232 = vector.broadcast %231 : vector<1x1x32xf32> to vector<1x16x32xf32>
    %233 = arith.addf %230, %232 : vector<1x16x32xf32>
    %234 = vector.extract_strided_slice %223 {offsets = [3, 0, 128], sizes = [1, 16, 16], strides = [1, 1, 1]} : vector<4x16x144xf32> to vector<1x16x16xf32>
    %235 = vector.shape_cast %214 : vector<1x16xf32> to vector<1x1x16xf32>
    %236 = vector.broadcast %235 : vector<1x1x16xf32> to vector<1x16x16xf32>
    %237 = arith.addf %234, %236 : vector<1x16x16xf32>
    %238 = vector.extract_strided_slice %233 {offsets = [0, 0, 0], sizes = [1, 16, 16], strides = [1, 1, 1]} : vector<1x16x32xf32> to vector<1x16x16xf32>
    %239 = arith.addf %238, %237 : vector<1x16x16xf32>
    %240 = vector.extract_strided_slice %233 {offsets = [0, 0, 16], sizes = [1, 16, 16], strides = [1, 1, 1]} : vector<1x16x32xf32> to vector<1x16x16xf32>
    %241 = arith.negf %240 : vector<1x16x16xf32>
    %242 = math.exp %241 : vector<1x16x16xf32>
    %cst_97 = arith.constant 1.000000e+00 : f32
    %243 = vector.broadcast %cst_97 : f32 to vector<1x16x16xf32>
    %244 = arith.addf %243, %242 : vector<1x16x16xf32>
    %245 = arith.divf %243, %244 : vector<1x16x16xf32>
    %246 = arith.mulf %239, %245 : vector<1x16x16xf32>
    %cst_98 = arith.constant dense<0.000000e+00> : vector<1x16xf32>
    %247 = vector.multi_reduction <add>, %246, %cst_98 [2] : vector<1x16x16xf32> to vector<1x16xf32>
    %248 = vector.shape_cast %247 : vector<1x16xf32> to vector<1x16x1xf32>
    %cst_99 = arith.constant dense<0.000000e+00> : vector<1x1xf32>
    %249 = vector.multi_reduction <add>, %248, %cst_99 [1] : vector<1x16x1xf32> to vector<1x1xf32>
    %250 = vector.shape_cast %249 : vector<1x1xf32> to vector<1x1x1xf32>
    %cst_100 = arith.constant 2.560000e+02 : f32
    %251 = vector.broadcast %cst_100 : f32 to vector<1x1x1xf32>
    %252 = arith.divf %250, %251 : vector<1x1x1xf32>
    %253 = vector.broadcast %252 : vector<1x1x1xf32> to vector<1x16x16xf32>
    %254 = arith.subf %246, %253 : vector<1x16x16xf32>
    %255 = arith.mulf %254, %254 : vector<1x16x16xf32>
    %cst_101 = arith.constant dense<0.000000e+00> : vector<1x16xf32>
    %256 = vector.multi_reduction <add>, %255, %cst_101 [2] : vector<1x16x16xf32> to vector<1x16xf32>
    %257 = vector.shape_cast %256 : vector<1x16xf32> to vector<1x16x1xf32>
    %cst_102 = arith.constant dense<0.000000e+00> : vector<1x1xf32>
    %258 = vector.multi_reduction <add>, %257, %cst_102 [1] : vector<1x16x1xf32> to vector<1x1xf32>
    %259 = vector.shape_cast %258 : vector<1x1xf32> to vector<1x1x1xf32>
    %cst_103 = arith.constant 2.560000e+02 : f32
    %260 = vector.broadcast %cst_103 : f32 to vector<1x1x1xf32>
    %261 = arith.divf %259, %260 : vector<1x1x1xf32>
    %cst_104 = arith.constant 9.99999996E-13 : f32
    %262 = vector.broadcast %cst_104 : f32 to vector<1x1x1xf32>
    %263 = arith.addf %261, %262 : vector<1x1x1xf32>
    %264 = math.rsqrt %263 : vector<1x1x1xf32>
    %265 = vector.broadcast %264 : vector<1x1x1xf32> to vector<1x16x16xf32>
    %266 = arith.mulf %254, %265 : vector<1x16x16xf32>
    %267 = vector.shape_cast %215 : vector<16x16xf32> to vector<1x16x16xf32>
    %268 = arith.mulf %266, %267 : vector<1x16x16xf32>
    %269 = vector.shape_cast %216 : vector<16x16xf32> to vector<1x16x16xf32>
    %270 = arith.addf %268, %269 : vector<1x16x16xf32>
    %271 = vector.shape_cast %270 : vector<1x16x16xf32> to vector<16x16xf32>
    %cst_105 = arith.constant dense<0.000000e+00> : vector<16x8xf32>
    %272 = tpu.matmul %271, %217, %cst_105 {dimension_numbers = #tpu.dot_dimension_numbers<[1], [0], [0], [1], [0, 0, 1, 1], [], []>} : vector<16x16xf32>, vector<16x8xf32>, vector<16x8xf32> -> vector<16x8xf32>
    %273 = vector.shape_cast %272 : vector<16x8xf32> to vector<1x16x8xf32>
    %274 = vector.shape_cast %218 : vector<1x8xf32> to vector<1x1x8xf32>
    %275 = vector.broadcast %274 : vector<1x1x8xf32> to vector<1x16x8xf32>
    %276 = arith.addf %273, %275 : vector<1x16x8xf32>
    %cst_106 = arith.constant 0.000000e+00 : f32
    %277 = vector.broadcast %cst_106 : f32 to vector<1x16x8xf32>
    %278 = arith.maximumf %276, %277 : vector<1x16x8xf32>
    %279 = vector.shape_cast %278 : vector<1x16x8xf32> to vector<16x8xf32>
    %cst_107 = arith.constant dense<0.000000e+00> : vector<16x2xf32>
    %280 = tpu.matmul %279, %219, %cst_107 {dimension_numbers = #tpu.dot_dimension_numbers<[1], [0], [0], [1], [0, 0, 1, 1], [], []>} : vector<16x8xf32>, vector<8x2xf32>, vector<16x2xf32> -> vector<16x2xf32>
    %281 = vector.shape_cast %280 : vector<16x2xf32> to vector<1x16x2xf32>
    %282 = vector.shape_cast %220 : vector<1x2xf32> to vector<1x1x2xf32>
    %283 = vector.broadcast %282 : vector<1x1x2xf32> to vector<1x16x2xf32>
    %284 = arith.addf %281, %283 : vector<1x16x2xf32>
    %285 = vector.shape_cast %284 : vector<1x16x2xf32> to vector<1x32xf32>
    %c0_108 = arith.constant 0 : index
    %c0_109 = arith.constant 0 : index
    %c0_110 = arith.constant 0 : index
    %286 = vector.load %arg35[%c0_108, %c0_109, %c0_110] : memref<1x1x32xf32, #tpu.memory_space<vmem>>, vector<1x1x32xf32>
    %287 = vector.shape_cast %286 : vector<1x1x32xf32> to vector<1x32xf32>
    %288 = vector.shape_cast %285 : vector<1x32xf32> to vector<1x1x32xf32>
    tpu.vector_store %arg35[%c0_108, %c0_109, %c0_110], %288 {strides = array<i32>} : memref<1x1x32xf32, #tpu.memory_space<vmem>>, vector<1x1x32xf32>,
    return
  }
  func.func @transform_0(%arg0: i32) -> (i32, i32, i32, i32) {
    %c0_i32 = arith.constant 0 : i32
    %c0_i32_0 = arith.constant 0 : i32
    %c0_i32_1 = arith.constant 0 : i32
    %c0_i32_2 = arith.constant 0 : i32
    return %arg0, %c0_i32, %c0_i32_0, %c0_i32_1 : i32, i32, i32, i32
  }
  func.func @transform_1(%arg0: i32) -> (i32, i32) {
    %c0_i32 = arith.constant 0 : i32
    %c0_i32_0 = arith.constant 0 : i32
    %c0_i32_1 = arith.constant 0 : i32
    return %c0_i32, %c0_i32_0 : i32, i32
  }
  func.func @transform_2(%arg0: i32) -> (i32, i32) {
    %c0_i32 = arith.constant 0 : i32
    %c0_i32_0 = arith.constant 0 : i32
    %c0_i32_1 = arith.constant 0 : i32
    return %c0_i32, %c0_i32_0 : i32, i32
  }
  func.func @transform_3(%arg0: i32) -> (i32, i32) {
    %c0_i32 = arith.constant 0 : i32
    %c0_i32_0 = arith.constant 0 : i32
    %c0_i32_1 = arith.constant 0 : i32
    return %c0_i32, %c0_i32_0 : i32, i32
  }
  func.func @transform_4(%arg0: i32) -> (i32, i32) {
    %c0_i32 = arith.constant 0 : i32
    %c0_i32_0 = arith.constant 0 : i32
    %c0_i32_1 = arith.constant 0 : i32
    return %c0_i32, %c0_i32_0 : i32, i32
  }
  func.func @transform_5(%arg0: i32) -> (i32, i32) {
    %c0_i32 = arith.constant 0 : i32
    %c0_i32_0 = arith.constant 0 : i32
    %c0_i32_1 = arith.constant 0 : i32
    return %c0_i32, %c0_i32_0 : i32, i32
  }
  func.func @transform_6(%arg0: i32) -> (i32, i32) {
    %c0_i32 = arith.constant 0 : i32
    %c0_i32_0 = arith.constant 0 : i32
    %c0_i32_1 = arith.constant 0 : i32
    return %c0_i32, %c0_i32_0 : i32, i32
  }
  func.func @transform_7(%arg0: i32) -> (i32, i32) {
    %c0_i32 = arith.constant 0 : i32
    %c0_i32_0 = arith.constant 0 : i32
    %c0_i32_1 = arith.constant 0 : i32
    return %c0_i32, %c0_i32_0 : i32, i32
  }
  func.func @transform_8(%arg0: i32) -> (i32, i32) {
    %c0_i32 = arith.constant 0 : i32
    %c0_i32_0 = arith.constant 0 : i32
    %c0_i32_1 = arith.constant 0 : i32
    return %c0_i32, %c0_i32_0 : i32, i32
  }
  func.func @transform_9(%arg0: i32) -> (i32, i32) {
    %c0_i32 = arith.constant 0 : i32
    %c0_i32_0 = arith.constant 0 : i32
    %c0_i32_1 = arith.constant 0 : i32
    return %c0_i32, %c0_i32_0 : i32, i32
  }
  func.func @transform_10(%arg0: i32) -> (i32, i32) {
    %c0_i32 = arith.constant 0 : i32
    %c0_i32_0 = arith.constant 0 : i32
    %c0_i32_1 = arith.constant 0 : i32
    return %c0_i32, %c0_i32_0 : i32, i32
  }
  func.func @transform_11(%arg0: i32) -> (i32, i32) {
    %c0_i32 = arith.constant 0 : i32
    %c0_i32_0 = arith.constant 0 : i32
    %c0_i32_1 = arith.constant 0 : i32
    return %c0_i32, %c0_i32_0 : i32, i32
  }
  func.func @transform_12(%arg0: i32) -> (i32, i32) {
    %c0_i32 = arith.constant 0 : i32
    %c0_i32_0 = arith.constant 0 : i32
    %c0_i32_1 = arith.constant 0 : i32
    return %c0_i32, %c0_i32_0 : i32, i32
  }
  func.func @transform_13(%arg0: i32) -> (i32, i32) {
    %c0_i32 = arith.constant 0 : i32
    %c0_i32_0 = arith.constant 0 : i32
    %c0_i32_1 = arith.constant 0 : i32
    return %c0_i32, %c0_i32_0 : i32, i32
  }
  func.func @transform_14(%arg0: i32) -> (i32, i32) {
    %c0_i32 = arith.constant 0 : i32
    %c0_i32_0 = arith.constant 0 : i32
    %c0_i32_1 = arith.constant 0 : i32
    return %c0_i32, %c0_i32_0 : i32, i32
  }
  func.func @transform_15(%arg0: i32) -> (i32, i32) {
    %c0_i32 = arith.constant 0 : i32
    %c0_i32_0 = arith.constant 0 : i32
    %c0_i32_1 = arith.constant 0 : i32
    return %c0_i32, %c0_i32_0 : i32, i32
  }
  func.func @transform_16(%arg0: i32) -> (i32, i32) {
    %c0_i32 = arith.constant 0 : i32
    %c0_i32_0 = arith.constant 0 : i32
    %c0_i32_1 = arith.constant 0 : i32
    return %c0_i32, %c0_i32_0 : i32, i32
  }
  func.func @transform_17(%arg0: i32) -> (i32, i32) {
    %c0_i32 = arith.constant 0 : i32
    %c0_i32_0 = arith.constant 0 : i32
    %c0_i32_1 = arith.constant 0 : i32
    return %c0_i32, %c0_i32_0 : i32, i32
  }
  func.func @transform_18(%arg0: i32) -> (i32, i32) {
    %c0_i32 = arith.constant 0 : i32
    %c0_i32_0 = arith.constant 0 : i32
    %c0_i32_1 = arith.constant 0 : i32
    return %c0_i32, %c0_i32_0 : i32, i32
  }
  func.func @transform_19(%arg0: i32) -> (i32, i32) {
    %c0_i32 = arith.constant 0 : i32
    %c0_i32_0 = arith.constant 0 : i32
    %c0_i32_1 = arith.constant 0 : i32
    return %c0_i32, %c0_i32_0 : i32, i32
  }
  func.func @transform_20(%arg0: i32) -> (i32, i32) {
    %c0_i32 = arith.constant 0 : i32
    %c0_i32_0 = arith.constant 0 : i32
    %c0_i32_1 = arith.constant 0 : i32
    return %c0_i32, %c0_i32_0 : i32, i32
  }
  func.func @transform_21(%arg0: i32) -> (i32, i32) {
    %c0_i32 = arith.constant 0 : i32
    %c0_i32_0 = arith.constant 0 : i32
    %c0_i32_1 = arith.constant 0 : i32
    return %c0_i32, %c0_i32_0 : i32, i32
  }
  func.func @transform_22(%arg0: i32) -> (i32, i32) {
    %c0_i32 = arith.constant 0 : i32
    %c0_i32_0 = arith.constant 0 : i32
    %c0_i32_1 = arith.constant 0 : i32
    return %c0_i32, %c0_i32_0 : i32, i32
  }
  func.func @transform_23(%arg0: i32) -> (i32, i32) {
    %c0_i32 = arith.constant 0 : i32
    %c0_i32_0 = arith.constant 0 : i32
    %c0_i32_1 = arith.constant 0 : i32
    return %c0_i32, %c0_i32_0 : i32, i32
  }
  func.func @transform_24(%arg0: i32) -> (i32, i32) {
    %c0_i32 = arith.constant 0 : i32
    %c0_i32_0 = arith.constant 0 : i32
    %c0_i32_1 = arith.constant 0 : i32
    return %c0_i32, %c0_i32_0 : i32, i32
  }
  func.func @transform_25(%arg0: i32) -> (i32, i32) {
    %c0_i32 = arith.constant 0 : i32
    %c0_i32_0 = arith.constant 0 : i32
    %c0_i32_1 = arith.constant 0 : i32
    return %c0_i32, %c0_i32_0 : i32, i32
  }
  func.func @transform_26(%arg0: i32) -> (i32, i32) {
    %c0_i32 = arith.constant 0 : i32
    %c0_i32_0 = arith.constant 0 : i32
    %c0_i32_1 = arith.constant 0 : i32
    return %c0_i32, %c0_i32_0 : i32, i32
  }
  func.func @transform_27(%arg0: i32) -> (i32, i32) {
    %c0_i32 = arith.constant 0 : i32
    %c0_i32_0 = arith.constant 0 : i32
    %c0_i32_1 = arith.constant 0 : i32
    return %c0_i32, %c0_i32_0 : i32, i32
  }
  func.func @transform_28(%arg0: i32) -> (i32, i32) {
    %c0_i32 = arith.constant 0 : i32
    %c0_i32_0 = arith.constant 0 : i32
    %c0_i32_1 = arith.constant 0 : i32
    return %c0_i32, %c0_i32_0 : i32, i32
  }
  func.func @transform_29(%arg0: i32) -> (i32, i32) {
    %c0_i32 = arith.constant 0 : i32
    %c0_i32_0 = arith.constant 0 : i32
    %c0_i32_1 = arith.constant 0 : i32
    return %c0_i32, %c0_i32_0 : i32, i32
  }
  func.func @transform_30(%arg0: i32) -> (i32, i32) {
    %c0_i32 = arith.constant 0 : i32
    %c0_i32_0 = arith.constant 0 : i32
    %c0_i32_1 = arith.constant 0 : i32
    return %c0_i32, %c0_i32_0 : i32, i32
  }
  func.func @transform_31(%arg0: i32) -> (i32, i32) {
    %c0_i32 = arith.constant 0 : i32
    %c0_i32_0 = arith.constant 0 : i32
    %c0_i32_1 = arith.constant 0 : i32
    return %c0_i32, %c0_i32_0 : i32, i32
  }
  func.func @transform_32(%arg0: i32) -> (i32, i32) {
    %c0_i32 = arith.constant 0 : i32
    %c0_i32_0 = arith.constant 0 : i32
    %c0_i32_1 = arith.constant 0 : i32
    return %c0_i32, %c0_i32_0 : i32, i32
  }
  func.func @transform_33(%arg0: i32) -> (i32, i32) {
    %c0_i32 = arith.constant 0 : i32
    %c0_i32_0 = arith.constant 0 : i32
    %c0_i32_1 = arith.constant 0 : i32
    return %c0_i32, %c0_i32_0 : i32, i32
  }
  func.func @transform_34(%arg0: i32) -> (i32, i32, i32) {
    %c0_i32 = arith.constant 0 : i32
    %c0_i32_0 = arith.constant 0 : i32
    %c0_i32_1 = arith.constant 0 : i32
    return %arg0, %c0_i32, %c0_i32_0 : i32, i32, i32
  }
}

</mosaic_0001>

<llo_original>
// kernel: stgcn_graph_conv_forward.1
$region0: #{stgcn_graph_conv_forward.1}
  #allocation0 [shape = 'u32[]', space=smem, size = 0x4, offset = 0x4, fixed_abs, tag = 'smem constant byte address 0x4 - core index']
  #allocation1 [shape = 'u32[144,128]{1,0:T(1,128)}', space=vmem, size = 0x12000, scoped, tag = 'internal scratch']
  %s0 = inlined_call_operand.smem [shape: u32[35], index: -1, kind: input, shape index: {}]
  %s1 = sld [smem:[%s0]]
  %s2 = scalar_lea.smem %s0, 1
  %s3 = sld [smem:[%s2]]
  %s4 = scalar_lea.smem %s0, 2
  %s5 = sld [smem:[%s4]]
  %s6 = scalar_lea.smem %s0, 3
  %s7 = sld [smem:[%s6]]
  %s8 = scalar_lea.smem %s0, 4
  %s9 = sld [smem:[%s8]]
  %s10 = scalar_lea.smem %s0, 5
  %s11 = sld [smem:[%s10]]
  %s12 = scalar_lea.smem %s0, 6
  %s13 = sld [smem:[%s12]]
  %s14 = scalar_lea.smem %s0, 7
  %s15 = sld [smem:[%s14]]
  %s16 = scalar_lea.smem %s0, 8
  %s17 = sld [smem:[%s16]]
  %s18 = scalar_lea.smem %s0, 9
  %s19 = sld [smem:[%s18]]
  %s20 = scalar_lea.smem %s0, 10
  %s21 = sld [smem:[%s20]]
  %s22 = scalar_lea.smem %s0, 11
  %s23 = sld [smem:[%s22]]
  %s24 = scalar_lea.smem %s0, 12
  %s25 = sld [smem:[%s24]]
  %s26 = scalar_lea.smem %s0, 13
  %s27 = sld [smem:[%s26]]
  %s28 = scalar_lea.smem %s0, 14
  %s29 = sld [smem:[%s28]]
  %s30 = scalar_lea.smem %s0, 15
  %s31 = sld [smem:[%s30]]
  %s32 = scalar_lea.smem %s0, 16
  %s33 = sld [smem:[%s32]]
  %s34 = scalar_lea.smem %s0, 17
  %s35 = sld [smem:[%s34]]
  %s36 = scalar_lea.smem %s0, 18
  %s37 = sld [smem:[%s36]]
  %s38 = scalar_lea.smem %s0, 19
  %s39 = sld [smem:[%s38]]
  %s40 = scalar_lea.smem %s0, 20
  %s41 = sld [smem:[%s40]]
  %s42 = scalar_lea.smem %s0, 21
  %s43 = sld [smem:[%s42]]
  %s44 = scalar_lea.smem %s0, 22
  %s45 = sld [smem:[%s44]]
  %s46 = scalar_lea.smem %s0, 23
  %s47 = sld [smem:[%s46]]
  %s48 = scalar_lea.smem %s0, 24
  %s49 = sld [smem:[%s48]]
  %s50 = scalar_lea.smem %s0, 25
  %s51 = sld [smem:[%s50]]
  %s52 = scalar_lea.smem %s0, 26
  %s53 = sld [smem:[%s52]]
  %s54 = scalar_lea.smem %s0, 27
  %s55 = sld [smem:[%s54]]
  %s56 = scalar_lea.smem %s0, 28
  %s57 = sld [smem:[%s56]]
  %s58 = scalar_lea.smem %s0, 29
  %s59 = sld [smem:[%s58]]
  %s60 = scalar_lea.smem %s0, 30
  %s61 = sld [smem:[%s60]]
  %s62 = scalar_lea.smem %s0, 31
  %s63 = sld [smem:[%s62]]
  %s64 = scalar_lea.smem %s0, 32
  %s65 = sld [smem:[%s64]]
  %s66 = scalar_lea.smem %s0, 33
  %s67 = sld [smem:[%s66]]
  %s68 = scalar_lea.smem %s0, 34
  %s69 = sld [smem:[%s68]]
  %s70 = sld [smem:[#allocation0]]
  $region169: #{stgcn_graph_conv_forward.1} parent=0
    _
  %s72 = ssub.s32 1, %s70
  %s73 = scalar_select 0, %s72, %s70
  loop: start=0, step=1, limit=4
  $region2: #{stgcn_graph_conv_forward.1} parent=0 // loop_pre_header
    _
  $region3: #{stgcn_graph_conv_forward.1} parent=0 // loop_header
    %s75 = sphi 0, %s79
    %p76 = scmp.ge.s32.totalorder %s75, 4
    %s85 = sphi 0, %s87
    %s88 = sphi 0, %s85
    %s89 = sphi 0, %s88
    %s105 = sphi 0, %s89
    %s109 = sphi 0, %s109
    %s111 = sphi 0, %s109
    %s112 = sphi 0, %s111
    %s126 = sphi 0, %s112
    %s130 = sphi 0, %s130
    %s132 = sphi 0, %s130
    %s133 = sphi 0, %s132
    %s147 = sphi 0, %s133
    %s151 = sphi 0, %s151
    %s153 = sphi 0, %s151
    %s154 = sphi 0, %s153
    %s168 = sphi 0, %s154
    %s172 = sphi 0, %s172
    %s174 = sphi 0, %s172
    %s175 = sphi 0, %s174
    %s189 = sphi 0, %s175
    %s193 = sphi 0, %s193
    %s195 = sphi 0, %s193
    %s196 = sphi 0, %s195
    %s210 = sphi 0, %s196
    %s214 = sphi 0, %s214
    %s216 = sphi 0, %s214
    %s217 = sphi 0, %s216
    %s231 = sphi 0, %s217
    %s235 = sphi 0, %s235
    %s237 = sphi 0, %s235
    %s238 = sphi 0, %s237
    %s252 = sphi 0, %s238
    %s256 = sphi 0, %s256
    %s258 = sphi 0, %s256
    %s259 = sphi 0, %s258
    %s273 = sphi 0, %s259
    %s277 = sphi 0, %s277
    %s279 = sphi 0, %s277
    %s280 = sphi 0, %s279
    %s294 = sphi 0, %s280
    %s298 = sphi 0, %s298
    %s300 = sphi 0, %s298
    %s301 = sphi 0, %s300
    %s315 = sphi 0, %s301
    %s319 = sphi 0, %s319
    %s321 = sphi 0, %s319
    %s322 = sphi 0, %s321
    %s336 = sphi 0, %s322
    %s340 = sphi 0, %s340
    %s342 = sphi 0, %s340
    %s343 = sphi 0, %s342
    %s357 = sphi 0, %s343
    %s361 = sphi 0, %s361
    %s363 = sphi 0, %s361
    %s364 = sphi 0, %s363
    %s378 = sphi 0, %s364
    %s382 = sphi 0, %s382
    %s384 = sphi 0, %s382
    %s385 = sphi 0, %s384
    %s399 = sphi 0, %s385
    %s403 = sphi 0, %s403
    %s405 = sphi 0, %s403
    %s406 = sphi 0, %s405
    %s420 = sphi 0, %s406
    %s424 = sphi 0, %s424
    %s426 = sphi 0, %s424
    %s427 = sphi 0, %s426
    %s441 = sphi 0, %s427
    %s445 = sphi 0, %s445
    %s447 = sphi 0, %s445
    %s448 = sphi 0, %s447
    %s462 = sphi 0, %s448
    %s466 = sphi 0, %s466
    %s468 = sphi 0, %s466
    %s469 = sphi 0, %s468
    %s483 = sphi 0, %s469
    %s487 = sphi 0, %s487
    %s489 = sphi 0, %s487
    %s490 = sphi 0, %s489
    %s504 = sphi 0, %s490
    %s508 = sphi 0, %s508
    %s510 = sphi 0, %s508
    %s511 = sphi 0, %s510
    %s525 = sphi 0, %s511
    %s529 = sphi 0, %s529
    %s531 = sphi 0, %s529
    %s532 = sphi 0, %s531
    %s546 = sphi 0, %s532
    %s550 = sphi 0, %s550
    %s552 = sphi 0, %s550
    %s553 = sphi 0, %s552
    %s567 = sphi 0, %s553
    %s571 = sphi 0, %s571
    %s573 = sphi 0, %s571
    %s574 = sphi 0, %s573
    %s588 = sphi 0, %s574
    %s592 = sphi 0, %s592
    %s594 = sphi 0, %s592
    %s595 = sphi 0, %s594
    %s609 = sphi 0, %s595
    %s613 = sphi 0, %s613
    %s615 = sphi 0, %s613
    %s616 = sphi 0, %s615
    %s630 = sphi 0, %s616
    %s634 = sphi 0, %s634
    %s636 = sphi 0, %s634
    %s637 = sphi 0, %s636
    %s651 = sphi 0, %s637
    %s655 = sphi 0, %s655
    %s657 = sphi 0, %s655
    %s658 = sphi 0, %s657
    %s672 = sphi 0, %s658
    %s676 = sphi 0, %s676
    %s678 = sphi 0, %s676
    %s679 = sphi 0, %s678
    %s693 = sphi 0, %s679
    %s697 = sphi 0, %s697
    %s699 = sphi 0, %s697
    %s700 = sphi 0, %s699
    %s714 = sphi 0, %s700
    %s718 = sphi 0, %s718
    %s720 = sphi 0, %s718
    %s721 = sphi 0, %s720
    %s735 = sphi 0, %s721
    %s739 = sphi 0, %s739
    %s741 = sphi 0, %s739
    %s742 = sphi 0, %s741
    %s756 = sphi 0, %s742
    %s760 = sphi 0, %s760
    %s762 = sphi 0, %s760
    %s763 = sphi 0, %s762
    %s777 = sphi 0, %s763
    %s781 = sphi 0, %s781
    %s783 = sphi 0, %s781
    %s784 = sphi 0, %s783
    %s798 = sphi 0, %s784
    %s804 = sphi 0, %s806
    %s807 = sphi 0, %s804
    %s808 = sphi 0, %s807
    %s824 = sphi 0, %s808
  $region4: #{stgcn_graph_conv_forward.1} parent=0 // loop_header_branch
    %78 = sbr.rel (%p76) target = $region8
  $region5: #{stgcn_graph_conv_forward.1} parent=0 // loop_body
    %s80 = ssub.s32 %s75, 1
    %s81 = ssub.s32 %s75, 2
    %s82 = sadd.s32 %s75, 1
    %s83 = ssub.s32 %s75, %s82
    %p84 = scmp.eq.s32.totalorder %s83, 0
    %s86 = sadd.s32 %s85, 1
    %s87 = scalar_select %p84, %s85, %s86
    %p90 = pneg %p84
    %p91 = scmp.eq.s32.totalorder %s75, 1
    %p92 = por %p90, %p91
    %p93 = scmp.ne.s32.totalorder %s85, %s88
    %p94 = scmp.eq.s32.totalorder %s75, 0
    %p95 = por %p93, %p94
    %p96 = scmp.ne.s32.totalorder %s85, %s88
    %p97 = scmp.eq.s32.totalorder %s80, 1
    %p98 = por %p96, %p97
    %p99 = scmp.ne.s32.totalorder %s88, %s89
    %p100 = scmp.eq.s32.totalorder %s80, 0
    %p101 = por %p99, %p100
    %p102 = scmp.ne.s32.totalorder %s88, %s89
    %p103 = scmp.eq.s32.totalorder %s81, 1
    %p104 = por %p102, %p103
    %p106 = scmp.ne.s32.totalorder %s89, %s105
    %p107 = scmp.eq.s32.totalorder %s81, 0
    %p108 = por %p106, %p107
    %s110 = sadd.s32 %s109, 1
    %p113 = scmp.eq.s32.totalorder %s75, 1
    %p114 = scmp.ne.s32.totalorder %s109, %s111
    %p115 = scmp.eq.s32.totalorder %s75, 0
    %p116 = por %p114, %p115
    %p117 = scmp.ne.s32.totalorder %s109, %s111
    %p118 = scmp.eq.s32.totalorder %s80, 1
    %p119 = por %p117, %p118
    %p120 = scmp.ne.s32.totalorder %s111, %s112
    %p121 = scmp.eq.s32.totalorder %s80, 0
    %p122 = por %p120, %p121
    %p123 = scmp.ne.s32.totalorder %s111, %s112
    %p124 = scmp.eq.s32.totalorder %s81, 1
    %p125 = por %p123, %p124
    %p127 = scmp.ne.s32.totalorder %s112, %s126
    %p128 = scmp.eq.s32.totalorder %s81, 0
    %p129 = por %p127, %p128
    %s131 = sadd.s32 %s130, 1
    %p134 = scmp.eq.s32.totalorder %s75, 1
    %p135 = scmp.ne.s32.totalorder %s130, %s132
    %p136 = scmp.eq.s32.totalorder %s75, 0
    %p137 = por %p135, %p136
    %p138 = scmp.ne.s32.totalorder %s130, %s132
    %p139 = scmp.eq.s32.totalorder %s80, 1
    %p140 = por %p138, %p139
    %p141 = scmp.ne.s32.totalorder %s132, %s133
    %p142 = scmp.eq.s32.totalorder %s80, 0
    %p143 = por %p141, %p142
    %p144 = scmp.ne.s32.totalorder %s132, %s133
    %p145 = scmp.eq.s32.totalorder %s81, 1
    %p146 = por %p144, %p145
    %p148 = scmp.ne.s32.totalorder %s133, %s147
    %p149 = scmp.eq.s32.totalorder %s81, 0
    %p150 = por %p148, %p149
    %s152 = sadd.s32 %s151, 1
    %p155 = scmp.eq.s32.totalorder %s75, 1
    %p156 = scmp.ne.s32.totalorder %s151, %s153
    %p157 = scmp.eq.s32.totalorder %s75, 0
    %p158 = por %p156, %p157
    %p159 = scmp.ne.s32.totalorder %s151, %s153
    %p160 = scmp.eq.s32.totalorder %s80, 1
    %p161 = por %p159, %p160
    %p162 = scmp.ne.s32.totalorder %s153, %s154
    %p163 = scmp.eq.s32.totalorder %s80, 0
    %p164 = por %p162, %p163
    %p165 = scmp.ne.s32.totalorder %s153, %s154
    %p166 = scmp.eq.s32.totalorder %s81, 1
    %p167 = por %p165, %p166
    %p169 = scmp.ne.s32.totalorder %s154, %s168
    %p170 = scmp.eq.s32.totalorder %s81, 0
    %p171 = por %p169, %p170
    %s173 = sadd.s32 %s172, 1
    %p176 = scmp.eq.s32.totalorder %s75, 1
    %p177 = scmp.ne.s32.totalorder %s172, %s174
    %p178 = scmp.eq.s32.totalorder %s75, 0
    %p179 = por %p177, %p178
    %p180 = scmp.ne.s32.totalorder %s172, %s174
    %p181 = scmp.eq.s32.totalorder %s80, 1
    %p182 = por %p180, %p181
    %p183 = scmp.ne.s32.totalorder %s174, %s175
    %p184 = scmp.eq.s32.totalorder %s80, 0
    %p185 = por %p183, %p184
    %p186 = scmp.ne.s32.totalorder %s174, %s175
    %p187 = scmp.eq.s32.totalorder %s81, 1
    %p188 = por %p186, %p187
    %p190 = scmp.ne.s32.totalorder %s175, %s189
    %p191 = scmp.eq.s32.totalorder %s81, 0
    %p192 = por %p190, %p191
    %s194 = sadd.s32 %s193, 1
    %p197 = scmp.eq.s32.totalorder %s75, 1
    %p198 = scmp.ne.s32.totalorder %s193, %s195
    %p199 = scmp.eq.s32.totalorder %s75, 0
    %p200 = por %p198, %p199
    %p201 = scmp.ne.s32.totalorder %s193, %s195
    %p202 = scmp.eq.s32.totalorder %s80, 1
    %p203 = por %p201, %p202
    %p204 = scmp.ne.s32.totalorder %s195, %s196
    %p205 = scmp.eq.s32.totalorder %s80, 0
    %p206 = por %p204, %p205
    %p207 = scmp.ne.s32.totalorder %s195, %s196
    %p208 = scmp.eq.s32.totalorder %s81, 1
    %p209 = por %p207, %p208
    %p211 = scmp.ne.s32.totalorder %s196, %s210
    %p212 = scmp.eq.s32.totalorder %s81, 0
    %p213 = por %p211, %p212
    %s215 = sadd.s32 %s214, 1
    %p218 = scmp.eq.s32.totalorder %s75, 1
    %p219 = scmp.ne.s32.totalorder %s214, %s216
    %p220 = scmp.eq.s32.totalorder %s75, 0
    %p221 = por %p219, %p220
    %p222 = scmp.ne.s32.totalorder %s214, %s216
    %p223 = scmp.eq.s32.totalorder %s80, 1
    %p224 = por %p222, %p223
    %p225 = scmp.ne.s32.totalorder %s216, %s217
    %p226 = scmp.eq.s32.totalorder %s80, 0
    %p227 = por %p225, %p226
    %p228 = scmp.ne.s32.totalorder %s216, %s217
    %p229 = scmp.eq.s32.totalorder %s81, 1
    %p230 = por %p228, %p229
    %p232 = scmp.ne.s32.totalorder %s217, %s231
    %p233 = scmp.eq.s32.totalorder %s81, 0
    %p234 = por %p232, %p233
    %s236 = sadd.s32 %s235, 1
    %p239 = scmp.eq.s32.totalorder %s75, 1
    %p240 = scmp.ne.s32.totalorder %s235, %s237
    %p241 = scmp.eq.s32.totalorder %s75, 0
    %p242 = por %p240, %p241
    %p243 = scmp.ne.s32.totalorder %s235, %s237
    %p244 = scmp.eq.s32.totalorder %s80, 1
    %p245 = por %p243, %p244
    %p246 = scmp.ne.s32.totalorder %s237, %s238
    %p247 = scmp.eq.s32.totalorder %s80, 0
    %p248 = por %p246, %p247
    %p249 = scmp.ne.s32.totalorder %s237, %s238
    %p250 = scmp.eq.s32.totalorder %s81, 1
    %p251 = por %p249, %p250
    %p253 = scmp.ne.s32.totalorder %s238, %s252
    %p254 = scmp.eq.s32.totalorder %s81, 0
    %p255 = por %p253, %p254
    %s257 = sadd.s32 %s256, 1
    %p260 = scmp.eq.s32.totalorder %s75, 1
    %p261 = scmp.ne.s32.totalorder %s256, %s258
    %p262 = scmp.eq.s32.totalorder %s75, 0
    %p263 = por %p261, %p262
    %p264 = scmp.ne.s32.totalorder %s256, %s258
    %p265 = scmp.eq.s32.totalorder %s80, 1
    %p266 = por %p264, %p265
    %p267 = scmp.ne.s32.totalorder %s258, %s259
    %p268 = scmp.eq.s32.totalorder %s80, 0
    %p269 = por %p267, %p268
    %p270 = scmp.ne.s32.totalorder %s258, %s259
    %p271 = scmp.eq.s32.totalorder %s81, 1
    %p272 = por %p270, %p271
    %p274 = scmp.ne.s32.totalorder %s259, %s273
    %p275 = scmp.eq.s32.totalorder %s81, 0
    %p276 = por %p274, %p275
    %s278 = sadd.s32 %s277, 1
    %p281 = scmp.eq.s32.totalorder %s75, 1
    %p282 = scmp.ne.s32.totalorder %s277, %s279
    %p283 = scmp.eq.s32.totalorder %s75, 0
    %p284 = por %p282, %p283
    %p285 = scmp.ne.s32.totalorder %s277, %s279
    %p286 = scmp.eq.s32.totalorder %s80, 1
    %p287 = por %p285, %p286
    %p288 = scmp.ne.s32.totalorder %s279, %s280
    %p289 = scmp.eq.s32.totalorder %s80, 0
    %p290 = por %p288, %p289
    %p291 = scmp.ne.s32.totalorder %s279, %s280
    %p292 = scmp.eq.s32.totalorder %s81, 1
    %p293 = por %p291, %p292
    %p295 = scmp.ne.s32.totalorder %s280, %s294
    %p296 = scmp.eq.s32.totalorder %s81, 0
    %p297 = por %p295, %p296
    %s299 = sadd.s32 %s298, 1
    %p302 = scmp.eq.s32.totalorder %s75, 1
    %p303 = scmp.ne.s32.totalorder %s298, %s300
    %p304 = scmp.eq.s32.totalorder %s75, 0
    %p305 = por %p303, %p304
    %p306 = scmp.ne.s32.totalorder %s298, %s300
    %p307 = scmp.eq.s32.totalorder %s80, 1
    %p308 = por %p306, %p307
    %p309 = scmp.ne.s32.totalorder %s300, %s301
    %p310 = scmp.eq.s32.totalorder %s80, 0
    %p311 = por %p309, %p310
    %p312 = scmp.ne.s32.totalorder %s300, %s301
    %p313 = scmp.eq.s32.totalorder %s81, 1
    %p314 = por %p312, %p313
    %p316 = scmp.ne.s32.totalorder %s301, %s315
    %p317 = scmp.eq.s32.totalorder %s81, 0
    %p318 = por %p316, %p317
    %s320 = sadd.s32 %s319, 1
    %p323 = scmp.eq.s32.totalorder %s75, 1
    %p324 = scmp.ne.s32.totalorder %s319, %s321
    %p325 = scmp.eq.s32.totalorder %s75, 0
    %p326 = por %p324, %p325
    %p327 = scmp.ne.s32.totalorder %s319, %s321
    %p328 = scmp.eq.s32.totalorder %s80, 1
    %p329 = por %p327, %p328
    %p330 = scmp.ne.s32.totalorder %s321, %s322
    %p331 = scmp.eq.s32.totalorder %s80, 0
    %p332 = por %p330, %p331
    %p333 = scmp.ne.s32.totalorder %s321, %s322
    %p334 = scmp.eq.s32.totalorder %s81, 1
    %p335 = por %p333, %p334
    %p337 = scmp.ne.s32.totalorder %s322, %s336
    %p338 = scmp.eq.s32.totalorder %s81, 0
    %p339 = por %p337, %p338
    %s341 = sadd.s32 %s340, 1
    %p344 = scmp.eq.s32.totalorder %s75, 1
    %p345 = scmp.ne.s32.totalorder %s340, %s342
    %p346 = scmp.eq.s32.totalorder %s75, 0
    %p347 = por %p345, %p346
    %p348 = scmp.ne.s32.totalorder %s340, %s342
    %p349 = scmp.eq.s32.totalorder %s80, 1
    %p350 = por %p348, %p349
    %p351 = scmp.ne.s32.totalorder %s342, %s343
    %p352 = scmp.eq.s32.totalorder %s80, 0
    %p353 = por %p351, %p352
    %p354 = scmp.ne.s32.totalorder %s342, %s343
    %p355 = scmp.eq.s32.totalorder %s81, 1
    %p356 = por %p354, %p355
    %p358 = scmp.ne.s32.totalorder %s343, %s357
    %p359 = scmp.eq.s32.totalorder %s81, 0
    %p360 = por %p358, %p359
    %s362 = sadd.s32 %s361, 1
    %p365 = scmp.eq.s32.totalorder %s75, 1
    %p366 = scmp.ne.s32.totalorder %s361, %s363
    %p367 = scmp.eq.s32.totalorder %s75, 0
    %p368 = por %p366, %p367
    %p369 = scmp.ne.s32.totalorder %s361, %s363
    %p370 = scmp.eq.s32.totalorder %s80, 1
    %p371 = por %p369, %p370
    %p372 = scmp.ne.s32.totalorder %s363, %s364
    %p373 = scmp.eq.s32.totalorder %s80, 0
    %p374 = por %p372, %p373
    %p375 = scmp.ne.s32.totalorder %s363, %s364
    %p376 = scmp.eq.s32.totalorder %s81, 1
    %p377 = por %p375, %p376
    %p379 = scmp.ne.s32.totalorder %s364, %s378
    %p380 = scmp.eq.s32.totalorder %s81, 0
    %p381 = por %p379, %p380
    %s383 = sadd.s32 %s382, 1
    %p386 = scmp.eq.s32.totalorder %s75, 1
    %p387 = scmp.ne.s32.totalorder %s382, %s384
    %p388 = scmp.eq.s32.totalorder %s75, 0
    %p389 = por %p387, %p388
    %p390 = scmp.ne.s32.totalorder %s382, %s384
    %p391 = scmp.eq.s32.totalorder %s80, 1
    %p392 = por %p390, %p391
    %p393 = scmp.ne.s32.totalorder %s384, %s385
    %p394 = scmp.eq.s32.totalorder %s80, 0
    %p395 = por %p393, %p394
    %p396 = scmp.ne.s32.totalorder %s384, %s385
    %p397 = scmp.eq.s32.totalorder %s81, 1
    %p398 = por %p396, %p397
    %p400 = scmp.ne.s32.totalorder %s385, %s399
    %p401 = scmp.eq.s32.totalorder %s81, 0
    %p402 = por %p400, %p401
    %s404 = sadd.s32 %s403, 1
    %p407 = scmp.eq.s32.totalorder %s75, 1
    %p408 = scmp.ne.s32.totalorder %s403, %s405
    %p409 = scmp.eq.s32.totalorder %s75, 0
    %p410 = por %p408, %p409
    %p411 = scmp.ne.s32.totalorder %s403, %s405
    %p412 = scmp.eq.s32.totalorder %s80, 1
    %p413 = por %p411, %p412
    %p414 = scmp.ne.s32.totalorder %s405, %s406
    %p415 = scmp.eq.s32.totalorder %s80, 0
    %p416 = por %p414, %p415
    %p417 = scmp.ne.s32.totalorder %s405, %s406
    %p418 = scmp.eq.s32.totalorder %s81, 1
    %p419 = por %p417, %p418
    %p421 = scmp.ne.s32.totalorder %s406, %s420
    %p422 = scmp.eq.s32.totalorder %s81, 0
    %p423 = por %p421, %p422
    %s425 = sadd.s32 %s424, 1
    %p428 = scmp.eq.s32.totalorder %s75, 1
    %p429 = scmp.ne.s32.totalorder %s424, %s426
    %p430 = scmp.eq.s32.totalorder %s75, 0
    %p431 = por %p429, %p430
    %p432 = scmp.ne.s32.totalorder %s424, %s426
    %p433 = scmp.eq.s32.totalorder %s80, 1
    %p434 = por %p432, %p433
    %p435 = scmp.ne.s32.totalorder %s426, %s427
    %p436 = scmp.eq.s32.totalorder %s80, 0
    %p437 = por %p435, %p436
    %p438 = scmp.ne.s32.totalorder %s426, %s427
    %p439 = scmp.eq.s32.totalorder %s81, 1
    %p440 = por %p438, %p439
    %p442 = scmp.ne.s32.totalorder %s427, %s441
    %p443 = scmp.eq.s32.totalorder %s81, 0
    %p444 = por %p442, %p443
    %s446 = sadd.s32 %s445, 1
    %p449 = scmp.eq.s32.totalorder %s75, 1
    %p450 = scmp.ne.s32.totalorder %s445, %s447
    %p451 = scmp.eq.s32.totalorder %s75, 0
    %p452 = por %p450, %p451
    %p453 = scmp.ne.s32.totalorder %s445, %s447
    %p454 = scmp.eq.s32.totalorder %s80, 1
    %p455 = por %p453, %p454
    %p456 = scmp.ne.s32.totalorder %s447, %s448
    %p457 = scmp.eq.s32.totalorder %s80, 0
    %p458 = por %p456, %p457
    %p459 = scmp.ne.s32.totalorder %s447, %s448
    %p460 = scmp.eq.s32.totalorder %s81, 1
    %p461 = por %p459, %p460
    %p463 = scmp.ne.s32.totalorder %s448, %s462
    %p464 = scmp.eq.s32.totalorder %s81, 0
    %p465 = por %p463, %p464
    %s467 = sadd.s32 %s466, 1
    %p470 = scmp.eq.s32.totalorder %s75, 1
    %p471 = scmp.ne.s32.totalorder %s466, %s468
    %p472 = scmp.eq.s32.totalorder %s75, 0
    %p473 = por %p471, %p472
    %p474 = scmp.ne.s32.totalorder %s466, %s468
    %p475 = scmp.eq.s32.totalorder %s80, 1
    %p476 = por %p474, %p475
    %p477 = scmp.ne.s32.totalorder %s468, %s469
    %p478 = scmp.eq.s32.totalorder %s80, 0
    %p479 = por %p477, %p478
    %p480 = scmp.ne.s32.totalorder %s468, %s469
    %p481 = scmp.eq.s32.totalorder %s81, 1
    %p482 = por %p480, %p481
    %p484 = scmp.ne.s32.totalorder %s469, %s483
    %p485 = scmp.eq.s32.totalorder %s81, 0
    %p486 = por %p484, %p485
    %s488 = sadd.s32 %s487, 1
    %p491 = scmp.eq.s32.totalorder %s75, 1
    %p492 = scmp.ne.s32.totalorder %s487, %s489
    %p493 = scmp.eq.s32.totalorder %s75, 0
    %p494 = por %p492, %p493
    %p495 = scmp.ne.s32.totalorder %s487, %s489
    %p496 = scmp.eq.s32.totalorder %s80, 1
    %p497 = por %p495, %p496
    %p498 = scmp.ne.s32.totalorder %s489, %s490
    %p499 = scmp.eq.s32.totalorder %s80, 0
    %p500 = por %p498, %p499
    %p501 = scmp.ne.s32.totalorder %s489, %s490
    %p502 = scmp.eq.s32.totalorder %s81, 1
    %p503 = por %p501, %p502
    %p505 = scmp.ne.s32.totalorder %s490, %s504
    %p506 = scmp.eq.s32.totalorder %s81, 0
    %p507 = por %p505, %p506
    %s509 = sadd.s32 %s508, 1
    %p512 = scmp.eq.s32.totalorder %s75, 1
    %p513 = scmp.ne.s32.totalorder %s508, %s510
    %p514 = scmp.eq.s32.totalorder %s75, 0
    %p515 = por %p513, %p514
    %p516 = scmp.ne.s32.totalorder %s508, %s510
    %p517 = scmp.eq.s32.totalorder %s80, 1
    %p518 = por %p516, %p517
    %p519 = scmp.ne.s32.totalorder %s510, %s511
    %p520 = scmp.eq.s32.totalorder %s80, 0
    %p521 = por %p519, %p520
    %p522 = scmp.ne.s32.totalorder %s510, %s511
    %p523 = scmp.eq.s32.totalorder %s81, 1
    %p524 = por %p522, %p523
    %p526 = scmp.ne.s32.totalorder %s511, %s525
    %p527 = scmp.eq.s32.totalorder %s81, 0
    %p528 = por %p526, %p527
    %s530 = sadd.s32 %s529, 1
    %p533 = scmp.eq.s32.totalorder %s75, 1
    %p534 = scmp.ne.s32.totalorder %s529, %s531
    %p535 = scmp.eq.s32.totalorder %s75, 0
    %p536 = por %p534, %p535
    %p537 = scmp.ne.s32.totalorder %s529, %s531
    %p538 = scmp.eq.s32.totalorder %s80, 1
    %p539 = por %p537, %p538
    %p540 = scmp.ne.s32.totalorder %s531, %s532
    %p541 = scmp.eq.s32.totalorder %s80, 0
    %p542 = por %p540, %p541
    %p543 = scmp.ne.s32.totalorder %s531, %s532
    %p544 = scmp.eq.s32.totalorder %s81, 1
    %p545 = por %p543, %p544
    %p547 = scmp.ne.s32.totalorder %s532, %s546
    %p548 = scmp.eq.s32.totalorder %s81, 0
    %p549 = por %p547, %p548
    %s551 = sadd.s32 %s550, 1
    %p554 = scmp.eq.s32.totalorder %s75, 1
    %p555 = scmp.ne.s32.totalorder %s550, %s552
    %p556 = scmp.eq.s32.totalorder %s75, 0
    %p557 = por %p555, %p556
    %p558 = scmp.ne.s32.totalorder %s550, %s552
    %p559 = scmp.eq.s32.totalorder %s80, 1
    %p560 = por %p558, %p559
    %p561 = scmp.ne.s32.totalorder %s552, %s553
    %p562 = scmp.eq.s32.totalorder %s80, 0
    %p563 = por %p561, %p562
    %p564 = scmp.ne.s32.totalorder %s552, %s553
    %p565 = scmp.eq.s32.totalorder %s81, 1
    %p566 = por %p564, %p565
    %p568 = scmp.ne.s32.totalorder %s553, %s567
    %p569 = scmp.eq.s32.totalorder %s81, 0
    %p570 = por %p568, %p569
    %s572 = sadd.s32 %s571, 1
    %p575 = scmp.eq.s32.totalorder %s75, 1
    %p576 = scmp.ne.s32.totalorder %s571, %s573
    %p577 = scmp.eq.s32.totalorder %s75, 0
    %p578 = por %p576, %p577
    %p579 = scmp.ne.s32.totalorder %s571, %s573
    %p580 = scmp.eq.s32.totalorder %s80, 1
    %p581 = por %p579, %p580
    %p582 = scmp.ne.s32.totalorder %s573, %s574
    %p583 = scmp.eq.s32.totalorder %s80, 0
    %p584 = por %p582, %p583
    %p585 = scmp.ne.s32.totalorder %s573, %s574
    %p586 = scmp.eq.s32.totalorder %s81, 1
    %p587 = por %p585, %p586
    %p589 = scmp.ne.s32.totalorder %s574, %s588
    %p590 = scmp.eq.s32.totalorder %s81, 0
    %p591 = por %p589, %p590
    %s593 = sadd.s32 %s592, 1
    %p596 = scmp.eq.s32.totalorder %s75, 1
    %p597 = scmp.ne.s32.totalorder %s592, %s594
    %p598 = scmp.eq.s32.totalorder %s75, 0
    %p599 = por %p597, %p598
    %p600 = scmp.ne.s32.totalorder %s592, %s594
    %p601 = scmp.eq.s32.totalorder %s80, 1
    %p602 = por %p600, %p601
    %p603 = scmp.ne.s32.totalorder %s594, %s595
    %p604 = scmp.eq.s32.totalorder %s80, 0
    %p605 = por %p603, %p604
    %p606 = scmp.ne.s32.totalorder %s594, %s595
    %p607 = scmp.eq.s32.totalorder %s81, 1
    %p608 = por %p606, %p607
    %p610 = scmp.ne.s32.totalorder %s595, %s609
    %p611 = scmp.eq.s32.totalorder %s81, 0
    %p612 = por %p610, %p611
    %s614 = sadd.s32 %s613, 1
    %p617 = scmp.eq.s32.totalorder %s75, 1
    %p618 = scmp.ne.s32.totalorder %s613, %s615
    %p619 = scmp.eq.s32.totalorder %s75, 0
    %p620 = por %p618, %p619
    %p621 = scmp.ne.s32.totalorder %s613, %s615
    %p622 = scmp.eq.s32.totalorder %s80, 1
    %p623 = por %p621, %p622
    %p624 = scmp.ne.s32.totalorder %s615, %s616
    %p625 = scmp.eq.s32.totalorder %s80, 0
    %p626 = por %p624, %p625
    %p627 = scmp.ne.s32.totalorder %s615, %s616
    %p628 = scmp.eq.s32.totalorder %s81, 1
    %p629 = por %p627, %p628
    %p631 = scmp.ne.s32.totalorder %s616, %s630
    %p632 = scmp.eq.s32.totalorder %s81, 0
    %p633 = por %p631, %p632
    %s635 = sadd.s32 %s634, 1
    %p638 = scmp.eq.s32.totalorder %s75, 1
    %p639 = scmp.ne.s32.totalorder %s634, %s636
    %p640 = scmp.eq.s32.totalorder %s75, 0
    %p641 = por %p639, %p640
    %p642 = scmp.ne.s32.totalorder %s634, %s636
    %p643 = scmp.eq.s32.totalorder %s80, 1
    %p644 = por %p642, %p643
    %p645 = scmp.ne.s32.totalorder %s636, %s637
    %p646 = scmp.eq.s32.totalorder %s80, 0
    %p647 = por %p645, %p646
    %p648 = scmp.ne.s32.totalorder %s636, %s637
    %p649 = scmp.eq.s32.totalorder %s81, 1
    %p650 = por %p648, %p649
    %p652 = scmp.ne.s32.totalorder %s637, %s651
    %p653 = scmp.eq.s32.totalorder %s81, 0
    %p654 = por %p652, %p653
    %s656 = sadd.s32 %s655, 1
    %p659 = scmp.eq.s32.totalorder %s75, 1
    %p660 = scmp.ne.s32.totalorder %s655, %s657
    %p661 = scmp.eq.s32.totalorder %s75, 0
    %p662 = por %p660, %p661
    %p663 = scmp.ne.s32.totalorder %s655, %s657
    %p664 = scmp.eq.s32.totalorder %s80, 1
    %p665 = por %p663, %p664
    %p666 = scmp.ne.s32.totalorder %s657, %s658
    %p667 = scmp.eq.s32.totalorder %s80, 0
    %p668 = por %p666, %p667
    %p669 = scmp.ne.s32.totalorder %s657, %s658
    %p670 = scmp.eq.s32.totalorder %s81, 1
    %p671 = por %p669, %p670
    %p673 = scmp.ne.s32.totalorder %s658, %s672
    %p674 = scmp.eq.s32.totalorder %s81, 0
    %p675 = por %p673, %p674
    %s677 = sadd.s32 %s676, 1
    %p680 = scmp.eq.s32.totalorder %s75, 1
    %p681 = scmp.ne.s32.totalorder %s676, %s678
    %p682 = scmp.eq.s32.totalorder %s75, 0
    %p683 = por %p681, %p682
    %p684 = scmp.ne.s32.totalorder %s676, %s678
    %p685 = scmp.eq.s32.totalorder %s80, 1
    %p686 = por %p684, %p685
    %p687 = scmp.ne.s32.totalorder %s678, %s679
    %p688 = scmp.eq.s32.totalorder %s80, 0
    %p689 = por %p687, %p688
    %p690 = scmp.ne.s32.totalorder %s678, %s679
    %p691 = scmp.eq.s32.totalorder %s81, 1
    %p692 = por %p690, %p691
    %p694 = scmp.ne.s32.totalorder %s679, %s693
    %p695 = scmp.eq.s32.totalorder %s81, 0
    %p696 = por %p694, %p695
    %s698 = sadd.s32 %s697, 1
    %p701 = scmp.eq.s32.totalorder %s75, 1
    %p702 = scmp.ne.s32.totalorder %s697, %s699
    %p703 = scmp.eq.s32.totalorder %s75, 0
    %p704 = por %p702, %p703
    %p705 = scmp.ne.s32.totalorder %s697, %s699
    %p706 = scmp.eq.s32.totalorder %s80, 1
    %p707 = por %p705, %p706
    %p708 = scmp.ne.s32.totalorder %s699, %s700
    %p709 = scmp.eq.s32.totalorder %s80, 0
    %p710 = por %p708, %p709
    %p711 = scmp.ne.s32.totalorder %s699, %s700
    %p712 = scmp.eq.s32.totalorder %s81, 1
    %p713 = por %p711, %p712
    %p715 = scmp.ne.s32.totalorder %s700, %s714
    %p716 = scmp.eq.s32.totalorder %s81, 0
    %p717 = por %p715, %p716
    %s719 = sadd.s32 %s718, 1
    %p722 = scmp.eq.s32.totalorder %s75, 1
    %p723 = scmp.ne.s32.totalorder %s718, %s720
    %p724 = scmp.eq.s32.totalorder %s75, 0
    %p725 = por %p723, %p724
    %p726 = scmp.ne.s32.totalorder %s718, %s720
    %p727 = scmp.eq.s32.totalorder %s80, 1
    %p728 = por %p726, %p727
    %p729 = scmp.ne.s32.totalorder %s720, %s721
    %p730 = scmp.eq.s32.totalorder %s80, 0
    %p731 = por %p729, %p730
    %p732 = scmp.ne.s32.totalorder %s720, %s721
    %p733 = scmp.eq.s32.totalorder %s81, 1
    %p734 = por %p732, %p733
    %p736 = scmp.ne.s32.totalorder %s721, %s735
    %p737 = scmp.eq.s32.totalorder %s81, 0
    %p738 = por %p736, %p737
    %s740 = sadd.s32 %s739, 1
    %p743 = scmp.eq.s32.totalorder %s75, 1
    %p744 = scmp.ne.s32.totalorder %s739, %s741
    %p745 = scmp.eq.s32.totalorder %s75, 0
    %p746 = por %p744, %p745
    %p747 = scmp.ne.s32.totalorder %s739, %s741
    %p748 = scmp.eq.s32.totalorder %s80, 1
    %p749 = por %p747, %p748
    %p750 = scmp.ne.s32.totalorder %s741, %s742
    %p751 = scmp.eq.s32.totalorder %s80, 0
    %p752 = por %p750, %p751
    %p753 = scmp.ne.s32.totalorder %s741, %s742
    %p754 = scmp.eq.s32.totalorder %s81, 1
    %p755 = por %p753, %p754
    %p757 = scmp.ne.s32.totalorder %s742, %s756
    %p758 = scmp.eq.s32.totalorder %s81, 0
    %p759 = por %p757, %p758
    %s761 = sadd.s32 %s760, 1
    %p764 = scmp.eq.s32.totalorder %s75, 1
    %p765 = scmp.ne.s32.totalorder %s760, %s762
    %p766 = scmp.eq.s32.totalorder %s75, 0
    %p767 = por %p765, %p766
    %p768 = scmp.ne.s32.totalorder %s760, %s762
    %p769 = scmp.eq.s32.totalorder %s80, 1
    %p770 = por %p768, %p769
    %p771 = scmp.ne.s32.totalorder %s762, %s763
    %p772 = scmp.eq.s32.totalorder %s80, 0
    %p773 = por %p771, %p772
    %p774 = scmp.ne.s32.totalorder %s762, %s763
    %p775 = scmp.eq.s32.totalorder %s81, 1
    %p776 = por %p774, %p775
    %p778 = scmp.ne.s32.totalorder %s763, %s777
    %p779 = scmp.eq.s32.totalorder %s81, 0
    %p780 = por %p778, %p779
    %s782 = sadd.s32 %s781, 1
    %p785 = scmp.eq.s32.totalorder %s75, 1
    %p786 = scmp.ne.s32.totalorder %s781, %s783
    %p787 = scmp.eq.s32.totalorder %s75, 0
    %p788 = por %p786, %p787
    %p789 = scmp.ne.s32.totalorder %s781, %s783
    %p790 = scmp.eq.s32.totalorder %s80, 1
    %p791 = por %p789, %p790
    %p792 = scmp.ne.s32.totalorder %s783, %s784
    %p793 = scmp.eq.s32.totalorder %s80, 0
    %p794 = por %p792, %p793
    %p795 = scmp.ne.s32.totalorder %s783, %s784
    %p796 = scmp.eq.s32.totalorder %s81, 1
    %p797 = por %p795, %p796
    %p799 = scmp.ne.s32.totalorder %s784, %s798
    %p800 = scmp.eq.s32.totalorder %s81, 0
    %p801 = por %p799, %p800
    %s802 = ssub.s32 %s75, %s82
    %p803 = scmp.eq.s32.totalorder %s802, 0
    %s805 = sadd.s32 %s804, 1
    %s806 = scalar_select %p803, %s804, %s805
    %p809 = pneg %p803
    %p810 = scmp.eq.s32.totalorder %s75, 1
    %p811 = por %p809, %p810
    %p812 = scmp.ne.s32.totalorder %s804, %s807
    %p813 = scmp.eq.s32.totalorder %s75, 0
    %p814 = por %p812, %p813
    %p815 = scmp.ne.s32.totalorder %s804, %s807
    %p816 = scmp.eq.s32.totalorder %s80, 1
    %p817 = por %p815, %p816
    %p818 = scmp.ne.s32.totalorder %s807, %s808
    %p819 = scmp.eq.s32.totalorder %s80, 0
    %p820 = por %p818, %p819
    %p821 = scmp.ne.s32.totalorder %s807, %s808
    %p822 = scmp.eq.s32.totalorder %s81, 1
    %p823 = por %p821, %p822
    %p825 = scmp.ne.s32.totalorder %s808, %s824
    %p826 = scmp.eq.s32.totalorder %s81, 0
    %p827 = por %p825, %p826
    %p828 = scmp.le.s32.totalorder 1, %s75
    %p829 = scmp.lt.s32.totalorder %s75, 3
    %p830 = pnand %p828, %p829
    %p831 = pneg %p830
    // Predicated region
    $region9: #{stgcn_graph_conv_forward.1} parent=5 // pred_check
      _
    $region10: #{stgcn_graph_conv_forward.1} parent=5 // pred_check_branch
      %833 = sbr.rel (%p830) target = $region12
    $region11: #{stgcn_graph_conv_forward.1} parent=5 // pred_region
      %s834 = ssub.s32 %s75, 1
      // Predicated region
      $region13: #{stgcn_graph_conv_forward.1} parent=11 // pred_check
        %p835 = pneg %p122
      $region14: #{stgcn_graph_conv_forward.1} parent=11 // pred_check_branch
        %837 = sbr.rel (%p835) target = $region16
      $region15: #{stgcn_graph_conv_forward.1} parent=11 // pred_region
        _
      $region16: #{stgcn_graph_conv_forward.1} parent=11 // pred_fallthru
        _
      // Predicated region
      $region17: #{stgcn_graph_conv_forward.1} parent=11 // pred_check
        %p838 = pneg %p143
      $region18: #{stgcn_graph_conv_forward.1} parent=11 // pred_check_branch
        %840 = sbr.rel (%p838) target = $region20
      $region19: #{stgcn_graph_conv_forward.1} parent=11 // pred_region
        _
      $region20: #{stgcn_graph_conv_forward.1} parent=11 // pred_fallthru
        _
      // Predicated region
      $region21: #{stgcn_graph_conv_forward.1} parent=11 // pred_check
        %p841 = pneg %p164
      $region22: #{stgcn_graph_conv_forward.1} parent=11 // pred_check_branch
        %843 = sbr.rel (%p841) target = $region24
      $region23: #{stgcn_graph_conv_forward.1} parent=11 // pred_region
        _
      $region24: #{stgcn_graph_conv_forward.1} parent=11 // pred_fallthru
        _
      // Predicated region
      $region25: #{stgcn_graph_conv_forward.1} parent=11 // pred_check
        %p844 = pneg %p185
      $region26: #{stgcn_graph_conv_forward.1} parent=11 // pred_check_branch
        %846 = sbr.rel (%p844) target = $region28
      $region27: #{stgcn_graph_conv_forward.1} parent=11 // pred_region
        _
      $region28: #{stgcn_graph_conv_forward.1} parent=11 // pred_fallthru
        _
      // Predicated region
      $region29: #{stgcn_graph_conv_forward.1} parent=11 // pred_check
        %p847 = pneg %p206
      $region30: #{stgcn_graph_conv_forward.1} parent=11 // pred_check_branch
        %849 = sbr.rel (%p847) target = $region32
      $region31: #{stgcn_graph_conv_forward.1} parent=11 // pred_region
        _
      $region32: #{stgcn_graph_conv_forward.1} parent=11 // pred_fallthru
        _
      // Predicated region
      $region33: #{stgcn_graph_conv_forward.1} parent=11 // pred_check
        %p850 = pneg %p227
      $region34: #{stgcn_graph_conv_forward.1} parent=11 // pred_check_branch
        %852 = sbr.rel (%p850) target = $region36
      $region35: #{stgcn_graph_conv_forward.1} parent=11 // pred_region
        _
      $region36: #{stgcn_graph_conv_forward.1} parent=11 // pred_fallthru
        _
      // Predicated region
      $region37: #{stgcn_graph_conv_forward.1} parent=11 // pred_check
        %p853 = pneg %p248
      $region38: #{stgcn_graph_conv_forward.1} parent=11 // pred_check_branch
        %855 = sbr.rel (%p853) target = $region40
      $region39: #{stgcn_graph_conv_forward.1} parent=11 // pred_region
        _
      $region40: #{stgcn_graph_conv_forward.1} parent=11 // pred_fallthru
        _
      // Predicated region
      $region41: #{stgcn_graph_conv_forward.1} parent=11 // pred_check
        %p856 = pneg %p269
      $region42: #{stgcn_graph_conv_forward.1} parent=11 // pred_check_branch
        %858 = sbr.rel (%p856) target = $region44
      $region43: #{stgcn_graph_conv_forward.1} parent=11 // pred_region
        _
      $region44: #{stgcn_graph_conv_forward.1} parent=11 // pred_fallthru
        _
      // Predicated region
      $region45: #{stgcn_graph_conv_forward.1} parent=11 // pred_check
        %p859 = pneg %p290
      $region46: #{stgcn_graph_conv_forward.1} parent=11 // pred_check_branch
        %861 = sbr.rel (%p859) target = $region48
      $region47: #{stgcn_graph_conv_forward.1} parent=11 // pred_region
        _
      $region48: #{stgcn_graph_conv_forward.1} parent=11 // pred_fallthru
        _
      // Predicated region
      $region49: #{stgcn_graph_conv_forward.1} parent=11 // pred_check
        %p862 = pneg %p311
      $region50: #{stgcn_graph_conv_forward.1} parent=11 // pred_check_branch
        %864 = sbr.rel (%p862) target = $region52
      $region51: #{stgcn_graph_conv_forward.1} parent=11 // pred_region
        _
      $region52: #{stgcn_graph_conv_forward.1} parent=11 // pred_fallthru
        _
      // Predicated region
      $region53: #{stgcn_graph_conv_forward.1} parent=11 // pred_check
        %p865 = pneg %p332
      $region54: #{stgcn_graph_conv_forward.1} parent=11 // pred_check_branch
        %867 = sbr.rel (%p865) target = $region56
      $region55: #{stgcn_graph_conv_forward.1} parent=11 // pred_region
        _
      $region56: #{stgcn_graph_conv_forward.1} parent=11 // pred_fallthru
        _
      // Predicated region
      $region57: #{stgcn_graph_conv_forward.1} parent=11 // pred_check
        %p868 = pneg %p353
      $region58: #{stgcn_graph_conv_forward.1} parent=11 // pred_check_branch
        %870 = sbr.rel (%p868) target = $region60
      $region59: #{stgcn_graph_conv_forward.1} parent=11 // pred_region
        _
      $region60: #{stgcn_graph_conv_forward.1} parent=11 // pred_fallthru
        _
      // Predicated region
      $region61: #{stgcn_graph_conv_forward.1} parent=11 // pred_check
        %p871 = pneg %p374
      $region62: #{stgcn_graph_conv_forward.1} parent=11 // pred_check_branch
        %873 = sbr.rel (%p871) target = $region64
      $region63: #{stgcn_graph_conv_forward.1} parent=11 // pred_region
        _
      $region64: #{stgcn_graph_conv_forward.1} parent=11 // pred_fallthru
        _
      // Predicated region
      $region65: #{stgcn_graph_conv_forward.1} parent=11 // pred_check
        %p874 = pneg %p395
      $region66: #{stgcn_graph_conv_forward.1} parent=11 // pred_check_branch
        %876 = sbr.rel (%p874) target = $region68
      $region67: #{stgcn_graph_conv_forward.1} parent=11 // pred_region
        _
      $region68: #{stgcn_graph_conv_forward.1} parent=11 // pred_fallthru
        _
      // Predicated region
      $region69: #{stgcn_graph_conv_forward.1} parent=11 // pred_check
        %p877 = pneg %p416
      $region70: #{stgcn_graph_conv_forward.1} parent=11 // pred_check_branch
        %879 = sbr.rel (%p877) target = $region72
      $region71: #{stgcn_graph_conv_forward.1} parent=11 // pred_region
        _
      $region72: #{stgcn_graph_conv_forward.1} parent=11 // pred_fallthru
        _
      // Predicated region
      $region73: #{stgcn_graph_conv_forward.1} parent=11 // pred_check
        %p880 = pneg %p437
      $region74: #{stgcn_graph_conv_forward.1} parent=11 // pred_check_branch
        %882 = sbr.rel (%p880) target = $region76
      $region75: #{stgcn_graph_conv_forward.1} parent=11 // pred_region
        _
      $region76: #{stgcn_graph_conv_forward.1} parent=11 // pred_fallthru
        _
      // Predicated region
      $region77: #{stgcn_graph_conv_forward.1} parent=11 // pred_check
        %p883 = pneg %p458
      $region78: #{stgcn_graph_conv_forward.1} parent=11 // pred_check_branch
        %885 = sbr.rel (%p883) target = $region80
      $region79: #{stgcn_graph_conv_forward.1} parent=11 // pred_region
        _
      $region80: #{stgcn_graph_conv_forward.1} parent=11 // pred_fallthru
        _
      // Predicated region
      $region81: #{stgcn_graph_conv_forward.1} parent=11 // pred_check
        %p886 = pneg %p479
      $region82: #{stgcn_graph_conv_forward.1} parent=11 // pred_check_branch
        %888 = sbr.rel (%p886) target = $region84
      $region83: #{stgcn_graph_conv_forward.1} parent=11 // pred_region
        _
      $region84: #{stgcn_graph_conv_forward.1} parent=11 // pred_fallthru
        _
      // Predicated region
      $region85: #{stgcn_graph_conv_forward.1} parent=11 // pred_check
        %p889 = pneg %p500
      $region86: #{stgcn_graph_conv_forward.1} parent=11 // pred_check_branch
        %891 = sbr.rel (%p889) target = $region88
      $region87: #{stgcn_graph_conv_forward.1} parent=11 // pred_region
        _
      $region88: #{stgcn_graph_conv_forward.1} parent=11 // pred_fallthru
        _
      // Predicated region
      $region89: #{stgcn_graph_conv_forward.1} parent=11 // pred_check
        %p892 = pneg %p521
      $region90: #{stgcn_graph_conv_forward.1} parent=11 // pred_check_branch
        %894 = sbr.rel (%p892) target = $region92
      $region91: #{stgcn_graph_conv_forward.1} parent=11 // pred_region
        _
      $region92: #{stgcn_graph_conv_forward.1} parent=11 // pred_fallthru
        _
      // Predicated region
      $region93: #{stgcn_graph_conv_forward.1} parent=11 // pred_check
        %p895 = pneg %p542
      $region94: #{stgcn_graph_conv_forward.1} parent=11 // pred_check_branch
        %897 = sbr.rel (%p895) target = $region96
      $region95: #{stgcn_graph_conv_forward.1} parent=11 // pred_region
        _
      $region96: #{stgcn_graph_conv_forward.1} parent=11 // pred_fallthru
        _
      // Predicated region
      $region97: #{stgcn_graph_conv_forward.1} parent=11 // pred_check
        %p898 = pneg %p563
      $region98: #{stgcn_graph_conv_forward.1} parent=11 // pred_check_branch
        %900 = sbr.rel (%p898) target = $region100
      $region99: #{stgcn_graph_conv_forward.1} parent=11 // pred_region
        _
      $region100: #{stgcn_graph_conv_forward.1} parent=11 // pred_fallthru
        _
      // Predicated region
      $region101: #{stgcn_graph_conv_forward.1} parent=11 // pred_check
        %p901 = pneg %p584
      $region102: #{stgcn_graph_conv_forward.1} parent=11 // pred_check_branch
        %903 = sbr.rel (%p901) target = $region104
      $region103: #{stgcn_graph_conv_forward.1} parent=11 // pred_region
        _
      $region104: #{stgcn_graph_conv_forward.1} parent=11 // pred_fallthru
        _
      // Predicated region
      $region105: #{stgcn_graph_conv_forward.1} parent=11 // pred_check
        %p904 = pneg %p605
      $region106: #{stgcn_graph_conv_forward.1} parent=11 // pred_check_branch
        %906 = sbr.rel (%p904) target = $region108
      $region107: #{stgcn_graph_conv_forward.1} parent=11 // pred_region
        _
      $region108: #{stgcn_graph_conv_forward.1} parent=11 // pred_fallthru
        _
      // Predicated region
      $region109: #{stgcn_graph_conv_forward.1} parent=11 // pred_check
        %p907 = pneg %p626
      $region110: #{stgcn_graph_conv_forward.1} parent=11 // pred_check_branch
        %909 = sbr.rel (%p907) target = $region112
      $region111: #{stgcn_graph_conv_forward.1} parent=11 // pred_region
        _
      $region112: #{stgcn_graph_conv_forward.1} parent=11 // pred_fallthru
        _
      // Predicated region
      $region113: #{stgcn_graph_conv_forward.1} parent=11 // pred_check
        %p910 = pneg %p647
      $region114: #{stgcn_graph_conv_forward.1} parent=11 // pred_check_branch
        %912 = sbr.rel (%p910) target = $region116
      $region115: #{stgcn_graph_conv_forward.1} parent=11 // pred_region
        _
      $region116: #{stgcn_graph_conv_forward.1} parent=11 // pred_fallthru
        _
      // Predicated region
      $region117: #{stgcn_graph_conv_forward.1} parent=11 // pred_check
        %p913 = pneg %p668
      $region118: #{stgcn_graph_conv_forward.1} parent=11 // pred_check_branch
        %915 = sbr.rel (%p913) target = $region120
      $region119: #{stgcn_graph_conv_forward.1} parent=11 // pred_region
        _
      $region120: #{stgcn_graph_conv_forward.1} parent=11 // pred_fallthru
        _
      // Predicated region
      $region121: #{stgcn_graph_conv_forward.1} parent=11 // pred_check
        %p916 = pneg %p689
      $region122: #{stgcn_graph_conv_forward.1} parent=11 // pred_check_branch
        %918 = sbr.rel (%p916) target = $region124
      $region123: #{stgcn_graph_conv_forward.1} parent=11 // pred_region
        _
      $region124: #{stgcn_graph_conv_forward.1} parent=11 // pred_fallthru
        _
      // Predicated region
      $region125: #{stgcn_graph_conv_forward.1} parent=11 // pred_check
        %p919 = pneg %p710
      $region126: #{stgcn_graph_conv_forward.1} parent=11 // pred_check_branch
        %921 = sbr.rel (%p919) target = $region128
      $region127: #{stgcn_graph_conv_forward.1} parent=11 // pred_region
        _
      $region128: #{stgcn_graph_conv_forward.1} parent=11 // pred_fallthru
        _
      // Predicated region
      $region129: #{stgcn_graph_conv_forward.1} parent=11 // pred_check
        %p922 = pneg %p731
      $region130: #{stgcn_graph_conv_forward.1} parent=11 // pred_check_branch
        %924 = sbr.rel (%p922) target = $region132
      $region131: #{stgcn_graph_conv_forward.1} parent=11 // pred_region
        _
      $region132: #{stgcn_graph_conv_forward.1} parent=11 // pred_fallthru
        _
      // Predicated region
      $region133: #{stgcn_graph_conv_forward.1} parent=11 // pred_check
        %p925 = pneg %p752
      $region134: #{stgcn_graph_conv_forward.1} parent=11 // pred_check_branch
        %927 = sbr.rel (%p925) target = $region136
      $region135: #{stgcn_graph_conv_forward.1} parent=11 // pred_region
        _
      $region136: #{stgcn_graph_conv_forward.1} parent=11 // pred_fallthru
        _
      // Predicated region
      $region137: #{stgcn_graph_conv_forward.1} parent=11 // pred_check
        %p928 = pneg %p773
      $region138: #{stgcn_graph_conv_forward.1} parent=11 // pred_check_branch
        %930 = sbr.rel (%p928) target = $region140
      $region139: #{stgcn_graph_conv_forward.1} parent=11 // pred_region
        _
      $region140: #{stgcn_graph_conv_forward.1} parent=11 // pred_fallthru
        _
      // Predicated region
      $region141: #{stgcn_graph_conv_forward.1} parent=11 // pred_check
        %p931 = pneg %p794
      $region142: #{stgcn_graph_conv_forward.1} parent=11 // pred_check_branch
        %933 = sbr.rel (%p931) target = $region144
      $region143: #{stgcn_graph_conv_forward.1} parent=11 // pred_region
        _
      $region144: #{stgcn_graph_conv_forward.1} parent=11 // pred_fallthru
        _
    $region12: #{stgcn_graph_conv_forward.1} parent=5 // pred_fallthru
      _
    %p934 = scmp.lt.s32.totalorder %s75, 2
    // Predicated region
    $region145: #{stgcn_graph_conv_forward.1} parent=5 // pred_check
      %p935 = pneg %p934
    $region146: #{stgcn_graph_conv_forward.1} parent=5 // pred_check_branch
      %937 = sbr.rel (%p935) target = $region148
    $region147: #{stgcn_graph_conv_forward.1} parent=5 // pred_region
      // Predicated region
      $region149: #{stgcn_graph_conv_forward.1} parent=147 // pred_check
        %p938 = pneg %p95
      $region150: #{stgcn_graph_conv_forward.1} parent=147 // pred_check_branch
        %940 = sbr.rel (%p938) target = $region152
      $region151: #{stgcn_graph_conv_forward.1} parent=147 // pred_region
        %p941 = scmp.lt.s32.totalorder %s75, 1
        %s942 = scalar_select %p941, %s75, 1
        %s943 = smul.addr %s942, 24
        %s944 = smul.addr %s943, 8
        %s945 = scalar_lea.vmem %s1, %s944
      $region152: #{stgcn_graph_conv_forward.1} parent=147 // pred_fallthru
        _
    $region148: #{stgcn_graph_conv_forward.1} parent=5 // pred_fallthru
      _
    %p946 = scmp.le.s32.totalorder 1, %s75
    %p947 = scmp.lt.s32.totalorder %s75, 3
    %p948 = pnand %p946, %p947
    %p949 = pneg %p948
    // Predicated region
    $region153: #{stgcn_graph_conv_forward.1} parent=5 // pred_check
      _
    $region154: #{stgcn_graph_conv_forward.1} parent=5 // pred_check_branch
      %951 = sbr.rel (%p948) target = $region156
    $region155: #{stgcn_graph_conv_forward.1} parent=5 // pred_region
      %s952 = ssub.s32 %s75, 1
      %p953 = scmp.lt.s32.totalorder %s80, 1
      %s954 = scalar_select %p953, %s80, 1
      %s955 = smul.addr %s954, 24
      %s956 = smul.addr %s955, 8
      %s957 = scalar_lea.vmem %s1, %s956
      %p958 = pneg %p101
      %p959 = pneg %p98
      %p960 = pneg %p122
      %p961 = pneg %p119
      %p962 = pneg %p143
      %p963 = pneg %p140
      %p964 = pneg %p164
      %p965 = pneg %p161
      %p966 = pneg %p185
      %p967 = pneg %p182
      %p968 = pneg %p206
      %p969 = pneg %p203
      %p970 = pneg %p227
      %p971 = pneg %p224
      %p972 = pneg %p248
      %p973 = pneg %p245
      %p974 = pneg %p269
      %p975 = pneg %p266
      %p976 = pneg %p290
      %p977 = pneg %p287
      %p978 = pneg %p311
      %p979 = pneg %p308
      %p980 = pneg %p332
      %p981 = pneg %p329
      %p982 = pneg %p353
      %p983 = pneg %p350
      %p984 = pneg %p374
      %p985 = pneg %p371
      %p986 = pneg %p395
      %p987 = pneg %p392
      %p988 = pneg %p416
      %p989 = pneg %p413
      %p990 = pneg %p437
      %p991 = pneg %p434
      %p992 = pneg %p458
      %p993 = pneg %p455
      %p994 = pneg %p479
      %p995 = pneg %p476
      %p996 = pneg %p500
      %p997 = pneg %p497
      %p998 = pneg %p521
      %p999 = pneg %p518
      %p1000 = pneg %p542
      %p1001 = pneg %p539
      %p1002 = pneg %p563
      %p1003 = pneg %p560
      %p1004 = pneg %p584
      %p1005 = pneg %p581
      %p1006 = pneg %p605
      %p1007 = pneg %p602
      %p1008 = pneg %p626
      %p1009 = pneg %p623
      %p1010 = pneg %p647
      %p1011 = pneg %p644
      %p1012 = pneg %p668
      %p1013 = pneg %p665
      %p1014 = pneg %p689
      %p1015 = pneg %p686
      %p1016 = pneg %p710
      %p1017 = pneg %p707
      %p1018 = pneg %p731
      %p1019 = pneg %p728
      %p1020 = pneg %p752
      %p1021 = pneg %p749
      %p1022 = pneg %p773
      %p1023 = pneg %p770
      %p1024 = pneg %p794
      %p1025 = pneg %p791
      %p1026 = pneg %p820
      %p1027 = pneg %p817
      %p1028 = scmp.lt.s32.totalorder %s80, 1
      %s1029 = scalar_select %p1028, %s80, 1
      %s1030 = scalar_lea.vmem %s69, %s1029
      %p1031 = scmp.lt.s32.totalorder %s80, 1
      %s1032 = scalar_select %p1031, %s80, 1
      %s1033 = smul.addr %s1032, 24
      %s1034 = smul.addr %s1033, 8
      %s1035 = scalar_lea.vmem %s1, %s1034
      %p1036 = scmp.lt.s32.totalorder %s80, 1
      %s1037 = scalar_select %p1036, %s80, 1
      %s1038 = scalar_lea.vmem %s69, %s1037
      %v1039 = vld [vmem:[%s1035] sm:$0xff]
      %v1040 = vld [vmem:[%s1035 + $0x8] sm:$0xff]
      %v1041 = vld [vmem:[%s1035 + $0x10] sm:$0xff]
      %v1042 = vld [vmem:[%s1035 + $0x18] sm:$0xff]
      %v1043 = vld [vmem:[%s1035 + $0x20] sm:$0xff]
      %v1044 = vld [vmem:[%s1035 + $0x28] sm:$0xff]
      %v1045 = vld [vmem:[%s1035 + $0x30] sm:$0xff]
      %v1046 = vld [vmem:[%s1035 + $0x38] sm:$0xff]
      %v1047 = vld [vmem:[%s1035 + $0x40] sm:$0xff]
      %v1048 = vld [vmem:[%s1035 + $0x48] sm:$0xff]
      %v1049 = vld [vmem:[%s1035 + $0x50] sm:$0xff]
      %v1050 = vld [vmem:[%s1035 + $0x58] sm:$0xff]
      %v1051 = vld [vmem:[%s1035 + $0x60] sm:$0xff]
      %v1052 = vld [vmem:[%s1035 + $0x68] sm:$0xff]
      %v1053 = vld [vmem:[%s1035 + $0x70] sm:$0xff]
      %v1054 = vld [vmem:[%s1035 + $0x78] sm:$0xff]
      %v1055 = vld [vmem:[%s1035 + $0x80] sm:$0xff]
      %v1056 = vld [vmem:[%s1035 + $0x88] sm:$0xff]
      %v1057 = vld [vmem:[%s1035 + $0x90] sm:$0xff]
      %v1058 = vld [vmem:[%s1035 + $0x98] sm:$0xff]
      %v1059 = vld [vmem:[%s1035 + $0xa0] sm:$0xff]
      %v1060 = vld [vmem:[%s1035 + $0xa8] sm:$0xff]
      %v1061 = vld [vmem:[%s1035 + $0xb0] sm:$0xff]
      %v1062 = vld [vmem:[%s1035 + $0xb8] sm:$0xff]
      %v1063 = vld [vmem:[%s3] sm:$0xff]
      %v1064 = vld [vmem:[%s3 + $0x8] sm:$0xff]
      %v1065 = vld [vmem:[%s5] sm:$0xf]
      %v1066 = vld [vmem:[%s7] sm:$0x1]
      %v1067 = vld [vmem:[%s9] sm:$0x1]
      %v1068 = vld [vmem:[%s11] sm:$0xff]
      %v1069 = vld [vmem:[%s11 + $0x8] sm:$0xff]
      %v1070 = vld [vmem:[%s13] sm:$0x1]
      %v1071 = vld [vmem:[%s15] sm:$0xff]
      %v1072 = vld [vmem:[%s15 + $0x8] sm:$0xff]
      %v1073 = vld [vmem:[%s17] sm:$0xff]
      %v1074 = vld [vmem:[%s19] sm:$0x1]
      %v1075 = vld [vmem:[%s21] sm:$0x1]
      %v1076 = vld [vmem:[%s23] sm:$0xff]
      %v1077 = vld [vmem:[%s23 + $0x8] sm:$0xff]
      %v1078 = vld [vmem:[%s25] sm:$0xff]
      %v1079 = vld [vmem:[%s25 + $0x8] sm:$0xff]
      %vm1080 = vcmask 31744
      %v1082 = vsel %vm1080, %v1039, 0
      %v1085 = vsel %vm1080, %v1040, 0
      %v1088 = vsel %vm1080, %v1041, 0
      %v1091 = vsel %vm1080, %v1042, 0
      %v1094 = vsel %vm1080, %v1043, 0
      %v1097 = vsel %vm1080, %v1044, 0
      %v1100 = vsel %vm1080, %v1045, 0
      %v1103 = vsel %vm1080, %v1046, 0
      %v1106 = vsel %vm1080, %v1047, 0
      %v1109 = vsel %vm1080, %v1048, 0
      %v1112 = vsel %vm1080, %v1049, 0
      %v1115 = vsel %vm1080, %v1050, 0
      %v1118 = vsel %vm1080, %v1051, 0
      %v1121 = vsel %vm1080, %v1052, 0
      %v1124 = vsel %vm1080, %v1053, 0
      %v1127 = vsel %vm1080, %v1054, 0
      %v1130 = vsel %vm1080, %v1055, 0
      %v1133 = vsel %vm1080, %v1056, 0
      %v1136 = vsel %vm1080, %v1057, 0
      %v1139 = vsel %vm1080, %v1058, 0
      %v1142 = vsel %vm1080, %v1059, 0
      %v1145 = vsel %vm1080, %v1060, 0
      %v1148 = vsel %vm1080, %v1061, 0
      %v1151 = vsel %vm1080, %v1062, 0
      %vm1153 = vcmask 1043456
      %v1155 = vsel %vm1153, %v1065, 0
      %1157 = vmatprep.subr.mxu0 0.0
      %1158 = vmatpush1.msra.mxu0 %v1155
      %1159 = vmatprep.subr.mxu0 0.0
      %1160 = vmatpush1.msra.mxu0 0.0
      %1161 = vmatprep.subr.mxu0 0.0
      %1162 = vmatpush1.msra.mxu0 0.0
      %1163 = vmatprep.subr.mxu0 0.0
      %1164 = vmatpush1.msra.mxu0 0.0
      %1165 = vmatprep.subr.mxu0 0.0
      %1166 = vmatpush1.msra.mxu0 0.0
      %1167 = vmatprep.subr.mxu0 0.0
      %1168 = vmatpush1.msra.mxu0 0.0
      %1169 = vmatprep.subr.mxu0 0.0
      %1170 = vmatpush1.msra.mxu0 0.0
      %1171 = vmatprep.subr.mxu0 0.0
      %1172 = vmatpush1.msra.mxu0 0.0
      %1173 = vmatprep.subr.mxu0 0.0
      %1174 = vmatpush1.msra.mxu0 0.0
      %1175 = vmatprep.subr.mxu0 0.0
      %1176 = vmatpush1.msra.mxu0 0.0
      %1177 = vmatprep.subr.mxu0 0.0
      %1178 = vmatpush1.msra.mxu0 0.0
      %1179 = vmatprep.subr.mxu0 0.0
      %1180 = vmatpush1.msra.mxu0 0.0
      %1181 = vmatprep.subr.mxu0 0.0
      %1182 = vmatpush1.msra.mxu0 0.0
      %1183 = vmatprep.subr.mxu0 0.0
      %1184 = vmatpush1.msra.mxu0 0.0
      %1185 = vmatprep.subr.mxu0 0.0
      %1186 = vmatpush1.msra.mxu0 0.0
      %1187 = vmatprep.subr.mxu0 0.0
      %1188 = vmatpush1.msra.mxu0 0.0
      %1189 = vmatprep.subr.mxu0 0.0
      %1190 = vmatpush1.msra.mxu0 0.0
      %1191 = vmatprep.subr.mxu0 0.0
      %1192 = vmatpush1.msra.mxu0 0.0
      %1193 = vmatprep.subr.mxu0 0.0
      %1194 = vmatpush1.msra.mxu0 0.0
      %1195 = vmatprep.subr.mxu0 0.0
      %1196 = vmatpush1.msra.mxu0 0.0
      %1197 = vmatprep.subr.mxu0 0.0
      %1198 = vmatpush1.msra.mxu0 0.0
      %1199 = vmatprep.subr.mxu0 0.0
      %1200 = vmatpush1.msra.mxu0 0.0
      %1201 = vmatprep.subr.mxu0 0.0
      %1202 = vmatpush1.msra.mxu0 0.0
      %1203 = vmatprep.subr.mxu0 0.0
      %1204 = vmatpush1.msra.mxu0 0.0
      %1205 = vmatprep.subr.mxu0 0.0
      %1206 = vmatpush1.msra.mxu0 0.0
      %1207 = vmatprep.subr.mxu0 0.0
      %1208 = vmatpush1.msra.mxu0 0.0
      %1209 = vmatprep.subr.mxu0 0.0
      %1210 = vmatpush1.msra.mxu0 0.0
      %1211 = vmatprep.subr.mxu0 0.0
      %1212 = vmatpush1.msra.mxu0 0.0
      %1213 = vmatprep.subr.mxu0 0.0
      %1214 = vmatpush1.msra.mxu0 0.0
      %1215 = vmatprep.subr.mxu0 0.0
      %1216 = vmatpush1.msra.mxu0 0.0
      %1217 = vmatprep.subr.mxu0 0.0
      %1218 = vmatpush1.msra.mxu0 0.0
      %1219 = vmatprep.subr.mxu0 0.0
      %1220 = vmatpush1.msra.mxu0 0.0
      %1221 = vmatprep.mubr.f32.mxu0 0.0
      %1222 = vmatmul.mubr.f32.gmra.mrb[0].mxu0 %v1082
      %v1223 = vpop.f32.mrb[0].mxu0
      %v1224 = vadd.f32 0.0, %v1223
      %v1225 = vpop.f32.mrb[0].mxu0
      %1226 = vmatprep.mubr.f32.mxu0 0.0
      %1227 = vmatmul.mubr.f32.gmra.mrb[0].mxu0 %v1085
      %v1228 = vpop.f32.mrb[0].mxu0
      %v1229 = vadd.f32 0.0, %v1228
      %v1230 = vpop.f32.mrb[0].mxu0
      %1231 = vmatprep.mubr.f32.mxu0 0.0
      %1232 = vmatmul.mubr.f32.gmra.mrb[0].mxu0 %v1088
      %v1233 = vpop.f32.mrb[0].mxu0
      %v1234 = vadd.f32 0.0, %v1233
      %v1235 = vpop.f32.mrb[0].mxu0
      %1236 = vmatprep.mubr.f32.mxu0 0.0
      %1237 = vmatmul.mubr.f32.gmra.mrb[0].mxu0 %v1091
      %v1238 = vpop.f32.mrb[0].mxu0
      %v1239 = vadd.f32 0.0, %v1238
      %v1240 = vpop.f32.mrb[0].mxu0
      %1241 = vmatprep.mubr.f32.mxu0 0.0
      %1242 = vmatmul.mubr.f32.gmra.mrb[0].mxu0 %v1094
      %v1243 = vpop.f32.mrb[0].mxu0
      %v1244 = vadd.f32 0.0, %v1243
      %v1245 = vpop.f32.mrb[0].mxu0
      %1246 = vmatprep.mubr.f32.mxu0 0.0
      %1247 = vmatmul.mubr.f32.gmra.mrb[0].mxu0 %v1097
      %v1248 = vpop.f32.mrb[0].mxu0
      %v1249 = vadd.f32 0.0, %v1248
      %v1250 = vpop.f32.mrb[0].mxu0
      %1251 = vmatprep.mubr.f32.mxu0 0.0
      %1252 = vmatmul.mubr.f32.gmra.mrb[0].mxu0 %v1100
      %v1253 = vpop.f32.mrb[0].mxu0
      %v1254 = vadd.f32 0.0, %v1253
      %v1255 = vpop.f32.mrb[0].mxu0
      %1256 = vmatprep.mubr.f32.mxu0 0.0
      %1257 = vmatmul.mubr.f32.gmra.mrb[0].mxu0 %v1103
      %v1258 = vpop.f32.mrb[0].mxu0
      %v1259 = vadd.f32 0.0, %v1258
      %v1260 = vpop.f32.mrb[0].mxu0
      %1261 = vmatprep.mubr.f32.mxu0 0.0
      %1262 = vmatmul.mubr.f32.gmra.mrb[0].mxu0 %v1106
      %v1263 = vpop.f32.mrb[0].mxu0
      %v1264 = vadd.f32 0.0, %v1263
      %v1265 = vpop.f32.mrb[0].mxu0
      %1266 = vmatprep.mubr.f32.mxu0 0.0
      %1267 = vmatmul.mubr.f32.gmra.mrb[0].mxu0 %v1109
      %v1268 = vpop.f32.mrb[0].mxu0
      %v1269 = vadd.f32 0.0, %v1268
      %v1270 = vpop.f32.mrb[0].mxu0
      %1271 = vmatprep.mubr.f32.mxu0 0.0
      %1272 = vmatmul.mubr.f32.gmra.mrb[0].mxu0 %v1112
      %v1273 = vpop.f32.mrb[0].mxu0
      %v1274 = vadd.f32 0.0, %v1273
      %v1275 = vpop.f32.mrb[0].mxu0
      %1276 = vmatprep.mubr.f32.mxu0 0.0
      %1277 = vmatmul.mubr.f32.gmra.mrb[0].mxu0 %v1115
      %v1278 = vpop.f32.mrb[0].mxu0
      %v1279 = vadd.f32 0.0, %v1278
      %v1280 = vpop.f32.mrb[0].mxu0
      %1281 = vmatprep.mubr.f32.mxu0 0.0
      %1282 = vmatmul.mubr.f32.gmra.mrb[0].mxu0 %v1118
      %v1283 = vpop.f32.mrb[0].mxu0
      %v1284 = vadd.f32 0.0, %v1283
      %v1285 = vpop.f32.mrb[0].mxu0
      %1286 = vmatprep.mubr.f32.mxu0 0.0
      %1287 = vmatmul.mubr.f32.gmra.mrb[0].mxu0 %v1121
      %v1288 = vpop.f32.mrb[0].mxu0
      %v1289 = vadd.f32 0.0, %v1288
      %v1290 = vpop.f32.mrb[0].mxu0
      %1291 = vmatprep.mubr.f32.mxu0 0.0
      %1292 = vmatmul.mubr.f32.gmra.mrb[0].mxu0 %v1124
      %v1293 = vpop.f32.mrb[0].mxu0
      %v1294 = vadd.f32 0.0, %v1293
      %v1295 = vpop.f32.mrb[0].mxu0
      %1296 = vmatprep.mubr.f32.mxu0 0.0
      %1297 = vmatmul.mubr.f32.gmra.mrb[0].mxu0 %v1127
      %v1298 = vpop.f32.mrb[0].mxu0
      %v1299 = vadd.f32 0.0, %v1298
      %v1300 = vpop.f32.mrb[0].mxu0
      %1301 = vmatprep.mubr.f32.mxu0 0.0
      %1302 = vmatmul.mubr.f32.gmra.mrb[0].mxu0 %v1130
      %v1303 = vpop.f32.mrb[0].mxu0
      %v1304 = vadd.f32 0.0, %v1303
      %v1305 = vpop.f32.mrb[0].mxu0
      %1306 = vmatprep.mubr.f32.mxu0 0.0
      %1307 = vmatmul.mubr.f32.gmra.mrb[0].mxu0 %v1133
      %v1308 = vpop.f32.mrb[0].mxu0
      %v1309 = vadd.f32 0.0, %v1308
      %v1310 = vpop.f32.mrb[0].mxu0
      %1311 = vmatprep.mubr.f32.mxu0 0.0
      %1312 = vmatmul.mubr.f32.gmra.mrb[0].mxu0 %v1136
      %v1313 = vpop.f32.mrb[0].mxu0
      %v1314 = vadd.f32 0.0, %v1313
      %v1315 = vpop.f32.mrb[0].mxu0
      %1316 = vmatprep.mubr.f32.mxu0 0.0
      %1317 = vmatmul.mubr.f32.gmra.mrb[0].mxu0 %v1139
      %v1318 = vpop.f32.mrb[0].mxu0
      %v1319 = vadd.f32 0.0, %v1318
      %v1320 = vpop.f32.mrb[0].mxu0
      %1321 = vmatprep.mubr.f32.mxu0 0.0
      %1322 = vmatmul.mubr.f32.gmra.mrb[0].mxu0 %v1142
      %v1323 = vpop.f32.mrb[0].mxu0
      %v1324 = vadd.f32 0.0, %v1323
      %v1325 = vpop.f32.mrb[0].mxu0
      %1326 = vmatprep.mubr.f32.mxu0 0.0
      %1327 = vmatmul.mubr.f32.gmra.mrb[0].mxu0 %v1145
      %v1328 = vpop.f32.mrb[0].mxu0
      %v1329 = vadd.f32 0.0, %v1328
      %v1330 = vpop.f32.mrb[0].mxu0
      %1331 = vmatprep.mubr.f32.mxu0 0.0
      %1332 = vmatmul.mubr.f32.gmra.mrb[0].mxu0 %v1148
      %v1333 = vpop.f32.mrb[0].mxu0
      %v1334 = vadd.f32 0.0, %v1333
      %v1335 = vpop.f32.mrb[0].mxu0
      %1336 = vmatprep.mubr.f32.mxu0 0.0
      %1337 = vmatmul.mubr.f32.gmra.mrb[0].mxu0 %v1151
      %v1338 = vpop.f32.mrb[0].mxu0
      %v1339 = vadd.f32 0.0, %v1338
      %v1340 = vpop.f32.mrb[0].mxu0
      %1341 = vdwg.mxu0
      %1362 = vrot.lane.b32.xlu0 %v1234, 96
      %v1363 = vpop.permute.xlu0 %1362
      %1364 = vrot.lane.b32.xlu0 %v1239, 96
      %v1365 = vpop.permute.xlu0 %1364
      %1366 = vrot.lane.b32.xlu0 %v1244, 96
      %v1367 = vpop.permute.xlu0 %1366
      %1368 = vrot.lane.b32.xlu0 %v1249, 96
      %v1369 = vpop.permute.xlu0 %1368
      %1370 = vrot.lane.b32.xlu0 %v1254, 96
      %v1371 = vpop.permute.xlu0 %1370
      %1372 = vrot.lane.b32.xlu0 %v1259, 96
      %v1373 = vpop.permute.xlu0 %1372
      %1374 = vrot.lane.b32.xlu0 %v1264, 96
      %v1375 = vpop.permute.xlu0 %1374
      %1376 = vrot.lane.b32.xlu0 %v1269, 96
      %v1377 = vpop.permute.xlu0 %1376
      %1378 = vrot.lane.b32.xlu0 %v1274, 96
      %v1379 = vpop.permute.xlu0 %1378
      %1380 = vrot.lane.b32.xlu0 %v1279, 96
      %v1381 = vpop.permute.xlu0 %1380
      %1382 = vrot.lane.b32.xlu0 %v1284, 96
      %v1383 = vpop.permute.xlu0 %1382
      %1384 = vrot.lane.b32.xlu0 %v1289, 96
      %v1385 = vpop.permute.xlu0 %1384
      %1386 = vrot.lane.b32.xlu0 %v1294, 96
      %v1387 = vpop.permute.xlu0 %1386
      %1388 = vrot.lane.b32.xlu0 %v1299, 96
      %v1389 = vpop.permute.xlu0 %1388
      %1390 = vrot.lane.b32.xlu0 %v1304, 96
      %v1391 = vpop.permute.xlu0 %1390
      %1392 = vrot.lane.b32.xlu0 %v1309, 96
      %v1393 = vpop.permute.xlu0 %1392
      %1394 = vrot.lane.b32.xlu0 %v1314, 96
      %v1395 = vpop.permute.xlu0 %1394
      %1396 = vrot.lane.b32.xlu0 %v1319, 96
      %v1397 = vpop.permute.xlu0 %1396
      %1398 = vrot.lane.b32.xlu0 %v1324, 96
      %v1399 = vpop.permute.xlu0 %1398
      %1400 = vrot.lane.b32.xlu0 %v1329, 96
      %v1401 = vpop.permute.xlu0 %1400
      %v1422 = vadd.f32 %v1224, %v1363
      %v1423 = vadd.f32 %v1229, %v1365
      %v1424 = vadd.f32 %v1234, %v1367
      %v1425 = vadd.f32 %v1239, %v1369
      %v1426 = vadd.f32 %v1244, %v1371
      %v1427 = vadd.f32 %v1249, %v1373
      %v1428 = vadd.f32 %v1254, %v1375
      %v1429 = vadd.f32 %v1259, %v1377
      %v1430 = vadd.f32 %v1264, %v1379
      %v1431 = vadd.f32 %v1269, %v1381
      %v1432 = vadd.f32 %v1274, %v1383
      %v1433 = vadd.f32 %v1279, %v1385
      %v1434 = vadd.f32 %v1284, %v1387
      %v1435 = vadd.f32 %v1289, %v1389
      %v1436 = vadd.f32 %v1294, %v1391
      %v1437 = vadd.f32 %v1299, %v1393
      %v1438 = vadd.f32 %v1304, %v1395
      %v1439 = vadd.f32 %v1309, %v1397
      %v1440 = vadd.f32 %v1314, %v1399
      %v1441 = vadd.f32 %v1319, %v1401
      %1444 = vrot.lane.b32.xlu0 %v1244, 64
      %v1445 = vpop.permute.xlu0 %1444
      %1446 = vrot.lane.b32.xlu0 %v1249, 64
      %v1447 = vpop.permute.xlu0 %1446
      %1448 = vrot.lane.b32.xlu0 %v1254, 64
      %v1449 = vpop.permute.xlu0 %1448
      %1450 = vrot.lane.b32.xlu0 %v1259, 64
      %v1451 = vpop.permute.xlu0 %1450
      %1452 = vrot.lane.b32.xlu0 %v1264, 64
      %v1453 = vpop.permute.xlu0 %1452
      %1454 = vrot.lane.b32.xlu0 %v1269, 64
      %v1455 = vpop.permute.xlu0 %1454
      %1456 = vrot.lane.b32.xlu0 %v1274, 64
      %v1457 = vpop.permute.xlu0 %1456
      %1458 = vrot.lane.b32.xlu0 %v1279, 64
      %v1459 = vpop.permute.xlu0 %1458
      %1460 = vrot.lane.b32.xlu0 %v1284, 64
      %v1461 = vpop.permute.xlu0 %1460
      %1462 = vrot.lane.b32.xlu0 %v1289, 64
      %v1463 = vpop.permute.xlu0 %1462
      %1464 = vrot.lane.b32.xlu0 %v1294, 64
      %v1465 = vpop.permute.xlu0 %1464
      %1466 = vrot.lane.b32.xlu0 %v1299, 64
      %v1467 = vpop.permute.xlu0 %1466
      %1468 = vrot.lane.b32.xlu0 %v1304, 64
      %v1469 = vpop.permute.xlu0 %1468
      %1470 = vrot.lane.b32.xlu0 %v1309, 64
      %v1471 = vpop.permute.xlu0 %1470
      %1472 = vrot.lane.b32.xlu0 %v1314, 64
      %v1473 = vpop.permute.xlu0 %1472
      %1474 = vrot.lane.b32.xlu0 %v1319, 64
      %v1475 = vpop.permute.xlu0 %1474
      %1476 = vrot.lane.b32.xlu0 %v1324, 64
      %v1477 = vpop.permute.xlu0 %1476
      %1478 = vrot.lane.b32.xlu0 %v1329, 64
      %v1479 = vpop.permute.xlu0 %1478
      %1480 = vrot.lane.b32.xlu0 %v1334, 64
      %v1481 = vpop.permute.xlu0 %1480
      %1482 = vrot.lane.b32.xlu0 %v1339, 64
      %v1483 = vpop.permute.xlu0 %1482
      %v1504 = vadd.f32 %v1422, %v1445
      %v1505 = vadd.f32 %v1423, %v1447
      %v1506 = vadd.f32 %v1424, %v1449
      %v1507 = vadd.f32 %v1425, %v1451
      %v1508 = vadd.f32 %v1426, %v1453
      %v1509 = vadd.f32 %v1427, %v1455
      %v1510 = vadd.f32 %v1428, %v1457
      %v1511 = vadd.f32 %v1429, %v1459
      %v1512 = vadd.f32 %v1430, %v1461
      %v1513 = vadd.f32 %v1431, %v1463
      %v1514 = vadd.f32 %v1432, %v1465
      %v1515 = vadd.f32 %v1433, %v1467
      %v1516 = vadd.f32 %v1434, %v1469
      %v1517 = vadd.f32 %v1435, %v1471
      %v1518 = vadd.f32 %v1436, %v1473
      %v1519 = vadd.f32 %v1437, %v1475
      %v1520 = vadd.f32 %v1438, %v1477
      %v1521 = vadd.f32 %v1439, %v1479
      %v1522 = vadd.f32 %v1440, %v1481
      %v1523 = vadd.f32 %v1441, %v1483
      %v1525 = vlaneseq
      %v1526 = vshrl.u32 %v1525, 7
      %v1527 = vsub.s32 0, %v1526
      %v1528 = vrot.slane %v1066, %v1527
      %v1530 = vadd.f32 %v1504, %v1528
      %v1531 = vadd.f32 %v1505, %v1528
      %v1532 = vadd.f32 %v1506, %v1528
      %v1533 = vadd.f32 %v1507, %v1528
      %v1534 = vadd.f32 %v1508, %v1528
      %v1535 = vadd.f32 %v1509, %v1528
      %v1536 = vadd.f32 %v1510, %v1528
      %v1537 = vadd.f32 %v1511, %v1528
      %v1538 = vadd.f32 %v1512, %v1528
      %v1539 = vadd.f32 %v1513, %v1528
      %v1540 = vadd.f32 %v1514, %v1528
      %v1541 = vadd.f32 %v1515, %v1528
      %v1542 = vadd.f32 %v1516, %v1528
      %v1543 = vadd.f32 %v1517, %v1528
      %v1544 = vadd.f32 %v1518, %v1528
      %v1545 = vadd.f32 %v1519, %v1528
      %v1546 = vadd.f32 %v1520, %v1528
      %v1547 = vadd.f32 %v1521, %v1528
      %v1548 = vadd.f32 %v1522, %v1528
      %v1549 = vadd.f32 %v1523, %v1528
      %v1551 = vlaneseq
      %v1552 = vshrl.u32 %v1551, 7
      %v1553 = vsub.s32 0, %v1552
      %v1554 = vrot.slane %v1067, %v1553
      %1555 = vrot.lane.b32.xlu0 %v1554, 96
      %v1556 = vpop.permute.xlu0 %1555
      %v1558 = vadd.f32 %v1244, %v1556
      %v1559 = vadd.f32 %v1249, %v1556
      %v1560 = vadd.f32 %v1254, %v1556
      %v1561 = vadd.f32 %v1259, %v1556
      %v1562 = vadd.f32 %v1264, %v1556
      %v1563 = vadd.f32 %v1269, %v1556
      %v1564 = vadd.f32 %v1274, %v1556
      %v1565 = vadd.f32 %v1279, %v1556
      %v1566 = vadd.f32 %v1284, %v1556
      %v1567 = vadd.f32 %v1289, %v1556
      %v1568 = vadd.f32 %v1294, %v1556
      %v1569 = vadd.f32 %v1299, %v1556
      %v1570 = vadd.f32 %v1304, %v1556
      %v1571 = vadd.f32 %v1309, %v1556
      %v1572 = vadd.f32 %v1314, %v1556
      %v1573 = vadd.f32 %v1319, %v1556
      %v1574 = vadd.f32 %v1324, %v1556
      %v1575 = vadd.f32 %v1329, %v1556
      %v1576 = vadd.f32 %v1334, %v1556
      %v1577 = vadd.f32 %v1339, %v1556
      %1598 = vrot.lane.b32.xlu0 %v1558, 32
      %v1599 = vpop.permute.xlu0 %1598
      %1600 = vrot.lane.b32.xlu0 %v1559, 32
      %v1601 = vpop.permute.xlu0 %1600
      %1602 = vrot.lane.b32.xlu0 %v1560, 32
      %v1603 = vpop.permute.xlu0 %1602
      %1604 = vrot.lane.b32.xlu0 %v1561, 32
      %v1605 = vpop.permute.xlu0 %1604
      %1606 = vrot.lane.b32.xlu0 %v1562, 32
      %v1607 = vpop.permute.xlu0 %1606
      %1608 = vrot.lane.b32.xlu0 %v1563, 32
      %v1609 = vpop.permute.xlu0 %1608
      %1610 = vrot.lane.b32.xlu0 %v1564, 32
      %v1611 = vpop.permute.xlu0 %1610
      %1612 = vrot.lane.b32.xlu0 %v1565, 32
      %v1613 = vpop.permute.xlu0 %1612
      %1614 = vrot.lane.b32.xlu0 %v1566, 32
      %v1615 = vpop.permute.xlu0 %1614
      %1616 = vrot.lane.b32.xlu0 %v1567, 32
      %v1617 = vpop.permute.xlu0 %1616
      %1618 = vrot.lane.b32.xlu0 %v1568, 32
      %v1619 = vpop.permute.xlu0 %1618
      %1620 = vrot.lane.b32.xlu0 %v1569, 32
      %v1621 = vpop.permute.xlu0 %1620
      %1622 = vrot.lane.b32.xlu0 %v1570, 32
      %v1623 = vpop.permute.xlu0 %1622
      %1624 = vrot.lane.b32.xlu0 %v1571, 32
      %v1625 = vpop.permute.xlu0 %1624
      %1626 = vrot.lane.b32.xlu0 %v1572, 32
      %v1627 = vpop.permute.xlu0 %1626
      %1628 = vrot.lane.b32.xlu0 %v1573, 32
      %v1629 = vpop.permute.xlu0 %1628
      %1630 = vrot.lane.b32.xlu0 %v1574, 32
      %v1631 = vpop.permute.xlu0 %1630
      %1632 = vrot.lane.b32.xlu0 %v1575, 32
      %v1633 = vpop.permute.xlu0 %1632
      %1634 = vrot.lane.b32.xlu0 %v1576, 32
      %v1635 = vpop.permute.xlu0 %1634
      %1636 = vrot.lane.b32.xlu0 %v1577, 32
      %v1637 = vpop.permute.xlu0 %1636
      %v1658 = vadd.f32 %v1530, %v1599
      %v1659 = vadd.f32 %v1531, %v1601
      %v1660 = vadd.f32 %v1532, %v1603
      %v1661 = vadd.f32 %v1533, %v1605
      %v1662 = vadd.f32 %v1534, %v1607
      %v1663 = vadd.f32 %v1535, %v1609
      %v1664 = vadd.f32 %v1536, %v1611
      %v1665 = vadd.f32 %v1537, %v1613
      %v1666 = vadd.f32 %v1538, %v1615
      %v1667 = vadd.f32 %v1539, %v1617
      %v1668 = vadd.f32 %v1540, %v1619
      %v1669 = vadd.f32 %v1541, %v1621
      %v1670 = vadd.f32 %v1542, %v1623
      %v1671 = vadd.f32 %v1543, %v1625
      %v1672 = vadd.f32 %v1544, %v1627
      %v1673 = vadd.f32 %v1545, %v1629
      %v1674 = vadd.f32 %v1546, %v1631
      %v1675 = vadd.f32 %v1547, %v1633
      %v1676 = vadd.f32 %v1548, %v1635
      %v1677 = vadd.f32 %v1549, %v1637
      %v1678 = vxor.u32 %v1530, 2147483648
      %v1679 = vxor.u32 %v1531, 2147483648
      %v1680 = vxor.u32 %v1532, 2147483648
      %v1681 = vxor.u32 %v1533, 2147483648
      %v1682 = vxor.u32 %v1534, 2147483648
      %v1683 = vxor.u32 %v1535, 2147483648
      %v1684 = vxor.u32 %v1536, 2147483648
      %v1685 = vxor.u32 %v1537, 2147483648
      %v1686 = vxor.u32 %v1538, 2147483648
      %v1687 = vxor.u32 %v1539, 2147483648
      %v1688 = vxor.u32 %v1540, 2147483648
      %v1689 = vxor.u32 %v1541, 2147483648
      %v1690 = vxor.u32 %v1542, 2147483648
      %v1691 = vxor.u32 %v1543, 2147483648
      %v1692 = vxor.u32 %v1544, 2147483648
      %v1693 = vxor.u32 %v1545, 2147483648
      %v1694 = vxor.u32 %v1546, 2147483648
      %v1695 = vxor.u32 %v1547, 2147483648
      %v1696 = vxor.u32 %v1548, 2147483648
      %v1697 = vxor.u32 %v1549, 2147483648
      %v1698 = vmul.f32 %v1678, 1.442695
      %v1699 = vpow.pop %v1698
      %v1700 = vmul.f32 %v1679, 1.442695
      %v1701 = vpow.pop %v1700
      %v1702 = vmul.f32 %v1680, 1.442695
      %v1703 = vpow.pop %v1702
      %v1704 = vmul.f32 %v1681, 1.442695
      %v1705 = vpow.pop %v1704
      %v1706 = vmul.f32 %v1682, 1.442695
      %v1707 = vpow.pop %v1706
      %v1708 = vmul.f32 %v1683, 1.442695
      %v1709 = vpow.pop %v1708
      %v1710 = vmul.f32 %v1684, 1.442695
      %v1711 = vpow.pop %v1710
      %v1712 = vmul.f32 %v1685, 1.442695
      %v1713 = vpow.pop %v1712
      %v1714 = vmul.f32 %v1686, 1.442695
      %v1715 = vpow.pop %v1714
      %v1716 = vmul.f32 %v1687, 1.442695
      %v1717 = vpow.pop %v1716
      %v1718 = vmul.f32 %v1688, 1.442695
      %v1719 = vpow.pop %v1718
      %v1720 = vmul.f32 %v1689, 1.442695
      %v1721 = vpow.pop %v1720
      %v1722 = vmul.f32 %v1690, 1.442695
      %v1723 = vpow.pop %v1722
      %v1724 = vmul.f32 %v1691, 1.442695
      %v1725 = vpow.pop %v1724
      %v1726 = vmul.f32 %v1692, 1.442695
      %v1727 = vpow.pop %v1726
      %v1728 = vmul.f32 %v1693, 1.442695
      %v1729 = vpow.pop %v1728
      %v1730 = vmul.f32 %v1694, 1.442695
      %v1731 = vpow.pop %v1730
      %v1732 = vmul.f32 %v1695, 1.442695
      %v1733 = vpow.pop %v1732
      %v1734 = vmul.f32 %v1696, 1.442695
      %v1735 = vpow.pop %v1734
      %v1736 = vmul.f32 %v1697, 1.442695
      %v1737 = vpow.pop %v1736
      %v1738 = vadd.f32 %v1699, 1.0
      %v1739 = vadd.f32 %v1701, 1.0
      %v1740 = vadd.f32 %v1703, 1.0
      %v1741 = vadd.f32 %v1705, 1.0
      %v1742 = vadd.f32 %v1707, 1.0
      %v1743 = vadd.f32 %v1709, 1.0
      %v1744 = vadd.f32 %v1711, 1.0
      %v1745 = vadd.f32 %v1713, 1.0
      %v1746 = vadd.f32 %v1715, 1.0
      %v1747 = vadd.f32 %v1717, 1.0
      %v1748 = vadd.f32 %v1719, 1.0
      %v1749 = vadd.f32 %v1721, 1.0
      %v1750 = vadd.f32 %v1723, 1.0
      %v1751 = vadd.f32 %v1725, 1.0
      %v1752 = vadd.f32 %v1727, 1.0
      %v1753 = vadd.f32 %v1729, 1.0
      %v1754 = vadd.f32 %v1731, 1.0
      %v1755 = vadd.f32 %v1733, 1.0
      %v1756 = vadd.f32 %v1735, 1.0
      %v1757 = vadd.f32 %v1737, 1.0
      %v1758 = vrcp.pop %v1738
      %v1759 = vmul.f32 1.0, %v1758
      %v1760 = vrcp.pop %v1739
      %v1761 = vmul.f32 1.0, %v1760
      %v1762 = vrcp.pop %v1740
      %v1763 = vmul.f32 1.0, %v1762
      %v1764 = vrcp.pop %v1741
      %v1765 = vmul.f32 1.0, %v1764
      %v1766 = vrcp.pop %v1742
      %v1767 = vmul.f32 1.0, %v1766
      %v1768 = vrcp.pop %v1743
      %v1769 = vmul.f32 1.0, %v1768
      %v1770 = vrcp.pop %v1744
      %v1771 = vmul.f32 1.0, %v1770
      %v1772 = vrcp.pop %v1745
      %v1773 = vmul.f32 1.0, %v1772
      %v1774 = vrcp.pop %v1746
      %v1775 = vmul.f32 1.0, %v1774
      %v1776 = vrcp.pop %v1747
      %v1777 = vmul.f32 1.0, %v1776
      %v1778 = vrcp.pop %v1748
      %v1779 = vmul.f32 1.0, %v1778
      %v1780 = vrcp.pop %v1749
      %v1781 = vmul.f32 1.0, %v1780
      %v1782 = vrcp.pop %v1750
      %v1783 = vmul.f32 1.0, %v1782
      %v1784 = vrcp.pop %v1751
      %v1785 = vmul.f32 1.0, %v1784
      %v1786 = vrcp.pop %v1752
      %v1787 = vmul.f32 1.0, %v1786
      %v1788 = vrcp.pop %v1753
      %v1789 = vmul.f32 1.0, %v1788
      %v1790 = vrcp.pop %v1754
      %v1791 = vmul.f32 1.0, %v1790
      %v1792 = vrcp.pop %v1755
      %v1793 = vmul.f32 1.0, %v1792
      %v1794 = vrcp.pop %v1756
      %v1795 = vmul.f32 1.0, %v1794
      %v1796 = vrcp.pop %v1757
      %v1797 = vmul.f32 1.0, %v1796
      %1818 = vrot.lane.b32.xlu0 %v1759, 112
      %v1819 = vpop.permute.xlu0 %1818
      %1820 = vrot.lane.b32.xlu0 %v1761, 112
      %v1821 = vpop.permute.xlu0 %1820
      %1822 = vrot.lane.b32.xlu0 %v1763, 112
      %v1823 = vpop.permute.xlu0 %1822
      %1824 = vrot.lane.b32.xlu0 %v1765, 112
      %v1825 = vpop.permute.xlu0 %1824
      %1826 = vrot.lane.b32.xlu0 %v1767, 112
      %v1827 = vpop.permute.xlu0 %1826
      %1828 = vrot.lane.b32.xlu0 %v1769, 112
      %v1829 = vpop.permute.xlu0 %1828
      %1830 = vrot.lane.b32.xlu0 %v1771, 112
      %v1831 = vpop.permute.xlu0 %1830
      %1832 = vrot.lane.b32.xlu0 %v1773, 112
      %v1833 = vpop.permute.xlu0 %1832
      %1834 = vrot.lane.b32.xlu0 %v1775, 112
      %v1835 = vpop.permute.xlu0 %1834
      %1836 = vrot.lane.b32.xlu0 %v1777, 112
      %v1837 = vpop.permute.xlu0 %1836
      %1838 = vrot.lane.b32.xlu0 %v1779, 112
      %v1839 = vpop.permute.xlu0 %1838
      %1840 = vrot.lane.b32.xlu0 %v1781, 112
      %v1841 = vpop.permute.xlu0 %1840
      %1842 = vrot.lane.b32.xlu0 %v1783, 112
      %v1843 = vpop.permute.xlu0 %1842
      %1844 = vrot.lane.b32.xlu0 %v1785, 112
      %v1845 = vpop.permute.xlu0 %1844
      %1846 = vrot.lane.b32.xlu0 %v1787, 112
      %v1847 = vpop.permute.xlu0 %1846
      %1848 = vrot.lane.b32.xlu0 %v1789, 112
      %v1849 = vpop.permute.xlu0 %1848
      %1850 = vrot.lane.b32.xlu0 %v1791, 112
      %v1851 = vpop.permute.xlu0 %1850
      %1852 = vrot.lane.b32.xlu0 %v1793, 112
      %v1853 = vpop.permute.xlu0 %1852
      %1854 = vrot.lane.b32.xlu0 %v1795, 112
      %v1855 = vpop.permute.xlu0 %1854
      %1856 = vrot.lane.b32.xlu0 %v1797, 112
      %v1857 = vpop.permute.xlu0 %1856
      %v1878 = vmul.f32 %v1658, %v1819
      %v1879 = vmul.f32 %v1659, %v1821
      %v1880 = vmul.f32 %v1660, %v1823
      %v1881 = vmul.f32 %v1661, %v1825
      %v1882 = vmul.f32 %v1662, %v1827
      %v1883 = vmul.f32 %v1663, %v1829
      %v1884 = vmul.f32 %v1664, %v1831
      %v1885 = vmul.f32 %v1665, %v1833
      %v1886 = vmul.f32 %v1666, %v1835
      %v1887 = vmul.f32 %v1667, %v1837
      %v1888 = vmul.f32 %v1668, %v1839
      %v1889 = vmul.f32 %v1669, %v1841
      %v1890 = vmul.f32 %v1670, %v1843
      %v1891 = vmul.f32 %v1671, %v1845
      %v1892 = vmul.f32 %v1672, %v1847
      %v1893 = vmul.f32 %v1673, %v1849
      %v1894 = vmul.f32 %v1674, %v1851
      %v1895 = vmul.f32 %v1675, %v1853
      %v1896 = vmul.f32 %v1676, %v1855
      %v1897 = vmul.f32 %v1677, %v1857
      %vm1898 = vcmask 130048
      %v1900 = vsel %vm1898, %v1878, 0
      %v1903 = vsel %vm1898, %v1879, 0
      %v1906 = vsel %vm1898, %v1880, 0
      %v1909 = vsel %vm1898, %v1881, 0
      %v1912 = vsel %vm1898, %v1882, 0
      %v1915 = vsel %vm1898, %v1883, 0
      %v1918 = vsel %vm1898, %v1884, 0
      %v1921 = vsel %vm1898, %v1885, 0
      %v1924 = vsel %vm1898, %v1886, 0
      %v1927 = vsel %vm1898, %v1887, 0
      %v1930 = vsel %vm1898, %v1888, 0
      %v1933 = vsel %vm1898, %v1889, 0
      %v1936 = vsel %vm1898, %v1890, 0
      %v1939 = vsel %vm1898, %v1891, 0
      %v1942 = vsel %vm1898, %v1892, 0
      %v1945 = vsel %vm1898, %v1893, 0
      %v1948 = vsel %vm1898, %v1894, 0
      %v1951 = vsel %vm1898, %v1895, 0
      %v1954 = vsel %vm1898, %v1896, 0
      %v1957 = vsel %vm1898, %v1897, 0
      %1959 = vmatprep.subr.mxu0 0.0
      %1960 = vmatpush1.msra.mxu0 %v1068
      %1961 = vmatprep.subr.mxu0 0.0
      %1962 = vmatpush1.msra.mxu0 %v1069
      %1963 = vmatprep.subr.mxu0 0.0
      %1964 = vmatpush1.msra.mxu0 0.0
      %1965 = vmatprep.subr.mxu0 0.0
      %1966 = vmatpush1.msra.mxu0 0.0
      %1967 = vmatprep.subr.mxu0 0.0
      %1968 = vmatpush1.msra.mxu0 0.0
      %1969 = vmatprep.subr.mxu0 0.0
      %1970 = vmatpush1.msra.mxu0 0.0
      %1971 = vmatprep.subr.mxu0 0.0
      %1972 = vmatpush1.msra.mxu0 0.0
      %1973 = vmatprep.subr.mxu0 0.0
      %1974 = vmatpush1.msra.mxu0 0.0
      %1975 = vmatprep.subr.mxu0 0.0
      %1976 = vmatpush1.msra.mxu0 0.0
      %1977 = vmatprep.subr.mxu0 0.0
      %1978 = vmatpush1.msra.mxu0 0.0
      %1979 = vmatprep.subr.mxu0 0.0
      %1980 = vmatpush1.msra.mxu0 0.0
      %1981 = vmatprep.subr.mxu0 0.0
      %1982 = vmatpush1.msra.mxu0 0.0
      %1983 = vmatprep.subr.mxu0 0.0
      %1984 = vmatpush1.msra.mxu0 0.0
      %1985 = vmatprep.subr.mxu0 0.0
      %1986 = vmatpush1.msra.mxu0 0.0
      %1987 = vmatprep.subr.mxu0 0.0
      %1988 = vmatpush1.msra.mxu0 0.0
      %1989 = vmatprep.subr.mxu0 0.0
      %1990 = vmatpush1.msra.mxu0 0.0
      %1991 = vmatprep.subr.mxu0 0.0
      %1992 = vmatpush1.msra.mxu0 0.0
      %1993 = vmatprep.subr.mxu0 0.0
      %1994 = vmatpush1.msra.mxu0 0.0
      %1995 = vmatprep.subr.mxu0 0.0
      %1996 = vmatpush1.msra.mxu0 0.0
      %1997 = vmatprep.subr.mxu0 0.0
      %1998 = vmatpush1.msra.mxu0 0.0
      %1999 = vmatprep.subr.mxu0 0.0
      %2000 = vmatpush1.msra.mxu0 0.0
      %2001 = vmatprep.subr.mxu0 0.0
      %2002 = vmatpush1.msra.mxu0 0.0
      %2003 = vmatprep.subr.mxu0 0.0
      %2004 = vmatpush1.msra.mxu0 0.0
      %2005 = vmatprep.subr.mxu0 0.0
      %2006 = vmatpush1.msra.mxu0 0.0
      %2007 = vmatprep.subr.mxu0 0.0
      %2008 = vmatpush1.msra.mxu0 0.0
      %2009 = vmatprep.subr.mxu0 0.0
      %2010 = vmatpush1.msra.mxu0 0.0
      %2011 = vmatprep.subr.mxu0 0.0
      %2012 = vmatpush1.msra.mxu0 0.0
      %2013 = vmatprep.subr.mxu0 0.0
      %2014 = vmatpush1.msra.mxu0 0.0
      %2015 = vmatprep.subr.mxu0 0.0
      %2016 = vmatpush1.msra.mxu0 0.0
      %2017 = vmatprep.subr.mxu0 0.0
      %2018 = vmatpush1.msra.mxu0 0.0
      %2019 = vmatprep.subr.mxu0 0.0
      %2020 = vmatpush1.msra.mxu0 0.0
      %2021 = vmatprep.subr.mxu0 0.0
      %2022 = vmatpush1.msra.mxu0 0.0
      %2023 = vmatprep.mubr.f32.mxu0 0.0
      %2024 = vmatmul.mubr.f32.gmra.mrb[0].mxu0 %v1900
      %v2025 = vpop.f32.mrb[0].mxu0
      %v2026 = vadd.f32 0.0, %v2025
      %v2027 = vpop.f32.mrb[0].mxu0
      %2028 = vmatprep.mubr.f32.mxu0 0.0
      %2029 = vmatmul.mubr.f32.gmra.mrb[0].mxu0 %v1903
      %v2030 = vpop.f32.mrb[0].mxu0
      %v2031 = vadd.f32 0.0, %v2030
      %v2032 = vpop.f32.mrb[0].mxu0
      %2033 = vmatprep.mubr.f32.mxu0 0.0
      %2034 = vmatmul.mubr.f32.gmra.mrb[0].mxu0 %v1906
      %v2035 = vpop.f32.mrb[0].mxu0
      %v2036 = vadd.f32 0.0, %v2035
      %v2037 = vpop.f32.mrb[0].mxu0
      %2038 = vmatprep.mubr.f32.mxu0 0.0
      %2039 = vmatmul.mubr.f32.gmra.mrb[0].mxu0 %v1909
      %v2040 = vpop.f32.mrb[0].mxu0
      %v2041 = vadd.f32 0.0, %v2040
      %v2042 = vpop.f32.mrb[0].mxu0
      %2043 = vmatprep.mubr.f32.mxu0 0.0
      %2044 = vmatmul.mubr.f32.gmra.mrb[0].mxu0 %v1912
      %v2045 = vpop.f32.mrb[0].mxu0
      %v2046 = vadd.f32 0.0, %v2045
      %v2047 = vpop.f32.mrb[0].mxu0
      %2048 = vmatprep.mubr.f32.mxu0 0.0
      %2049 = vmatmul.mubr.f32.gmra.mrb[0].mxu0 %v1915
      %v2050 = vpop.f32.mrb[0].mxu0
      %v2051 = vadd.f32 0.0, %v2050
      %v2052 = vpop.f32.mrb[0].mxu0
      %2053 = vmatprep.mubr.f32.mxu0 0.0
      %2054 = vmatmul.mubr.f32.gmra.mrb[0].mxu0 %v1918
      %v2055 = vpop.f32.mrb[0].mxu0
      %v2056 = vadd.f32 0.0, %v2055
      %v2057 = vpop.f32.mrb[0].mxu0
      %2058 = vmatprep.mubr.f32.mxu0 0.0
      %2059 = vmatmul.mubr.f32.gmra.mrb[0].mxu0 %v1921
      %v2060 = vpop.f32.mrb[0].mxu0
      %v2061 = vadd.f32 0.0, %v2060
      %v2062 = vpop.f32.mrb[0].mxu0
      %2063 = vmatprep.mubr.f32.mxu0 0.0
      %2064 = vmatmul.mubr.f32.gmra.mrb[0].mxu0 %v1924
      %v2065 = vpop.f32.mrb[0].mxu0
      %v2066 = vadd.f32 0.0, %v2065
      %v2067 = vpop.f32.mrb[0].mxu0
      %2068 = vmatprep.mubr.f32.mxu0 0.0
      %2069 = vmatmul.mubr.f32.gmra.mrb[0].mxu0 %v1927
      %v2070 = vpop.f32.mrb[0].mxu0
      %v2071 = vadd.f32 0.0, %v2070
      %v2072 = vpop.f32.mrb[0].mxu0
      %2073 = vmatprep.mubr.f32.mxu0 0.0
      %2074 = vmatmul.mubr.f32.gmra.mrb[0].mxu0 %v1930
      %v2075 = vpop.f32.mrb[0].mxu0
      %v2076 = vadd.f32 0.0, %v2075
      %v2077 = vpop.f32.mrb[0].mxu0
      %2078 = vmatprep.mubr.f32.mxu0 0.0
      %2079 = vmatmul.mubr.f32.gmra.mrb[0].mxu0 %v1933
      %v2080 = vpop.f32.mrb[0].mxu0
      %v2081 = vadd.f32 0.0, %v2080
      %v2082 = vpop.f32.mrb[0].mxu0
      %2083 = vmatprep.mubr.f32.mxu0 0.0
      %2084 = vmatmul.mubr.f32.gmra.mrb[0].mxu0 %v1936
      %v2085 = vpop.f32.mrb[0].mxu0
      %v2086 = vadd.f32 0.0, %v2085
      %v2087 = vpop.f32.mrb[0].mxu0
      %2088 = vmatprep.mubr.f32.mxu0 0.0
      %2089 = vmatmul.mubr.f32.gmra.mrb[0].mxu0 %v1939
      %v2090 = vpop.f32.mrb[0].mxu0
      %v2091 = vadd.f32 0.0, %v2090
      %v2092 = vpop.f32.mrb[0].mxu0
      %2093 = vmatprep.mubr.f32.mxu0 0.0
      %2094 = vmatmul.mubr.f32.gmra.mrb[0].mxu0 %v1942
      %v2095 = vpop.f32.mrb[0].mxu0
      %v2096 = vadd.f32 0.0, %v2095
      %v2097 = vpop.f32.mrb[0].mxu0
      %2098 = vmatprep.mubr.f32.mxu0 0.0
      %2099 = vmatmul.mubr.f32.gmra.mrb[0].mxu0 %v1945
      %v2100 = vpop.f32.mrb[0].mxu0
      %v2101 = vadd.f32 0.0, %v2100
      %v2102 = vpop.f32.mrb[0].mxu0
      %2103 = vmatprep.mubr.f32.mxu0 0.0
      %2104 = vmatmul.mubr.f32.gmra.mrb[0].mxu0 %v1948
      %v2105 = vpop.f32.mrb[0].mxu0
      %v2106 = vadd.f32 0.0, %v2105
      %v2107 = vpop.f32.mrb[0].mxu0
      %2108 = vmatprep.mubr.f32.mxu0 0.0
      %2109 = vmatmul.mubr.f32.gmra.mrb[0].mxu0 %v1951
      %v2110 = vpop.f32.mrb[0].mxu0
      %v2111 = vadd.f32 0.0, %v2110
      %v2112 = vpop.f32.mrb[0].mxu0
      %2113 = vmatprep.mubr.f32.mxu0 0.0
      %2114 = vmatmul.mubr.f32.gmra.mrb[0].mxu0 %v1954
      %v2115 = vpop.f32.mrb[0].mxu0
      %v2116 = vadd.f32 0.0, %v2115
      %v2117 = vpop.f32.mrb[0].mxu0
      %2118 = vmatprep.mubr.f32.mxu0 0.0
      %2119 = vmatmul.mubr.f32.gmra.mrb[0].mxu0 %v1957
      %v2120 = vpop.f32.mrb[0].mxu0
      %v2121 = vadd.f32 0.0, %v2120
      %v2122 = vpop.f32.mrb[0].mxu0
      %2123 = vdwg.mxu0
      %v2125 = vlaneseq
      %v2126 = vshrl.u32 %v2125, 7
      %v2127 = vsub.s32 0, %v2126
      %v2128 = vrot.slane %v1070, %v2127
      %v2130 = vadd.f32 %v2026, %v2128
      %v2131 = vadd.f32 %v2031, %v2128
      %v2132 = vadd.f32 %v2036, %v2128
      %v2133 = vadd.f32 %v2041, %v2128
      %v2134 = vadd.f32 %v2046, %v2128
      %v2135 = vadd.f32 %v2051, %v2128
      %v2136 = vadd.f32 %v2056, %v2128
      %v2137 = vadd.f32 %v2061, %v2128
      %v2138 = vadd.f32 %v2066, %v2128
      %v2139 = vadd.f32 %v2071, %v2128
      %v2140 = vadd.f32 %v2076, %v2128
      %v2141 = vadd.f32 %v2081, %v2128
      %v2142 = vadd.f32 %v2086, %v2128
      %v2143 = vadd.f32 %v2091, %v2128
      %v2144 = vadd.f32 %v2096, %v2128
      %v2145 = vadd.f32 %v2101, %v2128
      %v2146 = vadd.f32 %v2106, %v2128
      %v2147 = vadd.f32 %v2111, %v2128
      %v2148 = vadd.f32 %v2116, %v2128
      %v2149 = vadd.f32 %v2121, %v2128
      %2170 = vrot.lane.b32.xlu0 %v2026, 120
      %v2171 = vpop.permute.xlu0 %2170
      %2172 = vrot.lane.b32.xlu0 %v2031, 120
      %v2173 = vpop.permute.xlu0 %2172
      %2174 = vrot.lane.b32.xlu0 %v2036, 120
      %v2175 = vpop.permute.xlu0 %2174
      %2176 = vrot.lane.b32.xlu0 %v2041, 120
      %v2177 = vpop.permute.xlu0 %2176
      %2178 = vrot.lane.b32.xlu0 %v2046, 120
      %v2179 = vpop.permute.xlu0 %2178
      %2180 = vrot.lane.b32.xlu0 %v2051, 120
      %v2181 = vpop.permute.xlu0 %2180
      %2182 = vrot.lane.b32.xlu0 %v2056, 120
      %v2183 = vpop.permute.xlu0 %2182
      %2184 = vrot.lane.b32.xlu0 %v2061, 120
      %v2185 = vpop.permute.xlu0 %2184
      %2186 = vrot.lane.b32.xlu0 %v2066, 120
      %v2187 = vpop.permute.xlu0 %2186
      %2188 = vrot.lane.b32.xlu0 %v2071, 120
      %v2189 = vpop.permute.xlu0 %2188
      %2190 = vrot.lane.b32.xlu0 %v2076, 120
      %v2191 = vpop.permute.xlu0 %2190
      %2192 = vrot.lane.b32.xlu0 %v2081, 120
      %v2193 = vpop.permute.xlu0 %2192
      %2194 = vrot.lane.b32.xlu0 %v2086, 120
      %v2195 = vpop.permute.xlu0 %2194
      %2196 = vrot.lane.b32.xlu0 %v2091, 120
      %v2197 = vpop.permute.xlu0 %2196
      %2198 = vrot.lane.b32.xlu0 %v2096, 120
      %v2199 = vpop.permute.xlu0 %2198
      %2200 = vrot.lane.b32.xlu0 %v2101, 120
      %v2201 = vpop.permute.xlu0 %2200
      %2202 = vrot.lane.b32.xlu0 %v2106, 120
      %v2203 = vpop.permute.xlu0 %2202
      %2204 = vrot.lane.b32.xlu0 %v2111, 120
      %v2205 = vpop.permute.xlu0 %2204
      %2206 = vrot.lane.b32.xlu0 %v2116, 120
      %v2207 = vpop.permute.xlu0 %2206
      %2208 = vrot.lane.b32.xlu0 %v2121, 120
      %v2209 = vpop.permute.xlu0 %2208
      %v2230 = vcombine.low %v2171, %v2179
      %v2231 = vcombine.high %v2171, %v2179
      %v2233 = vunpack.c.l.s4 1983009808
      %v2234 = vunpack.c.0.s8 %v2233
      %v2235 = vlaneseq
      %v2236 = vshrl.u32 %v2235, 7
      %v2237 = vsub.s32 %v2234, %v2236
      %v2238 = vrot.slane %v2230, %v2237
      %v2240 = vunpack.c.l.s4 1983009808
      %v2241 = vunpack.c.0.s8 %v2240
      %v2242 = vlaneseq
      %v2243 = vshrl.u32 %v2242, 7
      %v2244 = vsub.s32 %v2241, %v2243
      %v2245 = vrot.slane %v2231, %v2244
      %v2246 = vcombine.low %v2175, %v2183
      %v2247 = vcombine.high %v2175, %v2183
      %v2249 = vunpack.c.l.s4 1983009808
      %v2250 = vunpack.c.0.s8 %v2249
      %v2251 = vlaneseq
      %v2252 = vshrl.u32 %v2251, 7
      %v2253 = vsub.s32 %v2250, %v2252
      %v2254 = vrot.slane %v2246, %v2253
      %v2256 = vunpack.c.l.s4 1983009808
      %v2257 = vunpack.c.0.s8 %v2256
      %v2258 = vlaneseq
      %v2259 = vshrl.u32 %v2258, 7
      %v2260 = vsub.s32 %v2257, %v2259
      %v2261 = vrot.slane %v2247, %v2260
      %v2262 = vcombine.low %v2187, %v2195
      %v2263 = vcombine.high %v2187, %v2195
      %v2265 = vunpack.c.l.s4 1983009808
      %v2266 = vunpack.c.0.s8 %v2265
      %v2267 = vlaneseq
      %v2268 = vshrl.u32 %v2267, 7
      %v2269 = vsub.s32 %v2266, %v2268
      %v2270 = vrot.slane %v2262, %v2269
      %v2272 = vunpack.c.l.s4 1983009808
      %v2273 = vunpack.c.0.s8 %v2272
      %v2274 = vlaneseq
      %v2275 = vshrl.u32 %v2274, 7
      %v2276 = vsub.s32 %v2273, %v2275
      %v2277 = vrot.slane %v2263, %v2276
      %v2278 = vcombine.low %v2191, %v2199
      %v2279 = vcombine.high %v2191, %v2199
      %v2281 = vunpack.c.l.s4 1983009808
      %v2282 = vunpack.c.0.s8 %v2281
      %v2283 = vlaneseq
      %v2284 = vshrl.u32 %v2283, 7
      %v2285 = vsub.s32 %v2282, %v2284
      %v2286 = vrot.slane %v2278, %v2285
      %v2288 = vunpack.c.l.s4 1983009808
      %v2289 = vunpack.c.0.s8 %v2288
      %v2290 = vlaneseq
      %v2291 = vshrl.u32 %v2290, 7
      %v2292 = vsub.s32 %v2289, %v2291
      %v2293 = vrot.slane %v2279, %v2292
      %v2294 = vcombine.low %v2238, %v2254
      %v2295 = vcombine.high %v2238, %v2254
      %v2297 = vunpack.c.l.s4 1934713408
      %v2298 = vunpack.c.0.s8 %v2297
      %v2299 = vlaneseq
      %v2300 = vshrl.u32 %v2299, 7
      %v2301 = vsub.s32 %v2298, %v2300
      %v2302 = vrot.slane %v2294, %v2301
      %v2304 = vunpack.c.l.s4 1934713408
      %v2305 = vunpack.c.0.s8 %v2304
      %v2306 = vlaneseq
      %v2307 = vshrl.u32 %v2306, 7
      %v2308 = vsub.s32 %v2305, %v2307
      %v2309 = vrot.slane %v2295, %v2308
      %v2310 = vcombine.low %v2245, %v2261
      %v2311 = vcombine.high %v2245, %v2261
      %v2313 = vunpack.c.l.s4 1934713408
      %v2314 = vunpack.c.0.s8 %v2313
      %v2315 = vlaneseq
      %v2316 = vshrl.u32 %v2315, 7
      %v2317 = vsub.s32 %v2314, %v2316
      %v2318 = vrot.slane %v2310, %v2317
      %v2320 = vunpack.c.l.s4 1934713408
      %v2321 = vunpack.c.0.s8 %v2320
      %v2322 = vlaneseq
      %v2323 = vshrl.u32 %v2322, 7
      %v2324 = vsub.s32 %v2321, %v2323
      %v2325 = vrot.slane %v2311, %v2324
      %v2326 = vcombine.low %v2270, %v2286
      %v2327 = vcombine.high %v2270, %v2286
      %v2329 = vunpack.c.l.s4 1934713408
      %v2330 = vunpack.c.0.s8 %v2329
      %v2331 = vlaneseq
      %v2332 = vshrl.u32 %v2331, 7
      %v2333 = vsub.s32 %v2330, %v2332
      %v2334 = vrot.slane %v2326, %v2333
      %v2336 = vunpack.c.l.s4 1934713408
      %v2337 = vunpack.c.0.s8 %v2336
      %v2338 = vlaneseq
      %v2339 = vshrl.u32 %v2338, 7
      %v2340 = vsub.s32 %v2337, %v2339
      %v2341 = vrot.slane %v2327, %v2340
      %v2342 = vcombine.low %v2277, %v2293
      %v2343 = vcombine.high %v2277, %v2293
      %v2345 = vunpack.c.l.s4 1934713408
      %v2346 = vunpack.c.0.s8 %v2345
      %v2347 = vlaneseq
      %v2348 = vshrl.u32 %v2347, 7
      %v2349 = vsub.s32 %v2346, %v2348
      %v2350 = vrot.slane %v2342, %v2349
      %v2352 = vunpack.c.l.s4 1934713408
      %v2353 = vunpack.c.0.s8 %v2352
      %v2354 = vlaneseq
      %v2355 = vshrl.u32 %v2354, 7
      %v2356 = vsub.s32 %v2353, %v2355
      %v2357 = vrot.slane %v2343, %v2356
      %v2358 = vcombine.low %v2302, %v2334
      %v2359 = vcombine.high %v2302, %v2334
      %v2360 = vcombine.low %v2309, %v2341
      %v2361 = vcombine.high %v2309, %v2341
      %v2362 = vcombine.low %v2318, %v2350
      %v2363 = vcombine.high %v2318, %v2350
      %v2364 = vcombine.low %v2325, %v2357
      %v2365 = vcombine.high %v2325, %v2357
      %v2366 = vcombine.high %v2203, 0.0
      %v2368 = vunpack.c.l.s4 1983009808
      %v2369 = vunpack.c.0.s8 %v2368
      %v2370 = vlaneseq
      %v2371 = vshrl.u32 %v2370, 7
      %v2372 = vsub.s32 %v2369, %v2371
      %v2373 = vrot.slane %v2203, %v2372
      %v2375 = vunpack.c.l.s4 1983009808
      %v2376 = vunpack.c.0.s8 %v2375
      %v2377 = vlaneseq
      %v2378 = vshrl.u32 %v2377, 7
      %v2379 = vsub.s32 %v2376, %v2378
      %v2380 = vrot.slane %v2366, %v2379
      %v2381 = vcombine.high %v2207, 0.0
      %v2383 = vunpack.c.l.s4 1983009808
      %v2384 = vunpack.c.0.s8 %v2383
      %v2385 = vlaneseq
      %v2386 = vshrl.u32 %v2385, 7
      %v2387 = vsub.s32 %v2384, %v2386
      %v2388 = vrot.slane %v2207, %v2387
      %v2390 = vunpack.c.l.s4 1983009808
      %v2391 = vunpack.c.0.s8 %v2390
      %v2392 = vlaneseq
      %v2393 = vshrl.u32 %v2392, 7
      %v2394 = vsub.s32 %v2391, %v2393
      %v2395 = vrot.slane %v2381, %v2394
      %v2396 = vcombine.low %v2373, %v2388
      %v2397 = vcombine.high %v2373, %v2388
      %v2399 = vunpack.c.l.s4 1934713408
      %v2400 = vunpack.c.0.s8 %v2399
      %v2401 = vlaneseq
      %v2402 = vshrl.u32 %v2401, 7
      %v2403 = vsub.s32 %v2400, %v2402
      %v2404 = vrot.slane %v2396, %v2403
      %v2406 = vunpack.c.l.s4 1934713408
      %v2407 = vunpack.c.0.s8 %v2406
      %v2408 = vlaneseq
      %v2409 = vshrl.u32 %v2408, 7
      %v2410 = vsub.s32 %v2407, %v2409
      %v2411 = vrot.slane %v2397, %v2410
      %v2412 = vcombine.low %v2380, %v2395
      %v2413 = vcombine.high %v2380, %v2395
      %v2415 = vunpack.c.l.s4 1934713408
      %v2416 = vunpack.c.0.s8 %v2415
      %v2417 = vlaneseq
      %v2418 = vshrl.u32 %v2417, 7
      %v2419 = vsub.s32 %v2416, %v2418
      %v2420 = vrot.slane %v2412, %v2419
      %v2422 = vunpack.c.l.s4 1934713408
      %v2423 = vunpack.c.0.s8 %v2422
      %v2424 = vlaneseq
      %v2425 = vshrl.u32 %v2424, 7
      %v2426 = vsub.s32 %v2423, %v2425
      %v2427 = vrot.slane %v2413, %v2426
      %v2428 = vcombine.high %v2404, 0.0
      %v2429 = vcombine.high %v2411, 0.0
      %v2430 = vcombine.high %v2420, 0.0
      %v2431 = vcombine.high %v2427, 0.0
      %v2432 = vcombine.low %v2173, %v2181
      %v2433 = vcombine.high %v2173, %v2181
      %v2435 = vunpack.c.l.s4 1983009808
      %v2436 = vunpack.c.0.s8 %v2435
      %v2437 = vlaneseq
      %v2438 = vshrl.u32 %v2437, 7
      %v2439 = vsub.s32 %v2436, %v2438
      %v2440 = vrot.slane %v2432, %v2439
      %v2442 = vunpack.c.l.s4 1983009808
      %v2443 = vunpack.c.0.s8 %v2442
      %v2444 = vlaneseq
      %v2445 = vshrl.u32 %v2444, 7
      %v2446 = vsub.s32 %v2443, %v2445
      %v2447 = vrot.slane %v2433, %v2446
      %v2448 = vcombine.low %v2177, %v2185
      %v2449 = vcombine.high %v2177, %v2185
      %v2451 = vunpack.c.l.s4 1983009808
      %v2452 = vunpack.c.0.s8 %v2451
      %v2453 = vlaneseq
      %v2454 = vshrl.u32 %v2453, 7
      %v2455 = vsub.s32 %v2452, %v2454
      %v2456 = vrot.slane %v2448, %v2455
      %v2458 = vunpack.c.l.s4 1983009808
      %v2459 = vunpack.c.0.s8 %v2458
      %v2460 = vlaneseq
      %v2461 = vshrl.u32 %v2460, 7
      %v2462 = vsub.s32 %v2459, %v2461
      %v2463 = vrot.slane %v2449, %v2462
      %v2464 = vcombine.low %v2189, %v2197
      %v2465 = vcombine.high %v2189, %v2197
      %v2467 = vunpack.c.l.s4 1983009808
      %v2468 = vunpack.c.0.s8 %v2467
      %v2469 = vlaneseq
      %v2470 = vshrl.u32 %v2469, 7
      %v2471 = vsub.s32 %v2468, %v2470
      %v2472 = vrot.slane %v2464, %v2471
      %v2474 = vunpack.c.l.s4 1983009808
      %v2475 = vunpack.c.0.s8 %v2474
      %v2476 = vlaneseq
      %v2477 = vshrl.u32 %v2476, 7
      %v2478 = vsub.s32 %v2475, %v2477
      %v2479 = vrot.slane %v2465, %v2478
      %v2480 = vcombine.low %v2193, %v2201
      %v2481 = vcombine.high %v2193, %v2201
      %v2483 = vunpack.c.l.s4 1983009808
      %v2484 = vunpack.c.0.s8 %v2483
      %v2485 = vlaneseq
      %v2486 = vshrl.u32 %v2485, 7
      %v2487 = vsub.s32 %v2484, %v2486
      %v2488 = vrot.slane %v2480, %v2487
      %v2490 = vunpack.c.l.s4 1983009808
      %v2491 = vunpack.c.0.s8 %v2490
      %v2492 = vlaneseq
      %v2493 = vshrl.u32 %v2492, 7
      %v2494 = vsub.s32 %v2491, %v2493
      %v2495 = vrot.slane %v2481, %v2494
      %v2496 = vcombine.low %v2440, %v2456
      %v2497 = vcombine.high %v2440, %v2456
      %v2499 = vunpack.c.l.s4 1934713408
      %v2500 = vunpack.c.0.s8 %v2499
      %v2501 = vlaneseq
      %v2502 = vshrl.u32 %v2501, 7
      %v2503 = vsub.s32 %v2500, %v2502
      %v2504 = vrot.slane %v2496, %v2503
      %v2506 = vunpack.c.l.s4 1934713408
      %v2507 = vunpack.c.0.s8 %v2506
      %v2508 = vlaneseq
      %v2509 = vshrl.u32 %v2508, 7
      %v2510 = vsub.s32 %v2507, %v2509
      %v2511 = vrot.slane %v2497, %v2510
      %v2512 = vcombine.low %v2447, %v2463
      %v2513 = vcombine.high %v2447, %v2463
      %v2515 = vunpack.c.l.s4 1934713408
      %v2516 = vunpack.c.0.s8 %v2515
      %v2517 = vlaneseq
      %v2518 = vshrl.u32 %v2517, 7
      %v2519 = vsub.s32 %v2516, %v2518
      %v2520 = vrot.slane %v2512, %v2519
      %v2522 = vunpack.c.l.s4 1934713408
      %v2523 = vunpack.c.0.s8 %v2522
      %v2524 = vlaneseq
      %v2525 = vshrl.u32 %v2524, 7
      %v2526 = vsub.s32 %v2523, %v2525
      %v2527 = vrot.slane %v2513, %v2526
      %v2528 = vcombine.low %v2472, %v2488
      %v2529 = vcombine.high %v2472, %v2488
      %v2531 = vunpack.c.l.s4 1934713408
      %v2532 = vunpack.c.0.s8 %v2531
      %v2533 = vlaneseq
      %v2534 = vshrl.u32 %v2533, 7
      %v2535 = vsub.s32 %v2532, %v2534
      %v2536 = vrot.slane %v2528, %v2535
      %v2538 = vunpack.c.l.s4 1934713408
      %v2539 = vunpack.c.0.s8 %v2538
      %v2540 = vlaneseq
      %v2541 = vshrl.u32 %v2540, 7
      %v2542 = vsub.s32 %v2539, %v2541
      %v2543 = vrot.slane %v2529, %v2542
      %v2544 = vcombine.low %v2479, %v2495
      %v2545 = vcombine.high %v2479, %v2495
      %v2547 = vunpack.c.l.s4 1934713408
      %v2548 = vunpack.c.0.s8 %v2547
      %v2549 = vlaneseq
      %v2550 = vshrl.u32 %v2549, 7
      %v2551 = vsub.s32 %v2548, %v2550
      %v2552 = vrot.slane %v2544, %v2551
      %v2554 = vunpack.c.l.s4 1934713408
      %v2555 = vunpack.c.0.s8 %v2554
      %v2556 = vlaneseq
      %v2557 = vshrl.u32 %v2556, 7
      %v2558 = vsub.s32 %v2555, %v2557
      %v2559 = vrot.slane %v2545, %v2558
      %v2560 = vcombine.low %v2504, %v2536
      %v2561 = vcombine.high %v2504, %v2536
      %v2562 = vcombine.low %v2511, %v2543
      %v2563 = vcombine.high %v2511, %v2543
      %v2564 = vcombine.low %v2520, %v2552
      %v2565 = vcombine.high %v2520, %v2552
      %v2566 = vcombine.low %v2527, %v2559
      %v2567 = vcombine.high %v2527, %v2559
      %v2568 = vcombine.high %v2205, 0.0
      %v2570 = vunpack.c.l.s4 1983009808
      %v2571 = vunpack.c.0.s8 %v2570
      %v2572 = vlaneseq
      %v2573 = vshrl.u32 %v2572, 7
      %v2574 = vsub.s32 %v2571, %v2573
      %v2575 = vrot.slane %v2205, %v2574
      %v2577 = vunpack.c.l.s4 1983009808
      %v2578 = vunpack.c.0.s8 %v2577
      %v2579 = vlaneseq
      %v2580 = vshrl.u32 %v2579, 7
      %v2581 = vsub.s32 %v2578, %v2580
      %v2582 = vrot.slane %v2568, %v2581
      %v2583 = vcombine.high %v2209, 0.0
      %v2585 = vunpack.c.l.s4 1983009808
      %v2586 = vunpack.c.0.s8 %v2585
      %v2587 = vlaneseq
      %v2588 = vshrl.u32 %v2587, 7
      %v2589 = vsub.s32 %v2586, %v2588
      %v2590 = vrot.slane %v2209, %v2589
      %v2592 = vunpack.c.l.s4 1983009808
      %v2593 = vunpack.c.0.s8 %v2592
      %v2594 = vlaneseq
      %v2595 = vshrl.u32 %v2594, 7
      %v2596 = vsub.s32 %v2593, %v2595
      %v2597 = vrot.slane %v2583, %v2596
      %v2598 = vcombine.low %v2575, %v2590
      %v2599 = vcombine.high %v2575, %v2590
      %v2601 = vunpack.c.l.s4 1934713408
      %v2602 = vunpack.c.0.s8 %v2601
      %v2603 = vlaneseq
      %v2604 = vshrl.u32 %v2603, 7
      %v2605 = vsub.s32 %v2602, %v2604
      %v2606 = vrot.slane %v2598, %v2605
      %v2608 = vunpack.c.l.s4 1934713408
      %v2609 = vunpack.c.0.s8 %v2608
      %v2610 = vlaneseq
      %v2611 = vshrl.u32 %v2610, 7
      %v2612 = vsub.s32 %v2609, %v2611
      %v2613 = vrot.slane %v2599, %v2612
      %v2614 = vcombine.low %v2582, %v2597
      %v2615 = vcombine.high %v2582, %v2597
      %v2617 = vunpack.c.l.s4 1934713408
      %v2618 = vunpack.c.0.s8 %v2617
      %v2619 = vlaneseq
      %v2620 = vshrl.u32 %v2619, 7
      %v2621 = vsub.s32 %v2618, %v2620
      %v2622 = vrot.slane %v2614, %v2621
      %v2624 = vunpack.c.l.s4 1934713408
      %v2625 = vunpack.c.0.s8 %v2624
      %v2626 = vlaneseq
      %v2627 = vshrl.u32 %v2626, 7
      %v2628 = vsub.s32 %v2625, %v2627
      %v2629 = vrot.slane %v2615, %v2628
      %v2630 = vcombine.high %v2606, 0.0
      %v2631 = vcombine.high %v2613, 0.0
      %v2632 = vcombine.high %v2622, 0.0
      %v2633 = vcombine.high %v2629, 0.0
      %v2634 = vcombine.low %v2358, %v2360
      %v2635 = vcombine.high %v2358, %v2360
      %v2637 = vunpack.c.l.s4 1983009808
      %v2638 = vunpack.c.0.s8 %v2637
      %v2639 = vlaneseq
      %v2640 = vshrl.u32 %v2639, 7
      %v2641 = vsub.s32 %v2638, %v2640
      %v2642 = vrot.slane %v2634, %v2641
      %v2644 = vunpack.c.l.s4 1983009808
      %v2645 = vunpack.c.0.s8 %v2644
      %v2646 = vlaneseq
      %v2647 = vshrl.u32 %v2646, 7
      %v2648 = vsub.s32 %v2645, %v2647
      %v2649 = vrot.slane %v2635, %v2648
      %v2650 = vcombine.low %v2359, %v2361
      %v2651 = vcombine.high %v2359, %v2361
      %v2653 = vunpack.c.l.s4 1983009808
      %v2654 = vunpack.c.0.s8 %v2653
      %v2655 = vlaneseq
      %v2656 = vshrl.u32 %v2655, 7
      %v2657 = vsub.s32 %v2654, %v2656
      %v2658 = vrot.slane %v2650, %v2657
      %v2660 = vunpack.c.l.s4 1983009808
      %v2661 = vunpack.c.0.s8 %v2660
      %v2662 = vlaneseq
      %v2663 = vshrl.u32 %v2662, 7
      %v2664 = vsub.s32 %v2661, %v2663
      %v2665 = vrot.slane %v2651, %v2664
      %v2666 = vcombine.low %v2362, %v2364
      %v2667 = vcombine.high %v2362, %v2364
      %v2669 = vunpack.c.l.s4 1983009808
      %v2670 = vunpack.c.0.s8 %v2669
      %v2671 = vlaneseq
      %v2672 = vshrl.u32 %v2671, 7
      %v2673 = vsub.s32 %v2670, %v2672
      %v2674 = vrot.slane %v2666, %v2673
      %v2676 = vunpack.c.l.s4 1983009808
      %v2677 = vunpack.c.0.s8 %v2676
      %v2678 = vlaneseq
      %v2679 = vshrl.u32 %v2678, 7
      %v2680 = vsub.s32 %v2677, %v2679
      %v2681 = vrot.slane %v2667, %v2680
      %v2682 = vcombine.low %v2363, %v2365
      %v2683 = vcombine.high %v2363, %v2365
      %v2685 = vunpack.c.l.s4 1983009808
      %v2686 = vunpack.c.0.s8 %v2685
      %v2687 = vlaneseq
      %v2688 = vshrl.u32 %v2687, 7
      %v2689 = vsub.s32 %v2686, %v2688
      %v2690 = vrot.slane %v2682, %v2689
      %v2692 = vunpack.c.l.s4 1983009808
      %v2693 = vunpack.c.0.s8 %v2692
      %v2694 = vlaneseq
      %v2695 = vshrl.u32 %v2694, 7
      %v2696 = vsub.s32 %v2693, %v2695
      %v2697 = vrot.slane %v2683, %v2696
      %v2698 = vcombine.low %v2642, %v2658
      %v2699 = vcombine.high %v2642, %v2658
      %v2701 = vunpack.c.l.s4 1934713408
      %v2702 = vunpack.c.0.s8 %v2701
      %v2703 = vlaneseq
      %v2704 = vshrl.u32 %v2703, 7
      %v2705 = vsub.s32 %v2702, %v2704
      %v2706 = vrot.slane %v2698, %v2705
      %v2708 = vunpack.c.l.s4 1934713408
      %v2709 = vunpack.c.0.s8 %v2708
      %v2710 = vlaneseq
      %v2711 = vshrl.u32 %v2710, 7
      %v2712 = vsub.s32 %v2709, %v2711
      %v2713 = vrot.slane %v2699, %v2712
      %v2714 = vcombine.low %v2649, %v2665
      %v2715 = vcombine.high %v2649, %v2665
      %v2717 = vunpack.c.l.s4 1934713408
      %v2718 = vunpack.c.0.s8 %v2717
      %v2719 = vlaneseq
      %v2720 = vshrl.u32 %v2719, 7
      %v2721 = vsub.s32 %v2718, %v2720
      %v2722 = vrot.slane %v2714, %v2721
      %v2724 = vunpack.c.l.s4 1934713408
      %v2725 = vunpack.c.0.s8 %v2724
      %v2726 = vlaneseq
      %v2727 = vshrl.u32 %v2726, 7
      %v2728 = vsub.s32 %v2725, %v2727
      %v2729 = vrot.slane %v2715, %v2728
      %v2730 = vcombine.low %v2674, %v2690
      %v2731 = vcombine.high %v2674, %v2690
      %v2733 = vunpack.c.l.s4 1934713408
      %v2734 = vunpack.c.0.s8 %v2733
      %v2735 = vlaneseq
      %v2736 = vshrl.u32 %v2735, 7
      %v2737 = vsub.s32 %v2734, %v2736
      %v2738 = vrot.slane %v2730, %v2737
      %v2740 = vunpack.c.l.s4 1934713408
      %v2741 = vunpack.c.0.s8 %v2740
      %v2742 = vlaneseq
      %v2743 = vshrl.u32 %v2742, 7
      %v2744 = vsub.s32 %v2741, %v2743
      %v2745 = vrot.slane %v2731, %v2744
      %v2746 = vcombine.low %v2681, %v2697
      %v2747 = vcombine.high %v2681, %v2697
      %v2749 = vunpack.c.l.s4 1934713408
      %v2750 = vunpack.c.0.s8 %v2749
      %v2751 = vlaneseq
      %v2752 = vshrl.u32 %v2751, 7
      %v2753 = vsub.s32 %v2750, %v2752
      %v2754 = vrot.slane %v2746, %v2753
      %v2756 = vunpack.c.l.s4 1934713408
      %v2757 = vunpack.c.0.s8 %v2756
      %v2758 = vlaneseq
      %v2759 = vshrl.u32 %v2758, 7
      %v2760 = vsub.s32 %v2757, %v2759
      %v2761 = vrot.slane %v2747, %v2760
      %v2762 = vcombine.low %v2706, %v2738
      %v2763 = vcombine.high %v2706, %v2738
      %v2764 = vcombine.low %v2713, %v2745
      %v2765 = vcombine.high %v2713, %v2745
      %v2766 = vcombine.low %v2722, %v2754
      %v2767 = vcombine.high %v2722, %v2754
      %v2768 = vcombine.low %v2729, %v2761
      %v2769 = vcombine.high %v2729, %v2761
      %v2770 = vcombine.low %v2560, %v2562
      %v2771 = vcombine.high %v2560, %v2562
      %v2773 = vunpack.c.l.s4 1983009808
      %v2774 = vunpack.c.0.s8 %v2773
      %v2775 = vlaneseq
      %v2776 = vshrl.u32 %v2775, 7
      %v2777 = vsub.s32 %v2774, %v2776
      %v2778 = vrot.slane %v2770, %v2777
      %v2780 = vunpack.c.l.s4 1983009808
      %v2781 = vunpack.c.0.s8 %v2780
      %v2782 = vlaneseq
      %v2783 = vshrl.u32 %v2782, 7
      %v2784 = vsub.s32 %v2781, %v2783
      %v2785 = vrot.slane %v2771, %v2784
      %v2786 = vcombine.low %v2561, %v2563
      %v2787 = vcombine.high %v2561, %v2563
      %v2789 = vunpack.c.l.s4 1983009808
      %v2790 = vunpack.c.0.s8 %v2789
      %v2791 = vlaneseq
      %v2792 = vshrl.u32 %v2791, 7
      %v2793 = vsub.s32 %v2790, %v2792
      %v2794 = vrot.slane %v2786, %v2793
      %v2796 = vunpack.c.l.s4 1983009808
      %v2797 = vunpack.c.0.s8 %v2796
      %v2798 = vlaneseq
      %v2799 = vshrl.u32 %v2798, 7
      %v2800 = vsub.s32 %v2797, %v2799
      %v2801 = vrot.slane %v2787, %v2800
      %v2802 = vcombine.low %v2564, %v2566
      %v2803 = vcombine.high %v2564, %v2566
      %v2805 = vunpack.c.l.s4 1983009808
      %v2806 = vunpack.c.0.s8 %v2805
      %v2807 = vlaneseq
      %v2808 = vshrl.u32 %v2807, 7
      %v2809 = vsub.s32 %v2806, %v2808
      %v2810 = vrot.slane %v2802, %v2809
      %v2812 = vunpack.c.l.s4 1983009808
      %v2813 = vunpack.c.0.s8 %v2812
      %v2814 = vlaneseq
      %v2815 = vshrl.u32 %v2814, 7
      %v2816 = vsub.s32 %v2813, %v2815
      %v2817 = vrot.slane %v2803, %v2816
      %v2818 = vcombine.low %v2565, %v2567
      %v2819 = vcombine.high %v2565, %v2567
      %v2821 = vunpack.c.l.s4 1983009808
      %v2822 = vunpack.c.0.s8 %v2821
      %v2823 = vlaneseq
      %v2824 = vshrl.u32 %v2823, 7
      %v2825 = vsub.s32 %v2822, %v2824
      %v2826 = vrot.slane %v2818, %v2825
      %v2828 = vunpack.c.l.s4 1983009808
      %v2829 = vunpack.c.0.s8 %v2828
      %v2830 = vlaneseq
      %v2831 = vshrl.u32 %v2830, 7
      %v2832 = vsub.s32 %v2829, %v2831
      %v2833 = vrot.slane %v2819, %v2832
      %v2834 = vcombine.low %v2778, %v2794
      %v2835 = vcombine.high %v2778, %v2794
      %v2837 = vunpack.c.l.s4 1934713408
      %v2838 = vunpack.c.0.s8 %v2837
      %v2839 = vlaneseq
      %v2840 = vshrl.u32 %v2839, 7
      %v2841 = vsub.s32 %v2838, %v2840
      %v2842 = vrot.slane %v2834, %v2841
      %v2844 = vunpack.c.l.s4 1934713408
      %v2845 = vunpack.c.0.s8 %v2844
      %v2846 = vlaneseq
      %v2847 = vshrl.u32 %v2846, 7
      %v2848 = vsub.s32 %v2845, %v2847
      %v2849 = vrot.slane %v2835, %v2848
      %v2850 = vcombine.low %v2785, %v2801
      %v2851 = vcombine.high %v2785, %v2801
      %v2853 = vunpack.c.l.s4 1934713408
      %v2854 = vunpack.c.0.s8 %v2853
      %v2855 = vlaneseq
      %v2856 = vshrl.u32 %v2855, 7
      %v2857 = vsub.s32 %v2854, %v2856
      %v2858 = vrot.slane %v2850, %v2857
      %v2860 = vunpack.c.l.s4 1934713408
      %v2861 = vunpack.c.0.s8 %v2860
      %v2862 = vlaneseq
      %v2863 = vshrl.u32 %v2862, 7
      %v2864 = vsub.s32 %v2861, %v2863
      %v2865 = vrot.slane %v2851, %v2864
      %v2866 = vcombine.low %v2810, %v2826
      %v2867 = vcombine.high %v2810, %v2826
      %v2869 = vunpack.c.l.s4 1934713408
      %v2870 = vunpack.c.0.s8 %v2869
      %v2871 = vlaneseq
      %v2872 = vshrl.u32 %v2871, 7
      %v2873 = vsub.s32 %v2870, %v2872
      %v2874 = vrot.slane %v2866, %v2873
      %v2876 = vunpack.c.l.s4 1934713408
      %v2877 = vunpack.c.0.s8 %v2876
      %v2878 = vlaneseq
      %v2879 = vshrl.u32 %v2878, 7
      %v2880 = vsub.s32 %v2877, %v2879
      %v2881 = vrot.slane %v2867, %v2880
      %v2882 = vcombine.low %v2817, %v2833
      %v2883 = vcombine.high %v2817, %v2833
      %v2885 = vunpack.c.l.s4 1934713408
      %v2886 = vunpack.c.0.s8 %v2885
      %v2887 = vlaneseq
      %v2888 = vshrl.u32 %v2887, 7
      %v2889 = vsub.s32 %v2886, %v2888
      %v2890 = vrot.slane %v2882, %v2889
      %v2892 = vunpack.c.l.s4 1934713408
      %v2893 = vunpack.c.0.s8 %v2892
      %v2894 = vlaneseq
      %v2895 = vshrl.u32 %v2894, 7
      %v2896 = vsub.s32 %v2893, %v2895
      %v2897 = vrot.slane %v2883, %v2896
      %v2898 = vcombine.low %v2842, %v2874
      %v2899 = vcombine.high %v2842, %v2874
      %v2900 = vcombine.low %v2849, %v2881
      %v2901 = vcombine.high %v2849, %v2881
      %v2902 = vcombine.low %v2858, %v2890
      %v2903 = vcombine.high %v2858, %v2890
      %v2904 = vcombine.low %v2865, %v2897
      %v2905 = vcombine.high %v2865, %v2897
      %v2906 = vcombine.low %v2404, %v2411
      %v2908 = vunpack.c.l.s4 1983009808
      %v2909 = vunpack.c.0.s8 %v2908
      %v2910 = vlaneseq
      %v2911 = vshrl.u32 %v2910, 7
      %v2912 = vsub.s32 %v2909, %v2911
      %v2913 = vrot.slane %v2906, %v2912
      %v2914 = vcombine.low %v2428, %v2429
      %v2916 = vunpack.c.l.s4 1983009808
      %v2917 = vunpack.c.0.s8 %v2916
      %v2918 = vlaneseq
      %v2919 = vshrl.u32 %v2918, 7
      %v2920 = vsub.s32 %v2917, %v2919
      %v2921 = vrot.slane %v2914, %v2920
      %v2922 = vcombine.low %v2420, %v2427
      %v2924 = vunpack.c.l.s4 1983009808
      %v2925 = vunpack.c.0.s8 %v2924
      %v2926 = vlaneseq
      %v2927 = vshrl.u32 %v2926, 7
      %v2928 = vsub.s32 %v2925, %v2927
      %v2929 = vrot.slane %v2922, %v2928
      %v2930 = vcombine.low %v2430, %v2431
      %v2932 = vunpack.c.l.s4 1983009808
      %v2933 = vunpack.c.0.s8 %v2932
      %v2934 = vlaneseq
      %v2935 = vshrl.u32 %v2934, 7
      %v2936 = vsub.s32 %v2933, %v2935
      %v2937 = vrot.slane %v2930, %v2936
      %v2938 = vcombine.low %v2913, %v2921
      %v2940 = vunpack.c.l.s4 1934713408
      %v2941 = vunpack.c.0.s8 %v2940
      %v2942 = vlaneseq
      %v2943 = vshrl.u32 %v2942, 7
      %v2944 = vsub.s32 %v2941, %v2943
      %v2945 = vrot.slane %v2938, %v2944
      %v2946 = vcombine.low %v2929, %v2937
      %v2948 = vunpack.c.l.s4 1934713408
      %v2949 = vunpack.c.0.s8 %v2948
      %v2950 = vlaneseq
      %v2951 = vshrl.u32 %v2950, 7
      %v2952 = vsub.s32 %v2949, %v2951
      %v2953 = vrot.slane %v2946, %v2952
      %v2954 = vcombine.low %v2945, %v2953
      %v2955 = vcombine.high %v2945, %v2953
      %v2956 = vcombine.low %v2606, %v2613
      %v2958 = vunpack.c.l.s4 1983009808
      %v2959 = vunpack.c.0.s8 %v2958
      %v2960 = vlaneseq
      %v2961 = vshrl.u32 %v2960, 7
      %v2962 = vsub.s32 %v2959, %v2961
      %v2963 = vrot.slane %v2956, %v2962
      %v2964 = vcombine.low %v2630, %v2631
      %v2966 = vunpack.c.l.s4 1983009808
      %v2967 = vunpack.c.0.s8 %v2966
      %v2968 = vlaneseq
      %v2969 = vshrl.u32 %v2968, 7
      %v2970 = vsub.s32 %v2967, %v2969
      %v2971 = vrot.slane %v2964, %v2970
      %v2972 = vcombine.low %v2622, %v2629
      %v2974 = vunpack.c.l.s4 1983009808
      %v2975 = vunpack.c.0.s8 %v2974
      %v2976 = vlaneseq
      %v2977 = vshrl.u32 %v2976, 7
      %v2978 = vsub.s32 %v2975, %v2977
      %v2979 = vrot.slane %v2972, %v2978
      %v2980 = vcombine.low %v2632, %v2633
      %v2982 = vunpack.c.l.s4 1983009808
      %v2983 = vunpack.c.0.s8 %v2982
      %v2984 = vlaneseq
      %v2985 = vshrl.u32 %v2984, 7
      %v2986 = vsub.s32 %v2983, %v2985
      %v2987 = vrot.slane %v2980, %v2986
      %v2988 = vcombine.low %v2963, %v2971
      %v2990 = vunpack.c.l.s4 1934713408
      %v2991 = vunpack.c.0.s8 %v2990
      %v2992 = vlaneseq
      %v2993 = vshrl.u32 %v2992, 7
      %v2994 = vsub.s32 %v2991, %v2993
      %v2995 = vrot.slane %v2988, %v2994
      %v2996 = vcombine.low %v2979, %v2987
      %v2998 = vunpack.c.l.s4 1934713408
      %v2999 = vunpack.c.0.s8 %v2998
      %v3000 = vlaneseq
      %v3001 = vshrl.u32 %v3000, 7
      %v3002 = vsub.s32 %v2999, %v3001
      %v3003 = vrot.slane %v2996, %v3002
      %v3004 = vcombine.low %v2995, %v3003
      %v3005 = vcombine.high %v2995, %v3003
      %3008 = vrot.lane.b32.xlu0 %v2763, 8
      %v3009 = vpop.permute.xlu0 %3008
      %3010 = vrot.lane.b32.xlu0 %v2899, 8
      %v3011 = vpop.permute.xlu0 %3010
      %3016 = vrot.lane.b32.xlu0 %v2764, 16
      %v3017 = vpop.permute.xlu0 %3016
      %3018 = vrot.lane.b32.xlu0 %v2900, 16
      %v3019 = vpop.permute.xlu0 %3018
      %3024 = vrot.lane.b32.xlu0 %v2765, 24
      %v3025 = vpop.permute.xlu0 %3024
      %3026 = vrot.lane.b32.xlu0 %v2901, 24
      %v3027 = vpop.permute.xlu0 %3026
      %3032 = vrot.lane.b32.xlu0 %v2766, 32
      %v3033 = vpop.permute.xlu0 %3032
      %3034 = vrot.lane.b32.xlu0 %v2902, 32
      %v3035 = vpop.permute.xlu0 %3034
      %3040 = vrot.lane.b32.xlu0 %v2767, 40
      %v3041 = vpop.permute.xlu0 %3040
      %3042 = vrot.lane.b32.xlu0 %v2903, 40
      %v3043 = vpop.permute.xlu0 %3042
      %3048 = vrot.lane.b32.xlu0 %v2768, 48
      %v3049 = vpop.permute.xlu0 %3048
      %3050 = vrot.lane.b32.xlu0 %v2904, 48
      %v3051 = vpop.permute.xlu0 %3050
      %3056 = vrot.lane.b32.xlu0 %v2769, 56
      %v3057 = vpop.permute.xlu0 %3056
      %3058 = vrot.lane.b32.xlu0 %v2905, 56
      %v3059 = vpop.permute.xlu0 %3058
      %3064 = vrot.lane.b32.xlu0 %v2954, 64
      %v3065 = vpop.permute.xlu0 %3064
      %3066 = vrot.lane.b32.xlu0 %v3004, 64
      %v3067 = vpop.permute.xlu0 %3066
      %3072 = vrot.lane.b32.xlu0 %v2955, 72
      %v3073 = vpop.permute.xlu0 %3072
      %3074 = vrot.lane.b32.xlu0 %v3005, 72
      %v3075 = vpop.permute.xlu0 %3074
      %vm3078 = vcmask 64512
      %v3079 = vsel %vm3078, %v2762, %v3009
      %v3080 = vsel %vm3078, %v2898, %v3011
      %v3081 = vsel %vm1898, %v3079, %v3017
      %v3082 = vsel %vm1898, %v3080, %v3019
      %vm3083 = vcmask 195584
      %v3084 = vsel %vm3083, %v3081, %v3025
      %v3085 = vsel %vm3083, %v3082, %v3027
      %vm3086 = vcmask 261120
      %v3087 = vsel %vm3086, %v3084, %v3033
      %v3088 = vsel %vm3086, %v3085, %v3035
      %vm3089 = vcmask 326656
      %v3090 = vsel %vm3089, %v3087, %v3041
      %v3091 = vsel %vm3089, %v3088, %v3043
      %vm3092 = vcmask 392192
      %v3093 = vsel %vm3092, %v3090, %v3049
      %v3094 = vsel %vm3092, %v3091, %v3051
      %vm3095 = vcmask 457728
      %v3096 = vsel %vm3095, %v3093, %v3057
      %v3097 = vsel %vm3095, %v3094, %v3059
      %vm3098 = vcmask 523264
      %v3099 = vsel %vm3098, %v3096, %v3065
      %v3100 = vsel %vm3098, %v3097, %v3067
      %vm3101 = vcmask 588800
      %v3102 = vsel %vm3101, %v3099, %v3073
      %v3103 = vsel %vm3101, %v3100, %v3075
      %v3105 = vsel %vm1898, %v1063, 0
      %v3108 = vsel %vm1898, %v1064, 0
      %3110 = vmatprep.subr.mxu0 0.0
      %3111 = vmatpush1.msra.mxu0 %v3102
      %3112 = vmatprep.subr.mxu0 0.0
      %3113 = vmatpush1.msra.mxu0 %v3103
      %3114 = vmatprep.subr.mxu0 0.0
      %3115 = vmatpush1.msra.mxu0 0.0
      %3116 = vmatprep.subr.mxu0 0.0
      %3117 = vmatpush1.msra.mxu0 0.0
      %3118 = vmatprep.subr.mxu0 0.0
      %3119 = vmatpush1.msra.mxu0 0.0
      %3120 = vmatprep.subr.mxu0 0.0
      %3121 = vmatpush1.msra.mxu0 0.0
      %3122 = vmatprep.subr.mxu0 0.0
      %3123 = vmatpush1.msra.mxu0 0.0
      %3124 = vmatprep.subr.mxu0 0.0
      %3125 = vmatpush1.msra.mxu0 0.0
      %3126 = vmatprep.subr.mxu0 0.0
      %3127 = vmatpush1.msra.mxu0 0.0
      %3128 = vmatprep.subr.mxu0 0.0
      %3129 = vmatpush1.msra.mxu0 0.0
      %3130 = vmatprep.subr.mxu0 0.0
      %3131 = vmatpush1.msra.mxu0 0.0
      %3132 = vmatprep.subr.mxu0 0.0
      %3133 = vmatpush1.msra.mxu0 0.0
      %3134 = vmatprep.subr.mxu0 0.0
      %3135 = vmatpush1.msra.mxu0 0.0
      %3136 = vmatprep.subr.mxu0 0.0
      %3137 = vmatpush1.msra.mxu0 0.0
      %3138 = vmatprep.subr.mxu0 0.0
      %3139 = vmatpush1.msra.mxu0 0.0
      %3140 = vmatprep.subr.mxu0 0.0
      %3141 = vmatpush1.msra.mxu0 0.0
      %3142 = vmatprep.subr.mxu0 0.0
      %3143 = vmatpush1.msra.mxu0 0.0
      %3144 = vmatprep.subr.mxu0 0.0
      %3145 = vmatpush1.msra.mxu0 0.0
      %3146 = vmatprep.subr.mxu0 0.0
      %3147 = vmatpush1.msra.mxu0 0.0
      %3148 = vmatprep.subr.mxu0 0.0
      %3149 = vmatpush1.msra.mxu0 0.0
      %3150 = vmatprep.subr.mxu0 0.0
      %3151 = vmatpush1.msra.mxu0 0.0
      %3152 = vmatprep.subr.mxu0 0.0
      %3153 = vmatpush1.msra.mxu0 0.0
      %3154 = vmatprep.subr.mxu0 0.0
      %3155 = vmatpush1.msra.mxu0 0.0
      %3156 = vmatprep.subr.mxu0 0.0
      %3157 = vmatpush1.msra.mxu0 0.0
      %3158 = vmatprep.subr.mxu0 0.0
      %3159 = vmatpush1.msra.mxu0 0.0
      %3160 = vmatprep.subr.mxu0 0.0
      %3161 = vmatpush1.msra.mxu0 0.0
      %3162 = vmatprep.subr.mxu0 0.0
      %3163 = vmatpush1.msra.mxu0 0.0
      %3164 = vmatprep.subr.mxu0 0.0
      %3165 = vmatpush1.msra.mxu0 0.0
      %3166 = vmatprep.subr.mxu0 0.0
      %3167 = vmatpush1.msra.mxu0 0.0
      %3168 = vmatprep.subr.mxu0 0.0
      %3169 = vmatpush1.msra.mxu0 0.0
      %3170 = vmatprep.subr.mxu0 0.0
      %3171 = vmatpush1.msra.mxu0 0.0
      %3172 = vmatprep.subr.mxu0 0.0
      %3173 = vmatpush1.msra.mxu0 0.0
      %3174 = vmatprep.mubr.f32.mxu0 0.0
      %3175 = vmatmul.mubr.f32.gmra.mrb[0].mxu0 %v3105
      %v3176 = vpop.f32.mrb[0].mxu0
      %v3177 = vadd.f32 0.0, %v3176
      %v3178 = vpop.f32.mrb[0].mxu0
      %3179 = vmatprep.mubr.f32.mxu0 0.0
      %3180 = vmatmul.mubr.f32.gmra.mrb[0].mxu0 %v3108
      %v3181 = vpop.f32.mrb[0].mxu0
      %v3182 = vadd.f32 0.0, %v3181
      %v3183 = vpop.f32.mrb[0].mxu0
      %3184 = vdwg.mxu0
      %3187 = vrot.lane.b32.xlu0 %v3177, 120
      %v3188 = vpop.permute.xlu0 %3187
      %3189 = vrot.lane.b32.xlu0 %v3182, 120
      %v3190 = vpop.permute.xlu0 %3189
      %3193 = vrot.lane.b32.xlu0 %v3177, 112
      %v3194 = vpop.permute.xlu0 %3193
      %3195 = vrot.lane.b32.xlu0 %v3182, 112
      %v3196 = vpop.permute.xlu0 %3195
      %3199 = vrot.lane.b32.xlu0 %v3177, 104
      %v3200 = vpop.permute.xlu0 %3199
      %3201 = vrot.lane.b32.xlu0 %v3182, 104
      %v3202 = vpop.permute.xlu0 %3201
      %3205 = vrot.lane.b32.xlu0 %v3177, 96
      %v3206 = vpop.permute.xlu0 %3205
      %3207 = vrot.lane.b32.xlu0 %v3182, 96
      %v3208 = vpop.permute.xlu0 %3207
      %3211 = vrot.lane.b32.xlu0 %v3177, 88
      %v3212 = vpop.permute.xlu0 %3211
      %3213 = vrot.lane.b32.xlu0 %v3182, 88
      %v3214 = vpop.permute.xlu0 %3213
      %3217 = vrot.lane.b32.xlu0 %v3177, 80
      %v3218 = vpop.permute.xlu0 %3217
      %3219 = vrot.lane.b32.xlu0 %v3182, 80
      %v3220 = vpop.permute.xlu0 %3219
      %3223 = vrot.lane.b32.xlu0 %v3177, 72
      %v3224 = vpop.permute.xlu0 %3223
      %3225 = vrot.lane.b32.xlu0 %v3182, 72
      %v3226 = vpop.permute.xlu0 %3225
      %3229 = vrot.lane.b32.xlu0 %v3177, 64
      %v3230 = vpop.permute.xlu0 %3229
      %3231 = vrot.lane.b32.xlu0 %v3182, 64
      %v3232 = vpop.permute.xlu0 %3231
      %3235 = vrot.lane.b32.xlu0 %v3177, 56
      %v3236 = vpop.permute.xlu0 %3235
      %3237 = vrot.lane.b32.xlu0 %v3182, 56
      %v3238 = vpop.permute.xlu0 %3237
      %v3241 = vcombine.low %v3177, %v3194
      %v3242 = vcombine.high %v3177, %v3194
      %v3244 = vunpack.c.l.s4 1983009808
      %v3245 = vunpack.c.0.s8 %v3244
      %v3246 = vlaneseq
      %v3247 = vshrl.u32 %v3246, 7
      %v3248 = vsub.s32 %v3245, %v3247
      %v3249 = vrot.slane %v3241, %v3248
      %v3251 = vunpack.c.l.s4 1983009808
      %v3252 = vunpack.c.0.s8 %v3251
      %v3253 = vlaneseq
      %v3254 = vshrl.u32 %v3253, 7
      %v3255 = vsub.s32 %v3252, %v3254
      %v3256 = vrot.slane %v3242, %v3255
      %v3257 = vcombine.low %v3188, %v3200
      %v3258 = vcombine.high %v3188, %v3200
      %v3260 = vunpack.c.l.s4 1983009808
      %v3261 = vunpack.c.0.s8 %v3260
      %v3262 = vlaneseq
      %v3263 = vshrl.u32 %v3262, 7
      %v3264 = vsub.s32 %v3261, %v3263
      %v3265 = vrot.slane %v3257, %v3264
      %v3267 = vunpack.c.l.s4 1983009808
      %v3268 = vunpack.c.0.s8 %v3267
      %v3269 = vlaneseq
      %v3270 = vshrl.u32 %v3269, 7
      %v3271 = vsub.s32 %v3268, %v3270
      %v3272 = vrot.slane %v3258, %v3271
      %v3273 = vcombine.low %v3206, %v3218
      %v3274 = vcombine.high %v3206, %v3218
      %v3276 = vunpack.c.l.s4 1983009808
      %v3277 = vunpack.c.0.s8 %v3276
      %v3278 = vlaneseq
      %v3279 = vshrl.u32 %v3278, 7
      %v3280 = vsub.s32 %v3277, %v3279
      %v3281 = vrot.slane %v3273, %v3280
      %v3283 = vunpack.c.l.s4 1983009808
      %v3284 = vunpack.c.0.s8 %v3283
      %v3285 = vlaneseq
      %v3286 = vshrl.u32 %v3285, 7
      %v3287 = vsub.s32 %v3284, %v3286
      %v3288 = vrot.slane %v3274, %v3287
      %v3289 = vcombine.low %v3212, %v3224
      %v3290 = vcombine.high %v3212, %v3224
      %v3292 = vunpack.c.l.s4 1983009808
      %v3293 = vunpack.c.0.s8 %v3292
      %v3294 = vlaneseq
      %v3295 = vshrl.u32 %v3294, 7
      %v3296 = vsub.s32 %v3293, %v3295
      %v3297 = vrot.slane %v3289, %v3296
      %v3299 = vunpack.c.l.s4 1983009808
      %v3300 = vunpack.c.0.s8 %v3299
      %v3301 = vlaneseq
      %v3302 = vshrl.u32 %v3301, 7
      %v3303 = vsub.s32 %v3300, %v3302
      %v3304 = vrot.slane %v3290, %v3303
      %v3305 = vcombine.low %v3249, %v3265
      %v3306 = vcombine.high %v3249, %v3265
      %v3308 = vunpack.c.l.s4 1934713408
      %v3309 = vunpack.c.0.s8 %v3308
      %v3310 = vlaneseq
      %v3311 = vshrl.u32 %v3310, 7
      %v3312 = vsub.s32 %v3309, %v3311
      %v3313 = vrot.slane %v3305, %v3312
      %v3315 = vunpack.c.l.s4 1934713408
      %v3316 = vunpack.c.0.s8 %v3315
      %v3317 = vlaneseq
      %v3318 = vshrl.u32 %v3317, 7
      %v3319 = vsub.s32 %v3316, %v3318
      %v3320 = vrot.slane %v3306, %v3319
      %v3321 = vcombine.low %v3256, %v3272
      %v3322 = vcombine.high %v3256, %v3272
      %v3324 = vunpack.c.l.s4 1934713408
      %v3325 = vunpack.c.0.s8 %v3324
      %v3326 = vlaneseq
      %v3327 = vshrl.u32 %v3326, 7
      %v3328 = vsub.s32 %v3325, %v3327
      %v3329 = vrot.slane %v3321, %v3328
      %v3331 = vunpack.c.l.s4 1934713408
      %v3332 = vunpack.c.0.s8 %v3331
      %v3333 = vlaneseq
      %v3334 = vshrl.u32 %v3333, 7
      %v3335 = vsub.s32 %v3332, %v3334
      %v3336 = vrot.slane %v3322, %v3335
      %v3337 = vcombine.low %v3281, %v3297
      %v3338 = vcombine.high %v3281, %v3297
      %v3340 = vunpack.c.l.s4 1934713408
      %v3341 = vunpack.c.0.s8 %v3340
      %v3342 = vlaneseq
      %v3343 = vshrl.u32 %v3342, 7
      %v3344 = vsub.s32 %v3341, %v3343
      %v3345 = vrot.slane %v3337, %v3344
      %v3347 = vunpack.c.l.s4 1934713408
      %v3348 = vunpack.c.0.s8 %v3347
      %v3349 = vlaneseq
      %v3350 = vshrl.u32 %v3349, 7
      %v3351 = vsub.s32 %v3348, %v3350
      %v3352 = vrot.slane %v3338, %v3351
      %v3353 = vcombine.low %v3288, %v3304
      %v3354 = vcombine.high %v3288, %v3304
      %v3356 = vunpack.c.l.s4 1934713408
      %v3357 = vunpack.c.0.s8 %v3356
      %v3358 = vlaneseq
      %v3359 = vshrl.u32 %v3358, 7
      %v3360 = vsub.s32 %v3357, %v3359
      %v3361 = vrot.slane %v3353, %v3360
      %v3363 = vunpack.c.l.s4 1934713408
      %v3364 = vunpack.c.0.s8 %v3363
      %v3365 = vlaneseq
      %v3366 = vshrl.u32 %v3365, 7
      %v3367 = vsub.s32 %v3364, %v3366
      %v3368 = vrot.slane %v3354, %v3367
      %v3369 = vcombine.low %v3313, %v3345
      %v3370 = vcombine.high %v3313, %v3345
      %v3371 = vcombine.low %v3320, %v3352
      %v3372 = vcombine.high %v3320, %v3352
      %v3373 = vcombine.low %v3329, %v3361
      %v3374 = vcombine.high %v3329, %v3361
      %v3375 = vcombine.low %v3336, %v3368
      %v3376 = vcombine.high %v3336, %v3368
      %v3377 = vcombine.high %v3230, 0.0
      %v3379 = vunpack.c.l.s4 1983009808
      %v3380 = vunpack.c.0.s8 %v3379
      %v3381 = vlaneseq
      %v3382 = vshrl.u32 %v3381, 7
      %v3383 = vsub.s32 %v3380, %v3382
      %v3384 = vrot.slane %v3230, %v3383
      %v3386 = vunpack.c.l.s4 1983009808
      %v3387 = vunpack.c.0.s8 %v3386
      %v3388 = vlaneseq
      %v3389 = vshrl.u32 %v3388, 7
      %v3390 = vsub.s32 %v3387, %v3389
      %v3391 = vrot.slane %v3377, %v3390
      %v3392 = vcombine.high %v3236, 0.0
      %v3394 = vunpack.c.l.s4 1983009808
      %v3395 = vunpack.c.0.s8 %v3394
      %v3396 = vlaneseq
      %v3397 = vshrl.u32 %v3396, 7
      %v3398 = vsub.s32 %v3395, %v3397
      %v3399 = vrot.slane %v3236, %v3398
      %v3401 = vunpack.c.l.s4 1983009808
      %v3402 = vunpack.c.0.s8 %v3401
      %v3403 = vlaneseq
      %v3404 = vshrl.u32 %v3403, 7
      %v3405 = vsub.s32 %v3402, %v3404
      %v3406 = vrot.slane %v3392, %v3405
      %v3407 = vcombine.low %v3384, %v3399
      %v3408 = vcombine.high %v3384, %v3399
      %v3410 = vunpack.c.l.s4 1934713408
      %v3411 = vunpack.c.0.s8 %v3410
      %v3412 = vlaneseq
      %v3413 = vshrl.u32 %v3412, 7
      %v3414 = vsub.s32 %v3411, %v3413
      %v3415 = vrot.slane %v3407, %v3414
      %v3417 = vunpack.c.l.s4 1934713408
      %v3418 = vunpack.c.0.s8 %v3417
      %v3419 = vlaneseq
      %v3420 = vshrl.u32 %v3419, 7
      %v3421 = vsub.s32 %v3418, %v3420
      %v3422 = vrot.slane %v3408, %v3421
      %v3423 = vcombine.low %v3391, %v3406
      %v3424 = vcombine.high %v3391, %v3406
      %v3426 = vunpack.c.l.s4 1934713408
      %v3427 = vunpack.c.0.s8 %v3426
      %v3428 = vlaneseq
      %v3429 = vshrl.u32 %v3428, 7
      %v3430 = vsub.s32 %v3427, %v3429
      %v3431 = vrot.slane %v3423, %v3430
      %v3433 = vunpack.c.l.s4 1934713408
      %v3434 = vunpack.c.0.s8 %v3433
      %v3435 = vlaneseq
      %v3436 = vshrl.u32 %v3435, 7
      %v3437 = vsub.s32 %v3434, %v3436
      %v3438 = vrot.slane %v3424, %v3437
      %v3439 = vcombine.high %v3415, 0.0
      %v3440 = vcombine.high %v3422, 0.0
      %v3441 = vcombine.high %v3431, 0.0
      %v3442 = vcombine.high %v3438, 0.0
      %v3443 = vcombine.low %v3182, %v3196
      %v3444 = vcombine.high %v3182, %v3196
      %v3446 = vunpack.c.l.s4 1983009808
      %v3447 = vunpack.c.0.s8 %v3446
      %v3448 = vlaneseq
      %v3449 = vshrl.u32 %v3448, 7
      %v3450 = vsub.s32 %v3447, %v3449
      %v3451 = vrot.slane %v3443, %v3450
      %v3453 = vunpack.c.l.s4 1983009808
      %v3454 = vunpack.c.0.s8 %v3453
      %v3455 = vlaneseq
      %v3456 = vshrl.u32 %v3455, 7
      %v3457 = vsub.s32 %v3454, %v3456
      %v3458 = vrot.slane %v3444, %v3457
      %v3459 = vcombine.low %v3190, %v3202
      %v3460 = vcombine.high %v3190, %v3202
      %v3462 = vunpack.c.l.s4 1983009808
      %v3463 = vunpack.c.0.s8 %v3462
      %v3464 = vlaneseq
      %v3465 = vshrl.u32 %v3464, 7
      %v3466 = vsub.s32 %v3463, %v3465
      %v3467 = vrot.slane %v3459, %v3466
      %v3469 = vunpack.c.l.s4 1983009808
      %v3470 = vunpack.c.0.s8 %v3469
      %v3471 = vlaneseq
      %v3472 = vshrl.u32 %v3471, 7
      %v3473 = vsub.s32 %v3470, %v3472
      %v3474 = vrot.slane %v3460, %v3473
      %v3475 = vcombine.low %v3208, %v3220
      %v3476 = vcombine.high %v3208, %v3220
      %v3478 = vunpack.c.l.s4 1983009808
      %v3479 = vunpack.c.0.s8 %v3478
      %v3480 = vlaneseq
      %v3481 = vshrl.u32 %v3480, 7
      %v3482 = vsub.s32 %v3479, %v3481
      %v3483 = vrot.slane %v3475, %v3482
      %v3485 = vunpack.c.l.s4 1983009808
      %v3486 = vunpack.c.0.s8 %v3485
      %v3487 = vlaneseq
      %v3488 = vshrl.u32 %v3487, 7
      %v3489 = vsub.s32 %v3486, %v3488
      %v3490 = vrot.slane %v3476, %v3489
      %v3491 = vcombine.low %v3214, %v3226
      %v3492 = vcombine.high %v3214, %v3226
      %v3494 = vunpack.c.l.s4 1983009808
      %v3495 = vunpack.c.0.s8 %v3494
      %v3496 = vlaneseq
      %v3497 = vshrl.u32 %v3496, 7
      %v3498 = vsub.s32 %v3495, %v3497
      %v3499 = vrot.slane %v3491, %v3498
      %v3501 = vunpack.c.l.s4 1983009808
      %v3502 = vunpack.c.0.s8 %v3501
      %v3503 = vlaneseq
      %v3504 = vshrl.u32 %v3503, 7
      %v3505 = vsub.s32 %v3502, %v3504
      %v3506 = vrot.slane %v3492, %v3505
      %v3507 = vcombine.low %v3451, %v3467
      %v3508 = vcombine.high %v3451, %v3467
      %v3510 = vunpack.c.l.s4 1934713408
      %v3511 = vunpack.c.0.s8 %v3510
      %v3512 = vlaneseq
      %v3513 = vshrl.u32 %v3512, 7
      %v3514 = vsub.s32 %v3511, %v3513
      %v3515 = vrot.slane %v3507, %v3514
      %v3517 = vunpack.c.l.s4 1934713408
      %v3518 = vunpack.c.0.s8 %v3517
      %v3519 = vlaneseq
      %v3520 = vshrl.u32 %v3519, 7
      %v3521 = vsub.s32 %v3518, %v3520
      %v3522 = vrot.slane %v3508, %v3521
      %v3523 = vcombine.low %v3458, %v3474
      %v3524 = vcombine.high %v3458, %v3474
      %v3526 = vunpack.c.l.s4 1934713408
      %v3527 = vunpack.c.0.s8 %v3526
      %v3528 = vlaneseq
      %v3529 = vshrl.u32 %v3528, 7
      %v3530 = vsub.s32 %v3527, %v3529
      %v3531 = vrot.slane %v3523, %v3530
      %v3533 = vunpack.c.l.s4 1934713408
      %v3534 = vunpack.c.0.s8 %v3533
      %v3535 = vlaneseq
      %v3536 = vshrl.u32 %v3535, 7
      %v3537 = vsub.s32 %v3534, %v3536
      %v3538 = vrot.slane %v3524, %v3537
      %v3539 = vcombine.low %v3483, %v3499
      %v3540 = vcombine.high %v3483, %v3499
      %v3542 = vunpack.c.l.s4 1934713408
      %v3543 = vunpack.c.0.s8 %v3542
      %v3544 = vlaneseq
      %v3545 = vshrl.u32 %v3544, 7
      %v3546 = vsub.s32 %v3543, %v3545
      %v3547 = vrot.slane %v3539, %v3546
      %v3549 = vunpack.c.l.s4 1934713408
      %v3550 = vunpack.c.0.s8 %v3549
      %v3551 = vlaneseq
      %v3552 = vshrl.u32 %v3551, 7
      %v3553 = vsub.s32 %v3550, %v3552
      %v3554 = vrot.slane %v3540, %v3553
      %v3555 = vcombine.low %v3490, %v3506
      %v3556 = vcombine.high %v3490, %v3506
      %v3558 = vunpack.c.l.s4 1934713408
      %v3559 = vunpack.c.0.s8 %v3558
      %v3560 = vlaneseq
      %v3561 = vshrl.u32 %v3560, 7
      %v3562 = vsub.s32 %v3559, %v3561
      %v3563 = vrot.slane %v3555, %v3562
      %v3565 = vunpack.c.l.s4 1934713408
      %v3566 = vunpack.c.0.s8 %v3565
      %v3567 = vlaneseq
      %v3568 = vshrl.u32 %v3567, 7
      %v3569 = vsub.s32 %v3566, %v3568
      %v3570 = vrot.slane %v3556, %v3569
      %v3571 = vcombine.low %v3515, %v3547
      %v3572 = vcombine.high %v3515, %v3547
      %v3573 = vcombine.low %v3522, %v3554
      %v3574 = vcombine.high %v3522, %v3554
      %v3575 = vcombine.low %v3531, %v3563
      %v3576 = vcombine.high %v3531, %v3563
      %v3577 = vcombine.low %v3538, %v3570
      %v3578 = vcombine.high %v3538, %v3570
      %v3579 = vcombine.high %v3232, 0.0
      %v3581 = vunpack.c.l.s4 1983009808
      %v3582 = vunpack.c.0.s8 %v3581
      %v3583 = vlaneseq
      %v3584 = vshrl.u32 %v3583, 7
      %v3585 = vsub.s32 %v3582, %v3584
      %v3586 = vrot.slane %v3232, %v3585
      %v3588 = vunpack.c.l.s4 1983009808
      %v3589 = vunpack.c.0.s8 %v3588
      %v3590 = vlaneseq
      %v3591 = vshrl.u32 %v3590, 7
      %v3592 = vsub.s32 %v3589, %v3591
      %v3593 = vrot.slane %v3579, %v3592
      %v3594 = vcombine.high %v3238, 0.0
      %v3596 = vunpack.c.l.s4 1983009808
      %v3597 = vunpack.c.0.s8 %v3596
      %v3598 = vlaneseq
      %v3599 = vshrl.u32 %v3598, 7
      %v3600 = vsub.s32 %v3597, %v3599
      %v3601 = vrot.slane %v3238, %v3600
      %v3603 = vunpack.c.l.s4 1983009808
      %v3604 = vunpack.c.0.s8 %v3603
      %v3605 = vlaneseq
      %v3606 = vshrl.u32 %v3605, 7
      %v3607 = vsub.s32 %v3604, %v3606
      %v3608 = vrot.slane %v3594, %v3607
      %v3609 = vcombine.low %v3586, %v3601
      %v3610 = vcombine.high %v3586, %v3601
      %v3612 = vunpack.c.l.s4 1934713408
      %v3613 = vunpack.c.0.s8 %v3612
      %v3614 = vlaneseq
      %v3615 = vshrl.u32 %v3614, 7
      %v3616 = vsub.s32 %v3613, %v3615
      %v3617 = vrot.slane %v3609, %v3616
      %v3619 = vunpack.c.l.s4 1934713408
      %v3620 = vunpack.c.0.s8 %v3619
      %v3621 = vlaneseq
      %v3622 = vshrl.u32 %v3621, 7
      %v3623 = vsub.s32 %v3620, %v3622
      %v3624 = vrot.slane %v3610, %v3623
      %v3625 = vcombine.low %v3593, %v3608
      %v3626 = vcombine.high %v3593, %v3608
      %v3628 = vunpack.c.l.s4 1934713408
      %v3629 = vunpack.c.0.s8 %v3628
      %v3630 = vlaneseq
      %v3631 = vshrl.u32 %v3630, 7
      %v3632 = vsub.s32 %v3629, %v3631
      %v3633 = vrot.slane %v3625, %v3632
      %v3635 = vunpack.c.l.s4 1934713408
      %v3636 = vunpack.c.0.s8 %v3635
      %v3637 = vlaneseq
      %v3638 = vshrl.u32 %v3637, 7
      %v3639 = vsub.s32 %v3636, %v3638
      %v3640 = vrot.slane %v3626, %v3639
      %v3641 = vcombine.high %v3617, 0.0
      %v3642 = vcombine.high %v3624, 0.0
      %v3643 = vcombine.high %v3633, 0.0
      %v3644 = vcombine.high %v3640, 0.0
      %v3645 = vcombine.low %v3369, %v3371
      %v3646 = vcombine.high %v3369, %v3371
      %v3648 = vunpack.c.l.s4 1983009808
      %v3649 = vunpack.c.0.s8 %v3648
      %v3650 = vlaneseq
      %v3651 = vshrl.u32 %v3650, 7
      %v3652 = vsub.s32 %v3649, %v3651
      %v3653 = vrot.slane %v3645, %v3652
      %v3655 = vunpack.c.l.s4 1983009808
      %v3656 = vunpack.c.0.s8 %v3655
      %v3657 = vlaneseq
      %v3658 = vshrl.u32 %v3657, 7
      %v3659 = vsub.s32 %v3656, %v3658
      %v3660 = vrot.slane %v3646, %v3659
      %v3661 = vcombine.low %v3370, %v3372
      %v3662 = vcombine.high %v3370, %v3372
      %v3664 = vunpack.c.l.s4 1983009808
      %v3665 = vunpack.c.0.s8 %v3664
      %v3666 = vlaneseq
      %v3667 = vshrl.u32 %v3666, 7
      %v3668 = vsub.s32 %v3665, %v3667
      %v3669 = vrot.slane %v3661, %v3668
      %v3671 = vunpack.c.l.s4 1983009808
      %v3672 = vunpack.c.0.s8 %v3671
      %v3673 = vlaneseq
      %v3674 = vshrl.u32 %v3673, 7
      %v3675 = vsub.s32 %v3672, %v3674
      %v3676 = vrot.slane %v3662, %v3675
      %v3677 = vcombine.low %v3373, %v3375
      %v3678 = vcombine.high %v3373, %v3375
      %v3680 = vunpack.c.l.s4 1983009808
      %v3681 = vunpack.c.0.s8 %v3680
      %v3682 = vlaneseq
      %v3683 = vshrl.u32 %v3682, 7
      %v3684 = vsub.s32 %v3681, %v3683
      %v3685 = vrot.slane %v3677, %v3684
      %v3687 = vunpack.c.l.s4 1983009808
      %v3688 = vunpack.c.0.s8 %v3687
      %v3689 = vlaneseq
      %v3690 = vshrl.u32 %v3689, 7
      %v3691 = vsub.s32 %v3688, %v3690
      %v3692 = vrot.slane %v3678, %v3691
      %v3693 = vcombine.low %v3374, %v3376
      %v3694 = vcombine.high %v3374, %v3376
      %v3696 = vunpack.c.l.s4 1983009808
      %v3697 = vunpack.c.0.s8 %v3696
      %v3698 = vlaneseq
      %v3699 = vshrl.u32 %v3698, 7
      %v3700 = vsub.s32 %v3697, %v3699
      %v3701 = vrot.slane %v3693, %v3700
      %v3703 = vunpack.c.l.s4 1983009808
      %v3704 = vunpack.c.0.s8 %v3703
      %v3705 = vlaneseq
      %v3706 = vshrl.u32 %v3705, 7
      %v3707 = vsub.s32 %v3704, %v3706
      %v3708 = vrot.slane %v3694, %v3707
      %v3709 = vcombine.low %v3653, %v3669
      %v3710 = vcombine.high %v3653, %v3669
      %v3712 = vunpack.c.l.s4 1934713408
      %v3713 = vunpack.c.0.s8 %v3712
      %v3714 = vlaneseq
      %v3715 = vshrl.u32 %v3714, 7
      %v3716 = vsub.s32 %v3713, %v3715
      %v3717 = vrot.slane %v3709, %v3716
      %v3719 = vunpack.c.l.s4 1934713408
      %v3720 = vunpack.c.0.s8 %v3719
      %v3721 = vlaneseq
      %v3722 = vshrl.u32 %v3721, 7
      %v3723 = vsub.s32 %v3720, %v3722
      %v3724 = vrot.slane %v3710, %v3723
      %v3725 = vcombine.low %v3660, %v3676
      %v3726 = vcombine.high %v3660, %v3676
      %v3728 = vunpack.c.l.s4 1934713408
      %v3729 = vunpack.c.0.s8 %v3728
      %v3730 = vlaneseq
      %v3731 = vshrl.u32 %v3730, 7
      %v3732 = vsub.s32 %v3729, %v3731
      %v3733 = vrot.slane %v3725, %v3732
      %v3735 = vunpack.c.l.s4 1934713408
      %v3736 = vunpack.c.0.s8 %v3735
      %v3737 = vlaneseq
      %v3738 = vshrl.u32 %v3737, 7
      %v3739 = vsub.s32 %v3736, %v3738
      %v3740 = vrot.slane %v3726, %v3739
      %v3741 = vcombine.low %v3685, %v3701
      %v3742 = vcombine.high %v3685, %v3701
      %v3744 = vunpack.c.l.s4 1934713408
      %v3745 = vunpack.c.0.s8 %v3744
      %v3746 = vlaneseq
      %v3747 = vshrl.u32 %v3746, 7
      %v3748 = vsub.s32 %v3745, %v3747
      %v3749 = vrot.slane %v3741, %v3748
      %v3751 = vunpack.c.l.s4 1934713408
      %v3752 = vunpack.c.0.s8 %v3751
      %v3753 = vlaneseq
      %v3754 = vshrl.u32 %v3753, 7
      %v3755 = vsub.s32 %v3752, %v3754
      %v3756 = vrot.slane %v3742, %v3755
      %v3757 = vcombine.low %v3692, %v3708
      %v3758 = vcombine.high %v3692, %v3708
      %v3760 = vunpack.c.l.s4 1934713408
      %v3761 = vunpack.c.0.s8 %v3760
      %v3762 = vlaneseq
      %v3763 = vshrl.u32 %v3762, 7
      %v3764 = vsub.s32 %v3761, %v3763
      %v3765 = vrot.slane %v3757, %v3764
      %v3767 = vunpack.c.l.s4 1934713408
      %v3768 = vunpack.c.0.s8 %v3767
      %v3769 = vlaneseq
      %v3770 = vshrl.u32 %v3769, 7
      %v3771 = vsub.s32 %v3768, %v3770
      %v3772 = vrot.slane %v3758, %v3771
      %v3773 = vcombine.low %v3717, %v3749
      %v3774 = vcombine.high %v3717, %v3749
      %v3775 = vcombine.low %v3724, %v3756
      %v3776 = vcombine.high %v3724, %v3756
      %v3777 = vcombine.low %v3733, %v3765
      %v3778 = vcombine.high %v3733, %v3765
      %v3779 = vcombine.low %v3740, %v3772
      %v3780 = vcombine.high %v3740, %v3772
      %v3781 = vcombine.low %v3571, %v3573
      %v3782 = vcombine.high %v3571, %v3573
      %v3784 = vunpack.c.l.s4 1983009808
      %v3785 = vunpack.c.0.s8 %v3784
      %v3786 = vlaneseq
      %v3787 = vshrl.u32 %v3786, 7
      %v3788 = vsub.s32 %v3785, %v3787
      %v3789 = vrot.slane %v3781, %v3788
      %v3791 = vunpack.c.l.s4 1983009808
      %v3792 = vunpack.c.0.s8 %v3791
      %v3793 = vlaneseq
      %v3794 = vshrl.u32 %v3793, 7
      %v3795 = vsub.s32 %v3792, %v3794
      %v3796 = vrot.slane %v3782, %v3795
      %v3797 = vcombine.low %v3572, %v3574
      %v3798 = vcombine.high %v3572, %v3574
      %v3800 = vunpack.c.l.s4 1983009808
      %v3801 = vunpack.c.0.s8 %v3800
      %v3802 = vlaneseq
      %v3803 = vshrl.u32 %v3802, 7
      %v3804 = vsub.s32 %v3801, %v3803
      %v3805 = vrot.slane %v3797, %v3804
      %v3807 = vunpack.c.l.s4 1983009808
      %v3808 = vunpack.c.0.s8 %v3807
      %v3809 = vlaneseq
      %v3810 = vshrl.u32 %v3809, 7
      %v3811 = vsub.s32 %v3808, %v3810
      %v3812 = vrot.slane %v3798, %v3811
      %v3813 = vcombine.low %v3575, %v3577
      %v3814 = vcombine.high %v3575, %v3577
      %v3816 = vunpack.c.l.s4 1983009808
      %v3817 = vunpack.c.0.s8 %v3816
      %v3818 = vlaneseq
      %v3819 = vshrl.u32 %v3818, 7
      %v3820 = vsub.s32 %v3817, %v3819
      %v3821 = vrot.slane %v3813, %v3820
      %v3823 = vunpack.c.l.s4 1983009808
      %v3824 = vunpack.c.0.s8 %v3823
      %v3825 = vlaneseq
      %v3826 = vshrl.u32 %v3825, 7
      %v3827 = vsub.s32 %v3824, %v3826
      %v3828 = vrot.slane %v3814, %v3827
      %v3829 = vcombine.low %v3576, %v3578
      %v3830 = vcombine.high %v3576, %v3578
      %v3832 = vunpack.c.l.s4 1983009808
      %v3833 = vunpack.c.0.s8 %v3832
      %v3834 = vlaneseq
      %v3835 = vshrl.u32 %v3834, 7
      %v3836 = vsub.s32 %v3833, %v3835
      %v3837 = vrot.slane %v3829, %v3836
      %v3839 = vunpack.c.l.s4 1983009808
      %v3840 = vunpack.c.0.s8 %v3839
      %v3841 = vlaneseq
      %v3842 = vshrl.u32 %v3841, 7
      %v3843 = vsub.s32 %v3840, %v3842
      %v3844 = vrot.slane %v3830, %v3843
      %v3845 = vcombine.low %v3789, %v3805
      %v3846 = vcombine.high %v3789, %v3805
      %v3848 = vunpack.c.l.s4 1934713408
      %v3849 = vunpack.c.0.s8 %v3848
      %v3850 = vlaneseq
      %v3851 = vshrl.u32 %v3850, 7
      %v3852 = vsub.s32 %v3849, %v3851
      %v3853 = vrot.slane %v3845, %v3852
      %v3855 = vunpack.c.l.s4 1934713408
      %v3856 = vunpack.c.0.s8 %v3855
      %v3857 = vlaneseq
      %v3858 = vshrl.u32 %v3857, 7
      %v3859 = vsub.s32 %v3856, %v3858
      %v3860 = vrot.slane %v3846, %v3859
      %v3861 = vcombine.low %v3796, %v3812
      %v3862 = vcombine.high %v3796, %v3812
      %v3864 = vunpack.c.l.s4 1934713408
      %v3865 = vunpack.c.0.s8 %v3864
      %v3866 = vlaneseq
      %v3867 = vshrl.u32 %v3866, 7
      %v3868 = vsub.s32 %v3865, %v3867
      %v3869 = vrot.slane %v3861, %v3868
      %v3871 = vunpack.c.l.s4 1934713408
      %v3872 = vunpack.c.0.s8 %v3871
      %v3873 = vlaneseq
      %v3874 = vshrl.u32 %v3873, 7
      %v3875 = vsub.s32 %v3872, %v3874
      %v3876 = vrot.slane %v3862, %v3875
      %v3877 = vcombine.low %v3821, %v3837
      %v3878 = vcombine.high %v3821, %v3837
      %v3880 = vunpack.c.l.s4 1934713408
      %v3881 = vunpack.c.0.s8 %v3880
      %v3882 = vlaneseq
      %v3883 = vshrl.u32 %v3882, 7
      %v3884 = vsub.s32 %v3881, %v3883
      %v3885 = vrot.slane %v3877, %v3884
      %v3887 = vunpack.c.l.s4 1934713408
      %v3888 = vunpack.c.0.s8 %v3887
      %v3889 = vlaneseq
      %v3890 = vshrl.u32 %v3889, 7
      %v3891 = vsub.s32 %v3888, %v3890
      %v3892 = vrot.slane %v3878, %v3891
      %v3893 = vcombine.low %v3828, %v3844
      %v3894 = vcombine.high %v3828, %v3844
      %v3896 = vunpack.c.l.s4 1934713408
      %v3897 = vunpack.c.0.s8 %v3896
      %v3898 = vlaneseq
      %v3899 = vshrl.u32 %v3898, 7
      %v3900 = vsub.s32 %v3897, %v3899
      %v3901 = vrot.slane %v3893, %v3900
      %v3903 = vunpack.c.l.s4 1934713408
      %v3904 = vunpack.c.0.s8 %v3903
      %v3905 = vlaneseq
      %v3906 = vshrl.u32 %v3905, 7
      %v3907 = vsub.s32 %v3904, %v3906
      %v3908 = vrot.slane %v3894, %v3907
      %v3909 = vcombine.low %v3853, %v3885
      %v3910 = vcombine.high %v3853, %v3885
      %v3911 = vcombine.low %v3860, %v3892
      %v3912 = vcombine.high %v3860, %v3892
      %v3913 = vcombine.low %v3869, %v3901
      %v3914 = vcombine.high %v3869, %v3901
      %v3915 = vcombine.low %v3876, %v3908
      %v3916 = vcombine.high %v3876, %v3908
      %v3917 = vcombine.low %v3415, %v3422
      %v3919 = vunpack.c.l.s4 1983009808
      %v3920 = vunpack.c.0.s8 %v3919
      %v3921 = vlaneseq
      %v3922 = vshrl.u32 %v3921, 7
      %v3923 = vsub.s32 %v3920, %v3922
      %v3924 = vrot.slane %v3917, %v3923
      %v3925 = vcombine.low %v3439, %v3440
      %v3927 = vunpack.c.l.s4 1983009808
      %v3928 = vunpack.c.0.s8 %v3927
      %v3929 = vlaneseq
      %v3930 = vshrl.u32 %v3929, 7
      %v3931 = vsub.s32 %v3928, %v3930
      %v3932 = vrot.slane %v3925, %v3931
      %v3933 = vcombine.low %v3431, %v3438
      %v3935 = vunpack.c.l.s4 1983009808
      %v3936 = vunpack.c.0.s8 %v3935
      %v3937 = vlaneseq
      %v3938 = vshrl.u32 %v3937, 7
      %v3939 = vsub.s32 %v3936, %v3938
      %v3940 = vrot.slane %v3933, %v3939
      %v3941 = vcombine.low %v3441, %v3442
      %v3943 = vunpack.c.l.s4 1983009808
      %v3944 = vunpack.c.0.s8 %v3943
      %v3945 = vlaneseq
      %v3946 = vshrl.u32 %v3945, 7
      %v3947 = vsub.s32 %v3944, %v3946
      %v3948 = vrot.slane %v3941, %v3947
      %v3949 = vcombine.low %v3924, %v3932
      %v3951 = vunpack.c.l.s4 1934713408
      %v3952 = vunpack.c.0.s8 %v3951
      %v3953 = vlaneseq
      %v3954 = vshrl.u32 %v3953, 7
      %v3955 = vsub.s32 %v3952, %v3954
      %v3956 = vrot.slane %v3949, %v3955
      %v3957 = vcombine.low %v3940, %v3948
      %v3959 = vunpack.c.l.s4 1934713408
      %v3960 = vunpack.c.0.s8 %v3959
      %v3961 = vlaneseq
      %v3962 = vshrl.u32 %v3961, 7
      %v3963 = vsub.s32 %v3960, %v3962
      %v3964 = vrot.slane %v3957, %v3963
      %v3965 = vcombine.low %v3956, %v3964
      %v3966 = vcombine.high %v3956, %v3964
      %v3967 = vcombine.low %v3617, %v3624
      %v3969 = vunpack.c.l.s4 1983009808
      %v3970 = vunpack.c.0.s8 %v3969
      %v3971 = vlaneseq
      %v3972 = vshrl.u32 %v3971, 7
      %v3973 = vsub.s32 %v3970, %v3972
      %v3974 = vrot.slane %v3967, %v3973
      %v3975 = vcombine.low %v3641, %v3642
      %v3977 = vunpack.c.l.s4 1983009808
      %v3978 = vunpack.c.0.s8 %v3977
      %v3979 = vlaneseq
      %v3980 = vshrl.u32 %v3979, 7
      %v3981 = vsub.s32 %v3978, %v3980
      %v3982 = vrot.slane %v3975, %v3981
      %v3983 = vcombine.low %v3633, %v3640
      %v3985 = vunpack.c.l.s4 1983009808
      %v3986 = vunpack.c.0.s8 %v3985
      %v3987 = vlaneseq
      %v3988 = vshrl.u32 %v3987, 7
      %v3989 = vsub.s32 %v3986, %v3988
      %v3990 = vrot.slane %v3983, %v3989
      %v3991 = vcombine.low %v3643, %v3644
      %v3993 = vunpack.c.l.s4 1983009808
      %v3994 = vunpack.c.0.s8 %v3993
      %v3995 = vlaneseq
      %v3996 = vshrl.u32 %v3995, 7
      %v3997 = vsub.s32 %v3994, %v3996
      %v3998 = vrot.slane %v3991, %v3997
      %v3999 = vcombine.low %v3974, %v3982
      %v4001 = vunpack.c.l.s4 1934713408
      %v4002 = vunpack.c.0.s8 %v4001
      %v4003 = vlaneseq
      %v4004 = vshrl.u32 %v4003, 7
      %v4005 = vsub.s32 %v4002, %v4004
      %v4006 = vrot.slane %v3999, %v4005
      %v4007 = vcombine.low %v3990, %v3998
      %v4009 = vunpack.c.l.s4 1934713408
      %v4010 = vunpack.c.0.s8 %v4009
      %v4011 = vlaneseq
      %v4012 = vshrl.u32 %v4011, 7
      %v4013 = vsub.s32 %v4010, %v4012
      %v4014 = vrot.slane %v4007, %v4013
      %v4015 = vcombine.low %v4006, %v4014
      %v4016 = vcombine.high %v4006, %v4014
      %v4017 = vadd.f32 %v3773, %v1071
      %v4018 = vadd.f32 %v3909, %v1072
      %v4019 = vadd.f32 %v3774, %v1071
      %v4020 = vadd.f32 %v3910, %v1072
      %v4021 = vadd.f32 %v3775, %v1071
      %v4022 = vadd.f32 %v3911, %v1072
      %v4023 = vadd.f32 %v3776, %v1071
      %v4024 = vadd.f32 %v3912, %v1072
      %v4025 = vadd.f32 %v3777, %v1071
      %v4026 = vadd.f32 %v3913, %v1072
      %v4027 = vadd.f32 %v3778, %v1071
      %v4028 = vadd.f32 %v3914, %v1072
      %v4029 = vadd.f32 %v3779, %v1071
      %v4030 = vadd.f32 %v3915, %v1072
      %v4031 = vadd.f32 %v3780, %v1071
      %v4032 = vadd.f32 %v3916, %v1072
      %v4033 = vadd.f32 %v3965, %v1071
      %v4034 = vadd.f32 %v4015, %v1072
      %v4035 = vadd.f32 %v3966, %v1071
      %v4036 = vadd.f32 %v4016, %v1072
      %v4037 = vadd.f32 %v4017, %v2130
      %v4038 = vadd.f32 %v4018, %v2131
      %v4039 = vadd.f32 %v4019, %v2132
      %v4040 = vadd.f32 %v4020, %v2133
      %v4041 = vadd.f32 %v4021, %v2134
      %v4042 = vadd.f32 %v4022, %v2135
      %v4043 = vadd.f32 %v4023, %v2136
      %v4044 = vadd.f32 %v4024, %v2137
      %v4045 = vadd.f32 %v4025, %v2138
      %v4046 = vadd.f32 %v4026, %v2139
      %v4047 = vadd.f32 %v4027, %v2140
      %v4048 = vadd.f32 %v4028, %v2141
      %v4049 = vadd.f32 %v4029, %v2142
      %v4050 = vadd.f32 %v4030, %v2143
      %v4051 = vadd.f32 %v4031, %v2144
      %v4052 = vadd.f32 %v4032, %v2145
      %v4053 = vadd.f32 %v4033, %v2146
      %v4054 = vadd.f32 %v4034, %v2147
      %v4055 = vadd.f32 %v4035, %v2148
      %v4056 = vadd.f32 %v4036, %v2149
      %v4057 = vmax.f32 %v4037, 0.0
      %v4058 = vmax.f32 %v4038, 0.0
      %v4059 = vmax.f32 %v4039, 0.0
      %v4060 = vmax.f32 %v4040, 0.0
      %v4061 = vmax.f32 %v4041, 0.0
      %v4062 = vmax.f32 %v4042, 0.0
      %v4063 = vmax.f32 %v4043, 0.0
      %v4064 = vmax.f32 %v4044, 0.0
      %v4065 = vmax.f32 %v4045, 0.0
      %v4066 = vmax.f32 %v4046, 0.0
      %v4067 = vmax.f32 %v4047, 0.0
      %v4068 = vmax.f32 %v4048, 0.0
      %v4069 = vmax.f32 %v4049, 0.0
      %v4070 = vmax.f32 %v4050, 0.0
      %v4071 = vmax.f32 %v4051, 0.0
      %v4072 = vmax.f32 %v4052, 0.0
      %v4073 = vmax.f32 %v4053, 0.0
      %v4074 = vmax.f32 %v4054, 0.0
      %v4075 = vmax.f32 %v4055, 0.0
      %v4076 = vmax.f32 %v4056, 0.0
      %v4078 = vsel %vm3078, %v4057, 0
      %v4081 = vsel %vm3078, %v4058, 0
      %v4084 = vsel %vm3078, %v4059, 0
      %v4087 = vsel %vm3078, %v4060, 0
      %v4090 = vsel %vm3078, %v4061, 0
      %v4093 = vsel %vm3078, %v4062, 0
      %v4096 = vsel %vm3078, %v4063, 0
      %v4099 = vsel %vm3078, %v4064, 0
      %v4102 = vsel %vm3078, %v4065, 0
      %v4105 = vsel %vm3078, %v4066, 0
      %v4108 = vsel %vm3078, %v4067, 0
      %v4111 = vsel %vm3078, %v4068, 0
      %v4114 = vsel %vm3078, %v4069, 0
      %v4117 = vsel %vm3078, %v4070, 0
      %v4120 = vsel %vm3078, %v4071, 0
      %v4123 = vsel %vm3078, %v4072, 0
      %v4126 = vsel %vm3078, %v4073, 0
      %v4129 = vsel %vm3078, %v4074, 0
      %v4132 = vsel %vm3078, %v4075, 0
      %v4135 = vsel %vm3078, %v4076, 0
      %4137 = vmatprep.subr.mxu0 0.0
      %4138 = vmatpush1.msra.mxu0 %v1073
      %4139 = vmatprep.subr.mxu0 0.0
      %4140 = vmatpush1.msra.mxu0 0.0
      %4141 = vmatprep.subr.mxu0 0.0
      %4142 = vmatpush1.msra.mxu0 0.0
      %4143 = vmatprep.subr.mxu0 0.0
      %4144 = vmatpush1.msra.mxu0 0.0
      %4145 = vmatprep.subr.mxu0 0.0
      %4146 = vmatpush1.msra.mxu0 0.0
      %4147 = vmatprep.subr.mxu0 0.0
      %4148 = vmatpush1.msra.mxu0 0.0
      %4149 = vmatprep.subr.mxu0 0.0
      %4150 = vmatpush1.msra.mxu0 0.0
      %4151 = vmatprep.subr.mxu0 0.0
      %4152 = vmatpush1.msra.mxu0 0.0
      %4153 = vmatprep.subr.mxu0 0.0
      %4154 = vmatpush1.msra.mxu0 0.0
      %4155 = vmatprep.subr.mxu0 0.0
      %4156 = vmatpush1.msra.mxu0 0.0
      %4157 = vmatprep.subr.mxu0 0.0
      %4158 = vmatpush1.msra.mxu0 0.0
      %4159 = vmatprep.subr.mxu0 0.0
      %4160 = vmatpush1.msra.mxu0 0.0
      %4161 = vmatprep.subr.mxu0 0.0
      %4162 = vmatpush1.msra.mxu0 0.0
      %4163 = vmatprep.subr.mxu0 0.0
      %4164 = vmatpush1.msra.mxu0 0.0
      %4165 = vmatprep.subr.mxu0 0.0
      %4166 = vmatpush1.msra.mxu0 0.0
      %4167 = vmatprep.subr.mxu0 0.0
      %4168 = vmatpush1.msra.mxu0 0.0
      %4169 = vmatprep.subr.mxu0 0.0
      %4170 = vmatpush1.msra.mxu0 0.0
      %4171 = vmatprep.subr.mxu0 0.0
      %4172 = vmatpush1.msra.mxu0 0.0
      %4173 = vmatprep.subr.mxu0 0.0
      %4174 = vmatpush1.msra.mxu0 0.0
      %4175 = vmatprep.subr.mxu0 0.0
      %4176 = vmatpush1.msra.mxu0 0.0
      %4177 = vmatprep.subr.mxu0 0.0
      %4178 = vmatpush1.msra.mxu0 0.0
      %4179 = vmatprep.subr.mxu0 0.0
      %4180 = vmatpush1.msra.mxu0 0.0
      %4181 = vmatprep.subr.mxu0 0.0
      %4182 = vmatpush1.msra.mxu0 0.0
      %4183 = vmatprep.subr.mxu0 0.0
      %4184 = vmatpush1.msra.mxu0 0.0
      %4185 = vmatprep.subr.mxu0 0.0
      %4186 = vmatpush1.msra.mxu0 0.0
      %4187 = vmatprep.subr.mxu0 0.0
      %4188 = vmatpush1.msra.mxu0 0.0
      %4189 = vmatprep.subr.mxu0 0.0
      %4190 = vmatpush1.msra.mxu0 0.0
      %4191 = vmatprep.subr.mxu0 0.0
      %4192 = vmatpush1.msra.mxu0 0.0
      %4193 = vmatprep.subr.mxu0 0.0
      %4194 = vmatpush1.msra.mxu0 0.0
      %4195 = vmatprep.subr.mxu0 0.0
      %4196 = vmatpush1.msra.mxu0 0.0
      %4197 = vmatprep.subr.mxu0 0.0
      %4198 = vmatpush1.msra.mxu0 0.0
      %4199 = vmatprep.subr.mxu0 0.0
      %4200 = vmatpush1.msra.mxu0 0.0
      %4201 = vmatprep.mubr.f32.mxu0 0.0
      %4202 = vmatmul.mubr.f32.gmra.mrb[0].mxu0 %v4078
      %v4203 = vpop.f32.mrb[0].mxu0
      %v4204 = vadd.f32 0.0, %v4203
      %v4205 = vpop.f32.mrb[0].mxu0
      %4206 = vmatprep.mubr.f32.mxu0 0.0
      %4207 = vmatmul.mubr.f32.gmra.mrb[0].mxu0 %v4081
      %v4208 = vpop.f32.mrb[0].mxu0
      %v4209 = vadd.f32 0.0, %v4208
      %v4210 = vpop.f32.mrb[0].mxu0
      %4211 = vmatprep.mubr.f32.mxu0 0.0
      %4212 = vmatmul.mubr.f32.gmra.mrb[0].mxu0 %v4084
      %v4213 = vpop.f32.mrb[0].mxu0
      %v4214 = vadd.f32 0.0, %v4213
      %v4215 = vpop.f32.mrb[0].mxu0
      %4216 = vmatprep.mubr.f32.mxu0 0.0
      %4217 = vmatmul.mubr.f32.gmra.mrb[0].mxu0 %v4087
      %v4218 = vpop.f32.mrb[0].mxu0
      %v4219 = vadd.f32 0.0, %v4218
      %v4220 = vpop.f32.mrb[0].mxu0
      %4221 = vmatprep.mubr.f32.mxu0 0.0
      %4222 = vmatmul.mubr.f32.gmra.mrb[0].mxu0 %v4090
      %v4223 = vpop.f32.mrb[0].mxu0
      %v4224 = vadd.f32 0.0, %v4223
      %v4225 = vpop.f32.mrb[0].mxu0
      %4226 = vmatprep.mubr.f32.mxu0 0.0
      %4227 = vmatmul.mubr.f32.gmra.mrb[0].mxu0 %v4093
      %v4228 = vpop.f32.mrb[0].mxu0
      %v4229 = vadd.f32 0.0, %v4228
      %v4230 = vpop.f32.mrb[0].mxu0
      %4231 = vmatprep.mubr.f32.mxu0 0.0
      %4232 = vmatmul.mubr.f32.gmra.mrb[0].mxu0 %v4096
      %v4233 = vpop.f32.mrb[0].mxu0
      %v4234 = vadd.f32 0.0, %v4233
      %v4235 = vpop.f32.mrb[0].mxu0
      %4236 = vmatprep.mubr.f32.mxu0 0.0
      %4237 = vmatmul.mubr.f32.gmra.mrb[0].mxu0 %v4099
      %v4238 = vpop.f32.mrb[0].mxu0
      %v4239 = vadd.f32 0.0, %v4238
      %v4240 = vpop.f32.mrb[0].mxu0
      %4241 = vmatprep.mubr.f32.mxu0 0.0
      %4242 = vmatmul.mubr.f32.gmra.mrb[0].mxu0 %v4102
      %v4243 = vpop.f32.mrb[0].mxu0
      %v4244 = vadd.f32 0.0, %v4243
      %v4245 = vpop.f32.mrb[0].mxu0
      %4246 = vmatprep.mubr.f32.mxu0 0.0
      %4247 = vmatmul.mubr.f32.gmra.mrb[0].mxu0 %v4105
      %v4248 = vpop.f32.mrb[0].mxu0
      %v4249 = vadd.f32 0.0, %v4248
      %v4250 = vpop.f32.mrb[0].mxu0
      %4251 = vmatprep.mubr.f32.mxu0 0.0
      %4252 = vmatmul.mubr.f32.gmra.mrb[0].mxu0 %v4108
      %v4253 = vpop.f32.mrb[0].mxu0
      %v4254 = vadd.f32 0.0, %v4253
      %v4255 = vpop.f32.mrb[0].mxu0
      %4256 = vmatprep.mubr.f32.mxu0 0.0
      %4257 = vmatmul.mubr.f32.gmra.mrb[0].mxu0 %v4111
      %v4258 = vpop.f32.mrb[0].mxu0
      %v4259 = vadd.f32 0.0, %v4258
      %v4260 = vpop.f32.mrb[0].mxu0
      %4261 = vmatprep.mubr.f32.mxu0 0.0
      %4262 = vmatmul.mubr.f32.gmra.mrb[0].mxu0 %v4114
      %v4263 = vpop.f32.mrb[0].mxu0
      %v4264 = vadd.f32 0.0, %v4263
      %v4265 = vpop.f32.mrb[0].mxu0
      %4266 = vmatprep.mubr.f32.mxu0 0.0
      %4267 = vmatmul.mubr.f32.gmra.mrb[0].mxu0 %v4117
      %v4268 = vpop.f32.mrb[0].mxu0
      %v4269 = vadd.f32 0.0, %v4268
      %v4270 = vpop.f32.mrb[0].mxu0
      %4271 = vmatprep.mubr.f32.mxu0 0.0
      %4272 = vmatmul.mubr.f32.gmra.mrb[0].mxu0 %v4120
      %v4273 = vpop.f32.mrb[0].mxu0
      %v4274 = vadd.f32 0.0, %v4273
      %v4275 = vpop.f32.mrb[0].mxu0
      %4276 = vmatprep.mubr.f32.mxu0 0.0
      %4277 = vmatmul.mubr.f32.gmra.mrb[0].mxu0 %v4123
      %v4278 = vpop.f32.mrb[0].mxu0
      %v4279 = vadd.f32 0.0, %v4278
      %v4280 = vpop.f32.mrb[0].mxu0
      %4281 = vmatprep.mubr.f32.mxu0 0.0
      %4282 = vmatmul.mubr.f32.gmra.mrb[0].mxu0 %v4126
      %v4283 = vpop.f32.mrb[0].mxu0
      %v4284 = vadd.f32 0.0, %v4283
      %v4285 = vpop.f32.mrb[0].mxu0
      %4286 = vmatprep.mubr.f32.mxu0 0.0
      %4287 = vmatmul.mubr.f32.gmra.mrb[0].mxu0 %v4129
      %v4288 = vpop.f32.mrb[0].mxu0
      %v4289 = vadd.f32 0.0, %v4288
      %v4290 = vpop.f32.mrb[0].mxu0
      %4291 = vmatprep.mubr.f32.mxu0 0.0
      %4292 = vmatmul.mubr.f32.gmra.mrb[0].mxu0 %v4132
      %v4293 = vpop.f32.mrb[0].mxu0
      %v4294 = vadd.f32 0.0, %v4293
      %v4295 = vpop.f32.mrb[0].mxu0
      %4296 = vmatprep.mubr.f32.mxu0 0.0
      %4297 = vmatmul.mubr.f32.gmra.mrb[0].mxu0 %v4135
      %v4298 = vpop.f32.mrb[0].mxu0
      %v4299 = vadd.f32 0.0, %v4298
      %v4300 = vpop.f32.mrb[0].mxu0
      %4301 = vdwg.mxu0
      %4318 = vrot.lane.b32.xlu0 %v4214, 96
      %v4319 = vpop.permute.xlu0 %4318
      %4320 = vrot.lane.b32.xlu0 %v4219, 96
      %v4321 = vpop.permute.xlu0 %4320
      %4322 = vrot.lane.b32.xlu0 %v4224, 96
      %v4323 = vpop.permute.xlu0 %4322
      %4324 = vrot.lane.b32.xlu0 %v4229, 96
      %v4325 = vpop.permute.xlu0 %4324
      %4326 = vrot.lane.b32.xlu0 %v4234, 96
      %v4327 = vpop.permute.xlu0 %4326
      %4328 = vrot.lane.b32.xlu0 %v4239, 96
      %v4329 = vpop.permute.xlu0 %4328
      %4330 = vrot.lane.b32.xlu0 %v4244, 96
      %v4331 = vpop.permute.xlu0 %4330
      %4332 = vrot.lane.b32.xlu0 %v4249, 96
      %v4333 = vpop.permute.xlu0 %4332
      %4334 = vrot.lane.b32.xlu0 %v4254, 96
      %v4335 = vpop.permute.xlu0 %4334
      %4336 = vrot.lane.b32.xlu0 %v4259, 96
      %v4337 = vpop.permute.xlu0 %4336
      %4338 = vrot.lane.b32.xlu0 %v4264, 96
      %v4339 = vpop.permute.xlu0 %4338
      %4340 = vrot.lane.b32.xlu0 %v4269, 96
      %v4341 = vpop.permute.xlu0 %4340
      %4342 = vrot.lane.b32.xlu0 %v4274, 96
      %v4343 = vpop.permute.xlu0 %4342
      %4344 = vrot.lane.b32.xlu0 %v4279, 96
      %v4345 = vpop.permute.xlu0 %4344
      %4346 = vrot.lane.b32.xlu0 %v4284, 96
      %v4347 = vpop.permute.xlu0 %4346
      %4348 = vrot.lane.b32.xlu0 %v4289, 96
      %v4349 = vpop.permute.xlu0 %4348
      %v4366 = vadd.f32 %v4204, %v4319
      %v4367 = vadd.f32 %v4209, %v4321
      %v4368 = vadd.f32 %v4214, %v4323
      %v4369 = vadd.f32 %v4219, %v4325
      %v4370 = vadd.f32 %v4224, %v4327
      %v4371 = vadd.f32 %v4229, %v4329
      %v4372 = vadd.f32 %v4234, %v4331
      %v4373 = vadd.f32 %v4239, %v4333
      %v4374 = vadd.f32 %v4244, %v4335
      %v4375 = vadd.f32 %v4249, %v4337
      %v4376 = vadd.f32 %v4254, %v4339
      %v4377 = vadd.f32 %v4259, %v4341
      %v4378 = vadd.f32 %v4264, %v4343
      %v4379 = vadd.f32 %v4269, %v4345
      %v4380 = vadd.f32 %v4274, %v4347
      %v4381 = vadd.f32 %v4279, %v4349
      %4384 = vrot.lane.b32.xlu0 %v4224, 64
      %v4385 = vpop.permute.xlu0 %4384
      %4386 = vrot.lane.b32.xlu0 %v4229, 64
      %v4387 = vpop.permute.xlu0 %4386
      %4388 = vrot.lane.b32.xlu0 %v4234, 64
      %v4389 = vpop.permute.xlu0 %4388
      %4390 = vrot.lane.b32.xlu0 %v4239, 64
      %v4391 = vpop.permute.xlu0 %4390
      %4392 = vrot.lane.b32.xlu0 %v4244, 64
      %v4393 = vpop.permute.xlu0 %4392
      %4394 = vrot.lane.b32.xlu0 %v4249, 64
      %v4395 = vpop.permute.xlu0 %4394
      %4396 = vrot.lane.b32.xlu0 %v4254, 64
      %v4397 = vpop.permute.xlu0 %4396
      %4398 = vrot.lane.b32.xlu0 %v4259, 64
      %v4399 = vpop.permute.xlu0 %4398
      %4400 = vrot.lane.b32.xlu0 %v4264, 64
      %v4401 = vpop.permute.xlu0 %4400
      %4402 = vrot.lane.b32.xlu0 %v4269, 64
      %v4403 = vpop.permute.xlu0 %4402
      %4404 = vrot.lane.b32.xlu0 %v4274, 64
      %v4405 = vpop.permute.xlu0 %4404
      %4406 = vrot.lane.b32.xlu0 %v4279, 64
      %v4407 = vpop.permute.xlu0 %4406
      %4408 = vrot.lane.b32.xlu0 %v4284, 64
      %v4409 = vpop.permute.xlu0 %4408
      %4410 = vrot.lane.b32.xlu0 %v4289, 64
      %v4411 = vpop.permute.xlu0 %4410
      %4412 = vrot.lane.b32.xlu0 %v4294, 64
      %v4413 = vpop.permute.xlu0 %4412
      %4414 = vrot.lane.b32.xlu0 %v4299, 64
      %v4415 = vpop.permute.xlu0 %4414
      %v4432 = vadd.f32 %v4366, %v4385
      %v4433 = vadd.f32 %v4367, %v4387
      %v4434 = vadd.f32 %v4368, %v4389
      %v4435 = vadd.f32 %v4369, %v4391
      %v4436 = vadd.f32 %v4370, %v4393
      %v4437 = vadd.f32 %v4371, %v4395
      %v4438 = vadd.f32 %v4372, %v4397
      %v4439 = vadd.f32 %v4373, %v4399
      %v4440 = vadd.f32 %v4374, %v4401
      %v4441 = vadd.f32 %v4375, %v4403
      %v4442 = vadd.f32 %v4376, %v4405
      %v4443 = vadd.f32 %v4377, %v4407
      %v4444 = vadd.f32 %v4378, %v4409
      %v4445 = vadd.f32 %v4379, %v4411
      %v4446 = vadd.f32 %v4380, %v4413
      %v4447 = vadd.f32 %v4381, %v4415
      %v4449 = vlaneseq
      %v4450 = vshrl.u32 %v4449, 7
      %v4451 = vsub.s32 0, %v4450
      %v4452 = vrot.slane %v1074, %v4451
      %v4454 = vadd.f32 %v4432, %v4452
      %v4455 = vadd.f32 %v4433, %v4452
      %v4456 = vadd.f32 %v4434, %v4452
      %v4457 = vadd.f32 %v4435, %v4452
      %v4458 = vadd.f32 %v4436, %v4452
      %v4459 = vadd.f32 %v4437, %v4452
      %v4460 = vadd.f32 %v4438, %v4452
      %v4461 = vadd.f32 %v4439, %v4452
      %v4462 = vadd.f32 %v4440, %v4452
      %v4463 = vadd.f32 %v4441, %v4452
      %v4464 = vadd.f32 %v4442, %v4452
      %v4465 = vadd.f32 %v4443, %v4452
      %v4466 = vadd.f32 %v4444, %v4452
      %v4467 = vadd.f32 %v4445, %v4452
      %v4468 = vadd.f32 %v4446, %v4452
      %v4469 = vadd.f32 %v4447, %v4452
      %v4471 = vlaneseq
      %v4472 = vshrl.u32 %v4471, 7
      %v4473 = vsub.s32 0, %v4472
      %v4474 = vrot.slane %v1075, %v4473
      %4475 = vrot.lane.b32.xlu0 %v4474, 96
      %v4476 = vpop.permute.xlu0 %4475
      %v4478 = vadd.f32 %v4224, %v4476
      %v4479 = vadd.f32 %v4229, %v4476
      %v4480 = vadd.f32 %v4234, %v4476
      %v4481 = vadd.f32 %v4239, %v4476
      %v4482 = vadd.f32 %v4244, %v4476
      %v4483 = vadd.f32 %v4249, %v4476
      %v4484 = vadd.f32 %v4254, %v4476
      %v4485 = vadd.f32 %v4259, %v4476
      %v4486 = vadd.f32 %v4264, %v4476
      %v4487 = vadd.f32 %v4269, %v4476
      %v4488 = vadd.f32 %v4274, %v4476
      %v4489 = vadd.f32 %v4279, %v4476
      %v4490 = vadd.f32 %v4284, %v4476
      %v4491 = vadd.f32 %v4289, %v4476
      %v4492 = vadd.f32 %v4294, %v4476
      %v4493 = vadd.f32 %v4299, %v4476
      %4510 = vrot.lane.b32.xlu0 %v4478, 32
      %v4511 = vpop.permute.xlu0 %4510
      %4512 = vrot.lane.b32.xlu0 %v4479, 32
      %v4513 = vpop.permute.xlu0 %4512
      %4514 = vrot.lane.b32.xlu0 %v4480, 32
      %v4515 = vpop.permute.xlu0 %4514
      %4516 = vrot.lane.b32.xlu0 %v4481, 32
      %v4517 = vpop.permute.xlu0 %4516
      %4518 = vrot.lane.b32.xlu0 %v4482, 32
      %v4519 = vpop.permute.xlu0 %4518
      %4520 = vrot.lane.b32.xlu0 %v4483, 32
      %v4521 = vpop.permute.xlu0 %4520
      %4522 = vrot.lane.b32.xlu0 %v4484, 32
      %v4523 = vpop.permute.xlu0 %4522
      %4524 = vrot.lane.b32.xlu0 %v4485, 32
      %v4525 = vpop.permute.xlu0 %4524
      %4526 = vrot.lane.b32.xlu0 %v4486, 32
      %v4527 = vpop.permute.xlu0 %4526
      %4528 = vrot.lane.b32.xlu0 %v4487, 32
      %v4529 = vpop.permute.xlu0 %4528
      %4530 = vrot.lane.b32.xlu0 %v4488, 32
      %v4531 = vpop.permute.xlu0 %4530
      %4532 = vrot.lane.b32.xlu0 %v4489, 32
      %v4533 = vpop.permute.xlu0 %4532
      %4534 = vrot.lane.b32.xlu0 %v4490, 32
      %v4535 = vpop.permute.xlu0 %4534
      %4536 = vrot.lane.b32.xlu0 %v4491, 32
      %v4537 = vpop.permute.xlu0 %4536
      %4538 = vrot.lane.b32.xlu0 %v4492, 32
      %v4539 = vpop.permute.xlu0 %4538
      %4540 = vrot.lane.b32.xlu0 %v4493, 32
      %v4541 = vpop.permute.xlu0 %4540
      %v4558 = vadd.f32 %v4454, %v4511
      %v4559 = vadd.f32 %v4455, %v4513
      %v4560 = vadd.f32 %v4456, %v4515
      %v4561 = vadd.f32 %v4457, %v4517
      %v4562 = vadd.f32 %v4458, %v4519
      %v4563 = vadd.f32 %v4459, %v4521
      %v4564 = vadd.f32 %v4460, %v4523
      %v4565 = vadd.f32 %v4461, %v4525
      %v4566 = vadd.f32 %v4462, %v4527
      %v4567 = vadd.f32 %v4463, %v4529
      %v4568 = vadd.f32 %v4464, %v4531
      %v4569 = vadd.f32 %v4465, %v4533
      %v4570 = vadd.f32 %v4466, %v4535
      %v4571 = vadd.f32 %v4467, %v4537
      %v4572 = vadd.f32 %v4468, %v4539
      %v4573 = vadd.f32 %v4469, %v4541
      %v4574 = vxor.u32 %v4454, 2147483648
      %v4575 = vxor.u32 %v4455, 2147483648
      %v4576 = vxor.u32 %v4456, 2147483648
      %v4577 = vxor.u32 %v4457, 2147483648
      %v4578 = vxor.u32 %v4458, 2147483648
      %v4579 = vxor.u32 %v4459, 2147483648
      %v4580 = vxor.u32 %v4460, 2147483648
      %v4581 = vxor.u32 %v4461, 2147483648
      %v4582 = vxor.u32 %v4462, 2147483648
      %v4583 = vxor.u32 %v4463, 2147483648
      %v4584 = vxor.u32 %v4464, 2147483648
      %v4585 = vxor.u32 %v4465, 2147483648
      %v4586 = vxor.u32 %v4466, 2147483648
      %v4587 = vxor.u32 %v4467, 2147483648
      %v4588 = vxor.u32 %v4468, 2147483648
      %v4589 = vxor.u32 %v4469, 2147483648
      %v4590 = vmul.f32 %v4574, 1.442695
      %v4591 = vpow.pop %v4590
      %v4592 = vmul.f32 %v4575, 1.442695
      %v4593 = vpow.pop %v4592
      %v4594 = vmul.f32 %v4576, 1.442695
      %v4595 = vpow.pop %v4594
      %v4596 = vmul.f32 %v4577, 1.442695
      %v4597 = vpow.pop %v4596
      %v4598 = vmul.f32 %v4578, 1.442695
      %v4599 = vpow.pop %v4598
      %v4600 = vmul.f32 %v4579, 1.442695
      %v4601 = vpow.pop %v4600
      %v4602 = vmul.f32 %v4580, 1.442695
      %v4603 = vpow.pop %v4602
      %v4604 = vmul.f32 %v4581, 1.442695
      %v4605 = vpow.pop %v4604
      %v4606 = vmul.f32 %v4582, 1.442695
      %v4607 = vpow.pop %v4606
      %v4608 = vmul.f32 %v4583, 1.442695
      %v4609 = vpow.pop %v4608
      %v4610 = vmul.f32 %v4584, 1.442695
      %v4611 = vpow.pop %v4610
      %v4612 = vmul.f32 %v4585, 1.442695
      %v4613 = vpow.pop %v4612
      %v4614 = vmul.f32 %v4586, 1.442695
      %v4615 = vpow.pop %v4614
      %v4616 = vmul.f32 %v4587, 1.442695
      %v4617 = vpow.pop %v4616
      %v4618 = vmul.f32 %v4588, 1.442695
      %v4619 = vpow.pop %v4618
      %v4620 = vmul.f32 %v4589, 1.442695
      %v4621 = vpow.pop %v4620
      %v4622 = vadd.f32 %v4591, 1.0
      %v4623 = vadd.f32 %v4593, 1.0
      %v4624 = vadd.f32 %v4595, 1.0
      %v4625 = vadd.f32 %v4597, 1.0
      %v4626 = vadd.f32 %v4599, 1.0
      %v4627 = vadd.f32 %v4601, 1.0
      %v4628 = vadd.f32 %v4603, 1.0
      %v4629 = vadd.f32 %v4605, 1.0
      %v4630 = vadd.f32 %v4607, 1.0
      %v4631 = vadd.f32 %v4609, 1.0
      %v4632 = vadd.f32 %v4611, 1.0
      %v4633 = vadd.f32 %v4613, 1.0
      %v4634 = vadd.f32 %v4615, 1.0
      %v4635 = vadd.f32 %v4617, 1.0
      %v4636 = vadd.f32 %v4619, 1.0
      %v4637 = vadd.f32 %v4621, 1.0
      %v4638 = vrcp.pop %v4622
      %v4639 = vmul.f32 1.0, %v4638
      %v4640 = vrcp.pop %v4623
      %v4641 = vmul.f32 1.0, %v4640
      %v4642 = vrcp.pop %v4624
      %v4643 = vmul.f32 1.0, %v4642
      %v4644 = vrcp.pop %v4625
      %v4645 = vmul.f32 1.0, %v4644
      %v4646 = vrcp.pop %v4626
      %v4647 = vmul.f32 1.0, %v4646
      %v4648 = vrcp.pop %v4627
      %v4649 = vmul.f32 1.0, %v4648
      %v4650 = vrcp.pop %v4628
      %v4651 = vmul.f32 1.0, %v4650
      %v4652 = vrcp.pop %v4629
      %v4653 = vmul.f32 1.0, %v4652
      %v4654 = vrcp.pop %v4630
      %v4655 = vmul.f32 1.0, %v4654
      %v4656 = vrcp.pop %v4631
      %v4657 = vmul.f32 1.0, %v4656
      %v4658 = vrcp.pop %v4632
      %v4659 = vmul.f32 1.0, %v4658
      %v4660 = vrcp.pop %v4633
      %v4661 = vmul.f32 1.0, %v4660
      %v4662 = vrcp.pop %v4634
      %v4663 = vmul.f32 1.0, %v4662
      %v4664 = vrcp.pop %v4635
      %v4665 = vmul.f32 1.0, %v4664
      %v4666 = vrcp.pop %v4636
      %v4667 = vmul.f32 1.0, %v4666
      %v4668 = vrcp.pop %v4637
      %v4669 = vmul.f32 1.0, %v4668
      %4686 = vrot.lane.b32.xlu0 %v4639, 112
      %v4687 = vpop.permute.xlu0 %4686
      %4688 = vrot.lane.b32.xlu0 %v4641, 112
      %v4689 = vpop.permute.xlu0 %4688
      %4690 = vrot.lane.b32.xlu0 %v4643, 112
      %v4691 = vpop.permute.xlu0 %4690
      %4692 = vrot.lane.b32.xlu0 %v4645, 112
      %v4693 = vpop.permute.xlu0 %4692
      %4694 = vrot.lane.b32.xlu0 %v4647, 112
      %v4695 = vpop.permute.xlu0 %4694
      %4696 = vrot.lane.b32.xlu0 %v4649, 112
      %v4697 = vpop.permute.xlu0 %4696
      %4698 = vrot.lane.b32.xlu0 %v4651, 112
      %v4699 = vpop.permute.xlu0 %4698
      %4700 = vrot.lane.b32.xlu0 %v4653, 112
      %v4701 = vpop.permute.xlu0 %4700
      %4702 = vrot.lane.b32.xlu0 %v4655, 112
      %v4703 = vpop.permute.xlu0 %4702
      %4704 = vrot.lane.b32.xlu0 %v4657, 112
      %v4705 = vpop.permute.xlu0 %4704
      %4706 = vrot.lane.b32.xlu0 %v4659, 112
      %v4707 = vpop.permute.xlu0 %4706
      %4708 = vrot.lane.b32.xlu0 %v4661, 112
      %v4709 = vpop.permute.xlu0 %4708
      %4710 = vrot.lane.b32.xlu0 %v4663, 112
      %v4711 = vpop.permute.xlu0 %4710
      %4712 = vrot.lane.b32.xlu0 %v4665, 112
      %v4713 = vpop.permute.xlu0 %4712
      %4714 = vrot.lane.b32.xlu0 %v4667, 112
      %v4715 = vpop.permute.xlu0 %4714
      %4716 = vrot.lane.b32.xlu0 %v4669, 112
      %v4717 = vpop.permute.xlu0 %4716
      %v4734 = vmul.f32 %v4558, %v4687
      %v4735 = vmul.f32 %v4559, %v4689
      %v4736 = vmul.f32 %v4560, %v4691
      %v4737 = vmul.f32 %v4561, %v4693
      %v4738 = vmul.f32 %v4562, %v4695
      %v4739 = vmul.f32 %v4563, %v4697
      %v4740 = vmul.f32 %v4564, %v4699
      %v4741 = vmul.f32 %v4565, %v4701
      %v4742 = vmul.f32 %v4566, %v4703
      %v4743 = vmul.f32 %v4567, %v4705
      %v4744 = vmul.f32 %v4568, %v4707
      %v4745 = vmul.f32 %v4569, %v4709
      %v4746 = vmul.f32 %v4570, %v4711
      %v4747 = vmul.f32 %v4571, %v4713
      %v4748 = vmul.f32 %v4572, %v4715
      %v4749 = vmul.f32 %v4573, %v4717
      %v4750 = vsel %vm1898, %v4734, 0.0
      %4751 = vadd.xlane.f32.xlu0 %v4750
      %v4752 = vpop.xlane.xlu0 %4751
      %v4753 = vsel %vm1898, %v4735, 0.0
      %4754 = vadd.xlane.f32.xlu0 %v4753
      %v4755 = vpop.xlane.xlu0 %4754
      %v4756 = vsel %vm1898, %v4736, 0.0
      %4757 = vadd.xlane.f32.xlu0 %v4756
      %v4758 = vpop.xlane.xlu0 %4757
      %v4759 = vsel %vm1898, %v4737, 0.0
      %4760 = vadd.xlane.f32.xlu0 %v4759
      %v4761 = vpop.xlane.xlu0 %4760
      %v4762 = vsel %vm1898, %v4738, 0.0
      %4763 = vadd.xlane.f32.xlu0 %v4762
      %v4764 = vpop.xlane.xlu0 %4763
      %v4765 = vsel %vm1898, %v4739, 0.0
      %4766 = vadd.xlane.f32.xlu0 %v4765
      %v4767 = vpop.xlane.xlu0 %4766
      %v4768 = vsel %vm1898, %v4740, 0.0
      %4769 = vadd.xlane.f32.xlu0 %v4768
      %v4770 = vpop.xlane.xlu0 %4769
      %v4771 = vsel %vm1898, %v4741, 0.0
      %4772 = vadd.xlane.f32.xlu0 %v4771
      %v4773 = vpop.xlane.xlu0 %4772
      %v4774 = vsel %vm1898, %v4742, 0.0
      %4775 = vadd.xlane.f32.xlu0 %v4774
      %v4776 = vpop.xlane.xlu0 %4775
      %v4777 = vsel %vm1898, %v4743, 0.0
      %4778 = vadd.xlane.f32.xlu0 %v4777
      %v4779 = vpop.xlane.xlu0 %4778
      %v4780 = vsel %vm1898, %v4744, 0.0
      %4781 = vadd.xlane.f32.xlu0 %v4780
      %v4782 = vpop.xlane.xlu0 %4781
      %v4783 = vsel %vm1898, %v4745, 0.0
      %4784 = vadd.xlane.f32.xlu0 %v4783
      %v4785 = vpop.xlane.xlu0 %4784
      %v4786 = vsel %vm1898, %v4746, 0.0
      %4787 = vadd.xlane.f32.xlu0 %v4786
      %v4788 = vpop.xlane.xlu0 %4787
      %v4789 = vsel %vm1898, %v4747, 0.0
      %4790 = vadd.xlane.f32.xlu0 %v4789
      %v4791 = vpop.xlane.xlu0 %4790
      %v4792 = vsel %vm1898, %v4748, 0.0
      %4793 = vadd.xlane.f32.xlu0 %v4792
      %v4794 = vpop.xlane.xlu0 %4793
      %v4795 = vsel %vm1898, %v4749, 0.0
      %4796 = vadd.xlane.f32.xlu0 %v4795
      %v4797 = vpop.xlane.xlu0 %4796
      %v4798 = vadd.f32 %v4752, %v4755
      %v4799 = vrot.slane %v4798, 4
      %v4800 = vadd.f32 %v4798, %v4799
      %v4801 = vrot.slane %v4800, 2
      %v4802 = vadd.f32 %v4800, %v4801
      %v4803 = vrot.slane %v4802, 1
      %v4804 = vadd.f32 %v4802, %v4803
      %v4805 = vadd.f32 %v4758, %v4761
      %v4806 = vrot.slane %v4805, 4
      %v4807 = vadd.f32 %v4805, %v4806
      %v4808 = vrot.slane %v4807, 2
      %v4809 = vadd.f32 %v4807, %v4808
      %v4810 = vrot.slane %v4809, 1
      %v4811 = vadd.f32 %v4809, %v4810
      %v4812 = vadd.f32 %v4764, %v4767
      %v4813 = vrot.slane %v4812, 4
      %v4814 = vadd.f32 %v4812, %v4813
      %v4815 = vrot.slane %v4814, 2
      %v4816 = vadd.f32 %v4814, %v4815
      %v4817 = vrot.slane %v4816, 1
      %v4818 = vadd.f32 %v4816, %v4817
      %v4819 = vadd.f32 %v4770, %v4773
      %v4820 = vrot.slane %v4819, 4
      %v4821 = vadd.f32 %v4819, %v4820
      %v4822 = vrot.slane %v4821, 2
      %v4823 = vadd.f32 %v4821, %v4822
      %v4824 = vrot.slane %v4823, 1
      %v4825 = vadd.f32 %v4823, %v4824
      %v4826 = vadd.f32 %v4776, %v4779
      %v4827 = vrot.slane %v4826, 4
      %v4828 = vadd.f32 %v4826, %v4827
      %v4829 = vrot.slane %v4828, 2
      %v4830 = vadd.f32 %v4828, %v4829
      %v4831 = vrot.slane %v4830, 1
      %v4832 = vadd.f32 %v4830, %v4831
      %v4833 = vadd.f32 %v4782, %v4785
      %v4834 = vrot.slane %v4833, 4
      %v4835 = vadd.f32 %v4833, %v4834
      %v4836 = vrot.slane %v4835, 2
      %v4837 = vadd.f32 %v4835, %v4836
      %v4838 = vrot.slane %v4837, 1
      %v4839 = vadd.f32 %v4837, %v4838
      %v4840 = vadd.f32 %v4788, %v4791
      %v4841 = vrot.slane %v4840, 4
      %v4842 = vadd.f32 %v4840, %v4841
      %v4843 = vrot.slane %v4842, 2
      %v4844 = vadd.f32 %v4842, %v4843
      %v4845 = vrot.slane %v4844, 1
      %v4846 = vadd.f32 %v4844, %v4845
      %v4847 = vadd.f32 %v4794, %v4797
      %v4848 = vrot.slane %v4847, 4
      %v4849 = vadd.f32 %v4847, %v4848
      %v4850 = vrot.slane %v4849, 2
      %v4851 = vadd.f32 %v4849, %v4850
      %v4852 = vrot.slane %v4851, 1
      %v4853 = vadd.f32 %v4851, %v4852
      %v4854 = vrcp.pop 256.0
      %v4855 = vmul.f32 %v4804, %v4854
      %v4856 = vmul.f32 %v4811, %v4854
      %v4857 = vmul.f32 %v4818, %v4854
      %v4858 = vmul.f32 %v4825, %v4854
      %v4859 = vmul.f32 %v4832, %v4854
      %v4860 = vmul.f32 %v4839, %v4854
      %v4861 = vmul.f32 %v4846, %v4854
      %v4862 = vmul.f32 %v4853, %v4854
      %v4863 = vsub.f32 %v4734, %v4855
      %v4864 = vsub.f32 %v4735, %v4855
      %v4865 = vsub.f32 %v4736, %v4856
      %v4866 = vsub.f32 %v4737, %v4856
      %v4867 = vsub.f32 %v4738, %v4857
      %v4868 = vsub.f32 %v4739, %v4857
      %v4869 = vsub.f32 %v4740, %v4858
      %v4870 = vsub.f32 %v4741, %v4858
      %v4871 = vsub.f32 %v4742, %v4859
      %v4872 = vsub.f32 %v4743, %v4859
      %v4873 = vsub.f32 %v4744, %v4860
      %v4874 = vsub.f32 %v4745, %v4860
      %v4875 = vsub.f32 %v4746, %v4861
      %v4876 = vsub.f32 %v4747, %v4861
      %v4877 = vsub.f32 %v4748, %v4862
      %v4878 = vsub.f32 %v4749, %v4862
      %v4879 = vmul.f32 %v4863, %v4863
      %v4880 = vmul.f32 %v4864, %v4864
      %v4881 = vmul.f32 %v4865, %v4865
      %v4882 = vmul.f32 %v4866, %v4866
      %v4883 = vmul.f32 %v4867, %v4867
      %v4884 = vmul.f32 %v4868, %v4868
      %v4885 = vmul.f32 %v4869, %v4869
      %v4886 = vmul.f32 %v4870, %v4870
      %v4887 = vmul.f32 %v4871, %v4871
      %v4888 = vmul.f32 %v4872, %v4872
      %v4889 = vmul.f32 %v4873, %v4873
      %v4890 = vmul.f32 %v4874, %v4874
      %v4891 = vmul.f32 %v4875, %v4875
      %v4892 = vmul.f32 %v4876, %v4876
      %v4893 = vmul.f32 %v4877, %v4877
      %v4894 = vmul.f32 %v4878, %v4878
      %v4895 = vsel %vm1898, %v4879, 0.0
      %4896 = vadd.xlane.f32.xlu0 %v4895
      %v4897 = vpop.xlane.xlu0 %4896
      %v4898 = vsel %vm1898, %v4880, 0.0
      %4899 = vadd.xlane.f32.xlu0 %v4898
      %v4900 = vpop.xlane.xlu0 %4899
      %v4901 = vsel %vm1898, %v4881, 0.0
      %4902 = vadd.xlane.f32.xlu0 %v4901
      %v4903 = vpop.xlane.xlu0 %4902
      %v4904 = vsel %vm1898, %v4882, 0.0
      %4905 = vadd.xlane.f32.xlu0 %v4904
      %v4906 = vpop.xlane.xlu0 %4905
      %v4907 = vsel %vm1898, %v4883, 0.0
      %4908 = vadd.xlane.f32.xlu0 %v4907
      %v4909 = vpop.xlane.xlu0 %4908
      %v4910 = vsel %vm1898, %v4884, 0.0
      %4911 = vadd.xlane.f32.xlu0 %v4910
      %v4912 = vpop.xlane.xlu0 %4911
      %v4913 = vsel %vm1898, %v4885, 0.0
      %4914 = vadd.xlane.f32.xlu0 %v4913
      %v4915 = vpop.xlane.xlu0 %4914
      %v4916 = vsel %vm1898, %v4886, 0.0
      %4917 = vadd.xlane.f32.xlu0 %v4916
      %v4918 = vpop.xlane.xlu0 %4917
      %v4919 = vsel %vm1898, %v4887, 0.0
      %4920 = vadd.xlane.f32.xlu0 %v4919
      %v4921 = vpop.xlane.xlu0 %4920
      %v4922 = vsel %vm1898, %v4888, 0.0
      %4923 = vadd.xlane.f32.xlu0 %v4922
      %v4924 = vpop.xlane.xlu0 %4923
      %v4925 = vsel %vm1898, %v4889, 0.0
      %4926 = vadd.xlane.f32.xlu0 %v4925
      %v4927 = vpop.xlane.xlu0 %4926
      %v4928 = vsel %vm1898, %v4890, 0.0
      %4929 = vadd.xlane.f32.xlu0 %v4928
      %v4930 = vpop.xlane.xlu0 %4929
      %v4931 = vsel %vm1898, %v4891, 0.0
      %4932 = vadd.xlane.f32.xlu0 %v4931
      %v4933 = vpop.xlane.xlu0 %4932
      %v4934 = vsel %vm1898, %v4892, 0.0
      %4935 = vadd.xlane.f32.xlu0 %v4934
      %v4936 = vpop.xlane.xlu0 %4935
      %v4937 = vsel %vm1898, %v4893, 0.0
      %4938 = vadd.xlane.f32.xlu0 %v4937
      %v4939 = vpop.xlane.xlu0 %4938
      %v4940 = vsel %vm1898, %v4894, 0.0
      %4941 = vadd.xlane.f32.xlu0 %v4940
      %v4942 = vpop.xlane.xlu0 %4941
      %v4943 = vadd.f32 %v4897, %v4900
      %v4944 = vrot.slane %v4943, 4
      %v4945 = vadd.f32 %v4943, %v4944
      %v4946 = vrot.slane %v4945, 2
      %v4947 = vadd.f32 %v4945, %v4946
      %v4948 = vrot.slane %v4947, 1
      %v4949 = vadd.f32 %v4947, %v4948
      %v4950 = vadd.f32 %v4903, %v4906
      %v4951 = vrot.slane %v4950, 4
      %v4952 = vadd.f32 %v4950, %v4951
      %v4953 = vrot.slane %v4952, 2
      %v4954 = vadd.f32 %v4952, %v4953
      %v4955 = vrot.slane %v4954, 1
      %v4956 = vadd.f32 %v4954, %v4955
      %v4957 = vadd.f32 %v4909, %v4912
      %v4958 = vrot.slane %v4957, 4
      %v4959 = vadd.f32 %v4957, %v4958
      %v4960 = vrot.slane %v4959, 2
      %v4961 = vadd.f32 %v4959, %v4960
      %v4962 = vrot.slane %v4961, 1
      %v4963 = vadd.f32 %v4961, %v4962
      %v4964 = vadd.f32 %v4915, %v4918
      %v4965 = vrot.slane %v4964, 4
      %v4966 = vadd.f32 %v4964, %v4965
      %v4967 = vrot.slane %v4966, 2
      %v4968 = vadd.f32 %v4966, %v4967
      %v4969 = vrot.slane %v4968, 1
      %v4970 = vadd.f32 %v4968, %v4969
      %v4971 = vadd.f32 %v4921, %v4924
      %v4972 = vrot.slane %v4971, 4
      %v4973 = vadd.f32 %v4971, %v4972
      %v4974 = vrot.slane %v4973, 2
      %v4975 = vadd.f32 %v4973, %v4974
      %v4976 = vrot.slane %v4975, 1
      %v4977 = vadd.f32 %v4975, %v4976
      %v4978 = vadd.f32 %v4927, %v4930
      %v4979 = vrot.slane %v4978, 4
      %v4980 = vadd.f32 %v4978, %v4979
      %v4981 = vrot.slane %v4980, 2
      %v4982 = vadd.f32 %v4980, %v4981
      %v4983 = vrot.slane %v4982, 1
      %v4984 = vadd.f32 %v4982, %v4983
      %v4985 = vadd.f32 %v4933, %v4936
      %v4986 = vrot.slane %v4985, 4
      %v4987 = vadd.f32 %v4985, %v4986
      %v4988 = vrot.slane %v4987, 2
      %v4989 = vadd.f32 %v4987, %v4988
      %v4990 = vrot.slane %v4989, 1
      %v4991 = vadd.f32 %v4989, %v4990
      %v4992 = vadd.f32 %v4939, %v4942
      %v4993 = vrot.slane %v4992, 4
      %v4994 = vadd.f32 %v4992, %v4993
      %v4995 = vrot.slane %v4994, 2
      %v4996 = vadd.f32 %v4994, %v4995
      %v4997 = vrot.slane %v4996, 1
      %v4998 = vadd.f32 %v4996, %v4997
      %v4999 = vmul.f32 %v4949, %v4854
      %v5000 = vmul.f32 %v4956, %v4854
      %v5001 = vmul.f32 %v4963, %v4854
      %v5002 = vmul.f32 %v4970, %v4854
      %v5003 = vmul.f32 %v4977, %v4854
      %v5004 = vmul.f32 %v4984, %v4854
      %v5005 = vmul.f32 %v4991, %v4854
      %v5006 = vmul.f32 %v4998, %v4854
      %v5007 = vadd.f32 %v4999, 1e-12
      %v5008 = vadd.f32 %v5000, 1e-12
      %v5009 = vadd.f32 %v5001, 1e-12
      %v5010 = vadd.f32 %v5002, 1e-12
      %v5011 = vadd.f32 %v5003, 1e-12
      %v5012 = vadd.f32 %v5004, 1e-12
      %v5013 = vadd.f32 %v5005, 1e-12
      %v5014 = vadd.f32 %v5006, 1e-12
      %v5015 = vrsqrt.pop %v5007
      %v5016 = vrsqrt.pop %v5008
      %v5017 = vrsqrt.pop %v5009
      %v5018 = vrsqrt.pop %v5010
      %v5019 = vrsqrt.pop %v5011
      %v5020 = vrsqrt.pop %v5012
      %v5021 = vrsqrt.pop %v5013
      %v5022 = vrsqrt.pop %v5014
      %v5023 = vmul.f32 %v4863, %v5015
      %v5024 = vmul.f32 %v4864, %v5015
      %v5025 = vmul.f32 %v4865, %v5016
      %v5026 = vmul.f32 %v4866, %v5016
      %v5027 = vmul.f32 %v4867, %v5017
      %v5028 = vmul.f32 %v4868, %v5017
      %v5029 = vmul.f32 %v4869, %v5018
      %v5030 = vmul.f32 %v4870, %v5018
      %v5031 = vmul.f32 %v4871, %v5019
      %v5032 = vmul.f32 %v4872, %v5019
      %v5033 = vmul.f32 %v4873, %v5020
      %v5034 = vmul.f32 %v4874, %v5020
      %v5035 = vmul.f32 %v4875, %v5021
      %v5036 = vmul.f32 %v4876, %v5021
      %v5037 = vmul.f32 %v4877, %v5022
      %v5038 = vmul.f32 %v4878, %v5022
      %v5039 = vmul.f32 %v5023, %v1076
      %v5040 = vmul.f32 %v5024, %v1077
      %v5041 = vmul.f32 %v5025, %v1076
      %v5042 = vmul.f32 %v5026, %v1077
      %v5043 = vmul.f32 %v5027, %v1076
      %v5044 = vmul.f32 %v5028, %v1077
      %v5045 = vmul.f32 %v5029, %v1076
      %v5046 = vmul.f32 %v5030, %v1077
      %v5047 = vmul.f32 %v5031, %v1076
      %v5048 = vmul.f32 %v5032, %v1077
      %v5049 = vmul.f32 %v5033, %v1076
      %v5050 = vmul.f32 %v5034, %v1077
      %v5051 = vmul.f32 %v5035, %v1076
      %v5052 = vmul.f32 %v5036, %v1077
      %v5053 = vmul.f32 %v5037, %v1076
      %v5054 = vmul.f32 %v5038, %v1077
      %v5055 = vadd.f32 %v5039, %v1078
      %v5056 = vadd.f32 %v5040, %v1079
      %v5057 = vadd.f32 %v5041, %v1078
      %v5058 = vadd.f32 %v5042, %v1079
      %v5059 = vadd.f32 %v5043, %v1078
      %v5060 = vadd.f32 %v5044, %v1079
      %v5061 = vadd.f32 %v5045, %v1078
      %v5062 = vadd.f32 %v5046, %v1079
      %v5063 = vadd.f32 %v5047, %v1078
      %v5064 = vadd.f32 %v5048, %v1079
      %v5065 = vadd.f32 %v5049, %v1078
      %v5066 = vadd.f32 %v5050, %v1079
      %v5067 = vadd.f32 %v5051, %v1078
      %v5068 = vadd.f32 %v5052, %v1079
      %v5069 = vadd.f32 %v5053, %v1078
      %v5070 = vadd.f32 %v5054, %v1079
      %v5071 = vld [vmem:[%s27] sm:$0xff]
      %v5072 = vld [vmem:[%s27 + $0x8] sm:$0xff]
      %v5073 = vld [vmem:[%s29] sm:$0xff]
      %v5074 = vld [vmem:[%s29 + $0x8] sm:$0xff]
      %v5075 = vld [vmem:[%s31] sm:$0x1]
      %v5076 = vld [vmem:[%s33] sm:$0x1]
      %v5077 = vld [vmem:[%s35] sm:$0xff]
      %v5078 = vld [vmem:[%s35 + $0x8] sm:$0xff]
      %v5079 = vld [vmem:[%s37] sm:$0x1]
      %v5080 = vld [vmem:[%s39] sm:$0xff]
      %v5081 = vld [vmem:[%s39 + $0x8] sm:$0xff]
      %v5082 = vld [vmem:[%s41] sm:$0xff]
      %v5083 = vld [vmem:[%s43] sm:$0x1]
      %v5084 = vld [vmem:[%s45] sm:$0x1]
      %v5085 = vld [vmem:[%s47] sm:$0xff]
      %v5086 = vld [vmem:[%s47 + $0x8] sm:$0xff]
      %v5087 = vld [vmem:[%s49] sm:$0xff]
      %v5088 = vld [vmem:[%s49 + $0x8] sm:$0xff]
      %v5090 = vsel %vm1898, %v5055, 0
      %v5093 = vsel %vm1898, %v5056, 0
      %v5096 = vsel %vm1898, %v5057, 0
      %v5099 = vsel %vm1898, %v5058, 0
      %v5102 = vsel %vm1898, %v5059, 0
      %v5105 = vsel %vm1898, %v5060, 0
      %v5108 = vsel %vm1898, %v5061, 0
      %v5111 = vsel %vm1898, %v5062, 0
      %v5114 = vsel %vm1898, %v5063, 0
      %v5117 = vsel %vm1898, %v5064, 0
      %v5120 = vsel %vm1898, %v5065, 0
      %v5123 = vsel %vm1898, %v5066, 0
      %v5126 = vsel %vm1898, %v5067, 0
      %v5129 = vsel %vm1898, %v5068, 0
      %v5132 = vsel %vm1898, %v5069, 0
      %v5135 = vsel %vm1898, %v5070, 0
      %5137 = vmatprep.subr.mxu0 0.0
      %5138 = vmatpush1.msra.mxu0 %v5073
      %5139 = vmatprep.subr.mxu0 0.0
      %5140 = vmatpush1.msra.mxu0 %v5074
      %5141 = vmatprep.subr.mxu0 0.0
      %5142 = vmatpush1.msra.mxu0 0.0
      %5143 = vmatprep.subr.mxu0 0.0
      %5144 = vmatpush1.msra.mxu0 0.0
      %5145 = vmatprep.subr.mxu0 0.0
      %5146 = vmatpush1.msra.mxu0 0.0
      %5147 = vmatprep.subr.mxu0 0.0
      %5148 = vmatpush1.msra.mxu0 0.0
      %5149 = vmatprep.subr.mxu0 0.0
      %5150 = vmatpush1.msra.mxu0 0.0
      %5151 = vmatprep.subr.mxu0 0.0
      %5152 = vmatpush1.msra.mxu0 0.0
      %5153 = vmatprep.subr.mxu0 0.0
      %5154 = vmatpush1.msra.mxu0 0.0
      %5155 = vmatprep.subr.mxu0 0.0
      %5156 = vmatpush1.msra.mxu0 0.0
      %5157 = vmatprep.subr.mxu0 0.0
      %5158 = vmatpush1.msra.mxu0 0.0
      %5159 = vmatprep.subr.mxu0 0.0
      %5160 = vmatpush1.msra.mxu0 0.0
      %5161 = vmatprep.subr.mxu0 0.0
      %5162 = vmatpush1.msra.mxu0 0.0
      %5163 = vmatprep.subr.mxu0 0.0
      %5164 = vmatpush1.msra.mxu0 0.0
      %5165 = vmatprep.subr.mxu0 0.0
      %5166 = vmatpush1.msra.mxu0 0.0
      %5167 = vmatprep.subr.mxu0 0.0
      %5168 = vmatpush1.msra.mxu0 0.0
      %5169 = vmatprep.subr.mxu0 0.0
      %5170 = vmatpush1.msra.mxu0 0.0
      %5171 = vmatprep.subr.mxu0 0.0
      %5172 = vmatpush1.msra.mxu0 0.0
      %5173 = vmatprep.subr.mxu0 0.0
      %5174 = vmatpush1.msra.mxu0 0.0
      %5175 = vmatprep.subr.mxu0 0.0
      %5176 = vmatpush1.msra.mxu0 0.0
      %5177 = vmatprep.subr.mxu0 0.0
      %5178 = vmatpush1.msra.mxu0 0.0
      %5179 = vmatprep.subr.mxu0 0.0
      %5180 = vmatpush1.msra.mxu0 0.0
      %5181 = vmatprep.subr.mxu0 0.0
      %5182 = vmatpush1.msra.mxu0 0.0
      %5183 = vmatprep.subr.mxu0 0.0
      %5184 = vmatpush1.msra.mxu0 0.0
      %5185 = vmatprep.subr.mxu0 0.0
      %5186 = vmatpush1.msra.mxu0 0.0
      %5187 = vmatprep.subr.mxu0 0.0
      %5188 = vmatpush1.msra.mxu0 0.0
      %5189 = vmatprep.subr.mxu0 0.0
      %5190 = vmatpush1.msra.mxu0 0.0
      %5191 = vmatprep.subr.mxu0 0.0
      %5192 = vmatpush1.msra.mxu0 0.0
      %5193 = vmatprep.subr.mxu0 0.0
      %5194 = vmatpush1.msra.mxu0 0.0
      %5195 = vmatprep.subr.mxu0 0.0
      %5196 = vmatpush1.msra.mxu0 0.0
      %5197 = vmatprep.subr.mxu0 0.0
      %5198 = vmatpush1.msra.mxu0 0.0
      %5199 = vmatprep.subr.mxu0 0.0
      %5200 = vmatpush1.msra.mxu0 0.0
      %5201 = vmatprep.mubr.f32.mxu0 0.0
      %5202 = vmatmul.mubr.f32.gmra.mrb[0].mxu0 %v5090
      %v5203 = vpop.f32.mrb[0].mxu0
      %v5204 = vadd.f32 0.0, %v5203
      %v5205 = vpop.f32.mrb[0].mxu0
      %5206 = vmatprep.mubr.f32.mxu0 0.0
      %5207 = vmatmul.mubr.f32.gmra.mrb[0].mxu0 %v5093
      %v5208 = vpop.f32.mrb[0].mxu0
      %v5209 = vadd.f32 0.0, %v5208
      %v5210 = vpop.f32.mrb[0].mxu0
      %5211 = vmatprep.mubr.f32.mxu0 0.0
      %5212 = vmatmul.mubr.f32.gmra.mrb[0].mxu0 %v5096
      %v5213 = vpop.f32.mrb[0].mxu0
      %v5214 = vadd.f32 0.0, %v5213
      %v5215 = vpop.f32.mrb[0].mxu0
      %5216 = vmatprep.mubr.f32.mxu0 0.0
      %5217 = vmatmul.mubr.f32.gmra.mrb[0].mxu0 %v5099
      %v5218 = vpop.f32.mrb[0].mxu0
      %v5219 = vadd.f32 0.0, %v5218
      %v5220 = vpop.f32.mrb[0].mxu0
      %5221 = vmatprep.mubr.f32.mxu0 0.0
      %5222 = vmatmul.mubr.f32.gmra.mrb[0].mxu0 %v5102
      %v5223 = vpop.f32.mrb[0].mxu0
      %v5224 = vadd.f32 0.0, %v5223
      %v5225 = vpop.f32.mrb[0].mxu0
      %5226 = vmatprep.mubr.f32.mxu0 0.0
      %5227 = vmatmul.mubr.f32.gmra.mrb[0].mxu0 %v5105
      %v5228 = vpop.f32.mrb[0].mxu0
      %v5229 = vadd.f32 0.0, %v5228
      %v5230 = vpop.f32.mrb[0].mxu0
      %5231 = vmatprep.mubr.f32.mxu0 0.0
      %5232 = vmatmul.mubr.f32.gmra.mrb[0].mxu0 %v5108
      %v5233 = vpop.f32.mrb[0].mxu0
      %v5234 = vadd.f32 0.0, %v5233
      %v5235 = vpop.f32.mrb[0].mxu0
      %5236 = vmatprep.mubr.f32.mxu0 0.0
      %5237 = vmatmul.mubr.f32.gmra.mrb[0].mxu0 %v5111
      %v5238 = vpop.f32.mrb[0].mxu0
      %v5239 = vadd.f32 0.0, %v5238
      %v5240 = vpop.f32.mrb[0].mxu0
      %5241 = vmatprep.mubr.f32.mxu0 0.0
      %5242 = vmatmul.mubr.f32.gmra.mrb[0].mxu0 %v5114
      %v5243 = vpop.f32.mrb[0].mxu0
      %v5244 = vadd.f32 0.0, %v5243
      %v5245 = vpop.f32.mrb[0].mxu0
      %5246 = vmatprep.mubr.f32.mxu0 0.0
      %5247 = vmatmul.mubr.f32.gmra.mrb[0].mxu0 %v5117
      %v5248 = vpop.f32.mrb[0].mxu0
      %v5249 = vadd.f32 0.0, %v5248
      %v5250 = vpop.f32.mrb[0].mxu0
      %5251 = vmatprep.mubr.f32.mxu0 0.0
      %5252 = vmatmul.mubr.f32.gmra.mrb[0].mxu0 %v5120
      %v5253 = vpop.f32.mrb[0].mxu0
      %v5254 = vadd.f32 0.0, %v5253
      %v5255 = vpop.f32.mrb[0].mxu0
      %5256 = vmatprep.mubr.f32.mxu0 0.0
      %5257 = vmatmul.mubr.f32.gmra.mrb[0].mxu0 %v5123
      %v5258 = vpop.f32.mrb[0].mxu0
      %v5259 = vadd.f32 0.0, %v5258
      %v5260 = vpop.f32.mrb[0].mxu0
      %5261 = vmatprep.mubr.f32.mxu0 0.0
      %5262 = vmatmul.mubr.f32.gmra.mrb[0].mxu0 %v5126
      %v5263 = vpop.f32.mrb[0].mxu0
      %v5264 = vadd.f32 0.0, %v5263
      %v5265 = vpop.f32.mrb[0].mxu0
      %5266 = vmatprep.mubr.f32.mxu0 0.0
      %5267 = vmatmul.mubr.f32.gmra.mrb[0].mxu0 %v5129
      %v5268 = vpop.f32.mrb[0].mxu0
      %v5269 = vadd.f32 0.0, %v5268
      %v5270 = vpop.f32.mrb[0].mxu0
      %5271 = vmatprep.mubr.f32.mxu0 0.0
      %5272 = vmatmul.mubr.f32.gmra.mrb[0].mxu0 %v5132
      %v5273 = vpop.f32.mrb[0].mxu0
      %v5274 = vadd.f32 0.0, %v5273
      %v5275 = vpop.f32.mrb[0].mxu0
      %5276 = vmatprep.mubr.f32.mxu0 0.0
      %5277 = vmatmul.mubr.f32.gmra.mrb[0].mxu0 %v5135
      %v5278 = vpop.f32.mrb[0].mxu0
      %v5279 = vadd.f32 0.0, %v5278
      %v5280 = vpop.f32.mrb[0].mxu0
      %5281 = vdwg.mxu0
      %5294 = vrot.lane.b32.xlu0 %v5214, 96
      %v5295 = vpop.permute.xlu0 %5294
      %5296 = vrot.lane.b32.xlu0 %v5219, 96
      %v5297 = vpop.permute.xlu0 %5296
      %5298 = vrot.lane.b32.xlu0 %v5224, 96
      %v5299 = vpop.permute.xlu0 %5298
      %5300 = vrot.lane.b32.xlu0 %v5229, 96
      %v5301 = vpop.permute.xlu0 %5300
      %5302 = vrot.lane.b32.xlu0 %v5234, 96
      %v5303 = vpop.permute.xlu0 %5302
      %5304 = vrot.lane.b32.xlu0 %v5239, 96
      %v5305 = vpop.permute.xlu0 %5304
      %5306 = vrot.lane.b32.xlu0 %v5244, 96
      %v5307 = vpop.permute.xlu0 %5306
      %5308 = vrot.lane.b32.xlu0 %v5249, 96
      %v5309 = vpop.permute.xlu0 %5308
      %5310 = vrot.lane.b32.xlu0 %v5254, 96
      %v5311 = vpop.permute.xlu0 %5310
      %5312 = vrot.lane.b32.xlu0 %v5259, 96
      %v5313 = vpop.permute.xlu0 %5312
      %5314 = vrot.lane.b32.xlu0 %v5264, 96
      %v5315 = vpop.permute.xlu0 %5314
      %5316 = vrot.lane.b32.xlu0 %v5269, 96
      %v5317 = vpop.permute.xlu0 %5316
      %v5330 = vadd.f32 %v5204, %v5295
      %v5331 = vadd.f32 %v5209, %v5297
      %v5332 = vadd.f32 %v5214, %v5299
      %v5333 = vadd.f32 %v5219, %v5301
      %v5334 = vadd.f32 %v5224, %v5303
      %v5335 = vadd.f32 %v5229, %v5305
      %v5336 = vadd.f32 %v5234, %v5307
      %v5337 = vadd.f32 %v5239, %v5309
      %v5338 = vadd.f32 %v5244, %v5311
      %v5339 = vadd.f32 %v5249, %v5313
      %v5340 = vadd.f32 %v5254, %v5315
      %v5341 = vadd.f32 %v5259, %v5317
      %5344 = vrot.lane.b32.xlu0 %v5224, 64
      %v5345 = vpop.permute.xlu0 %5344
      %5346 = vrot.lane.b32.xlu0 %v5229, 64
      %v5347 = vpop.permute.xlu0 %5346
      %5348 = vrot.lane.b32.xlu0 %v5234, 64
      %v5349 = vpop.permute.xlu0 %5348
      %5350 = vrot.lane.b32.xlu0 %v5239, 64
      %v5351 = vpop.permute.xlu0 %5350
      %5352 = vrot.lane.b32.xlu0 %v5244, 64
      %v5353 = vpop.permute.xlu0 %5352
      %5354 = vrot.lane.b32.xlu0 %v5249, 64
      %v5355 = vpop.permute.xlu0 %5354
      %5356 = vrot.lane.b32.xlu0 %v5254, 64
      %v5357 = vpop.permute.xlu0 %5356
      %5358 = vrot.lane.b32.xlu0 %v5259, 64
      %v5359 = vpop.permute.xlu0 %5358
      %5360 = vrot.lane.b32.xlu0 %v5264, 64
      %v5361 = vpop.permute.xlu0 %5360
      %5362 = vrot.lane.b32.xlu0 %v5269, 64
      %v5363 = vpop.permute.xlu0 %5362
      %5364 = vrot.lane.b32.xlu0 %v5274, 64
      %v5365 = vpop.permute.xlu0 %5364
      %5366 = vrot.lane.b32.xlu0 %v5279, 64
      %v5367 = vpop.permute.xlu0 %5366
      %v5380 = vadd.f32 %v5330, %v5345
      %v5381 = vadd.f32 %v5331, %v5347
      %v5382 = vadd.f32 %v5332, %v5349
      %v5383 = vadd.f32 %v5333, %v5351
      %v5384 = vadd.f32 %v5334, %v5353
      %v5385 = vadd.f32 %v5335, %v5355
      %v5386 = vadd.f32 %v5336, %v5357
      %v5387 = vadd.f32 %v5337, %v5359
      %v5388 = vadd.f32 %v5338, %v5361
      %v5389 = vadd.f32 %v5339, %v5363
      %v5390 = vadd.f32 %v5340, %v5365
      %v5391 = vadd.f32 %v5341, %v5367
      %v5393 = vlaneseq
      %v5394 = vshrl.u32 %v5393, 7
      %v5395 = vsub.s32 0, %v5394
      %v5396 = vrot.slane %v5075, %v5395
      %v5398 = vadd.f32 %v5380, %v5396
      %v5399 = vadd.f32 %v5381, %v5396
      %v5400 = vadd.f32 %v5382, %v5396
      %v5401 = vadd.f32 %v5383, %v5396
      %v5402 = vadd.f32 %v5384, %v5396
      %v5403 = vadd.f32 %v5385, %v5396
      %v5404 = vadd.f32 %v5386, %v5396
      %v5405 = vadd.f32 %v5387, %v5396
      %v5406 = vadd.f32 %v5388, %v5396
      %v5407 = vadd.f32 %v5389, %v5396
      %v5408 = vadd.f32 %v5390, %v5396
      %v5409 = vadd.f32 %v5391, %v5396
      %v5411 = vlaneseq
      %v5412 = vshrl.u32 %v5411, 7
      %v5413 = vsub.s32 0, %v5412
      %v5414 = vrot.slane %v5076, %v5413
      %5415 = vrot.lane.b32.xlu0 %v5414, 96
      %v5416 = vpop.permute.xlu0 %5415
      %v5418 = vadd.f32 %v5224, %v5416
      %v5419 = vadd.f32 %v5229, %v5416
      %v5420 = vadd.f32 %v5234, %v5416
      %v5421 = vadd.f32 %v5239, %v5416
      %v5422 = vadd.f32 %v5244, %v5416
      %v5423 = vadd.f32 %v5249, %v5416
      %v5424 = vadd.f32 %v5254, %v5416
      %v5425 = vadd.f32 %v5259, %v5416
      %v5426 = vadd.f32 %v5264, %v5416
      %v5427 = vadd.f32 %v5269, %v5416
      %v5428 = vadd.f32 %v5274, %v5416
      %v5429 = vadd.f32 %v5279, %v5416
      %5442 = vrot.lane.b32.xlu0 %v5418, 32
      %v5443 = vpop.permute.xlu0 %5442
      %5444 = vrot.lane.b32.xlu0 %v5419, 32
      %v5445 = vpop.permute.xlu0 %5444
      %5446 = vrot.lane.b32.xlu0 %v5420, 32
      %v5447 = vpop.permute.xlu0 %5446
      %5448 = vrot.lane.b32.xlu0 %v5421, 32
      %v5449 = vpop.permute.xlu0 %5448
      %5450 = vrot.lane.b32.xlu0 %v5422, 32
      %v5451 = vpop.permute.xlu0 %5450
      %5452 = vrot.lane.b32.xlu0 %v5423, 32
      %v5453 = vpop.permute.xlu0 %5452
      %5454 = vrot.lane.b32.xlu0 %v5424, 32
      %v5455 = vpop.permute.xlu0 %5454
      %5456 = vrot.lane.b32.xlu0 %v5425, 32
      %v5457 = vpop.permute.xlu0 %5456
      %5458 = vrot.lane.b32.xlu0 %v5426, 32
      %v5459 = vpop.permute.xlu0 %5458
      %5460 = vrot.lane.b32.xlu0 %v5427, 32
      %v5461 = vpop.permute.xlu0 %5460
      %5462 = vrot.lane.b32.xlu0 %v5428, 32
      %v5463 = vpop.permute.xlu0 %5462
      %5464 = vrot.lane.b32.xlu0 %v5429, 32
      %v5465 = vpop.permute.xlu0 %5464
      %v5478 = vadd.f32 %v5398, %v5443
      %v5479 = vadd.f32 %v5399, %v5445
      %v5480 = vadd.f32 %v5400, %v5447
      %v5481 = vadd.f32 %v5401, %v5449
      %v5482 = vadd.f32 %v5402, %v5451
      %v5483 = vadd.f32 %v5403, %v5453
      %v5484 = vadd.f32 %v5404, %v5455
      %v5485 = vadd.f32 %v5405, %v5457
      %v5486 = vadd.f32 %v5406, %v5459
      %v5487 = vadd.f32 %v5407, %v5461
      %v5488 = vadd.f32 %v5408, %v5463
      %v5489 = vadd.f32 %v5409, %v5465
      %v5490 = vxor.u32 %v5398, 2147483648
      %v5491 = vxor.u32 %v5399, 2147483648
      %v5492 = vxor.u32 %v5400, 2147483648
      %v5493 = vxor.u32 %v5401, 2147483648
      %v5494 = vxor.u32 %v5402, 2147483648
      %v5495 = vxor.u32 %v5403, 2147483648
      %v5496 = vxor.u32 %v5404, 2147483648
      %v5497 = vxor.u32 %v5405, 2147483648
      %v5498 = vxor.u32 %v5406, 2147483648
      %v5499 = vxor.u32 %v5407, 2147483648
      %v5500 = vxor.u32 %v5408, 2147483648
      %v5501 = vxor.u32 %v5409, 2147483648
      %v5502 = vmul.f32 %v5490, 1.442695
      %v5503 = vpow.pop %v5502
      %v5504 = vmul.f32 %v5491, 1.442695
      %v5505 = vpow.pop %v5504
      %v5506 = vmul.f32 %v5492, 1.442695
      %v5507 = vpow.pop %v5506
      %v5508 = vmul.f32 %v5493, 1.442695
      %v5509 = vpow.pop %v5508
      %v5510 = vmul.f32 %v5494, 1.442695
      %v5511 = vpow.pop %v5510
      %v5512 = vmul.f32 %v5495, 1.442695
      %v5513 = vpow.pop %v5512
      %v5514 = vmul.f32 %v5496, 1.442695
      %v5515 = vpow.pop %v5514
      %v5516 = vmul.f32 %v5497, 1.442695
      %v5517 = vpow.pop %v5516
      %v5518 = vmul.f32 %v5498, 1.442695
      %v5519 = vpow.pop %v5518
      %v5520 = vmul.f32 %v5499, 1.442695
      %v5521 = vpow.pop %v5520
      %v5522 = vmul.f32 %v5500, 1.442695
      %v5523 = vpow.pop %v5522
      %v5524 = vmul.f32 %v5501, 1.442695
      %v5525 = vpow.pop %v5524
      %v5526 = vadd.f32 %v5503, 1.0
      %v5527 = vadd.f32 %v5505, 1.0
      %v5528 = vadd.f32 %v5507, 1.0
      %v5529 = vadd.f32 %v5509, 1.0
      %v5530 = vadd.f32 %v5511, 1.0
      %v5531 = vadd.f32 %v5513, 1.0
      %v5532 = vadd.f32 %v5515, 1.0
      %v5533 = vadd.f32 %v5517, 1.0
      %v5534 = vadd.f32 %v5519, 1.0
      %v5535 = vadd.f32 %v5521, 1.0
      %v5536 = vadd.f32 %v5523, 1.0
      %v5537 = vadd.f32 %v5525, 1.0
      %v5538 = vrcp.pop %v5526
      %v5539 = vmul.f32 1.0, %v5538
      %v5540 = vrcp.pop %v5527
      %v5541 = vmul.f32 1.0, %v5540
      %v5542 = vrcp.pop %v5528
      %v5543 = vmul.f32 1.0, %v5542
      %v5544 = vrcp.pop %v5529
      %v5545 = vmul.f32 1.0, %v5544
      %v5546 = vrcp.pop %v5530
      %v5547 = vmul.f32 1.0, %v5546
      %v5548 = vrcp.pop %v5531
      %v5549 = vmul.f32 1.0, %v5548
      %v5550 = vrcp.pop %v5532
      %v5551 = vmul.f32 1.0, %v5550
      %v5552 = vrcp.pop %v5533
      %v5553 = vmul.f32 1.0, %v5552
      %v5554 = vrcp.pop %v5534
      %v5555 = vmul.f32 1.0, %v5554
      %v5556 = vrcp.pop %v5535
      %v5557 = vmul.f32 1.0, %v5556
      %v5558 = vrcp.pop %v5536
      %v5559 = vmul.f32 1.0, %v5558
      %v5560 = vrcp.pop %v5537
      %v5561 = vmul.f32 1.0, %v5560
      %5574 = vrot.lane.b32.xlu0 %v5539, 112
      %v5575 = vpop.permute.xlu0 %5574
      %5576 = vrot.lane.b32.xlu0 %v5541, 112
      %v5577 = vpop.permute.xlu0 %5576
      %5578 = vrot.lane.b32.xlu0 %v5543, 112
      %v5579 = vpop.permute.xlu0 %5578
      %5580 = vrot.lane.b32.xlu0 %v5545, 112
      %v5581 = vpop.permute.xlu0 %5580
      %5582 = vrot.lane.b32.xlu0 %v5547, 112
      %v5583 = vpop.permute.xlu0 %5582
      %5584 = vrot.lane.b32.xlu0 %v5549, 112
      %v5585 = vpop.permute.xlu0 %5584
      %5586 = vrot.lane.b32.xlu0 %v5551, 112
      %v5587 = vpop.permute.xlu0 %5586
      %5588 = vrot.lane.b32.xlu0 %v5553, 112
      %v5589 = vpop.permute.xlu0 %5588
      %5590 = vrot.lane.b32.xlu0 %v5555, 112
      %v5591 = vpop.permute.xlu0 %5590
      %5592 = vrot.lane.b32.xlu0 %v5557, 112
      %v5593 = vpop.permute.xlu0 %5592
      %5594 = vrot.lane.b32.xlu0 %v5559, 112
      %v5595 = vpop.permute.xlu0 %5594
      %5596 = vrot.lane.b32.xlu0 %v5561, 112
      %v5597 = vpop.permute.xlu0 %5596
      %v5610 = vmul.f32 %v5478, %v5575
      %v5611 = vmul.f32 %v5479, %v5577
      %v5612 = vmul.f32 %v5480, %v5579
      %v5613 = vmul.f32 %v5481, %v5581
      %v5614 = vmul.f32 %v5482, %v5583
      %v5615 = vmul.f32 %v5483, %v5585
      %v5616 = vmul.f32 %v5484, %v5587
      %v5617 = vmul.f32 %v5485, %v5589
      %v5618 = vmul.f32 %v5486, %v5591
      %v5619 = vmul.f32 %v5487, %v5593
      %v5620 = vmul.f32 %v5488, %v5595
      %v5621 = vmul.f32 %v5489, %v5597
      %v5623 = vsel %vm1898, %v5610, 0
      %v5626 = vsel %vm1898, %v5611, 0
      %v5629 = vsel %vm1898, %v5612, 0
      %v5632 = vsel %vm1898, %v5613, 0
      %v5635 = vsel %vm1898, %v5614, 0
      %v5638 = vsel %vm1898, %v5615, 0
      %v5641 = vsel %vm1898, %v5616, 0
      %v5644 = vsel %vm1898, %v5617, 0
      %v5647 = vsel %vm1898, %v5618, 0
      %v5650 = vsel %vm1898, %v5619, 0
      %v5653 = vsel %vm1898, %v5620, 0
      %v5656 = vsel %vm1898, %v5621, 0
      %5658 = vmatprep.subr.mxu0 0.0
      %5659 = vmatpush1.msra.mxu0 %v5077
      %5660 = vmatprep.subr.mxu0 0.0
      %5661 = vmatpush1.msra.mxu0 %v5078
      %5662 = vmatprep.subr.mxu0 0.0
      %5663 = vmatpush1.msra.mxu0 0.0
      %5664 = vmatprep.subr.mxu0 0.0
      %5665 = vmatpush1.msra.mxu0 0.0
      %5666 = vmatprep.subr.mxu0 0.0
      %5667 = vmatpush1.msra.mxu0 0.0
      %5668 = vmatprep.subr.mxu0 0.0
      %5669 = vmatpush1.msra.mxu0 0.0
      %5670 = vmatprep.subr.mxu0 0.0
      %5671 = vmatpush1.msra.mxu0 0.0
      %5672 = vmatprep.subr.mxu0 0.0
      %5673 = vmatpush1.msra.mxu0 0.0
      %5674 = vmatprep.subr.mxu0 0.0
      %5675 = vmatpush1.msra.mxu0 0.0
      %5676 = vmatprep.subr.mxu0 0.0
      %5677 = vmatpush1.msra.mxu0 0.0
      %5678 = vmatprep.subr.mxu0 0.0
      %5679 = vmatpush1.msra.mxu0 0.0
      %5680 = vmatprep.subr.mxu0 0.0
      %5681 = vmatpush1.msra.mxu0 0.0
      %5682 = vmatprep.subr.mxu0 0.0
      %5683 = vmatpush1.msra.mxu0 0.0
      %5684 = vmatprep.subr.mxu0 0.0
      %5685 = vmatpush1.msra.mxu0 0.0
      %5686 = vmatprep.subr.mxu0 0.0
      %5687 = vmatpush1.msra.mxu0 0.0
      %5688 = vmatprep.subr.mxu0 0.0
      %5689 = vmatpush1.msra.mxu0 0.0
      %5690 = vmatprep.subr.mxu0 0.0
      %5691 = vmatpush1.msra.mxu0 0.0
      %5692 = vmatprep.subr.mxu0 0.0
      %5693 = vmatpush1.msra.mxu0 0.0
      %5694 = vmatprep.subr.mxu0 0.0
      %5695 = vmatpush1.msra.mxu0 0.0
      %5696 = vmatprep.subr.mxu0 0.0
      %5697 = vmatpush1.msra.mxu0 0.0
      %5698 = vmatprep.subr.mxu0 0.0
      %5699 = vmatpush1.msra.mxu0 0.0
      %5700 = vmatprep.subr.mxu0 0.0
      %5701 = vmatpush1.msra.mxu0 0.0
      %5702 = vmatprep.subr.mxu0 0.0
      %5703 = vmatpush1.msra.mxu0 0.0
      %5704 = vmatprep.subr.mxu0 0.0
      %5705 = vmatpush1.msra.mxu0 0.0
      %5706 = vmatprep.subr.mxu0 0.0
      %5707 = vmatpush1.msra.mxu0 0.0
      %5708 = vmatprep.subr.mxu0 0.0
      %5709 = vmatpush1.msra.mxu0 0.0
      %5710 = vmatprep.subr.mxu0 0.0
      %5711 = vmatpush1.msra.mxu0 0.0
      %5712 = vmatprep.subr.mxu0 0.0
      %5713 = vmatpush1.msra.mxu0 0.0
      %5714 = vmatprep.subr.mxu0 0.0
      %5715 = vmatpush1.msra.mxu0 0.0
      %5716 = vmatprep.subr.mxu0 0.0
      %5717 = vmatpush1.msra.mxu0 0.0
      %5718 = vmatprep.subr.mxu0 0.0
      %5719 = vmatpush1.msra.mxu0 0.0
      %5720 = vmatprep.subr.mxu0 0.0
      %5721 = vmatpush1.msra.mxu0 0.0
      %5722 = vmatprep.mubr.f32.mxu0 0.0
      %5723 = vmatmul.mubr.f32.gmra.mrb[0].mxu0 %v5623
      %v5724 = vpop.f32.mrb[0].mxu0
      %v5725 = vadd.f32 0.0, %v5724
      %v5726 = vpop.f32.mrb[0].mxu0
      %5727 = vmatprep.mubr.f32.mxu0 0.0
      %5728 = vmatmul.mubr.f32.gmra.mrb[0].mxu0 %v5626
      %v5729 = vpop.f32.mrb[0].mxu0
      %v5730 = vadd.f32 0.0, %v5729
      %v5731 = vpop.f32.mrb[0].mxu0
      %5732 = vmatprep.mubr.f32.mxu0 0.0
      %5733 = vmatmul.mubr.f32.gmra.mrb[0].mxu0 %v5629
      %v5734 = vpop.f32.mrb[0].mxu0
      %v5735 = vadd.f32 0.0, %v5734
      %v5736 = vpop.f32.mrb[0].mxu0
      %5737 = vmatprep.mubr.f32.mxu0 0.0
      %5738 = vmatmul.mubr.f32.gmra.mrb[0].mxu0 %v5632
      %v5739 = vpop.f32.mrb[0].mxu0
      %v5740 = vadd.f32 0.0, %v5739
      %v5741 = vpop.f32.mrb[0].mxu0
      %5742 = vmatprep.mubr.f32.mxu0 0.0
      %5743 = vmatmul.mubr.f32.gmra.mrb[0].mxu0 %v5635
      %v5744 = vpop.f32.mrb[0].mxu0
      %v5745 = vadd.f32 0.0, %v5744
      %v5746 = vpop.f32.mrb[0].mxu0
      %5747 = vmatprep.mubr.f32.mxu0 0.0
      %5748 = vmatmul.mubr.f32.gmra.mrb[0].mxu0 %v5638
      %v5749 = vpop.f32.mrb[0].mxu0
      %v5750 = vadd.f32 0.0, %v5749
      %v5751 = vpop.f32.mrb[0].mxu0
      %5752 = vmatprep.mubr.f32.mxu0 0.0
      %5753 = vmatmul.mubr.f32.gmra.mrb[0].mxu0 %v5641
      %v5754 = vpop.f32.mrb[0].mxu0
      %v5755 = vadd.f32 0.0, %v5754
      %v5756 = vpop.f32.mrb[0].mxu0
      %5757 = vmatprep.mubr.f32.mxu0 0.0
      %5758 = vmatmul.mubr.f32.gmra.mrb[0].mxu0 %v5644
      %v5759 = vpop.f32.mrb[0].mxu0
      %v5760 = vadd.f32 0.0, %v5759
      %v5761 = vpop.f32.mrb[0].mxu0
      %5762 = vmatprep.mubr.f32.mxu0 0.0
      %5763 = vmatmul.mubr.f32.gmra.mrb[0].mxu0 %v5647
      %v5764 = vpop.f32.mrb[0].mxu0
      %v5765 = vadd.f32 0.0, %v5764
      %v5766 = vpop.f32.mrb[0].mxu0
      %5767 = vmatprep.mubr.f32.mxu0 0.0
      %5768 = vmatmul.mubr.f32.gmra.mrb[0].mxu0 %v5650
      %v5769 = vpop.f32.mrb[0].mxu0
      %v5770 = vadd.f32 0.0, %v5769
      %v5771 = vpop.f32.mrb[0].mxu0
      %5772 = vmatprep.mubr.f32.mxu0 0.0
      %5773 = vmatmul.mubr.f32.gmra.mrb[0].mxu0 %v5653
      %v5774 = vpop.f32.mrb[0].mxu0
      %v5775 = vadd.f32 0.0, %v5774
      %v5776 = vpop.f32.mrb[0].mxu0
      %5777 = vmatprep.mubr.f32.mxu0 0.0
      %5778 = vmatmul.mubr.f32.gmra.mrb[0].mxu0 %v5656
      %v5779 = vpop.f32.mrb[0].mxu0
      %v5780 = vadd.f32 0.0, %v5779
      %v5781 = vpop.f32.mrb[0].mxu0
      %5782 = vdwg.mxu0
      %v5784 = vlaneseq
      %v5785 = vshrl.u32 %v5784, 7
      %v5786 = vsub.s32 0, %v5785
      %v5787 = vrot.slane %v5079, %v5786
      %v5789 = vadd.f32 %v5725, %v5787
      %v5790 = vadd.f32 %v5730, %v5787
      %v5791 = vadd.f32 %v5735, %v5787
      %v5792 = vadd.f32 %v5740, %v5787
      %v5793 = vadd.f32 %v5745, %v5787
      %v5794 = vadd.f32 %v5750, %v5787
      %v5795 = vadd.f32 %v5755, %v5787
      %v5796 = vadd.f32 %v5760, %v5787
      %v5797 = vadd.f32 %v5765, %v5787
      %v5798 = vadd.f32 %v5770, %v5787
      %v5799 = vadd.f32 %v5775, %v5787
      %v5800 = vadd.f32 %v5780, %v5787
      %5813 = vrot.lane.b32.xlu0 %v5725, 120
      %v5814 = vpop.permute.xlu0 %5813
      %5815 = vrot.lane.b32.xlu0 %v5730, 120
      %v5816 = vpop.permute.xlu0 %5815
      %5817 = vrot.lane.b32.xlu0 %v5735, 120
      %v5818 = vpop.permute.xlu0 %5817
      %5819 = vrot.lane.b32.xlu0 %v5740, 120
      %v5820 = vpop.permute.xlu0 %5819
      %5821 = vrot.lane.b32.xlu0 %v5745, 120
      %v5822 = vpop.permute.xlu0 %5821
      %5823 = vrot.lane.b32.xlu0 %v5750, 120
      %v5824 = vpop.permute.xlu0 %5823
      %5825 = vrot.lane.b32.xlu0 %v5755, 120
      %v5826 = vpop.permute.xlu0 %5825
      %5827 = vrot.lane.b32.xlu0 %v5760, 120
      %v5828 = vpop.permute.xlu0 %5827
      %5829 = vrot.lane.b32.xlu0 %v5765, 120
      %v5830 = vpop.permute.xlu0 %5829
      %5831 = vrot.lane.b32.xlu0 %v5770, 120
      %v5832 = vpop.permute.xlu0 %5831
      %5833 = vrot.lane.b32.xlu0 %v5775, 120
      %v5834 = vpop.permute.xlu0 %5833
      %5835 = vrot.lane.b32.xlu0 %v5780, 120
      %v5836 = vpop.permute.xlu0 %5835
      %v5849 = vcombine.low %v5814, %v5822
      %v5850 = vcombine.high %v5814, %v5822
      %v5852 = vunpack.c.l.s4 1983009808
      %v5853 = vunpack.c.0.s8 %v5852
      %v5854 = vlaneseq
      %v5855 = vshrl.u32 %v5854, 7
      %v5856 = vsub.s32 %v5853, %v5855
      %v5857 = vrot.slane %v5849, %v5856
      %v5859 = vunpack.c.l.s4 1983009808
      %v5860 = vunpack.c.0.s8 %v5859
      %v5861 = vlaneseq
      %v5862 = vshrl.u32 %v5861, 7
      %v5863 = vsub.s32 %v5860, %v5862
      %v5864 = vrot.slane %v5850, %v5863
      %v5865 = vcombine.low %v5818, %v5826
      %v5866 = vcombine.high %v5818, %v5826
      %v5868 = vunpack.c.l.s4 1983009808
      %v5869 = vunpack.c.0.s8 %v5868
      %v5870 = vlaneseq
      %v5871 = vshrl.u32 %v5870, 7
      %v5872 = vsub.s32 %v5869, %v5871
      %v5873 = vrot.slane %v5865, %v5872
      %v5875 = vunpack.c.l.s4 1983009808
      %v5876 = vunpack.c.0.s8 %v5875
      %v5877 = vlaneseq
      %v5878 = vshrl.u32 %v5877, 7
      %v5879 = vsub.s32 %v5876, %v5878
      %v5880 = vrot.slane %v5866, %v5879
      %v5881 = vcombine.high %v5830, 0.0
      %v5883 = vunpack.c.l.s4 1983009808
      %v5884 = vunpack.c.0.s8 %v5883
      %v5885 = vlaneseq
      %v5886 = vshrl.u32 %v5885, 7
      %v5887 = vsub.s32 %v5884, %v5886
      %v5888 = vrot.slane %v5830, %v5887
      %v5890 = vunpack.c.l.s4 1983009808
      %v5891 = vunpack.c.0.s8 %v5890
      %v5892 = vlaneseq
      %v5893 = vshrl.u32 %v5892, 7
      %v5894 = vsub.s32 %v5891, %v5893
      %v5895 = vrot.slane %v5881, %v5894
      %v5896 = vcombine.high %v5834, 0.0
      %v5898 = vunpack.c.l.s4 1983009808
      %v5899 = vunpack.c.0.s8 %v5898
      %v5900 = vlaneseq
      %v5901 = vshrl.u32 %v5900, 7
      %v5902 = vsub.s32 %v5899, %v5901
      %v5903 = vrot.slane %v5834, %v5902
      %v5905 = vunpack.c.l.s4 1983009808
      %v5906 = vunpack.c.0.s8 %v5905
      %v5907 = vlaneseq
      %v5908 = vshrl.u32 %v5907, 7
      %v5909 = vsub.s32 %v5906, %v5908
      %v5910 = vrot.slane %v5896, %v5909
      %v5911 = vcombine.low %v5857, %v5873
      %v5912 = vcombine.high %v5857, %v5873
      %v5914 = vunpack.c.l.s4 1934713408
      %v5915 = vunpack.c.0.s8 %v5914
      %v5916 = vlaneseq
      %v5917 = vshrl.u32 %v5916, 7
      %v5918 = vsub.s32 %v5915, %v5917
      %v5919 = vrot.slane %v5911, %v5918
      %v5921 = vunpack.c.l.s4 1934713408
      %v5922 = vunpack.c.0.s8 %v5921
      %v5923 = vlaneseq
      %v5924 = vshrl.u32 %v5923, 7
      %v5925 = vsub.s32 %v5922, %v5924
      %v5926 = vrot.slane %v5912, %v5925
      %v5927 = vcombine.low %v5864, %v5880
      %v5928 = vcombine.high %v5864, %v5880
      %v5930 = vunpack.c.l.s4 1934713408
      %v5931 = vunpack.c.0.s8 %v5930
      %v5932 = vlaneseq
      %v5933 = vshrl.u32 %v5932, 7
      %v5934 = vsub.s32 %v5931, %v5933
      %v5935 = vrot.slane %v5927, %v5934
      %v5937 = vunpack.c.l.s4 1934713408
      %v5938 = vunpack.c.0.s8 %v5937
      %v5939 = vlaneseq
      %v5940 = vshrl.u32 %v5939, 7
      %v5941 = vsub.s32 %v5938, %v5940
      %v5942 = vrot.slane %v5928, %v5941
      %v5943 = vcombine.low %v5888, %v5903
      %v5944 = vcombine.high %v5888, %v5903
      %v5946 = vunpack.c.l.s4 1934713408
      %v5947 = vunpack.c.0.s8 %v5946
      %v5948 = vlaneseq
      %v5949 = vshrl.u32 %v5948, 7
      %v5950 = vsub.s32 %v5947, %v5949
      %v5951 = vrot.slane %v5943, %v5950
      %v5953 = vunpack.c.l.s4 1934713408
      %v5954 = vunpack.c.0.s8 %v5953
      %v5955 = vlaneseq
      %v5956 = vshrl.u32 %v5955, 7
      %v5957 = vsub.s32 %v5954, %v5956
      %v5958 = vrot.slane %v5944, %v5957
      %v5959 = vcombine.low %v5895, %v5910
      %v5960 = vcombine.high %v5895, %v5910
      %v5962 = vunpack.c.l.s4 1934713408
      %v5963 = vunpack.c.0.s8 %v5962
      %v5964 = vlaneseq
      %v5965 = vshrl.u32 %v5964, 7
      %v5966 = vsub.s32 %v5963, %v5965
      %v5967 = vrot.slane %v5959, %v5966
      %v5969 = vunpack.c.l.s4 1934713408
      %v5970 = vunpack.c.0.s8 %v5969
      %v5971 = vlaneseq
      %v5972 = vshrl.u32 %v5971, 7
      %v5973 = vsub.s32 %v5970, %v5972
      %v5974 = vrot.slane %v5960, %v5973
      %v5975 = vcombine.low %v5919, %v5951
      %v5976 = vcombine.high %v5919, %v5951
      %v5977 = vcombine.low %v5926, %v5958
      %v5978 = vcombine.high %v5926, %v5958
      %v5979 = vcombine.low %v5935, %v5967
      %v5980 = vcombine.high %v5935, %v5967
      %v5981 = vcombine.low %v5942, %v5974
      %v5982 = vcombine.high %v5942, %v5974
      %v5983 = vcombine.low %v5816, %v5824
      %v5984 = vcombine.high %v5816, %v5824
      %v5986 = vunpack.c.l.s4 1983009808
      %v5987 = vunpack.c.0.s8 %v5986
      %v5988 = vlaneseq
      %v5989 = vshrl.u32 %v5988, 7
      %v5990 = vsub.s32 %v5987, %v5989
      %v5991 = vrot.slane %v5983, %v5990
      %v5993 = vunpack.c.l.s4 1983009808
      %v5994 = vunpack.c.0.s8 %v5993
      %v5995 = vlaneseq
      %v5996 = vshrl.u32 %v5995, 7
      %v5997 = vsub.s32 %v5994, %v5996
      %v5998 = vrot.slane %v5984, %v5997
      %v5999 = vcombine.low %v5820, %v5828
      %v6000 = vcombine.high %v5820, %v5828
      %v6002 = vunpack.c.l.s4 1983009808
      %v6003 = vunpack.c.0.s8 %v6002
      %v6004 = vlaneseq
      %v6005 = vshrl.u32 %v6004, 7
      %v6006 = vsub.s32 %v6003, %v6005
      %v6007 = vrot.slane %v5999, %v6006
      %v6009 = vunpack.c.l.s4 1983009808
      %v6010 = vunpack.c.0.s8 %v6009
      %v6011 = vlaneseq
      %v6012 = vshrl.u32 %v6011, 7
      %v6013 = vsub.s32 %v6010, %v6012
      %v6014 = vrot.slane %v6000, %v6013
      %v6015 = vcombine.high %v5832, 0.0
      %v6017 = vunpack.c.l.s4 1983009808
      %v6018 = vunpack.c.0.s8 %v6017
      %v6019 = vlaneseq
      %v6020 = vshrl.u32 %v6019, 7
      %v6021 = vsub.s32 %v6018, %v6020
      %v6022 = vrot.slane %v5832, %v6021
      %v6024 = vunpack.c.l.s4 1983009808
      %v6025 = vunpack.c.0.s8 %v6024
      %v6026 = vlaneseq
      %v6027 = vshrl.u32 %v6026, 7
      %v6028 = vsub.s32 %v6025, %v6027
      %v6029 = vrot.slane %v6015, %v6028
      %v6030 = vcombine.high %v5836, 0.0
      %v6032 = vunpack.c.l.s4 1983009808
      %v6033 = vunpack.c.0.s8 %v6032
      %v6034 = vlaneseq
      %v6035 = vshrl.u32 %v6034, 7
      %v6036 = vsub.s32 %v6033, %v6035
      %v6037 = vrot.slane %v5836, %v6036
      %v6039 = vunpack.c.l.s4 1983009808
      %v6040 = vunpack.c.0.s8 %v6039
      %v6041 = vlaneseq
      %v6042 = vshrl.u32 %v6041, 7
      %v6043 = vsub.s32 %v6040, %v6042
      %v6044 = vrot.slane %v6030, %v6043
      %v6045 = vcombine.low %v5991, %v6007
      %v6046 = vcombine.high %v5991, %v6007
      %v6048 = vunpack.c.l.s4 1934713408
      %v6049 = vunpack.c.0.s8 %v6048
      %v6050 = vlaneseq
      %v6051 = vshrl.u32 %v6050, 7
      %v6052 = vsub.s32 %v6049, %v6051
      %v6053 = vrot.slane %v6045, %v6052
      %v6055 = vunpack.c.l.s4 1934713408
      %v6056 = vunpack.c.0.s8 %v6055
      %v6057 = vlaneseq
      %v6058 = vshrl.u32 %v6057, 7
      %v6059 = vsub.s32 %v6056, %v6058
      %v6060 = vrot.slane %v6046, %v6059
      %v6061 = vcombine.low %v5998, %v6014
      %v6062 = vcombine.high %v5998, %v6014
      %v6064 = vunpack.c.l.s4 1934713408
      %v6065 = vunpack.c.0.s8 %v6064
      %v6066 = vlaneseq
      %v6067 = vshrl.u32 %v6066, 7
      %v6068 = vsub.s32 %v6065, %v6067
      %v6069 = vrot.slane %v6061, %v6068
      %v6071 = vunpack.c.l.s4 1934713408
      %v6072 = vunpack.c.0.s8 %v6071
      %v6073 = vlaneseq
      %v6074 = vshrl.u32 %v6073, 7
      %v6075 = vsub.s32 %v6072, %v6074
      %v6076 = vrot.slane %v6062, %v6075
      %v6077 = vcombine.low %v6022, %v6037
      %v6078 = vcombine.high %v6022, %v6037
      %v6080 = vunpack.c.l.s4 1934713408
      %v6081 = vunpack.c.0.s8 %v6080
      %v6082 = vlaneseq
      %v6083 = vshrl.u32 %v6082, 7
      %v6084 = vsub.s32 %v6081, %v6083
      %v6085 = vrot.slane %v6077, %v6084
      %v6087 = vunpack.c.l.s4 1934713408
      %v6088 = vunpack.c.0.s8 %v6087
      %v6089 = vlaneseq
      %v6090 = vshrl.u32 %v6089, 7
      %v6091 = vsub.s32 %v6088, %v6090
      %v6092 = vrot.slane %v6078, %v6091
      %v6093 = vcombine.low %v6029, %v6044
      %v6094 = vcombine.high %v6029, %v6044
      %v6096 = vunpack.c.l.s4 1934713408
      %v6097 = vunpack.c.0.s8 %v6096
      %v6098 = vlaneseq
      %v6099 = vshrl.u32 %v6098, 7
      %v6100 = vsub.s32 %v6097, %v6099
      %v6101 = vrot.slane %v6093, %v6100
      %v6103 = vunpack.c.l.s4 1934713408
      %v6104 = vunpack.c.0.s8 %v6103
      %v6105 = vlaneseq
      %v6106 = vshrl.u32 %v6105, 7
      %v6107 = vsub.s32 %v6104, %v6106
      %v6108 = vrot.slane %v6094, %v6107
      %v6109 = vcombine.low %v6053, %v6085
      %v6110 = vcombine.high %v6053, %v6085
      %v6111 = vcombine.low %v6060, %v6092
      %v6112 = vcombine.high %v6060, %v6092
      %v6113 = vcombine.low %v6069, %v6101
      %v6114 = vcombine.high %v6069, %v6101
      %v6115 = vcombine.low %v6076, %v6108
      %v6116 = vcombine.high %v6076, %v6108
      %v6117 = vcombine.low %v5975, %v5977
      %v6118 = vcombine.high %v5975, %v5977
      %v6120 = vunpack.c.l.s4 1983009808
      %v6121 = vunpack.c.0.s8 %v6120
      %v6122 = vlaneseq
      %v6123 = vshrl.u32 %v6122, 7
      %v6124 = vsub.s32 %v6121, %v6123
      %v6125 = vrot.slane %v6117, %v6124
      %v6127 = vunpack.c.l.s4 1983009808
      %v6128 = vunpack.c.0.s8 %v6127
      %v6129 = vlaneseq
      %v6130 = vshrl.u32 %v6129, 7
      %v6131 = vsub.s32 %v6128, %v6130
      %v6132 = vrot.slane %v6118, %v6131
      %v6133 = vcombine.low %v5976, %v5978
      %v6134 = vcombine.high %v5976, %v5978
      %v6136 = vunpack.c.l.s4 1983009808
      %v6137 = vunpack.c.0.s8 %v6136
      %v6138 = vlaneseq
      %v6139 = vshrl.u32 %v6138, 7
      %v6140 = vsub.s32 %v6137, %v6139
      %v6141 = vrot.slane %v6133, %v6140
      %v6143 = vunpack.c.l.s4 1983009808
      %v6144 = vunpack.c.0.s8 %v6143
      %v6145 = vlaneseq
      %v6146 = vshrl.u32 %v6145, 7
      %v6147 = vsub.s32 %v6144, %v6146
      %v6148 = vrot.slane %v6134, %v6147
      %v6149 = vcombine.low %v5979, %v5981
      %v6150 = vcombine.high %v5979, %v5981
      %v6152 = vunpack.c.l.s4 1983009808
      %v6153 = vunpack.c.0.s8 %v6152
      %v6154 = vlaneseq
      %v6155 = vshrl.u32 %v6154, 7
      %v6156 = vsub.s32 %v6153, %v6155
      %v6157 = vrot.slane %v6149, %v6156
      %v6159 = vunpack.c.l.s4 1983009808
      %v6160 = vunpack.c.0.s8 %v6159
      %v6161 = vlaneseq
      %v6162 = vshrl.u32 %v6161, 7
      %v6163 = vsub.s32 %v6160, %v6162
      %v6164 = vrot.slane %v6150, %v6163
      %v6165 = vcombine.low %v5980, %v5982
      %v6166 = vcombine.high %v5980, %v5982
      %v6168 = vunpack.c.l.s4 1983009808
      %v6169 = vunpack.c.0.s8 %v6168
      %v6170 = vlaneseq
      %v6171 = vshrl.u32 %v6170, 7
      %v6172 = vsub.s32 %v6169, %v6171
      %v6173 = vrot.slane %v6165, %v6172
      %v6175 = vunpack.c.l.s4 1983009808
      %v6176 = vunpack.c.0.s8 %v6175
      %v6177 = vlaneseq
      %v6178 = vshrl.u32 %v6177, 7
      %v6179 = vsub.s32 %v6176, %v6178
      %v6180 = vrot.slane %v6166, %v6179
      %v6181 = vcombine.low %v6125, %v6141
      %v6182 = vcombine.high %v6125, %v6141
      %v6184 = vunpack.c.l.s4 1934713408
      %v6185 = vunpack.c.0.s8 %v6184
      %v6186 = vlaneseq
      %v6187 = vshrl.u32 %v6186, 7
      %v6188 = vsub.s32 %v6185, %v6187
      %v6189 = vrot.slane %v6181, %v6188
      %v6191 = vunpack.c.l.s4 1934713408
      %v6192 = vunpack.c.0.s8 %v6191
      %v6193 = vlaneseq
      %v6194 = vshrl.u32 %v6193, 7
      %v6195 = vsub.s32 %v6192, %v6194
      %v6196 = vrot.slane %v6182, %v6195
      %v6197 = vcombine.low %v6132, %v6148
      %v6199 = vunpack.c.l.s4 1934713408
      %v6200 = vunpack.c.0.s8 %v6199
      %v6201 = vlaneseq
      %v6202 = vshrl.u32 %v6201, 7
      %v6203 = vsub.s32 %v6200, %v6202
      %v6204 = vrot.slane %v6197, %v6203
      %v6205 = vcombine.low %v6157, %v6173
      %v6206 = vcombine.high %v6157, %v6173
      %v6208 = vunpack.c.l.s4 1934713408
      %v6209 = vunpack.c.0.s8 %v6208
      %v6210 = vlaneseq
      %v6211 = vshrl.u32 %v6210, 7
      %v6212 = vsub.s32 %v6209, %v6211
      %v6213 = vrot.slane %v6205, %v6212
      %v6215 = vunpack.c.l.s4 1934713408
      %v6216 = vunpack.c.0.s8 %v6215
      %v6217 = vlaneseq
      %v6218 = vshrl.u32 %v6217, 7
      %v6219 = vsub.s32 %v6216, %v6218
      %v6220 = vrot.slane %v6206, %v6219
      %v6221 = vcombine.low %v6164, %v6180
      %v6223 = vunpack.c.l.s4 1934713408
      %v6224 = vunpack.c.0.s8 %v6223
      %v6225 = vlaneseq
      %v6226 = vshrl.u32 %v6225, 7
      %v6227 = vsub.s32 %v6224, %v6226
      %v6228 = vrot.slane %v6221, %v6227
      %v6229 = vcombine.low %v6189, %v6213
      %v6230 = vcombine.high %v6189, %v6213
      %v6231 = vcombine.low %v6196, %v6220
      %v6232 = vcombine.high %v6196, %v6220
      %v6233 = vcombine.low %v6204, %v6228
      %v6234 = vcombine.high %v6204, %v6228
      %v6235 = vcombine.low %v6109, %v6111
      %v6236 = vcombine.high %v6109, %v6111
      %v6238 = vunpack.c.l.s4 1983009808
      %v6239 = vunpack.c.0.s8 %v6238
      %v6240 = vlaneseq
      %v6241 = vshrl.u32 %v6240, 7
      %v6242 = vsub.s32 %v6239, %v6241
      %v6243 = vrot.slane %v6235, %v6242
      %v6245 = vunpack.c.l.s4 1983009808
      %v6246 = vunpack.c.0.s8 %v6245
      %v6247 = vlaneseq
      %v6248 = vshrl.u32 %v6247, 7
      %v6249 = vsub.s32 %v6246, %v6248
      %v6250 = vrot.slane %v6236, %v6249
      %v6251 = vcombine.low %v6110, %v6112
      %v6252 = vcombine.high %v6110, %v6112
      %v6254 = vunpack.c.l.s4 1983009808
      %v6255 = vunpack.c.0.s8 %v6254
      %v6256 = vlaneseq
      %v6257 = vshrl.u32 %v6256, 7
      %v6258 = vsub.s32 %v6255, %v6257
      %v6259 = vrot.slane %v6251, %v6258
      %v6261 = vunpack.c.l.s4 1983009808
      %v6262 = vunpack.c.0.s8 %v6261
      %v6263 = vlaneseq
      %v6264 = vshrl.u32 %v6263, 7
      %v6265 = vsub.s32 %v6262, %v6264
      %v6266 = vrot.slane %v6252, %v6265
      %v6267 = vcombine.low %v6113, %v6115
      %v6268 = vcombine.high %v6113, %v6115
      %v6270 = vunpack.c.l.s4 1983009808
      %v6271 = vunpack.c.0.s8 %v6270
      %v6272 = vlaneseq
      %v6273 = vshrl.u32 %v6272, 7
      %v6274 = vsub.s32 %v6271, %v6273
      %v6275 = vrot.slane %v6267, %v6274
      %v6277 = vunpack.c.l.s4 1983009808
      %v6278 = vunpack.c.0.s8 %v6277
      %v6279 = vlaneseq
      %v6280 = vshrl.u32 %v6279, 7
      %v6281 = vsub.s32 %v6278, %v6280
      %v6282 = vrot.slane %v6268, %v6281
      %v6283 = vcombine.low %v6114, %v6116
      %v6284 = vcombine.high %v6114, %v6116
      %v6286 = vunpack.c.l.s4 1983009808
      %v6287 = vunpack.c.0.s8 %v6286
      %v6288 = vlaneseq
      %v6289 = vshrl.u32 %v6288, 7
      %v6290 = vsub.s32 %v6287, %v6289
      %v6291 = vrot.slane %v6283, %v6290
      %v6293 = vunpack.c.l.s4 1983009808
      %v6294 = vunpack.c.0.s8 %v6293
      %v6295 = vlaneseq
      %v6296 = vshrl.u32 %v6295, 7
      %v6297 = vsub.s32 %v6294, %v6296
      %v6298 = vrot.slane %v6284, %v6297
      %v6299 = vcombine.low %v6243, %v6259
      %v6300 = vcombine.high %v6243, %v6259
      %v6302 = vunpack.c.l.s4 1934713408
      %v6303 = vunpack.c.0.s8 %v6302
      %v6304 = vlaneseq
      %v6305 = vshrl.u32 %v6304, 7
      %v6306 = vsub.s32 %v6303, %v6305
      %v6307 = vrot.slane %v6299, %v6306
      %v6309 = vunpack.c.l.s4 1934713408
      %v6310 = vunpack.c.0.s8 %v6309
      %v6311 = vlaneseq
      %v6312 = vshrl.u32 %v6311, 7
      %v6313 = vsub.s32 %v6310, %v6312
      %v6314 = vrot.slane %v6300, %v6313
      %v6315 = vcombine.low %v6250, %v6266
      %v6317 = vunpack.c.l.s4 1934713408
      %v6318 = vunpack.c.0.s8 %v6317
      %v6319 = vlaneseq
      %v6320 = vshrl.u32 %v6319, 7
      %v6321 = vsub.s32 %v6318, %v6320
      %v6322 = vrot.slane %v6315, %v6321
      %v6323 = vcombine.low %v6275, %v6291
      %v6324 = vcombine.high %v6275, %v6291
      %v6326 = vunpack.c.l.s4 1934713408
      %v6327 = vunpack.c.0.s8 %v6326
      %v6328 = vlaneseq
      %v6329 = vshrl.u32 %v6328, 7
      %v6330 = vsub.s32 %v6327, %v6329
      %v6331 = vrot.slane %v6323, %v6330
      %v6333 = vunpack.c.l.s4 1934713408
      %v6334 = vunpack.c.0.s8 %v6333
      %v6335 = vlaneseq
      %v6336 = vshrl.u32 %v6335, 7
      %v6337 = vsub.s32 %v6334, %v6336
      %v6338 = vrot.slane %v6324, %v6337
      %v6339 = vcombine.low %v6282, %v6298
      %v6341 = vunpack.c.l.s4 1934713408
      %v6342 = vunpack.c.0.s8 %v6341
      %v6343 = vlaneseq
      %v6344 = vshrl.u32 %v6343, 7
      %v6345 = vsub.s32 %v6342, %v6344
      %v6346 = vrot.slane %v6339, %v6345
      %v6347 = vcombine.low %v6307, %v6331
      %v6348 = vcombine.high %v6307, %v6331
      %v6349 = vcombine.low %v6314, %v6338
      %v6350 = vcombine.high %v6314, %v6338
      %v6351 = vcombine.low %v6322, %v6346
      %v6352 = vcombine.high %v6322, %v6346
      %6355 = vrot.lane.b32.xlu0 %v6230, 8
      %v6356 = vpop.permute.xlu0 %6355
      %6357 = vrot.lane.b32.xlu0 %v6348, 8
      %v6358 = vpop.permute.xlu0 %6357
      %6363 = vrot.lane.b32.xlu0 %v6231, 16
      %v6364 = vpop.permute.xlu0 %6363
      %6365 = vrot.lane.b32.xlu0 %v6349, 16
      %v6366 = vpop.permute.xlu0 %6365
      %6371 = vrot.lane.b32.xlu0 %v6232, 24
      %v6372 = vpop.permute.xlu0 %6371
      %6373 = vrot.lane.b32.xlu0 %v6350, 24
      %v6374 = vpop.permute.xlu0 %6373
      %6379 = vrot.lane.b32.xlu0 %v6233, 32
      %v6380 = vpop.permute.xlu0 %6379
      %6381 = vrot.lane.b32.xlu0 %v6351, 32
      %v6382 = vpop.permute.xlu0 %6381
      %6387 = vrot.lane.b32.xlu0 %v6234, 40
      %v6388 = vpop.permute.xlu0 %6387
      %6389 = vrot.lane.b32.xlu0 %v6352, 40
      %v6390 = vpop.permute.xlu0 %6389
      %v6393 = vsel %vm3078, %v6229, %v6356
      %v6394 = vsel %vm3078, %v6347, %v6358
      %v6395 = vsel %vm1898, %v6393, %v6364
      %v6396 = vsel %vm1898, %v6394, %v6366
      %v6397 = vsel %vm3083, %v6395, %v6372
      %v6398 = vsel %vm3083, %v6396, %v6374
      %v6399 = vsel %vm3086, %v6397, %v6380
      %v6400 = vsel %vm3086, %v6398, %v6382
      %v6401 = vsel %vm3089, %v6399, %v6388
      %v6402 = vsel %vm3089, %v6400, %v6390
      %v6404 = vsel %vm1898, %v5071, 0
      %v6407 = vsel %vm1898, %v5072, 0
      %6409 = vmatprep.subr.mxu0 0.0
      %6410 = vmatpush1.msra.mxu0 %v6401
      %6411 = vmatprep.subr.mxu0 0.0
      %6412 = vmatpush1.msra.mxu0 %v6402
      %6413 = vmatprep.subr.mxu0 0.0
      %6414 = vmatpush1.msra.mxu0 0.0
      %6415 = vmatprep.subr.mxu0 0.0
      %6416 = vmatpush1.msra.mxu0 0.0
      %6417 = vmatprep.subr.mxu0 0.0
      %6418 = vmatpush1.msra.mxu0 0.0
      %6419 = vmatprep.subr.mxu0 0.0
      %6420 = vmatpush1.msra.mxu0 0.0
      %6421 = vmatprep.subr.mxu0 0.0
      %6422 = vmatpush1.msra.mxu0 0.0
      %6423 = vmatprep.subr.mxu0 0.0
      %6424 = vmatpush1.msra.mxu0 0.0
      %6425 = vmatprep.subr.mxu0 0.0
      %6426 = vmatpush1.msra.mxu0 0.0
      %6427 = vmatprep.subr.mxu0 0.0
      %6428 = vmatpush1.msra.mxu0 0.0
      %6429 = vmatprep.subr.mxu0 0.0
      %6430 = vmatpush1.msra.mxu0 0.0
      %6431 = vmatprep.subr.mxu0 0.0
      %6432 = vmatpush1.msra.mxu0 0.0
      %6433 = vmatprep.subr.mxu0 0.0
      %6434 = vmatpush1.msra.mxu0 0.0
      %6435 = vmatprep.subr.mxu0 0.0
      %6436 = vmatpush1.msra.mxu0 0.0
      %6437 = vmatprep.subr.mxu0 0.0
      %6438 = vmatpush1.msra.mxu0 0.0
      %6439 = vmatprep.subr.mxu0 0.0
      %6440 = vmatpush1.msra.mxu0 0.0
      %6441 = vmatprep.subr.mxu0 0.0
      %6442 = vmatpush1.msra.mxu0 0.0
      %6443 = vmatprep.subr.mxu0 0.0
      %6444 = vmatpush1.msra.mxu0 0.0
      %6445 = vmatprep.subr.mxu0 0.0
      %6446 = vmatpush1.msra.mxu0 0.0
      %6447 = vmatprep.subr.mxu0 0.0
      %6448 = vmatpush1.msra.mxu0 0.0
      %6449 = vmatprep.subr.mxu0 0.0
      %6450 = vmatpush1.msra.mxu0 0.0
      %6451 = vmatprep.subr.mxu0 0.0
      %6452 = vmatpush1.msra.mxu0 0.0
      %6453 = vmatprep.subr.mxu0 0.0
      %6454 = vmatpush1.msra.mxu0 0.0
      %6455 = vmatprep.subr.mxu0 0.0
      %6456 = vmatpush1.msra.mxu0 0.0
      %6457 = vmatprep.subr.mxu0 0.0
      %6458 = vmatpush1.msra.mxu0 0.0
      %6459 = vmatprep.subr.mxu0 0.0
      %6460 = vmatpush1.msra.mxu0 0.0
      %6461 = vmatprep.subr.mxu0 0.0
      %6462 = vmatpush1.msra.mxu0 0.0
      %6463 = vmatprep.subr.mxu0 0.0
      %6464 = vmatpush1.msra.mxu0 0.0
      %6465 = vmatprep.subr.mxu0 0.0
      %6466 = vmatpush1.msra.mxu0 0.0
      %6467 = vmatprep.subr.mxu0 0.0
      %6468 = vmatpush1.msra.mxu0 0.0
      %6469 = vmatprep.subr.mxu0 0.0
      %6470 = vmatpush1.msra.mxu0 0.0
      %6471 = vmatprep.subr.mxu0 0.0
      %6472 = vmatpush1.msra.mxu0 0.0
      %6473 = vmatprep.mubr.f32.mxu0 0.0
      %6474 = vmatmul.mubr.f32.gmra.mrb[0].mxu0 %v6404
      %v6475 = vpop.f32.mrb[0].mxu0
      %v6476 = vadd.f32 0.0, %v6475
      %v6477 = vpop.f32.mrb[0].mxu0
      %6478 = vmatprep.mubr.f32.mxu0 0.0
      %6479 = vmatmul.mubr.f32.gmra.mrb[0].mxu0 %v6407
      %v6480 = vpop.f32.mrb[0].mxu0
      %v6481 = vadd.f32 0.0, %v6480
      %v6482 = vpop.f32.mrb[0].mxu0
      %6483 = vdwg.mxu0
      %6486 = vrot.lane.b32.xlu0 %v6476, 120
      %v6487 = vpop.permute.xlu0 %6486
      %6488 = vrot.lane.b32.xlu0 %v6481, 120
      %v6489 = vpop.permute.xlu0 %6488
      %6492 = vrot.lane.b32.xlu0 %v6476, 112
      %v6493 = vpop.permute.xlu0 %6492
      %6494 = vrot.lane.b32.xlu0 %v6481, 112
      %v6495 = vpop.permute.xlu0 %6494
      %6498 = vrot.lane.b32.xlu0 %v6476, 104
      %v6499 = vpop.permute.xlu0 %6498
      %6500 = vrot.lane.b32.xlu0 %v6481, 104
      %v6501 = vpop.permute.xlu0 %6500
      %6504 = vrot.lane.b32.xlu0 %v6476, 96
      %v6505 = vpop.permute.xlu0 %6504
      %6506 = vrot.lane.b32.xlu0 %v6481, 96
      %v6507 = vpop.permute.xlu0 %6506
      %6510 = vrot.lane.b32.xlu0 %v6476, 88
      %v6511 = vpop.permute.xlu0 %6510
      %6512 = vrot.lane.b32.xlu0 %v6481, 88
      %v6513 = vpop.permute.xlu0 %6512
      %v6516 = vcombine.low %v6476, %v6493
      %v6517 = vcombine.high %v6476, %v6493
      %v6519 = vunpack.c.l.s4 1983009808
      %v6520 = vunpack.c.0.s8 %v6519
      %v6521 = vlaneseq
      %v6522 = vshrl.u32 %v6521, 7
      %v6523 = vsub.s32 %v6520, %v6522
      %v6524 = vrot.slane %v6516, %v6523
      %v6526 = vunpack.c.l.s4 1983009808
      %v6527 = vunpack.c.0.s8 %v6526
      %v6528 = vlaneseq
      %v6529 = vshrl.u32 %v6528, 7
      %v6530 = vsub.s32 %v6527, %v6529
      %v6531 = vrot.slane %v6517, %v6530
      %v6532 = vcombine.low %v6487, %v6499
      %v6533 = vcombine.high %v6487, %v6499
      %v6535 = vunpack.c.l.s4 1983009808
      %v6536 = vunpack.c.0.s8 %v6535
      %v6537 = vlaneseq
      %v6538 = vshrl.u32 %v6537, 7
      %v6539 = vsub.s32 %v6536, %v6538
      %v6540 = vrot.slane %v6532, %v6539
      %v6542 = vunpack.c.l.s4 1983009808
      %v6543 = vunpack.c.0.s8 %v6542
      %v6544 = vlaneseq
      %v6545 = vshrl.u32 %v6544, 7
      %v6546 = vsub.s32 %v6543, %v6545
      %v6547 = vrot.slane %v6533, %v6546
      %v6548 = vcombine.high %v6505, 0.0
      %v6550 = vunpack.c.l.s4 1983009808
      %v6551 = vunpack.c.0.s8 %v6550
      %v6552 = vlaneseq
      %v6553 = vshrl.u32 %v6552, 7
      %v6554 = vsub.s32 %v6551, %v6553
      %v6555 = vrot.slane %v6505, %v6554
      %v6557 = vunpack.c.l.s4 1983009808
      %v6558 = vunpack.c.0.s8 %v6557
      %v6559 = vlaneseq
      %v6560 = vshrl.u32 %v6559, 7
      %v6561 = vsub.s32 %v6558, %v6560
      %v6562 = vrot.slane %v6548, %v6561
      %v6563 = vcombine.high %v6511, 0.0
      %v6565 = vunpack.c.l.s4 1983009808
      %v6566 = vunpack.c.0.s8 %v6565
      %v6567 = vlaneseq
      %v6568 = vshrl.u32 %v6567, 7
      %v6569 = vsub.s32 %v6566, %v6568
      %v6570 = vrot.slane %v6511, %v6569
      %v6572 = vunpack.c.l.s4 1983009808
      %v6573 = vunpack.c.0.s8 %v6572
      %v6574 = vlaneseq
      %v6575 = vshrl.u32 %v6574, 7
      %v6576 = vsub.s32 %v6573, %v6575
      %v6577 = vrot.slane %v6563, %v6576
      %v6578 = vcombine.low %v6524, %v6540
      %v6579 = vcombine.high %v6524, %v6540
      %v6581 = vunpack.c.l.s4 1934713408
      %v6582 = vunpack.c.0.s8 %v6581
      %v6583 = vlaneseq
      %v6584 = vshrl.u32 %v6583, 7
      %v6585 = vsub.s32 %v6582, %v6584
      %v6586 = vrot.slane %v6578, %v6585
      %v6588 = vunpack.c.l.s4 1934713408
      %v6589 = vunpack.c.0.s8 %v6588
      %v6590 = vlaneseq
      %v6591 = vshrl.u32 %v6590, 7
      %v6592 = vsub.s32 %v6589, %v6591
      %v6593 = vrot.slane %v6579, %v6592
      %v6594 = vcombine.low %v6531, %v6547
      %v6595 = vcombine.high %v6531, %v6547
      %v6597 = vunpack.c.l.s4 1934713408
      %v6598 = vunpack.c.0.s8 %v6597
      %v6599 = vlaneseq
      %v6600 = vshrl.u32 %v6599, 7
      %v6601 = vsub.s32 %v6598, %v6600
      %v6602 = vrot.slane %v6594, %v6601
      %v6604 = vunpack.c.l.s4 1934713408
      %v6605 = vunpack.c.0.s8 %v6604
      %v6606 = vlaneseq
      %v6607 = vshrl.u32 %v6606, 7
      %v6608 = vsub.s32 %v6605, %v6607
      %v6609 = vrot.slane %v6595, %v6608
      %v6610 = vcombine.low %v6555, %v6570
      %v6611 = vcombine.high %v6555, %v6570
      %v6613 = vunpack.c.l.s4 1934713408
      %v6614 = vunpack.c.0.s8 %v6613
      %v6615 = vlaneseq
      %v6616 = vshrl.u32 %v6615, 7
      %v6617 = vsub.s32 %v6614, %v6616
      %v6618 = vrot.slane %v6610, %v6617
      %v6620 = vunpack.c.l.s4 1934713408
      %v6621 = vunpack.c.0.s8 %v6620
      %v6622 = vlaneseq
      %v6623 = vshrl.u32 %v6622, 7
      %v6624 = vsub.s32 %v6621, %v6623
      %v6625 = vrot.slane %v6611, %v6624
      %v6626 = vcombine.low %v6562, %v6577
      %v6627 = vcombine.high %v6562, %v6577
      %v6629 = vunpack.c.l.s4 1934713408
      %v6630 = vunpack.c.0.s8 %v6629
      %v6631 = vlaneseq
      %v6632 = vshrl.u32 %v6631, 7
      %v6633 = vsub.s32 %v6630, %v6632
      %v6634 = vrot.slane %v6626, %v6633
      %v6636 = vunpack.c.l.s4 1934713408
      %v6637 = vunpack.c.0.s8 %v6636
      %v6638 = vlaneseq
      %v6639 = vshrl.u32 %v6638, 7
      %v6640 = vsub.s32 %v6637, %v6639
      %v6641 = vrot.slane %v6627, %v6640
      %v6642 = vcombine.low %v6586, %v6618
      %v6643 = vcombine.high %v6586, %v6618
      %v6644 = vcombine.low %v6593, %v6625
      %v6645 = vcombine.high %v6593, %v6625
      %v6646 = vcombine.low %v6602, %v6634
      %v6647 = vcombine.high %v6602, %v6634
      %v6648 = vcombine.low %v6609, %v6641
      %v6649 = vcombine.high %v6609, %v6641
      %v6650 = vcombine.low %v6481, %v6495
      %v6651 = vcombine.high %v6481, %v6495
      %v6653 = vunpack.c.l.s4 1983009808
      %v6654 = vunpack.c.0.s8 %v6653
      %v6655 = vlaneseq
      %v6656 = vshrl.u32 %v6655, 7
      %v6657 = vsub.s32 %v6654, %v6656
      %v6658 = vrot.slane %v6650, %v6657
      %v6660 = vunpack.c.l.s4 1983009808
      %v6661 = vunpack.c.0.s8 %v6660
      %v6662 = vlaneseq
      %v6663 = vshrl.u32 %v6662, 7
      %v6664 = vsub.s32 %v6661, %v6663
      %v6665 = vrot.slane %v6651, %v6664
      %v6666 = vcombine.low %v6489, %v6501
      %v6667 = vcombine.high %v6489, %v6501
      %v6669 = vunpack.c.l.s4 1983009808
      %v6670 = vunpack.c.0.s8 %v6669
      %v6671 = vlaneseq
      %v6672 = vshrl.u32 %v6671, 7
      %v6673 = vsub.s32 %v6670, %v6672
      %v6674 = vrot.slane %v6666, %v6673
      %v6676 = vunpack.c.l.s4 1983009808
      %v6677 = vunpack.c.0.s8 %v6676
      %v6678 = vlaneseq
      %v6679 = vshrl.u32 %v6678, 7
      %v6680 = vsub.s32 %v6677, %v6679
      %v6681 = vrot.slane %v6667, %v6680
      %v6682 = vcombine.high %v6507, 0.0
      %v6684 = vunpack.c.l.s4 1983009808
      %v6685 = vunpack.c.0.s8 %v6684
      %v6686 = vlaneseq
      %v6687 = vshrl.u32 %v6686, 7
      %v6688 = vsub.s32 %v6685, %v6687
      %v6689 = vrot.slane %v6507, %v6688
      %v6691 = vunpack.c.l.s4 1983009808
      %v6692 = vunpack.c.0.s8 %v6691
      %v6693 = vlaneseq
      %v6694 = vshrl.u32 %v6693, 7
      %v6695 = vsub.s32 %v6692, %v6694
      %v6696 = vrot.slane %v6682, %v6695
      %v6697 = vcombine.high %v6513, 0.0
      %v6699 = vunpack.c.l.s4 1983009808
      %v6700 = vunpack.c.0.s8 %v6699
      %v6701 = vlaneseq
      %v6702 = vshrl.u32 %v6701, 7
      %v6703 = vsub.s32 %v6700, %v6702
      %v6704 = vrot.slane %v6513, %v6703
      %v6706 = vunpack.c.l.s4 1983009808
      %v6707 = vunpack.c.0.s8 %v6706
      %v6708 = vlaneseq
      %v6709 = vshrl.u32 %v6708, 7
      %v6710 = vsub.s32 %v6707, %v6709
      %v6711 = vrot.slane %v6697, %v6710
      %v6712 = vcombine.low %v6658, %v6674
      %v6713 = vcombine.high %v6658, %v6674
      %v6715 = vunpack.c.l.s4 1934713408
      %v6716 = vunpack.c.0.s8 %v6715
      %v6717 = vlaneseq
      %v6718 = vshrl.u32 %v6717, 7
      %v6719 = vsub.s32 %v6716, %v6718
      %v6720 = vrot.slane %v6712, %v6719
      %v6722 = vunpack.c.l.s4 1934713408
      %v6723 = vunpack.c.0.s8 %v6722
      %v6724 = vlaneseq
      %v6725 = vshrl.u32 %v6724, 7
      %v6726 = vsub.s32 %v6723, %v6725
      %v6727 = vrot.slane %v6713, %v6726
      %v6728 = vcombine.low %v6665, %v6681
      %v6729 = vcombine.high %v6665, %v6681
      %v6731 = vunpack.c.l.s4 1934713408
      %v6732 = vunpack.c.0.s8 %v6731
      %v6733 = vlaneseq
      %v6734 = vshrl.u32 %v6733, 7
      %v6735 = vsub.s32 %v6732, %v6734
      %v6736 = vrot.slane %v6728, %v6735
      %v6738 = vunpack.c.l.s4 1934713408
      %v6739 = vunpack.c.0.s8 %v6738
      %v6740 = vlaneseq
      %v6741 = vshrl.u32 %v6740, 7
      %v6742 = vsub.s32 %v6739, %v6741
      %v6743 = vrot.slane %v6729, %v6742
      %v6744 = vcombine.low %v6689, %v6704
      %v6745 = vcombine.high %v6689, %v6704
      %v6747 = vunpack.c.l.s4 1934713408
      %v6748 = vunpack.c.0.s8 %v6747
      %v6749 = vlaneseq
      %v6750 = vshrl.u32 %v6749, 7
      %v6751 = vsub.s32 %v6748, %v6750
      %v6752 = vrot.slane %v6744, %v6751
      %v6754 = vunpack.c.l.s4 1934713408
      %v6755 = vunpack.c.0.s8 %v6754
      %v6756 = vlaneseq
      %v6757 = vshrl.u32 %v6756, 7
      %v6758 = vsub.s32 %v6755, %v6757
      %v6759 = vrot.slane %v6745, %v6758
      %v6760 = vcombine.low %v6696, %v6711
      %v6761 = vcombine.high %v6696, %v6711
      %v6763 = vunpack.c.l.s4 1934713408
      %v6764 = vunpack.c.0.s8 %v6763
      %v6765 = vlaneseq
      %v6766 = vshrl.u32 %v6765, 7
      %v6767 = vsub.s32 %v6764, %v6766
      %v6768 = vrot.slane %v6760, %v6767
      %v6770 = vunpack.c.l.s4 1934713408
      %v6771 = vunpack.c.0.s8 %v6770
      %v6772 = vlaneseq
      %v6773 = vshrl.u32 %v6772, 7
      %v6774 = vsub.s32 %v6771, %v6773
      %v6775 = vrot.slane %v6761, %v6774
      %v6776 = vcombine.low %v6720, %v6752
      %v6777 = vcombine.high %v6720, %v6752
      %v6778 = vcombine.low %v6727, %v6759
      %v6779 = vcombine.high %v6727, %v6759
      %v6780 = vcombine.low %v6736, %v6768
      %v6781 = vcombine.high %v6736, %v6768
      %v6782 = vcombine.low %v6743, %v6775
      %v6783 = vcombine.high %v6743, %v6775
      %v6784 = vcombine.low %v6642, %v6644
      %v6785 = vcombine.high %v6642, %v6644
      %v6787 = vunpack.c.l.s4 1983009808
      %v6788 = vunpack.c.0.s8 %v6787
      %v6789 = vlaneseq
      %v6790 = vshrl.u32 %v6789, 7
      %v6791 = vsub.s32 %v6788, %v6790
      %v6792 = vrot.slane %v6784, %v6791
      %v6794 = vunpack.c.l.s4 1983009808
      %v6795 = vunpack.c.0.s8 %v6794
      %v6796 = vlaneseq
      %v6797 = vshrl.u32 %v6796, 7
      %v6798 = vsub.s32 %v6795, %v6797
      %v6799 = vrot.slane %v6785, %v6798
      %v6800 = vcombine.low %v6643, %v6645
      %v6801 = vcombine.high %v6643, %v6645
      %v6803 = vunpack.c.l.s4 1983009808
      %v6804 = vunpack.c.0.s8 %v6803
      %v6805 = vlaneseq
      %v6806 = vshrl.u32 %v6805, 7
      %v6807 = vsub.s32 %v6804, %v6806
      %v6808 = vrot.slane %v6800, %v6807
      %v6810 = vunpack.c.l.s4 1983009808
      %v6811 = vunpack.c.0.s8 %v6810
      %v6812 = vlaneseq
      %v6813 = vshrl.u32 %v6812, 7
      %v6814 = vsub.s32 %v6811, %v6813
      %v6815 = vrot.slane %v6801, %v6814
      %v6816 = vcombine.low %v6646, %v6648
      %v6817 = vcombine.high %v6646, %v6648
      %v6819 = vunpack.c.l.s4 1983009808
      %v6820 = vunpack.c.0.s8 %v6819
      %v6821 = vlaneseq
      %v6822 = vshrl.u32 %v6821, 7
      %v6823 = vsub.s32 %v6820, %v6822
      %v6824 = vrot.slane %v6816, %v6823
      %v6826 = vunpack.c.l.s4 1983009808
      %v6827 = vunpack.c.0.s8 %v6826
      %v6828 = vlaneseq
      %v6829 = vshrl.u32 %v6828, 7
      %v6830 = vsub.s32 %v6827, %v6829
      %v6831 = vrot.slane %v6817, %v6830
      %v6832 = vcombine.low %v6647, %v6649
      %v6833 = vcombine.high %v6647, %v6649
      %v6835 = vunpack.c.l.s4 1983009808
      %v6836 = vunpack.c.0.s8 %v6835
      %v6837 = vlaneseq
      %v6838 = vshrl.u32 %v6837, 7
      %v6839 = vsub.s32 %v6836, %v6838
      %v6840 = vrot.slane %v6832, %v6839
      %v6842 = vunpack.c.l.s4 1983009808
      %v6843 = vunpack.c.0.s8 %v6842
      %v6844 = vlaneseq
      %v6845 = vshrl.u32 %v6844, 7
      %v6846 = vsub.s32 %v6843, %v6845
      %v6847 = vrot.slane %v6833, %v6846
      %v6848 = vcombine.low %v6792, %v6808
      %v6849 = vcombine.high %v6792, %v6808
      %v6851 = vunpack.c.l.s4 1934713408
      %v6852 = vunpack.c.0.s8 %v6851
      %v6853 = vlaneseq
      %v6854 = vshrl.u32 %v6853, 7
      %v6855 = vsub.s32 %v6852, %v6854
      %v6856 = vrot.slane %v6848, %v6855
      %v6858 = vunpack.c.l.s4 1934713408
      %v6859 = vunpack.c.0.s8 %v6858
      %v6860 = vlaneseq
      %v6861 = vshrl.u32 %v6860, 7
      %v6862 = vsub.s32 %v6859, %v6861
      %v6863 = vrot.slane %v6849, %v6862
      %v6864 = vcombine.low %v6799, %v6815
      %v6866 = vunpack.c.l.s4 1934713408
      %v6867 = vunpack.c.0.s8 %v6866
      %v6868 = vlaneseq
      %v6869 = vshrl.u32 %v6868, 7
      %v6870 = vsub.s32 %v6867, %v6869
      %v6871 = vrot.slane %v6864, %v6870
      %v6872 = vcombine.low %v6824, %v6840
      %v6873 = vcombine.high %v6824, %v6840
      %v6875 = vunpack.c.l.s4 1934713408
      %v6876 = vunpack.c.0.s8 %v6875
      %v6877 = vlaneseq
      %v6878 = vshrl.u32 %v6877, 7
      %v6879 = vsub.s32 %v6876, %v6878
      %v6880 = vrot.slane %v6872, %v6879
      %v6882 = vunpack.c.l.s4 1934713408
      %v6883 = vunpack.c.0.s8 %v6882
      %v6884 = vlaneseq
      %v6885 = vshrl.u32 %v6884, 7
      %v6886 = vsub.s32 %v6883, %v6885
      %v6887 = vrot.slane %v6873, %v6886
      %v6888 = vcombine.low %v6831, %v6847
      %v6890 = vunpack.c.l.s4 1934713408
      %v6891 = vunpack.c.0.s8 %v6890
      %v6892 = vlaneseq
      %v6893 = vshrl.u32 %v6892, 7
      %v6894 = vsub.s32 %v6891, %v6893
      %v6895 = vrot.slane %v6888, %v6894
      %v6896 = vcombine.low %v6856, %v6880
      %v6897 = vcombine.high %v6856, %v6880
      %v6898 = vcombine.low %v6863, %v6887
      %v6899 = vcombine.high %v6863, %v6887
      %v6900 = vcombine.low %v6871, %v6895
      %v6901 = vcombine.high %v6871, %v6895
      %v6902 = vcombine.low %v6776, %v6778
      %v6903 = vcombine.high %v6776, %v6778
      %v6905 = vunpack.c.l.s4 1983009808
      %v6906 = vunpack.c.0.s8 %v6905
      %v6907 = vlaneseq
      %v6908 = vshrl.u32 %v6907, 7
      %v6909 = vsub.s32 %v6906, %v6908
      %v6910 = vrot.slane %v6902, %v6909
      %v6912 = vunpack.c.l.s4 1983009808
      %v6913 = vunpack.c.0.s8 %v6912
      %v6914 = vlaneseq
      %v6915 = vshrl.u32 %v6914, 7
      %v6916 = vsub.s32 %v6913, %v6915
      %v6917 = vrot.slane %v6903, %v6916
      %v6918 = vcombine.low %v6777, %v6779
      %v6919 = vcombine.high %v6777, %v6779
      %v6921 = vunpack.c.l.s4 1983009808
      %v6922 = vunpack.c.0.s8 %v6921
      %v6923 = vlaneseq
      %v6924 = vshrl.u32 %v6923, 7
      %v6925 = vsub.s32 %v6922, %v6924
      %v6926 = vrot.slane %v6918, %v6925
      %v6928 = vunpack.c.l.s4 1983009808
      %v6929 = vunpack.c.0.s8 %v6928
      %v6930 = vlaneseq
      %v6931 = vshrl.u32 %v6930, 7
      %v6932 = vsub.s32 %v6929, %v6931
      %v6933 = vrot.slane %v6919, %v6932
      %v6934 = vcombine.low %v6780, %v6782
      %v6935 = vcombine.high %v6780, %v6782
      %v6937 = vunpack.c.l.s4 1983009808
      %v6938 = vunpack.c.0.s8 %v6937
      %v6939 = vlaneseq
      %v6940 = vshrl.u32 %v6939, 7
      %v6941 = vsub.s32 %v6938, %v6940
      %v6942 = vrot.slane %v6934, %v6941
      %v6944 = vunpack.c.l.s4 1983009808
      %v6945 = vunpack.c.0.s8 %v6944
      %v6946 = vlaneseq
      %v6947 = vshrl.u32 %v6946, 7
      %v6948 = vsub.s32 %v6945, %v6947
      %v6949 = vrot.slane %v6935, %v6948
      %v6950 = vcombine.low %v6781, %v6783
      %v6951 = vcombine.high %v6781, %v6783
      %v6953 = vunpack.c.l.s4 1983009808
      %v6954 = vunpack.c.0.s8 %v6953
      %v6955 = vlaneseq
      %v6956 = vshrl.u32 %v6955, 7
      %v6957 = vsub.s32 %v6954, %v6956
      %v6958 = vrot.slane %v6950, %v6957
      %v6960 = vunpack.c.l.s4 1983009808
      %v6961 = vunpack.c.0.s8 %v6960
      %v6962 = vlaneseq
      %v6963 = vshrl.u32 %v6962, 7
      %v6964 = vsub.s32 %v6961, %v6963
      %v6965 = vrot.slane %v6951, %v6964
      %v6966 = vcombine.low %v6910, %v6926
      %v6967 = vcombine.high %v6910, %v6926
      %v6969 = vunpack.c.l.s4 1934713408
      %v6970 = vunpack.c.0.s8 %v6969
      %v6971 = vlaneseq
      %v6972 = vshrl.u32 %v6971, 7
      %v6973 = vsub.s32 %v6970, %v6972
      %v6974 = vrot.slane %v6966, %v6973
      %v6976 = vunpack.c.l.s4 1934713408
      %v6977 = vunpack.c.0.s8 %v6976
      %v6978 = vlaneseq
      %v6979 = vshrl.u32 %v6978, 7
      %v6980 = vsub.s32 %v6977, %v6979
      %v6981 = vrot.slane %v6967, %v6980
      %v6982 = vcombine.low %v6917, %v6933
      %v6984 = vunpack.c.l.s4 1934713408
      %v6985 = vunpack.c.0.s8 %v6984
      %v6986 = vlaneseq
      %v6987 = vshrl.u32 %v6986, 7
      %v6988 = vsub.s32 %v6985, %v6987
      %v6989 = vrot.slane %v6982, %v6988
      %v6990 = vcombine.low %v6942, %v6958
      %v6991 = vcombine.high %v6942, %v6958
      %v6993 = vunpack.c.l.s4 1934713408
      %v6994 = vunpack.c.0.s8 %v6993
      %v6995 = vlaneseq
      %v6996 = vshrl.u32 %v6995, 7
      %v6997 = vsub.s32 %v6994, %v6996
      %v6998 = vrot.slane %v6990, %v6997
      %v7000 = vunpack.c.l.s4 1934713408
      %v7001 = vunpack.c.0.s8 %v7000
      %v7002 = vlaneseq
      %v7003 = vshrl.u32 %v7002, 7
      %v7004 = vsub.s32 %v7001, %v7003
      %v7005 = vrot.slane %v6991, %v7004
      %v7006 = vcombine.low %v6949, %v6965
      %v7008 = vunpack.c.l.s4 1934713408
      %v7009 = vunpack.c.0.s8 %v7008
      %v7010 = vlaneseq
      %v7011 = vshrl.u32 %v7010, 7
      %v7012 = vsub.s32 %v7009, %v7011
      %v7013 = vrot.slane %v7006, %v7012
      %v7014 = vcombine.low %v6974, %v6998
      %v7015 = vcombine.high %v6974, %v6998
      %v7016 = vcombine.low %v6981, %v7005
      %v7017 = vcombine.high %v6981, %v7005
      %v7018 = vcombine.low %v6989, %v7013
      %v7019 = vcombine.high %v6989, %v7013
      %v7020 = vadd.f32 %v6896, %v5080
      %v7021 = vadd.f32 %v7014, %v5081
      %v7022 = vadd.f32 %v6897, %v5080
      %v7023 = vadd.f32 %v7015, %v5081
      %v7024 = vadd.f32 %v6898, %v5080
      %v7025 = vadd.f32 %v7016, %v5081
      %v7026 = vadd.f32 %v6899, %v5080
      %v7027 = vadd.f32 %v7017, %v5081
      %v7028 = vadd.f32 %v6900, %v5080
      %v7029 = vadd.f32 %v7018, %v5081
      %v7030 = vadd.f32 %v6901, %v5080
      %v7031 = vadd.f32 %v7019, %v5081
      %v7032 = vadd.f32 %v7020, %v5789
      %v7033 = vadd.f32 %v7021, %v5790
      %v7034 = vadd.f32 %v7022, %v5791
      %v7035 = vadd.f32 %v7023, %v5792
      %v7036 = vadd.f32 %v7024, %v5793
      %v7037 = vadd.f32 %v7025, %v5794
      %v7038 = vadd.f32 %v7026, %v5795
      %v7039 = vadd.f32 %v7027, %v5796
      %v7040 = vadd.f32 %v7028, %v5797
      %v7041 = vadd.f32 %v7029, %v5798
      %v7042 = vadd.f32 %v7030, %v5799
      %v7043 = vadd.f32 %v7031, %v5800
      %v7044 = vmax.f32 %v7032, 0.0
      %v7045 = vmax.f32 %v7033, 0.0
      %v7046 = vmax.f32 %v7034, 0.0
      %v7047 = vmax.f32 %v7035, 0.0
      %v7048 = vmax.f32 %v7036, 0.0
      %v7049 = vmax.f32 %v7037, 0.0
      %v7050 = vmax.f32 %v7038, 0.0
      %v7051 = vmax.f32 %v7039, 0.0
      %v7052 = vmax.f32 %v7040, 0.0
      %v7053 = vmax.f32 %v7041, 0.0
      %v7054 = vmax.f32 %v7042, 0.0
      %v7055 = vmax.f32 %v7043, 0.0
      %v7057 = vsel %vm3078, %v7044, 0
      %v7060 = vsel %vm3078, %v7045, 0
      %v7063 = vsel %vm3078, %v7046, 0
      %v7066 = vsel %vm3078, %v7047, 0
      %v7069 = vsel %vm3078, %v7048, 0
      %v7072 = vsel %vm3078, %v7049, 0
      %v7075 = vsel %vm3078, %v7050, 0
      %v7078 = vsel %vm3078, %v7051, 0
      %v7081 = vsel %vm3078, %v7052, 0
      %v7084 = vsel %vm3078, %v7053, 0
      %v7087 = vsel %vm3078, %v7054, 0
      %v7090 = vsel %vm3078, %v7055, 0
      %7092 = vmatprep.subr.mxu0 0.0
      %7093 = vmatpush1.msra.mxu0 %v5082
      %7094 = vmatprep.subr.mxu0 0.0
      %7095 = vmatpush1.msra.mxu0 0.0
      %7096 = vmatprep.subr.mxu0 0.0
      %7097 = vmatpush1.msra.mxu0 0.0
      %7098 = vmatprep.subr.mxu0 0.0
      %7099 = vmatpush1.msra.mxu0 0.0
      %7100 = vmatprep.subr.mxu0 0.0
      %7101 = vmatpush1.msra.mxu0 0.0
      %7102 = vmatprep.subr.mxu0 0.0
      %7103 = vmatpush1.msra.mxu0 0.0
      %7104 = vmatprep.subr.mxu0 0.0
      %7105 = vmatpush1.msra.mxu0 0.0
      %7106 = vmatprep.subr.mxu0 0.0
      %7107 = vmatpush1.msra.mxu0 0.0
      %7108 = vmatprep.subr.mxu0 0.0
      %7109 = vmatpush1.msra.mxu0 0.0
      %7110 = vmatprep.subr.mxu0 0.0
      %7111 = vmatpush1.msra.mxu0 0.0
      %7112 = vmatprep.subr.mxu0 0.0
      %7113 = vmatpush1.msra.mxu0 0.0
      %7114 = vmatprep.subr.mxu0 0.0
      %7115 = vmatpush1.msra.mxu0 0.0
      %7116 = vmatprep.subr.mxu0 0.0
      %7117 = vmatpush1.msra.mxu0 0.0
      %7118 = vmatprep.subr.mxu0 0.0
      %7119 = vmatpush1.msra.mxu0 0.0
      %7120 = vmatprep.subr.mxu0 0.0
      %7121 = vmatpush1.msra.mxu0 0.0
      %7122 = vmatprep.subr.mxu0 0.0
      %7123 = vmatpush1.msra.mxu0 0.0
      %7124 = vmatprep.subr.mxu0 0.0
      %7125 = vmatpush1.msra.mxu0 0.0
      %7126 = vmatprep.subr.mxu0 0.0
      %7127 = vmatpush1.msra.mxu0 0.0
      %7128 = vmatprep.subr.mxu0 0.0
      %7129 = vmatpush1.msra.mxu0 0.0
      %7130 = vmatprep.subr.mxu0 0.0
      %7131 = vmatpush1.msra.mxu0 0.0
      %7132 = vmatprep.subr.mxu0 0.0
      %7133 = vmatpush1.msra.mxu0 0.0
      %7134 = vmatprep.subr.mxu0 0.0
      %7135 = vmatpush1.msra.mxu0 0.0
      %7136 = vmatprep.subr.mxu0 0.0
      %7137 = vmatpush1.msra.mxu0 0.0
      %7138 = vmatprep.subr.mxu0 0.0
      %7139 = vmatpush1.msra.mxu0 0.0
      %7140 = vmatprep.subr.mxu0 0.0
      %7141 = vmatpush1.msra.mxu0 0.0
      %7142 = vmatprep.subr.mxu0 0.0
      %7143 = vmatpush1.msra.mxu0 0.0
      %7144 = vmatprep.subr.mxu0 0.0
      %7145 = vmatpush1.msra.mxu0 0.0
      %7146 = vmatprep.subr.mxu0 0.0
      %7147 = vmatpush1.msra.mxu0 0.0
      %7148 = vmatprep.subr.mxu0 0.0
      %7149 = vmatpush1.msra.mxu0 0.0
      %7150 = vmatprep.subr.mxu0 0.0
      %7151 = vmatpush1.msra.mxu0 0.0
      %7152 = vmatprep.subr.mxu0 0.0
      %7153 = vmatpush1.msra.mxu0 0.0
      %7154 = vmatprep.subr.mxu0 0.0
      %7155 = vmatpush1.msra.mxu0 0.0
      %7156 = vmatprep.mubr.f32.mxu0 0.0
      %7157 = vmatmul.mubr.f32.gmra.mrb[0].mxu0 %v7057
      %v7158 = vpop.f32.mrb[0].mxu0
      %v7159 = vadd.f32 0.0, %v7158
      %v7160 = vpop.f32.mrb[0].mxu0
      %7161 = vmatprep.mubr.f32.mxu0 0.0
      %7162 = vmatmul.mubr.f32.gmra.mrb[0].mxu0 %v7060
      %v7163 = vpop.f32.mrb[0].mxu0
      %v7164 = vadd.f32 0.0, %v7163
      %v7165 = vpop.f32.mrb[0].mxu0
      %7166 = vmatprep.mubr.f32.mxu0 0.0
      %7167 = vmatmul.mubr.f32.gmra.mrb[0].mxu0 %v7063
      %v7168 = vpop.f32.mrb[0].mxu0
      %v7169 = vadd.f32 0.0, %v7168
      %v7170 = vpop.f32.mrb[0].mxu0
      %7171 = vmatprep.mubr.f32.mxu0 0.0
      %7172 = vmatmul.mubr.f32.gmra.mrb[0].mxu0 %v7066
      %v7173 = vpop.f32.mrb[0].mxu0
      %v7174 = vadd.f32 0.0, %v7173
      %v7175 = vpop.f32.mrb[0].mxu0
      %7176 = vmatprep.mubr.f32.mxu0 0.0
      %7177 = vmatmul.mubr.f32.gmra.mrb[0].mxu0 %v7069
      %v7178 = vpop.f32.mrb[0].mxu0
      %v7179 = vadd.f32 0.0, %v7178
      %v7180 = vpop.f32.mrb[0].mxu0
      %7181 = vmatprep.mubr.f32.mxu0 0.0
      %7182 = vmatmul.mubr.f32.gmra.mrb[0].mxu0 %v7072
      %v7183 = vpop.f32.mrb[0].mxu0
      %v7184 = vadd.f32 0.0, %v7183
      %v7185 = vpop.f32.mrb[0].mxu0
      %7186 = vmatprep.mubr.f32.mxu0 0.0
      %7187 = vmatmul.mubr.f32.gmra.mrb[0].mxu0 %v7075
      %v7188 = vpop.f32.mrb[0].mxu0
      %v7189 = vadd.f32 0.0, %v7188
      %v7190 = vpop.f32.mrb[0].mxu0
      %7191 = vmatprep.mubr.f32.mxu0 0.0
      %7192 = vmatmul.mubr.f32.gmra.mrb[0].mxu0 %v7078
      %v7193 = vpop.f32.mrb[0].mxu0
      %v7194 = vadd.f32 0.0, %v7193
      %v7195 = vpop.f32.mrb[0].mxu0
      %7196 = vmatprep.mubr.f32.mxu0 0.0
      %7197 = vmatmul.mubr.f32.gmra.mrb[0].mxu0 %v7081
      %v7198 = vpop.f32.mrb[0].mxu0
      %v7199 = vadd.f32 0.0, %v7198
      %v7200 = vpop.f32.mrb[0].mxu0
      %7201 = vmatprep.mubr.f32.mxu0 0.0
      %7202 = vmatmul.mubr.f32.gmra.mrb[0].mxu0 %v7084
      %v7203 = vpop.f32.mrb[0].mxu0
      %v7204 = vadd.f32 0.0, %v7203
      %v7205 = vpop.f32.mrb[0].mxu0
      %7206 = vmatprep.mubr.f32.mxu0 0.0
      %7207 = vmatmul.mubr.f32.gmra.mrb[0].mxu0 %v7087
      %v7208 = vpop.f32.mrb[0].mxu0
      %v7209 = vadd.f32 0.0, %v7208
      %v7210 = vpop.f32.mrb[0].mxu0
      %7211 = vmatprep.mubr.f32.mxu0 0.0
      %7212 = vmatmul.mubr.f32.gmra.mrb[0].mxu0 %v7090
      %v7213 = vpop.f32.mrb[0].mxu0
      %v7214 = vadd.f32 0.0, %v7213
      %v7215 = vpop.f32.mrb[0].mxu0
      %7216 = vdwg.mxu0
      %7225 = vrot.lane.b32.xlu0 %v7169, 96
      %v7226 = vpop.permute.xlu0 %7225
      %7227 = vrot.lane.b32.xlu0 %v7174, 96
      %v7228 = vpop.permute.xlu0 %7227
      %7229 = vrot.lane.b32.xlu0 %v7179, 96
      %v7230 = vpop.permute.xlu0 %7229
      %7231 = vrot.lane.b32.xlu0 %v7184, 96
      %v7232 = vpop.permute.xlu0 %7231
      %7233 = vrot.lane.b32.xlu0 %v7189, 96
      %v7234 = vpop.permute.xlu0 %7233
      %7235 = vrot.lane.b32.xlu0 %v7194, 96
      %v7236 = vpop.permute.xlu0 %7235
      %7237 = vrot.lane.b32.xlu0 %v7199, 96
      %v7238 = vpop.permute.xlu0 %7237
      %7239 = vrot.lane.b32.xlu0 %v7204, 96
      %v7240 = vpop.permute.xlu0 %7239
      %v7249 = vadd.f32 %v7159, %v7226
      %v7250 = vadd.f32 %v7164, %v7228
      %v7251 = vadd.f32 %v7169, %v7230
      %v7252 = vadd.f32 %v7174, %v7232
      %v7253 = vadd.f32 %v7179, %v7234
      %v7254 = vadd.f32 %v7184, %v7236
      %v7255 = vadd.f32 %v7189, %v7238
      %v7256 = vadd.f32 %v7194, %v7240
      %7259 = vrot.lane.b32.xlu0 %v7179, 64
      %v7260 = vpop.permute.xlu0 %7259
      %7261 = vrot.lane.b32.xlu0 %v7184, 64
      %v7262 = vpop.permute.xlu0 %7261
      %7263 = vrot.lane.b32.xlu0 %v7189, 64
      %v7264 = vpop.permute.xlu0 %7263
      %7265 = vrot.lane.b32.xlu0 %v7194, 64
      %v7266 = vpop.permute.xlu0 %7265
      %7267 = vrot.lane.b32.xlu0 %v7199, 64
      %v7268 = vpop.permute.xlu0 %7267
      %7269 = vrot.lane.b32.xlu0 %v7204, 64
      %v7270 = vpop.permute.xlu0 %7269
      %7271 = vrot.lane.b32.xlu0 %v7209, 64
      %v7272 = vpop.permute.xlu0 %7271
      %7273 = vrot.lane.b32.xlu0 %v7214, 64
      %v7274 = vpop.permute.xlu0 %7273
      %v7283 = vadd.f32 %v7249, %v7260
      %v7284 = vadd.f32 %v7250, %v7262
      %v7285 = vadd.f32 %v7251, %v7264
      %v7286 = vadd.f32 %v7252, %v7266
      %v7287 = vadd.f32 %v7253, %v7268
      %v7288 = vadd.f32 %v7254, %v7270
      %v7289 = vadd.f32 %v7255, %v7272
      %v7290 = vadd.f32 %v7256, %v7274
      %v7292 = vlaneseq
      %v7293 = vshrl.u32 %v7292, 7
      %v7294 = vsub.s32 0, %v7293
      %v7295 = vrot.slane %v5083, %v7294
      %v7297 = vadd.f32 %v7283, %v7295
      %v7298 = vadd.f32 %v7284, %v7295
      %v7299 = vadd.f32 %v7285, %v7295
      %v7300 = vadd.f32 %v7286, %v7295
      %v7301 = vadd.f32 %v7287, %v7295
      %v7302 = vadd.f32 %v7288, %v7295
      %v7303 = vadd.f32 %v7289, %v7295
      %v7304 = vadd.f32 %v7290, %v7295
      %v7306 = vlaneseq
      %v7307 = vshrl.u32 %v7306, 7
      %v7308 = vsub.s32 0, %v7307
      %v7309 = vrot.slane %v5084, %v7308
      %7310 = vrot.lane.b32.xlu0 %v7309, 96
      %v7311 = vpop.permute.xlu0 %7310
      %v7313 = vadd.f32 %v7179, %v7311
      %v7314 = vadd.f32 %v7184, %v7311
      %v7315 = vadd.f32 %v7189, %v7311
      %v7316 = vadd.f32 %v7194, %v7311
      %v7317 = vadd.f32 %v7199, %v7311
      %v7318 = vadd.f32 %v7204, %v7311
      %v7319 = vadd.f32 %v7209, %v7311
      %v7320 = vadd.f32 %v7214, %v7311
      %7329 = vrot.lane.b32.xlu0 %v7313, 32
      %v7330 = vpop.permute.xlu0 %7329
      %7331 = vrot.lane.b32.xlu0 %v7314, 32
      %v7332 = vpop.permute.xlu0 %7331
      %7333 = vrot.lane.b32.xlu0 %v7315, 32
      %v7334 = vpop.permute.xlu0 %7333
      %7335 = vrot.lane.b32.xlu0 %v7316, 32
      %v7336 = vpop.permute.xlu0 %7335
      %7337 = vrot.lane.b32.xlu0 %v7317, 32
      %v7338 = vpop.permute.xlu0 %7337
      %7339 = vrot.lane.b32.xlu0 %v7318, 32
      %v7340 = vpop.permute.xlu0 %7339
      %7341 = vrot.lane.b32.xlu0 %v7319, 32
      %v7342 = vpop.permute.xlu0 %7341
      %7343 = vrot.lane.b32.xlu0 %v7320, 32
      %v7344 = vpop.permute.xlu0 %7343
      %v7353 = vadd.f32 %v7297, %v7330
      %v7354 = vadd.f32 %v7298, %v7332
      %v7355 = vadd.f32 %v7299, %v7334
      %v7356 = vadd.f32 %v7300, %v7336
      %v7357 = vadd.f32 %v7301, %v7338
      %v7358 = vadd.f32 %v7302, %v7340
      %v7359 = vadd.f32 %v7303, %v7342
      %v7360 = vadd.f32 %v7304, %v7344
      %v7361 = vxor.u32 %v7297, 2147483648
      %v7362 = vxor.u32 %v7298, 2147483648
      %v7363 = vxor.u32 %v7299, 2147483648
      %v7364 = vxor.u32 %v7300, 2147483648
      %v7365 = vxor.u32 %v7301, 2147483648
      %v7366 = vxor.u32 %v7302, 2147483648
      %v7367 = vxor.u32 %v7303, 2147483648
      %v7368 = vxor.u32 %v7304, 2147483648
      %v7369 = vmul.f32 %v7361, 1.442695
      %v7370 = vpow.pop %v7369
      %v7371 = vmul.f32 %v7362, 1.442695
      %v7372 = vpow.pop %v7371
      %v7373 = vmul.f32 %v7363, 1.442695
      %v7374 = vpow.pop %v7373
      %v7375 = vmul.f32 %v7364, 1.442695
      %v7376 = vpow.pop %v7375
      %v7377 = vmul.f32 %v7365, 1.442695
      %v7378 = vpow.pop %v7377
      %v7379 = vmul.f32 %v7366, 1.442695
      %v7380 = vpow.pop %v7379
      %v7381 = vmul.f32 %v7367, 1.442695
      %v7382 = vpow.pop %v7381
      %v7383 = vmul.f32 %v7368, 1.442695
      %v7384 = vpow.pop %v7383
      %v7385 = vadd.f32 %v7370, 1.0
      %v7386 = vadd.f32 %v7372, 1.0
      %v7387 = vadd.f32 %v7374, 1.0
      %v7388 = vadd.f32 %v7376, 1.0
      %v7389 = vadd.f32 %v7378, 1.0
      %v7390 = vadd.f32 %v7380, 1.0
      %v7391 = vadd.f32 %v7382, 1.0
      %v7392 = vadd.f32 %v7384, 1.0
      %v7393 = vrcp.pop %v7385
      %v7394 = vmul.f32 1.0, %v7393
      %v7395 = vrcp.pop %v7386
      %v7396 = vmul.f32 1.0, %v7395
      %v7397 = vrcp.pop %v7387
      %v7398 = vmul.f32 1.0, %v7397
      %v7399 = vrcp.pop %v7388
      %v7400 = vmul.f32 1.0, %v7399
      %v7401 = vrcp.pop %v7389
      %v7402 = vmul.f32 1.0, %v7401
      %v7403 = vrcp.pop %v7390
      %v7404 = vmul.f32 1.0, %v7403
      %v7405 = vrcp.pop %v7391
      %v7406 = vmul.f32 1.0, %v7405
      %v7407 = vrcp.pop %v7392
      %v7408 = vmul.f32 1.0, %v7407
      %7417 = vrot.lane.b32.xlu0 %v7394, 112
      %v7418 = vpop.permute.xlu0 %7417
      %7419 = vrot.lane.b32.xlu0 %v7396, 112
      %v7420 = vpop.permute.xlu0 %7419
      %7421 = vrot.lane.b32.xlu0 %v7398, 112
      %v7422 = vpop.permute.xlu0 %7421
      %7423 = vrot.lane.b32.xlu0 %v7400, 112
      %v7424 = vpop.permute.xlu0 %7423
      %7425 = vrot.lane.b32.xlu0 %v7402, 112
      %v7426 = vpop.permute.xlu0 %7425
      %7427 = vrot.lane.b32.xlu0 %v7404, 112
      %v7428 = vpop.permute.xlu0 %7427
      %7429 = vrot.lane.b32.xlu0 %v7406, 112
      %v7430 = vpop.permute.xlu0 %7429
      %7431 = vrot.lane.b32.xlu0 %v7408, 112
      %v7432 = vpop.permute.xlu0 %7431
      %v7441 = vmul.f32 %v7353, %v7418
      %v7442 = vmul.f32 %v7354, %v7420
      %v7443 = vmul.f32 %v7355, %v7422
      %v7444 = vmul.f32 %v7356, %v7424
      %v7445 = vmul.f32 %v7357, %v7426
      %v7446 = vmul.f32 %v7358, %v7428
      %v7447 = vmul.f32 %v7359, %v7430
      %v7448 = vmul.f32 %v7360, %v7432
      %v7449 = vsel %vm1898, %v7441, 0.0
      %7450 = vadd.xlane.f32.xlu0 %v7449
      %v7451 = vpop.xlane.xlu0 %7450
      %v7452 = vsel %vm1898, %v7442, 0.0
      %7453 = vadd.xlane.f32.xlu0 %v7452
      %v7454 = vpop.xlane.xlu0 %7453
      %v7455 = vsel %vm1898, %v7443, 0.0
      %7456 = vadd.xlane.f32.xlu0 %v7455
      %v7457 = vpop.xlane.xlu0 %7456
      %v7458 = vsel %vm1898, %v7444, 0.0
      %7459 = vadd.xlane.f32.xlu0 %v7458
      %v7460 = vpop.xlane.xlu0 %7459
      %v7461 = vsel %vm1898, %v7445, 0.0
      %7462 = vadd.xlane.f32.xlu0 %v7461
      %v7463 = vpop.xlane.xlu0 %7462
      %v7464 = vsel %vm1898, %v7446, 0.0
      %7465 = vadd.xlane.f32.xlu0 %v7464
      %v7466 = vpop.xlane.xlu0 %7465
      %v7467 = vsel %vm1898, %v7447, 0.0
      %7468 = vadd.xlane.f32.xlu0 %v7467
      %v7469 = vpop.xlane.xlu0 %7468
      %v7470 = vsel %vm1898, %v7448, 0.0
      %7471 = vadd.xlane.f32.xlu0 %v7470
      %v7472 = vpop.xlane.xlu0 %7471
      %v7473 = vadd.f32 %v7451, %v7454
      %v7474 = vrot.slane %v7473, 4
      %v7475 = vadd.f32 %v7473, %v7474
      %v7476 = vrot.slane %v7475, 2
      %v7477 = vadd.f32 %v7475, %v7476
      %v7478 = vrot.slane %v7477, 1
      %v7479 = vadd.f32 %v7477, %v7478
      %v7480 = vadd.f32 %v7457, %v7460
      %v7481 = vrot.slane %v7480, 4
      %v7482 = vadd.f32 %v7480, %v7481
      %v7483 = vrot.slane %v7482, 2
      %v7484 = vadd.f32 %v7482, %v7483
      %v7485 = vrot.slane %v7484, 1
      %v7486 = vadd.f32 %v7484, %v7485
      %v7487 = vadd.f32 %v7463, %v7466
      %v7488 = vrot.slane %v7487, 4
      %v7489 = vadd.f32 %v7487, %v7488
      %v7490 = vrot.slane %v7489, 2
      %v7491 = vadd.f32 %v7489, %v7490
      %v7492 = vrot.slane %v7491, 1
      %v7493 = vadd.f32 %v7491, %v7492
      %v7494 = vadd.f32 %v7469, %v7472
      %v7495 = vrot.slane %v7494, 4
      %v7496 = vadd.f32 %v7494, %v7495
      %v7497 = vrot.slane %v7496, 2
      %v7498 = vadd.f32 %v7496, %v7497
      %v7499 = vrot.slane %v7498, 1
      %v7500 = vadd.f32 %v7498, %v7499
      %v7501 = vmul.f32 %v7479, %v4854
      %v7502 = vmul.f32 %v7486, %v4854
      %v7503 = vmul.f32 %v7493, %v4854
      %v7504 = vmul.f32 %v7500, %v4854
      %v7505 = vsub.f32 %v7441, %v7501
      %v7506 = vsub.f32 %v7442, %v7501
      %v7507 = vsub.f32 %v7443, %v7502
      %v7508 = vsub.f32 %v7444, %v7502
      %v7509 = vsub.f32 %v7445, %v7503
      %v7510 = vsub.f32 %v7446, %v7503
      %v7511 = vsub.f32 %v7447, %v7504
      %v7512 = vsub.f32 %v7448, %v7504
      %v7513 = vmul.f32 %v7505, %v7505
      %v7514 = vmul.f32 %v7506, %v7506
      %v7515 = vmul.f32 %v7507, %v7507
      %v7516 = vmul.f32 %v7508, %v7508
      %v7517 = vmul.f32 %v7509, %v7509
      %v7518 = vmul.f32 %v7510, %v7510
      %v7519 = vmul.f32 %v7511, %v7511
      %v7520 = vmul.f32 %v7512, %v7512
      %v7521 = vsel %vm1898, %v7513, 0.0
      %7522 = vadd.xlane.f32.xlu0 %v7521
      %v7523 = vpop.xlane.xlu0 %7522
      %v7524 = vsel %vm1898, %v7514, 0.0
      %7525 = vadd.xlane.f32.xlu0 %v7524
      %v7526 = vpop.xlane.xlu0 %7525
      %v7527 = vsel %vm1898, %v7515, 0.0
      %7528 = vadd.xlane.f32.xlu0 %v7527
      %v7529 = vpop.xlane.xlu0 %7528
      %v7530 = vsel %vm1898, %v7516, 0.0
      %7531 = vadd.xlane.f32.xlu0 %v7530
      %v7532 = vpop.xlane.xlu0 %7531
      %v7533 = vsel %vm1898, %v7517, 0.0
      %7534 = vadd.xlane.f32.xlu0 %v7533
      %v7535 = vpop.xlane.xlu0 %7534
      %v7536 = vsel %vm1898, %v7518, 0.0
      %7537 = vadd.xlane.f32.xlu0 %v7536
      %v7538 = vpop.xlane.xlu0 %7537
      %v7539 = vsel %vm1898, %v7519, 0.0
      %7540 = vadd.xlane.f32.xlu0 %v7539
      %v7541 = vpop.xlane.xlu0 %7540
      %v7542 = vsel %vm1898, %v7520, 0.0
      %7543 = vadd.xlane.f32.xlu0 %v7542
      %v7544 = vpop.xlane.xlu0 %7543
      %v7545 = vadd.f32 %v7523, %v7526
      %v7546 = vrot.slane %v7545, 4
      %v7547 = vadd.f32 %v7545, %v7546
      %v7548 = vrot.slane %v7547, 2
      %v7549 = vadd.f32 %v7547, %v7548
      %v7550 = vrot.slane %v7549, 1
      %v7551 = vadd.f32 %v7549, %v7550
      %v7552 = vadd.f32 %v7529, %v7532
      %v7553 = vrot.slane %v7552, 4
      %v7554 = vadd.f32 %v7552, %v7553
      %v7555 = vrot.slane %v7554, 2
      %v7556 = vadd.f32 %v7554, %v7555
      %v7557 = vrot.slane %v7556, 1
      %v7558 = vadd.f32 %v7556, %v7557
      %v7559 = vadd.f32 %v7535, %v7538
      %v7560 = vrot.slane %v7559, 4
      %v7561 = vadd.f32 %v7559, %v7560
      %v7562 = vrot.slane %v7561, 2
      %v7563 = vadd.f32 %v7561, %v7562
      %v7564 = vrot.slane %v7563, 1
      %v7565 = vadd.f32 %v7563, %v7564
      %v7566 = vadd.f32 %v7541, %v7544
      %v7567 = vrot.slane %v7566, 4
      %v7568 = vadd.f32 %v7566, %v7567
      %v7569 = vrot.slane %v7568, 2
      %v7570 = vadd.f32 %v7568, %v7569
      %v7571 = vrot.slane %v7570, 1
      %v7572 = vadd.f32 %v7570, %v7571
      %v7573 = vmul.f32 %v7551, %v4854
      %v7574 = vmul.f32 %v7558, %v4854
      %v7575 = vmul.f32 %v7565, %v4854
      %v7576 = vmul.f32 %v7572, %v4854
      %v7577 = vadd.f32 %v7573, 1e-12
      %v7578 = vadd.f32 %v7574, 1e-12
      %v7579 = vadd.f32 %v7575, 1e-12
      %v7580 = vadd.f32 %v7576, 1e-12
      %v7581 = vrsqrt.pop %v7577
      %v7582 = vrsqrt.pop %v7578
      %v7583 = vrsqrt.pop %v7579
      %v7584 = vrsqrt.pop %v7580
      %v7585 = vmul.f32 %v7505, %v7581
      %v7586 = vmul.f32 %v7506, %v7581
      %v7587 = vmul.f32 %v7507, %v7582
      %v7588 = vmul.f32 %v7508, %v7582
      %v7589 = vmul.f32 %v7509, %v7583
      %v7590 = vmul.f32 %v7510, %v7583
      %v7591 = vmul.f32 %v7511, %v7584
      %v7592 = vmul.f32 %v7512, %v7584
      %v7593 = vmul.f32 %v7585, %v5085
      %v7594 = vmul.f32 %v7586, %v5086
      %v7595 = vmul.f32 %v7587, %v5085
      %v7596 = vmul.f32 %v7588, %v5086
      %v7597 = vmul.f32 %v7589, %v5085
      %v7598 = vmul.f32 %v7590, %v5086
      %v7599 = vmul.f32 %v7591, %v5085
      %v7600 = vmul.f32 %v7592, %v5086
      %v7601 = vadd.f32 %v7593, %v5087
      %v7602 = vadd.f32 %v7594, %v5088
      %v7603 = vadd.f32 %v7595, %v5087
      %v7604 = vadd.f32 %v7596, %v5088
      %v7605 = vadd.f32 %v7597, %v5087
      %v7606 = vadd.f32 %v7598, %v5088
      %v7607 = vadd.f32 %v7599, %v5087
      %v7608 = vadd.f32 %v7600, %v5088
      %v7609 = vld [vmem:[%s51] sm:$0xff]
      %v7610 = vld [vmem:[%s51 + $0x8] sm:$0xff]
      %v7611 = vld [vmem:[%s51 + $0x10] sm:$0xff]
      %v7612 = vld [vmem:[%s51 + $0x18] sm:$0xff]
      %v7613 = vld [vmem:[%s53] sm:$0x1]
      %v7614 = vld [vmem:[%s55] sm:$0x1]
      %v7615 = vld [vmem:[%s57] sm:$0xff]
      %v7616 = vld [vmem:[%s57 + $0x8] sm:$0xff]
      %v7617 = vld [vmem:[%s59] sm:$0xff]
      %v7618 = vld [vmem:[%s59 + $0x8] sm:$0xff]
      %v7619 = vld [vmem:[%s61] sm:$0xff]
      %v7620 = vld [vmem:[%s61 + $0x8] sm:$0xff]
      %v7621 = vld [vmem:[%s63] sm:$0x1]
      %v7622 = vld [vmem:[%s65] sm:$0xff]
      %v7623 = vld [vmem:[%s67] sm:$0x1]
      %v7625 = vsel %vm1898, %v7601, 0
      %v7628 = vsel %vm1898, %v7602, 0
      %v7631 = vsel %vm1898, %v7603, 0
      %v7634 = vsel %vm1898, %v7604, 0
      %v7637 = vsel %vm1898, %v7605, 0
      %v7640 = vsel %vm1898, %v7606, 0
      %v7643 = vsel %vm1898, %v7607, 0
      %v7646 = vsel %vm1898, %v7608, 0
      %7648 = vmatprep.subr.mxu0 %v7610
      %7649 = vmatpush1.msra.mxu0 %v7609
      %7650 = vmatprep.subr.mxu0 %v7612
      %7651 = vmatpush1.msra.mxu0 %v7611
      %7652 = vmatprep.subr.mxu0 0.0
      %7653 = vmatpush1.msra.mxu0 0.0
      %7654 = vmatprep.subr.mxu0 0.0
      %7655 = vmatpush1.msra.mxu0 0.0
      %7656 = vmatprep.subr.mxu0 0.0
      %7657 = vmatpush1.msra.mxu0 0.0
      %7658 = vmatprep.subr.mxu0 0.0
      %7659 = vmatpush1.msra.mxu0 0.0
      %7660 = vmatprep.subr.mxu0 0.0
      %7661 = vmatpush1.msra.mxu0 0.0
      %7662 = vmatprep.subr.mxu0 0.0
      %7663 = vmatpush1.msra.mxu0 0.0
      %7664 = vmatprep.subr.mxu0 0.0
      %7665 = vmatpush1.msra.mxu0 0.0
      %7666 = vmatprep.subr.mxu0 0.0
      %7667 = vmatpush1.msra.mxu0 0.0
      %7668 = vmatprep.subr.mxu0 0.0
      %7669 = vmatpush1.msra.mxu0 0.0
      %7670 = vmatprep.subr.mxu0 0.0
      %7671 = vmatpush1.msra.mxu0 0.0
      %7672 = vmatprep.subr.mxu0 0.0
      %7673 = vmatpush1.msra.mxu0 0.0
      %7674 = vmatprep.subr.mxu0 0.0
      %7675 = vmatpush1.msra.mxu0 0.0
      %7676 = vmatprep.subr.mxu0 0.0
      %7677 = vmatpush1.msra.mxu0 0.0
      %7678 = vmatprep.subr.mxu0 0.0
      %7679 = vmatpush1.msra.mxu0 0.0
      %7680 = vmatprep.subr.mxu0 0.0
      %7681 = vmatpush1.msra.mxu0 0.0
      %7682 = vmatprep.subr.mxu0 0.0
      %7683 = vmatpush1.msra.mxu0 0.0
      %7684 = vmatprep.subr.mxu0 0.0
      %7685 = vmatpush1.msra.mxu0 0.0
      %7686 = vmatprep.subr.mxu0 0.0
      %7687 = vmatpush1.msra.mxu0 0.0
      %7688 = vmatprep.subr.mxu0 0.0
      %7689 = vmatpush1.msra.mxu0 0.0
      %7690 = vmatprep.subr.mxu0 0.0
      %7691 = vmatpush1.msra.mxu0 0.0
      %7692 = vmatprep.subr.mxu0 0.0
      %7693 = vmatpush1.msra.mxu0 0.0
      %7694 = vmatprep.subr.mxu0 0.0
      %7695 = vmatpush1.msra.mxu0 0.0
      %7696 = vmatprep.subr.mxu0 0.0
      %7697 = vmatpush1.msra.mxu0 0.0
      %7698 = vmatprep.subr.mxu0 0.0
      %7699 = vmatpush1.msra.mxu0 0.0
      %7700 = vmatprep.subr.mxu0 0.0
      %7701 = vmatpush1.msra.mxu0 0.0
      %7702 = vmatprep.subr.mxu0 0.0
      %7703 = vmatpush1.msra.mxu0 0.0
      %7704 = vmatprep.subr.mxu0 0.0
      %7705 = vmatpush1.msra.mxu0 0.0
      %7706 = vmatprep.subr.mxu0 0.0
      %7707 = vmatpush1.msra.mxu0 0.0
      %7708 = vmatprep.subr.mxu0 0.0
      %7709 = vmatpush1.msra.mxu0 0.0
      %7710 = vmatprep.subr.mxu0 0.0
      %7711 = vmatpush1.msra.mxu0 0.0
      %7712 = vmatprep.mubr.f32.mxu0 0.0
      %7713 = vmatmul.mubr.f32.gmra.mrb[0].mxu0 %v7625
      %v7714 = vpop.f32.mrb[0].mxu0
      %v7715 = vadd.f32 0.0, %v7714
      %v7716 = vpop.f32.mrb[0].mxu0
      %7717 = vmatprep.mubr.f32.mxu0 0.0
      %7718 = vmatmul.mubr.f32.gmra.mrb[0].mxu0 %v7628
      %v7719 = vpop.f32.mrb[0].mxu0
      %v7720 = vadd.f32 0.0, %v7719
      %v7721 = vpop.f32.mrb[0].mxu0
      %7722 = vmatprep.mubr.f32.mxu0 0.0
      %7723 = vmatmul.mubr.f32.gmra.mrb[0].mxu0 %v7631
      %v7724 = vpop.f32.mrb[0].mxu0
      %v7725 = vadd.f32 0.0, %v7724
      %v7726 = vpop.f32.mrb[0].mxu0
      %7727 = vmatprep.mubr.f32.mxu0 0.0
      %7728 = vmatmul.mubr.f32.gmra.mrb[0].mxu0 %v7634
      %v7729 = vpop.f32.mrb[0].mxu0
      %v7730 = vadd.f32 0.0, %v7729
      %v7731 = vpop.f32.mrb[0].mxu0
      %7732 = vmatprep.mubr.f32.mxu0 0.0
      %7733 = vmatmul.mubr.f32.gmra.mrb[0].mxu0 %v7637
      %v7734 = vpop.f32.mrb[0].mxu0
      %v7735 = vadd.f32 0.0, %v7734
      %v7736 = vpop.f32.mrb[0].mxu0
      %7737 = vmatprep.mubr.f32.mxu0 0.0
      %7738 = vmatmul.mubr.f32.gmra.mrb[0].mxu0 %v7640
      %v7739 = vpop.f32.mrb[0].mxu0
      %v7740 = vadd.f32 0.0, %v7739
      %v7741 = vpop.f32.mrb[0].mxu0
      %7742 = vmatprep.mubr.f32.mxu0 0.0
      %7743 = vmatmul.mubr.f32.gmra.mrb[0].mxu0 %v7643
      %v7744 = vpop.f32.mrb[0].mxu0
      %v7745 = vadd.f32 0.0, %v7744
      %v7746 = vpop.f32.mrb[0].mxu0
      %v7747 = vadd.f32 0.0, %v7746
      %7748 = vmatprep.mubr.f32.mxu0 0.0
      %7749 = vmatmul.mubr.f32.gmra.mrb[0].mxu0 %v7646
      %v7750 = vpop.f32.mrb[0].mxu0
      %v7751 = vadd.f32 0.0, %v7750
      %v7752 = vpop.f32.mrb[0].mxu0
      %v7753 = vadd.f32 0.0, %v7752
      %7754 = vdwg.mxu0
      %7757 = vrot.lane.b32.xlu0 %v7725, 96
      %v7758 = vpop.permute.xlu0 %7757
      %7759 = vrot.lane.b32.xlu0 %v7730, 96
      %v7760 = vpop.permute.xlu0 %7759
      %v7763 = vadd.f32 %v7715, %v7758
      %v7764 = vadd.f32 %v7720, %v7760
      %7767 = vrot.lane.b32.xlu0 %v7735, 64
      %v7768 = vpop.permute.xlu0 %7767
      %7769 = vrot.lane.b32.xlu0 %v7740, 64
      %v7770 = vpop.permute.xlu0 %7769
      %v7773 = vadd.f32 %v7763, %v7768
      %v7774 = vadd.f32 %v7764, %v7770
      %7777 = vrot.lane.b32.xlu0 %v7745, 32
      %v7778 = vpop.permute.xlu0 %7777
      %7779 = vrot.lane.b32.xlu0 %v7751, 32
      %v7780 = vpop.permute.xlu0 %7779
      %v7783 = vadd.f32 %v7773, %v7778
      %v7784 = vadd.f32 %v7774, %v7780
      %v7786 = vlaneseq
      %v7787 = vshrl.u32 %v7786, 7
      %v7788 = vsub.s32 0, %v7787
      %v7789 = vrot.slane %v7613, %v7788
      %v7791 = vadd.f32 %v7783, %v7789
      %v7792 = vadd.f32 %v7784, %v7789
      %v7794 = vlaneseq
      %v7795 = vshrl.u32 %v7794, 7
      %v7796 = vsub.s32 0, %v7795
      %v7797 = vrot.slane %v7614, %v7796
      %v7799 = vadd.f32 %v7747, %v7797
      %v7800 = vadd.f32 %v7753, %v7797
      %v7801 = vadd.f32 %v7791, %v7799
      %v7802 = vadd.f32 %v7792, %v7800
      %v7803 = vxor.u32 %v7791, 2147483648
      %v7804 = vxor.u32 %v7792, 2147483648
      %v7805 = vmul.f32 %v7803, 1.442695
      %v7806 = vpow.pop %v7805
      %v7807 = vmul.f32 %v7804, 1.442695
      %v7808 = vpow.pop %v7807
      %v7809 = vadd.f32 %v7806, 1.0
      %v7810 = vadd.f32 %v7808, 1.0
      %v7811 = vrcp.pop %v7809
      %v7812 = vmul.f32 1.0, %v7811
      %v7813 = vrcp.pop %v7810
      %v7814 = vmul.f32 1.0, %v7813
      %7817 = vrot.lane.b32.xlu0 %v7812, 112
      %v7818 = vpop.permute.xlu0 %7817
      %7819 = vrot.lane.b32.xlu0 %v7814, 112
      %v7820 = vpop.permute.xlu0 %7819
      %v7823 = vmul.f32 %v7801, %v7818
      %v7824 = vmul.f32 %v7802, %v7820
      %v7825 = vsel %vm1898, %v7823, 0.0
      %7826 = vadd.xlane.f32.xlu0 %v7825
      %v7827 = vpop.xlane.xlu0 %7826
      %v7828 = vsel %vm1898, %v7824, 0.0
      %7829 = vadd.xlane.f32.xlu0 %v7828
      %v7830 = vpop.xlane.xlu0 %7829
      %v7831 = vadd.f32 %v7827, %v7830
      %v7832 = vrot.slane %v7831, 4
      %v7833 = vadd.f32 %v7831, %v7832
      %v7834 = vrot.slane %v7833, 2
      %v7835 = vadd.f32 %v7833, %v7834
      %v7836 = vrot.slane %v7835, 1
      %v7837 = vadd.f32 %v7835, %v7836
      %v7838 = vmul.f32 %v7837, %v4854
      %v7839 = vsub.f32 %v7823, %v7838
      %v7840 = vsub.f32 %v7824, %v7838
      %v7841 = vmul.f32 %v7839, %v7839
      %v7842 = vmul.f32 %v7840, %v7840
      %v7843 = vsel %vm1898, %v7841, 0.0
      %7844 = vadd.xlane.f32.xlu0 %v7843
      %v7845 = vpop.xlane.xlu0 %7844
      %v7846 = vsel %vm1898, %v7842, 0.0
      %7847 = vadd.xlane.f32.xlu0 %v7846
      %v7848 = vpop.xlane.xlu0 %7847
      %v7849 = vadd.f32 %v7845, %v7848
      %v7850 = vrot.slane %v7849, 4
      %v7851 = vadd.f32 %v7849, %v7850
      %v7852 = vrot.slane %v7851, 2
      %v7853 = vadd.f32 %v7851, %v7852
      %v7854 = vrot.slane %v7853, 1
      %v7855 = vadd.f32 %v7853, %v7854
      %v7856 = vmul.f32 %v7855, %v4854
      %v7857 = vadd.f32 %v7856, 1e-12
      %v7858 = vrsqrt.pop %v7857
      %v7859 = vmul.f32 %v7839, %v7858
      %v7860 = vmul.f32 %v7840, %v7858
      %v7861 = vmul.f32 %v7859, %v7615
      %v7862 = vmul.f32 %v7860, %v7616
      %v7863 = vadd.f32 %v7861, %v7617
      %v7864 = vadd.f32 %v7862, %v7618
      %v7866 = vsel %vm1898, %v7863, 0
      %v7869 = vsel %vm1898, %v7864, 0
      %7871 = vmatprep.subr.mxu0 0.0
      %7872 = vmatpush1.msra.mxu0 %v7619
      %7873 = vmatprep.subr.mxu0 0.0
      %7874 = vmatpush1.msra.mxu0 %v7620
      %7875 = vmatprep.subr.mxu0 0.0
      %7876 = vmatpush1.msra.mxu0 0.0
      %7877 = vmatprep.subr.mxu0 0.0
      %7878 = vmatpush1.msra.mxu0 0.0
      %7879 = vmatprep.subr.mxu0 0.0
      %7880 = vmatpush1.msra.mxu0 0.0
      %7881 = vmatprep.subr.mxu0 0.0
      %7882 = vmatpush1.msra.mxu0 0.0
      %7883 = vmatprep.subr.mxu0 0.0
      %7884 = vmatpush1.msra.mxu0 0.0
      %7885 = vmatprep.subr.mxu0 0.0
      %7886 = vmatpush1.msra.mxu0 0.0
      %7887 = vmatprep.subr.mxu0 0.0
      %7888 = vmatpush1.msra.mxu0 0.0
      %7889 = vmatprep.subr.mxu0 0.0
      %7890 = vmatpush1.msra.mxu0 0.0
      %7891 = vmatprep.subr.mxu0 0.0
      %7892 = vmatpush1.msra.mxu0 0.0
      %7893 = vmatprep.subr.mxu0 0.0
      %7894 = vmatpush1.msra.mxu0 0.0
      %7895 = vmatprep.subr.mxu0 0.0
      %7896 = vmatpush1.msra.mxu0 0.0
      %7897 = vmatprep.subr.mxu0 0.0
      %7898 = vmatpush1.msra.mxu0 0.0
      %7899 = vmatprep.subr.mxu0 0.0
      %7900 = vmatpush1.msra.mxu0 0.0
      %7901 = vmatprep.subr.mxu0 0.0
      %7902 = vmatpush1.msra.mxu0 0.0
      %7903 = vmatprep.subr.mxu0 0.0
      %7904 = vmatpush1.msra.mxu0 0.0
      %7905 = vmatprep.subr.mxu0 0.0
      %7906 = vmatpush1.msra.mxu0 0.0
      %7907 = vmatprep.subr.mxu0 0.0
      %7908 = vmatpush1.msra.mxu0 0.0
      %7909 = vmatprep.subr.mxu0 0.0
      %7910 = vmatpush1.msra.mxu0 0.0
      %7911 = vmatprep.subr.mxu0 0.0
      %7912 = vmatpush1.msra.mxu0 0.0
      %7913 = vmatprep.subr.mxu0 0.0
      %7914 = vmatpush1.msra.mxu0 0.0
      %7915 = vmatprep.subr.mxu0 0.0
      %7916 = vmatpush1.msra.mxu0 0.0
      %7917 = vmatprep.subr.mxu0 0.0
      %7918 = vmatpush1.msra.mxu0 0.0
      %7919 = vmatprep.subr.mxu0 0.0
      %7920 = vmatpush1.msra.mxu0 0.0
      %7921 = vmatprep.subr.mxu0 0.0
      %7922 = vmatpush1.msra.mxu0 0.0
      %7923 = vmatprep.subr.mxu0 0.0
      %7924 = vmatpush1.msra.mxu0 0.0
      %7925 = vmatprep.subr.mxu0 0.0
      %7926 = vmatpush1.msra.mxu0 0.0
      %7927 = vmatprep.subr.mxu0 0.0
      %7928 = vmatpush1.msra.mxu0 0.0
      %7929 = vmatprep.subr.mxu0 0.0
      %7930 = vmatpush1.msra.mxu0 0.0
      %7931 = vmatprep.subr.mxu0 0.0
      %7932 = vmatpush1.msra.mxu0 0.0
      %7933 = vmatprep.subr.mxu0 0.0
      %7934 = vmatpush1.msra.mxu0 0.0
      %7935 = vmatprep.mubr.f32.mxu0 0.0
      %7936 = vmatmul.mubr.f32.gmra.mrb[0].mxu0 %v7866
      %v7937 = vpop.f32.mrb[0].mxu0
      %v7938 = vadd.f32 0.0, %v7937
      %v7939 = vpop.f32.mrb[0].mxu0
      %7940 = vmatprep.mubr.f32.mxu0 0.0
      %7941 = vmatmul.mubr.f32.gmra.mrb[0].mxu0 %v7869
      %v7942 = vpop.f32.mrb[0].mxu0
      %v7943 = vadd.f32 0.0, %v7942
      %v7944 = vpop.f32.mrb[0].mxu0
      %7945 = vdwg.mxu0
      %v7947 = vlaneseq
      %v7948 = vshrl.u32 %v7947, 7
      %v7949 = vsub.s32 0, %v7948
      %v7950 = vrot.slane %v7621, %v7949
      %v7952 = vadd.f32 %v7938, %v7950
      %v7953 = vadd.f32 %v7943, %v7950
      %v7954 = vmax.f32 %v7952, 0.0
      %v7955 = vmax.f32 %v7953, 0.0
      %v7957 = vsel %vm3078, %v7954, 0
      %v7960 = vsel %vm3078, %v7955, 0
      %7962 = vmatprep.subr.mxu0 0.0
      %7963 = vmatpush1.msra.mxu0 %v7622
      %7964 = vmatprep.subr.mxu0 0.0
      %7965 = vmatpush1.msra.mxu0 0.0
      %7966 = vmatprep.subr.mxu0 0.0
      %7967 = vmatpush1.msra.mxu0 0.0
      %7968 = vmatprep.subr.mxu0 0.0
      %7969 = vmatpush1.msra.mxu0 0.0
      %7970 = vmatprep.subr.mxu0 0.0
      %7971 = vmatpush1.msra.mxu0 0.0
      %7972 = vmatprep.subr.mxu0 0.0
      %7973 = vmatpush1.msra.mxu0 0.0
      %7974 = vmatprep.subr.mxu0 0.0
      %7975 = vmatpush1.msra.mxu0 0.0
      %7976 = vmatprep.subr.mxu0 0.0
      %7977 = vmatpush1.msra.mxu0 0.0
      %7978 = vmatprep.subr.mxu0 0.0
      %7979 = vmatpush1.msra.mxu0 0.0
      %7980 = vmatprep.subr.mxu0 0.0
      %7981 = vmatpush1.msra.mxu0 0.0
      %7982 = vmatprep.subr.mxu0 0.0
      %7983 = vmatpush1.msra.mxu0 0.0
      %7984 = vmatprep.subr.mxu0 0.0
      %7985 = vmatpush1.msra.mxu0 0.0
      %7986 = vmatprep.subr.mxu0 0.0
      %7987 = vmatpush1.msra.mxu0 0.0
      %7988 = vmatprep.subr.mxu0 0.0
      %7989 = vmatpush1.msra.mxu0 0.0
      %7990 = vmatprep.subr.mxu0 0.0
      %7991 = vmatpush1.msra.mxu0 0.0
      %7992 = vmatprep.subr.mxu0 0.0
      %7993 = vmatpush1.msra.mxu0 0.0
      %7994 = vmatprep.subr.mxu0 0.0
      %7995 = vmatpush1.msra.mxu0 0.0
      %7996 = vmatprep.subr.mxu0 0.0
      %7997 = vmatpush1.msra.mxu0 0.0
      %7998 = vmatprep.subr.mxu0 0.0
      %7999 = vmatpush1.msra.mxu0 0.0
      %8000 = vmatprep.subr.mxu0 0.0
      %8001 = vmatpush1.msra.mxu0 0.0
      %8002 = vmatprep.subr.mxu0 0.0
      %8003 = vmatpush1.msra.mxu0 0.0
      %8004 = vmatprep.subr.mxu0 0.0
      %8005 = vmatpush1.msra.mxu0 0.0
      %8006 = vmatprep.subr.mxu0 0.0
      %8007 = vmatpush1.msra.mxu0 0.0
      %8008 = vmatprep.subr.mxu0 0.0
      %8009 = vmatpush1.msra.mxu0 0.0
      %8010 = vmatprep.subr.mxu0 0.0
      %8011 = vmatpush1.msra.mxu0 0.0
      %8012 = vmatprep.subr.mxu0 0.0
      %8013 = vmatpush1.msra.mxu0 0.0
      %8014 = vmatprep.subr.mxu0 0.0
      %8015 = vmatpush1.msra.mxu0 0.0
      %8016 = vmatprep.subr.mxu0 0.0
      %8017 = vmatpush1.msra.mxu0 0.0
      %8018 = vmatprep.subr.mxu0 0.0
      %8019 = vmatpush1.msra.mxu0 0.0
      %8020 = vmatprep.subr.mxu0 0.0
      %8021 = vmatpush1.msra.mxu0 0.0
      %8022 = vmatprep.subr.mxu0 0.0
      %8023 = vmatpush1.msra.mxu0 0.0
      %8024 = vmatprep.subr.mxu0 0.0
      %8025 = vmatpush1.msra.mxu0 0.0
      %8026 = vmatprep.mubr.f32.mxu0 0.0
      %8027 = vmatmul.mubr.f32.gmra.mrb[0].mxu0 %v7957
      %v8028 = vpop.f32.mrb[0].mxu0
      %v8029 = vadd.f32 0.0, %v8028
      %v8030 = vpop.f32.mrb[0].mxu0
      %8031 = vmatprep.mubr.f32.mxu0 0.0
      %8032 = vmatmul.mubr.f32.gmra.mrb[0].mxu0 %v7960
      %v8033 = vpop.f32.mrb[0].mxu0
      %v8034 = vadd.f32 0.0, %v8033
      %v8035 = vpop.f32.mrb[0].mxu0
      %8036 = vdwg.mxu0
      %v8038 = vlaneseq
      %v8039 = vshrl.u32 %v8038, 7
      %v8040 = vsub.s32 0, %v8039
      %v8041 = vrot.slane %v7623, %v8040
      %v8043 = vadd.f32 %v8029, %v8041
      %v8044 = vadd.f32 %v8034, %v8041
      %v8045 = vcombine.high %v8043, 0.0
      %v8047 = vunpack.c.l.s4 1983009808
      %v8048 = vunpack.c.0.s8 %v8047
      %v8049 = vlaneseq
      %v8050 = vshrl.u32 %v8049, 7
      %v8051 = vsub.s32 %v8048, %v8050
      %v8052 = vrot.slane %v8043, %v8051
      %v8054 = vunpack.c.l.s4 1983009808
      %v8055 = vunpack.c.0.s8 %v8054
      %v8056 = vlaneseq
      %v8057 = vshrl.u32 %v8056, 7
      %v8058 = vsub.s32 %v8055, %v8057
      %v8059 = vrot.slane %v8045, %v8058
      %v8060 = vcombine.high %v8052, 0.0
      %v8062 = vunpack.c.l.s4 1934713408
      %v8063 = vunpack.c.0.s8 %v8062
      %v8064 = vlaneseq
      %v8065 = vshrl.u32 %v8064, 7
      %v8066 = vsub.s32 %v8063, %v8065
      %v8067 = vrot.slane %v8052, %v8066
      %v8069 = vunpack.c.l.s4 1934713408
      %v8070 = vunpack.c.0.s8 %v8069
      %v8071 = vlaneseq
      %v8072 = vshrl.u32 %v8071, 7
      %v8073 = vsub.s32 %v8070, %v8072
      %v8074 = vrot.slane %v8060, %v8073
      %v8075 = vcombine.high %v8059, 0.0
      %v8077 = vunpack.c.l.s4 1934713408
      %v8078 = vunpack.c.0.s8 %v8077
      %v8079 = vlaneseq
      %v8080 = vshrl.u32 %v8079, 7
      %v8081 = vsub.s32 %v8078, %v8080
      %v8082 = vrot.slane %v8059, %v8081
      %v8084 = vunpack.c.l.s4 1934713408
      %v8085 = vunpack.c.0.s8 %v8084
      %v8086 = vlaneseq
      %v8087 = vshrl.u32 %v8086, 7
      %v8088 = vsub.s32 %v8085, %v8087
      %v8089 = vrot.slane %v8075, %v8088
      %v8090 = vcombine.high %v8067, 0.0
      %v8091 = vcombine.high %v8074, 0.0
      %v8092 = vcombine.high %v8082, 0.0
      %v8093 = vcombine.high %v8089, 0.0
      %v8094 = vcombine.high %v8044, 0.0
      %v8096 = vunpack.c.l.s4 1983009808
      %v8097 = vunpack.c.0.s8 %v8096
      %v8098 = vlaneseq
      %v8099 = vshrl.u32 %v8098, 7
      %v8100 = vsub.s32 %v8097, %v8099
      %v8101 = vrot.slane %v8044, %v8100
      %v8103 = vunpack.c.l.s4 1983009808
      %v8104 = vunpack.c.0.s8 %v8103
      %v8105 = vlaneseq
      %v8106 = vshrl.u32 %v8105, 7
      %v8107 = vsub.s32 %v8104, %v8106
      %v8108 = vrot.slane %v8094, %v8107
      %v8109 = vcombine.high %v8101, 0.0
      %v8111 = vunpack.c.l.s4 1934713408
      %v8112 = vunpack.c.0.s8 %v8111
      %v8113 = vlaneseq
      %v8114 = vshrl.u32 %v8113, 7
      %v8115 = vsub.s32 %v8112, %v8114
      %v8116 = vrot.slane %v8101, %v8115
      %v8118 = vunpack.c.l.s4 1934713408
      %v8119 = vunpack.c.0.s8 %v8118
      %v8120 = vlaneseq
      %v8121 = vshrl.u32 %v8120, 7
      %v8122 = vsub.s32 %v8119, %v8121
      %v8123 = vrot.slane %v8109, %v8122
      %v8124 = vcombine.high %v8108, 0.0
      %v8126 = vunpack.c.l.s4 1934713408
      %v8127 = vunpack.c.0.s8 %v8126
      %v8128 = vlaneseq
      %v8129 = vshrl.u32 %v8128, 7
      %v8130 = vsub.s32 %v8127, %v8129
      %v8131 = vrot.slane %v8108, %v8130
      %v8133 = vunpack.c.l.s4 1934713408
      %v8134 = vunpack.c.0.s8 %v8133
      %v8135 = vlaneseq
      %v8136 = vshrl.u32 %v8135, 7
      %v8137 = vsub.s32 %v8134, %v8136
      %v8138 = vrot.slane %v8124, %v8137
      %v8139 = vcombine.high %v8116, 0.0
      %v8140 = vcombine.high %v8123, 0.0
      %v8141 = vcombine.high %v8131, 0.0
      %v8142 = vcombine.high %v8138, 0.0
      %8144 = vrot.lane.b32.xlu0 %v8090, 2
      %v8145 = vpop.permute.xlu0 %8144
      %8148 = vrot.lane.b32.xlu0 %v8074, 4
      %v8149 = vpop.permute.xlu0 %8148
      %8152 = vrot.lane.b32.xlu0 %v8091, 6
      %v8153 = vpop.permute.xlu0 %8152
      %8156 = vrot.lane.b32.xlu0 %v8082, 8
      %v8157 = vpop.permute.xlu0 %8156
      %8160 = vrot.lane.b32.xlu0 %v8092, 10
      %v8161 = vpop.permute.xlu0 %8160
      %8164 = vrot.lane.b32.xlu0 %v8089, 12
      %v8165 = vpop.permute.xlu0 %8164
      %8168 = vrot.lane.b32.xlu0 %v8093, 14
      %v8169 = vpop.permute.xlu0 %8168
      %8172 = vrot.lane.b32.xlu0 %v8116, 16
      %v8173 = vpop.permute.xlu0 %8172
      %8176 = vrot.lane.b32.xlu0 %v8139, 18
      %v8177 = vpop.permute.xlu0 %8176
      %8180 = vrot.lane.b32.xlu0 %v8123, 20
      %v8181 = vpop.permute.xlu0 %8180
      %8184 = vrot.lane.b32.xlu0 %v8140, 22
      %v8185 = vpop.permute.xlu0 %8184
      %8188 = vrot.lane.b32.xlu0 %v8131, 24
      %v8189 = vpop.permute.xlu0 %8188
      %8192 = vrot.lane.b32.xlu0 %v8141, 26
      %v8193 = vpop.permute.xlu0 %8192
      %8196 = vrot.lane.b32.xlu0 %v8138, 28
      %v8197 = vpop.permute.xlu0 %8196
      %8200 = vrot.lane.b32.xlu0 %v8142, 30
      %v8201 = vpop.permute.xlu0 %8200
      %vm8203 = vcmask 15360
      %v8204 = vsel %vm8203, %v8067, %v8145
      %v8205 = vsel %vm1080, %v8204, %v8149
      %vm8206 = vcmask 48128
      %v8207 = vsel %vm8206, %v8205, %v8153
      %v8208 = vsel %vm3078, %v8207, %v8157
      %vm8209 = vcmask 80896
      %v8210 = vsel %vm8209, %v8208, %v8161
      %vm8211 = vcmask 97280
      %v8212 = vsel %vm8211, %v8210, %v8165
      %vm8213 = vcmask 113664
      %v8214 = vsel %vm8213, %v8212, %v8169
      %v8215 = vsel %vm1898, %v8214, %v8173
      %vm8216 = vcmask 146432
      %v8217 = vsel %vm8216, %v8215, %v8177
      %vm8218 = vcmask 162816
      %v8219 = vsel %vm8218, %v8217, %v8181
      %vm8220 = vcmask 179200
      %v8221 = vsel %vm8220, %v8219, %v8185
      %v8222 = vsel %vm3083, %v8221, %v8189
      %vm8223 = vcmask 211968
      %v8224 = vsel %vm8223, %v8222, %v8193
      %vm8225 = vcmask 228352
      %v8226 = vsel %vm8225, %v8224, %v8197
      %vm8227 = vcmask 244736
      %v8228 = vsel %vm8227, %v8226, %v8201
      %vm8229 = vcmask 253952
      %8230 = vst.msk [vmem:[%s1038] sm:$0x1] %vm8229, %v8228
      %p8231 = scmp.lt.s32.totalorder %s80, 1
      %s8232 = scalar_select %p8231, %s80, 1
      %s8233 = scalar_lea.vmem %s69, %s8232
      // Predicated region
      $region157: #{stgcn_graph_conv_forward.1} parent=155 // pred_check
        %p8234 = pneg %p817
      $region158: #{stgcn_graph_conv_forward.1} parent=155 // pred_check_branch
        %8236 = sbr.rel (%p8234) target = $region160
      $region159: #{stgcn_graph_conv_forward.1} parent=155 // pred_region
        _
      $region160: #{stgcn_graph_conv_forward.1} parent=155 // pred_fallthru
        _
    $region156: #{stgcn_graph_conv_forward.1} parent=5 // pred_fallthru
      _
    %p8237 = scmp.le.s32.totalorder 2, %s75
    // Predicated region
    $region161: #{stgcn_graph_conv_forward.1} parent=5 // pred_check
      %p8238 = pneg %p8237
    $region162: #{stgcn_graph_conv_forward.1} parent=5 // pred_check_branch
      %8240 = sbr.rel (%p8238) target = $region164
    $region163: #{stgcn_graph_conv_forward.1} parent=5 // pred_region
      %s8241 = ssub.s32 %s75, 2
      // Predicated region
      $region165: #{stgcn_graph_conv_forward.1} parent=163 // pred_check
        %p8242 = pneg %p823
      $region166: #{stgcn_graph_conv_forward.1} parent=163 // pred_check_branch
        %8244 = sbr.rel (%p8242) target = $region168
      $region167: #{stgcn_graph_conv_forward.1} parent=163 // pred_region
        %p8245 = scmp.lt.s32.totalorder %s81, 1
        %s8246 = scalar_select %p8245, %s81, 1
        %s8247 = scalar_lea.vmem %s69, %s8246
      $region168: #{stgcn_graph_conv_forward.1} parent=163 // pred_fallthru
        _
    $region164: #{stgcn_graph_conv_forward.1} parent=5 // pred_fallthru
      _
  $region6: #{stgcn_graph_conv_forward.1} parent=0 // loop_footer
    %s79 = sadd.s32 1, %s75
  $region7: #{stgcn_graph_conv_forward.1} parent=0 // loop_footer_branch
    %74 = sbr.rel target = $region3
  $region8: #{stgcn_graph_conv_forward.1} parent=0 // loop_exit
    _

</llo_original>
